<compile_context>
chip_gen: v5e
topology: v5e:2x2
jax: 0.10.0
libtpu: 0.0.40
codegen_flags: <defaults>
</compile_context>

<pallas_src>
import math

import numpy as np
import jax
import jax.numpy as jnp
from jax import lax
from jax.experimental import pallas as pl
from jax.experimental.pallas import tpu as pltpu


# ----------------------------- plain-JAX glue -------------------------------

def _get_window_size(x_size, window_size, shift_size):
    ws = list(window_size)
    ss = list(shift_size)
    for i in range(len(x_size)):
        if x_size[i] <= window_size[i]:
            ws[i] = x_size[i]
            ss[i] = 0
    return tuple(ws), tuple(ss)


def _window_partition(x, ws):
    B, D, H, W, C = x.shape
    x = x.reshape(B, D // ws[0], ws[0], H // ws[1], ws[1], W // ws[2], ws[2], C)
    x = x.transpose(0, 1, 3, 5, 2, 4, 6, 7)
    return x.reshape(-1, ws[0] * ws[1] * ws[2], C)


def _window_reverse(windows, ws, B, D, H, W):
    x = windows.reshape(B, D // ws[0], H // ws[1], W // ws[2], ws[0], ws[1], ws[2], -1)
    x = x.transpose(0, 1, 4, 2, 5, 3, 6, 7)
    return x.reshape(B, D, H, W, -1)


def _sine_position_encoding(HW, num_pos_feats, temperature=10000.0):
    # mirrors WindowAttention3D.get_sine_position_encoding
    h, w = HW
    not_mask = np.ones((1, h, w), dtype=np.float32)
    y_embed = np.cumsum(not_mask, axis=1, dtype=np.float32)
    x_embed = np.cumsum(not_mask, axis=2, dtype=np.float32)
    scale = np.float32(2.0 * math.pi)
    y_embed = y_embed / (y_embed[:, -1:, :] + 1e-6) * scale
    x_embed = x_embed / (x_embed[:, :, -1:] + 1e-6) * scale
    dim_t = np.arange(num_pos_feats, dtype=np.float32)
    dim_t = np.float32(temperature) ** (2.0 * np.floor(dim_t / 2.0) / np.float32(num_pos_feats))
    pos_x = x_embed[:, :, :, None] / dim_t
    pos_y = y_embed[:, :, :, None] / dim_t
    pos_x = np.stack((np.sin(pos_x[:, :, :, 0::2]), np.cos(pos_x[:, :, :, 1::2])),
                     axis=4).reshape(1, h, w, -1)
    pos_y = np.stack((np.sin(pos_y[:, :, :, 0::2]), np.cos(pos_y[:, :, :, 1::2])),
                     axis=4).reshape(1, h, w, -1)
    pos = np.concatenate((pos_y, pos_x), axis=3)          # (1, h, w, 2*npf)
    return pos.reshape(1, h * w, 2 * num_pos_feats).astype(np.float32)


# ------------------------------ Pallas kernel --------------------------------

def _build_kernel(G, N, M, C, WD, NH, HD):
    F32 = jnp.float32
    BF16 = jnp.bfloat16

    def layernorm(x, w, b):
        mu = jnp.mean(x, axis=-1, keepdims=True)
        var = jnp.mean(jnp.square(x - mu), axis=-1, keepdims=True)
        return (x - mu) * lax.rsqrt(var + 1e-5) * w + b

    def gelu(x):
        # tanh-approx GELU (EUP slot); ~1e-3-level deviation from the exact
        # erf GELU of nn.GELU(), as sanctioned by the perf review.
        c = 0.7978845608028654  # sqrt(2/pi)
        return 0.5 * x * (1.0 + jnp.tanh(c * (x + 0.044715 * x * x * x)))

    def kernel(x_ref, xt_ref, pos_ref,
               qkv_w, qkv_b, pjw_top, pjw_bot, pj_b, na_w, na_b,
               am1_w, am1_b, am2_w, am2_b,
               n2_w_a, n2_b_a, n2_w_b, n2_b_b,
               f1_w_a, f1_w_b, f1_b, f2_w, f2_b,
               out_ref):
        x3 = x_ref[...]                                         # (G, N, C) f32

        # qkv for all G*N tokens in ONE MXU matmul (qk scale pre-folded into
        # the Q columns / bias).  Single bf16 cast, reused by every q/k/v
        # slice below (cast hoisting, per review).
        xq = (x3 + pos_ref[...][None]).reshape(G * N, C).astype(BF16)
        qkv_bf = (jnp.dot(xq, qkv_w[...], preferred_element_type=F32)
                  + qkv_b[...]).astype(BF16)                    # (G*N, 3C) bf16
        qkv3 = qkv_bf.reshape(G, N, 3 * C)

        # Per-head V @ proj_attn_top precompute (i/j invariant), cast to bf16
        # once, then arranged per temporal chunk j as a head-concatenated
        # (G, NH*M, C) slab so the PV contraction below runs over NH*M.
        vw = []
        for h in range(NH):
            vh = qkv_bf[:, 2 * C + h * HD:2 * C + (h + 1) * HD]          # (G*N, HD)
            vw.append(jnp.dot(vh, pjw_top[h], preferred_element_type=F32)
                      .astype(BF16).reshape(G, N, C))
        vw_blk = [jnp.concatenate([vw[h][:, j * M:(j + 1) * M, :] for h in range(NH)],
                                  axis=1)                                 # (G, NH*M, C)
                  for j in range(WD)]
        k_blk = [[qkv3[:, j * M:(j + 1) * M, C + h * HD:C + (h + 1) * HD]
                  for h in range(NH)] for j in range(WD)]                 # bf16 slices

        inv_wd = 1.0 / float(WD)
        for i in range(WD):
            q_i = [qkv3[:, i * M:(i + 1) * M, h * HD:(h + 1) * HD] for h in range(NH)]
            # j-invariant half of proj_attn: x_tmp[i] @ pj_w[C:2C] + pj_b.
            t_i = (jnp.dot(xt_ref[i].reshape(G * M, C), pjw_bot[...],
                           preferred_element_type=F32) + pj_b[...])       # (G*M, C)
            acc = jnp.zeros((G * M, C), F32)
            for j in range(WD):
                # Per-head (i, j) score block + softmax (HD-sized contractions),
                # then ONE merged (head, key) PV contraction of length NH*M
                # against the precomputed head-concatenated V @ W_top slab.
                p_parts = []
                for h in range(NH):
                    s = jnp.einsum('gqd,gkd->gqk', q_i[h], k_blk[j][h],
                                   preferred_element_type=F32)            # (G, M, M)
                    s = s - jnp.max(s, axis=-1, keepdims=True)
                    p = jnp.exp(s)
                    p = p * pl.reciprocal(jnp.sum(p, axis=-1, keepdims=True),
                                          approx=True)
                    p_parts.append(p.astype(BF16))
                p_cat = jnp.concatenate(p_parts, axis=-1)                 # (G, M, NH*M)
                pv = jnp.einsum('gqk,gkc->gqc', p_cat, vw_blk[j],
                                preferred_element_type=F32)               # (G, M, C)
                y = t_i + pv.reshape(G * M, C)
                # norm_attn -> attn.mlp, accumulated over j (fc2 bias hoisted)
                yl = layernorm(y, na_w[...], na_b[...])
                h1 = gelu(jnp.dot(yl.astype(BF16), am1_w[...],
                                  preferred_element_type=F32) + am1_b[...])
                acc = acc + jnp.dot(h1.astype(BF16), am2_w[...],
                                    preferred_element_type=F32)

            # x_out for temporal slice i (hoisted fc2 bias: WD*b/WD == b), then
            # the fused block head: norm2 over the virtual cat(x, x_out)
            # without materializing it, split-weight fc1, gelu, fc2.
            x_i = x3[:, i * M:(i + 1) * M, :].reshape(G * M, C)
            xo_i = x_i + acc * inv_wd + am2_b[...]
            mu = (jnp.sum(x_i, axis=-1, keepdims=True)
                  + jnp.sum(xo_i, axis=-1, keepdims=True)) / (2.0 * C)
            var = (jnp.sum(jnp.square(x_i - mu), axis=-1, keepdims=True)
                   + jnp.sum(jnp.square(xo_i - mu), axis=-1, keepdims=True)) / (2.0 * C)
            inv = lax.rsqrt(var + 1e-5)
            z1 = (x_i - mu) * inv * n2_w_a[...] + n2_b_a[...]
            z2 = (xo_i - mu) * inv * n2_w_b[...] + n2_b_b[...]
            hdn = gelu(jnp.dot(z1.astype(BF16), f1_w_a[...], preferred_element_type=F32)
                       + jnp.dot(z2.astype(BF16), f1_w_b[...], preferred_element_type=F32)
                       + f1_b[...])
            out_i = jnp.dot(hdn.astype(BF16), f2_w[...],
                            preferred_element_type=F32) + f2_b[...]       # (G*M, C)
            out_ref[:, i * M:(i + 1) * M, :] = out_i.reshape(G, M, C)

    return kernel


# ------------------------------ forward wrapper -------------------------------

def aswin_block_forward(x, params, *, num_heads, window_size=8, window_size_t=2,
                        shift_size=(0, 0, 0), window_block=32,
                        vmem_limit_bytes=None):
    (qkv_w, qkv_b, pj_w, pj_b, na_w, na_b, am1_w, am1_b, am2_w, am2_b,
     n2_w, n2_b, f1_w, f1_b, f2_w, f2_b) = params

    B, D, H, W, C = x.shape
    ws3 = (window_size_t, window_size, window_size)
    ws, ss = _get_window_size((D, H, W), ws3, shift_size)
    assert ws == ws3, "pick example shapes that keep the construction-time window"

    pad_d1 = (ws[0] - D % ws[0]) % ws[0]
    pad_b = (ws[1] - H % ws[1]) % ws[1]
    pad_r = (ws[2] - W % ws[2]) % ws[2]
    xp = jnp.pad(x, ((0, 0), (0, pad_d1), (0, pad_b), (0, pad_r), (0, 0)))
    _, Dp, Hp, Wp, _ = xp.shape
    if any(s > 0 for s in ss):
        xp = jnp.roll(xp, shift=(-ss[0], -ss[1], -ss[2]), axis=(1, 2, 3))

    x_windows = _window_partition(xp, ws).astype(jnp.float32)     # (B_, N, C)
    B_, N, _ = x_windows.shape
    WD = ws[0]
    M = ws[1] * ws[2]
    NH = num_heads
    HD = C // NH
    scale = HD ** (-0.5)

    # torch quirk: x.view(-1, B_, wh*ww, dim) mixes windows across the batch;
    # reproduce it exactly as a row-major reshape of the window set, staged in
    # bf16 (it only feeds a bf16 matmul) to halve its duplicated HBM stream.
    # TODO(synk): x_tmp is a cross-window gather of x_windows that a BlockSpec
    # cannot express, so it remains a second (now bf16) HBM operand.
    x_tmp = x_windows.astype(jnp.bfloat16).reshape(WD, B_, M, C)

    # ---- choose windows-per-step G -------------------------------------------
    # (a) >= 2 grid steps when possible: megacore split on v7x + double-buffered
    #     block DMA on every generation;
    # (b) conservative per-step VMEM estimate kept under the tightest default
    #     scoped budget (v5e 16 MiB; v7x has only 64 MiB physical).  On
    #     v5e/v6e (128 MiB physical) raise window_block together with
    #     vmem_limit_bytes for larger steps.
    G = max(1, min(window_block, B_))
    if B_ >= 2:
        G = min(G, (B_ + 1) // 2)          # at least 2 grid steps

    def _step_bytes(g):
        f32b, bf16b = 4, 2
        blocks = 2 * (g * N * C * f32b           # x block (double-buffered)
                      + WD * g * M * C * bf16b   # x_tmp block
                      + g * N * C * f32b)        # out block
        interm = (g * N * 3 * C * (f32b + bf16b)        # qkv f32 acc + bf16 copy
                  + NH * g * N * C * (f32b + bf16b)     # vw precompute
                  + 2 * g * M * NH * M * f32b           # score / prob tiles
                  + 3 * g * M * 4 * C * f32b)           # norm / mlp intermediates
        return blocks + interm

    _BUDGET = 12 * 1024 * 1024
    while G > 1 and _step_bytes(G) > _BUDGET:
        G = (G + 1) // 2

    B_pad = ((B_ + G - 1) // G) * G
    if B_pad != B_:
        x_windows_p = jnp.pad(x_windows, ((0, B_pad - B_), (0, 0), (0, 0)))
        x_tmp_p = jnp.pad(x_tmp, ((0, 0), (0, B_pad - B_), (0, 0), (0, 0)))
    else:
        x_windows_p, x_tmp_p = x_windows, x_tmp

    pos = jnp.asarray(_sine_position_encoding((ws3[1], ws3[2]), C // 2))   # (1, M, C)
    pos = jnp.tile(pos, (1, WD, 1))[0]                                     # (N, C)

    bf16 = jnp.bfloat16
    # fold the qk scale into the Q columns of the qkv linear (bias included)
    qkv_w_s = jnp.concatenate([qkv_w[:, :C] * scale, qkv_w[:, C:]], axis=1).astype(bf16)
    qkv_b_s = jnp.concatenate([qkv_b[:, :C] * scale, qkv_b[:, C:]], axis=1)
    kparams = (
        qkv_w_s, qkv_b_s,
        pj_w[:C, :].reshape(NH, HD, C).astype(bf16),   # proj_attn top, pre-split/head
        pj_w[C:, :].astype(bf16),                      # proj_attn bottom half
        pj_b, na_w, na_b,
        am1_w.astype(bf16), am1_b, am2_w.astype(bf16), am2_b,
        n2_w[:, :C], n2_b[:, :C], n2_w[:, C:], n2_b[:, C:],
        f1_w[:C, :].astype(bf16), f1_w[C:, :].astype(bf16), f1_b,
        f2_w.astype(bf16), f2_b,
    )

    kernel = _build_kernel(G, N, M, C, WD, NH, HD)

    def full_spec(a):
        return pl.BlockSpec(a.shape, lambda g, _nd=a.ndim: (0,) * _nd)

    in_specs = [
        pl.BlockSpec((G, N, C), lambda g: (g, 0, 0)),            # this window block
        pl.BlockSpec((WD, G, M, C), lambda g: (0, g, 0, 0)),     # x_tmp[:, block] (bf16)
        pl.BlockSpec((N, C), lambda g: (0, 0)),                  # position bias
    ] + [full_spec(a) for a in kparams]

    out = pl.pallas_call(
        kernel,
        out_shape=jax.ShapeDtypeStruct((B_pad, N, C), jnp.float32),
        grid=(B_pad // G,),
        in_specs=in_specs,
        out_specs=pl.BlockSpec((G, N, C), lambda g: (g, 0, 0)),
        compiler_params=pltpu.CompilerParams(
            dimension_semantics=("parallel",),                   # independent window blocks
            vmem_limit_bytes=vmem_limit_bytes,
        ),
    )(x_windows_p, x_tmp_p, pos, *kparams)

    out = out[:B_]
    xr = _window_reverse(out, ws, B, Dp, Hp, Wp)                 # (B, Dp, Hp, Wp, C)
    if any(s > 0 for s in ss):
        xr = jnp.roll(xr, shift=(ss[0], ss[1], ss[2]), axis=(1, 2, 3))
    if pad_d1 > 0 or pad_b > 0 or pad_r > 0:
        xr = xr[:, :D, :H, :W, :]
    return xr


# ----------------------------------- main -------------------------------------

if __name__ == "__main__":
    dim = 16
    num_heads = 2
    window_size = 4
    window_size_t = 2
    B, D, H, W = 2, 2, 8, 8

    key = jax.random.PRNGKey(0)
    keys = list(jax.random.split(key, 16))
    kit = iter(keys)

    def linear(fan_in, fan_out):
        w = jax.random.normal(next(kit), (fan_in, fan_out), jnp.float32) * 0.05
        b = jax.random.normal(next(kit), (1, fan_out), jnp.float32) * 0.05
        return w, b

    C = dim
    qkv_w, qkv_b = linear(C, 3 * C)            # attn.qkv         (bias=True)
    pj_w, pj_b = linear(2 * C, C)              # attn.proj_attn
    na_w = jnp.ones((1, C), jnp.float32)       # attn.norm_attn
    na_b = jnp.zeros((1, C), jnp.float32)
    am1_w, am1_b = linear(C, C)                # attn.mlp.fc1
    am2_w, am2_b = linear(C, C)                # attn.mlp.fc2
    n2_w = jnp.ones((1, 2 * C), jnp.float32)   # block.norm2
    n2_b = jnp.zeros((1, 2 * C), jnp.float32)
    f1_w, f1_b = linear(2 * C, 4 * C)          # block.mlp.fc1
    f2_w, f2_b = linear(4 * C, C)              # block.mlp.fc2

    params = (qkv_w, qkv_b, pj_w, pj_b, na_w, na_b, am1_w, am1_b, am2_w, am2_b,
              n2_w, n2_b, f1_w, f1_b, f2_w, f2_b)

    x = jax.random.normal(next(kit), (B, D, H, W, dim), jnp.float32)

    @jax.jit
    def fwd(x_, params_):
        return aswin_block_forward(x_, params_, num_heads=num_heads,
                                   window_size=window_size,
                                   window_size_t=window_size_t,
                                   shift_size=(0, 0, 0))

    y = fwd(x, params)
    y = jax.block_until_ready(y)
    assert y.shape == (B, D, H, W, dim), y.shape
    assert bool(jnp.all(jnp.isfinite(y)))
    print("KERNEL_OK")
</pallas_src>

<mosaic_0001>
module attributes {stable_mosaic.version = 11 : i64} {
  func.func @kernel(%arg0: i32, %arg1: memref<4x32x16xf32, #tpu.memory_space<vmem>>, %arg2: memref<2x4x16x16xbf16, #tpu.memory_space<vmem>>, %arg3: memref<32x16xf32, #tpu.memory_space<vmem>>, %arg4: memref<16x48xbf16, #tpu.memory_space<vmem>>, %arg5: memref<1x48xf32, #tpu.memory_space<vmem>>, %arg6: memref<2x8x16xbf16, #tpu.memory_space<vmem>>, %arg7: memref<16x16xbf16, #tpu.memory_space<vmem>>, %arg8: memref<1x16xf32, #tpu.memory_space<vmem>>, %arg9: memref<1x16xf32, #tpu.memory_space<vmem>>, %arg10: memref<1x16xf32, #tpu.memory_space<vmem>>, %arg11: memref<16x16xbf16, #tpu.memory_space<vmem>>, %arg12: memref<1x16xf32, #tpu.memory_space<vmem>>, %arg13: memref<16x16xbf16, #tpu.memory_space<vmem>>, %arg14: memref<1x16xf32, #tpu.memory_space<vmem>>, %arg15: memref<1x16xf32, #tpu.memory_space<vmem>>, %arg16: memref<1x16xf32, #tpu.memory_space<vmem>>, %arg17: memref<1x16xf32, #tpu.memory_space<vmem>>, %arg18: memref<1x16xf32, #tpu.memory_space<vmem>>, %arg19: memref<16x64xbf16, #tpu.memory_space<vmem>>, %arg20: memref<16x64xbf16, #tpu.memory_space<vmem>>, %arg21: memref<1x64xf32, #tpu.memory_space<vmem>>, %arg22: memref<64x16xbf16, #tpu.memory_space<vmem>>, %arg23: memref<1x16xf32, #tpu.memory_space<vmem>>, %arg24: memref<4x32x16xf32, #tpu.memory_space<vmem>>) attributes {dimension_semantics = [#tpu.dimension_semantics<parallel>], iteration_bounds = array<i64: 2>, scalar_prefetch = 0 : i64, scratch_operands = 0 : i64, tpu.core_type = #tpu.core_type<tc>, window_params = [{transform_indices = @transform_0, window_bounds = array<i64: 4, 32, 16>}, {transform_indices = @transform_1, window_bounds = array<i64: 2, 4, 16, 16>}, {pipeline_mode = #tpu.pipeline_mode<synchronous>, transform_indices = @transform_2, window_bounds = array<i64: 32, 16>}, {pipeline_mode = #tpu.pipeline_mode<synchronous>, transform_indices = @transform_3, window_bounds = array<i64: 16, 48>}, {pipeline_mode = #tpu.pipeline_mode<synchronous>, transform_indices = @transform_4, window_bounds = array<i64: 1, 48>}, {pipeline_mode = #tpu.pipeline_mode<synchronous>, transform_indices = @transform_5, window_bounds = array<i64: 2, 8, 16>}, {pipeline_mode = #tpu.pipeline_mode<synchronous>, transform_indices = @transform_6, window_bounds = array<i64: 16, 16>}, {pipeline_mode = #tpu.pipeline_mode<synchronous>, transform_indices = @transform_7, window_bounds = array<i64: 1, 16>}, {pipeline_mode = #tpu.pipeline_mode<synchronous>, transform_indices = @transform_8, window_bounds = array<i64: 1, 16>}, {pipeline_mode = #tpu.pipeline_mode<synchronous>, transform_indices = @transform_9, window_bounds = array<i64: 1, 16>}, {pipeline_mode = #tpu.pipeline_mode<synchronous>, transform_indices = @transform_10, window_bounds = array<i64: 16, 16>}, {pipeline_mode = #tpu.pipeline_mode<synchronous>, transform_indices = @transform_11, window_bounds = array<i64: 1, 16>}, {pipeline_mode = #tpu.pipeline_mode<synchronous>, transform_indices = @transform_12, window_bounds = array<i64: 16, 16>}, {pipeline_mode = #tpu.pipeline_mode<synchronous>, transform_indices = @transform_13, window_bounds = array<i64: 1, 16>}, {pipeline_mode = #tpu.pipeline_mode<synchronous>, transform_indices = @transform_14, window_bounds = array<i64: 1, 16>}, {pipeline_mode = #tpu.pipeline_mode<synchronous>, transform_indices = @transform_15, window_bounds = array<i64: 1, 16>}, {pipeline_mode = #tpu.pipeline_mode<synchronous>, transform_indices = @transform_16, window_bounds = array<i64: 1, 16>}, {pipeline_mode = #tpu.pipeline_mode<synchronous>, transform_indices = @transform_17, window_bounds = array<i64: 1, 16>}, {pipeline_mode = #tpu.pipeline_mode<synchronous>, transform_indices = @transform_18, window_bounds = array<i64: 16, 64>}, {pipeline_mode = #tpu.pipeline_mode<synchronous>, transform_indices = @transform_19, window_bounds = array<i64: 16, 64>}, {pipeline_mode = #tpu.pipeline_mode<synchronous>, transform_indices = @transform_20, window_bounds = array<i64: 1, 64>}, {pipeline_mode = #tpu.pipeline_mode<synchronous>, transform_indices = @transform_21, window_bounds = array<i64: 64, 16>}, {pipeline_mode = #tpu.pipeline_mode<synchronous>, transform_indices = @transform_22, window_bounds = array<i64: 1, 16>}, {transform_indices = @transform_23, window_bounds = array<i64: 4, 32, 16>}]} {
    %c0 = arith.constant 0 : index
    %c0_0 = arith.constant 0 : index
    %c0_1 = arith.constant 0 : index
    %0 = vector.load %arg1[%c0, %c0_0, %c0_1] : memref<4x32x16xf32, #tpu.memory_space<vmem>>, vector<4x32x16xf32>
    %c0_2 = arith.constant 0 : index
    %c0_3 = arith.constant 0 : index
    %1 = vector.load %arg3[%c0_2, %c0_3] : memref<32x16xf32, #tpu.memory_space<vmem>>, vector<32x16xf32>
    %2 = vector.shape_cast %1 : vector<32x16xf32> to vector<1x32x16xf32>
    %3 = vector.broadcast %2 : vector<1x32x16xf32> to vector<4x32x16xf32>
    %4 = arith.addf %0, %3 : vector<4x32x16xf32>
    %5 = vector.shape_cast %4 : vector<4x32x16xf32> to vector<128x16xf32>
    %6 = arith.truncf %5 : vector<128x16xf32> to vector<128x16xbf16>
    %c0_4 = arith.constant 0 : index
    %c0_5 = arith.constant 0 : index
    %7 = vector.load %arg4[%c0_4, %c0_5] : memref<16x48xbf16, #tpu.memory_space<vmem>>, vector<16x48xbf16>
    %cst = arith.constant dense<0.000000e+00> : vector<128x48xf32>
    %8 = tpu.matmul %6, %7, %cst {dimension_numbers = #tpu.dot_dimension_numbers<[1], [0], [0], [1], [0, 0, 1, 1], [], []>} : vector<128x16xbf16>, vector<16x48xbf16>, vector<128x48xf32> -> vector<128x48xf32>
    %c0_6 = arith.constant 0 : index
    %c0_7 = arith.constant 0 : index
    %9 = vector.load %arg5[%c0_6, %c0_7] : memref<1x48xf32, #tpu.memory_space<vmem>>, vector<1x48xf32>
    %10 = vector.broadcast %9 : vector<1x48xf32> to vector<128x48xf32>
    %11 = arith.addf %8, %10 : vector<128x48xf32>
    %12 = arith.truncf %11 : vector<128x48xf32> to vector<128x48xbf16>
    %13 = vector.shape_cast %12 : vector<128x48xbf16> to vector<4x32x48xbf16>
    %14 = vector.extract_strided_slice %12 {offsets = [0, 32], sizes = [128, 8], strides = [1, 1]} : vector<128x48xbf16> to vector<128x8xbf16>
    %c0_8 = arith.constant 0 : index
    %c0_9 = arith.constant 0 : index
    %c0_10 = arith.constant 0 : index
    %15 = vector.load %arg6[%c0_8, %c0_9, %c0_10] : memref<2x8x16xbf16, #tpu.memory_space<vmem>>, vector<1x8x16xbf16>
    %16 = vector.shape_cast %15 : vector<1x8x16xbf16> to vector<8x16xbf16>
    %cst_11 = arith.constant dense<0.000000e+00> : vector<128x16xf32>
    %17 = tpu.matmul %14, %16, %cst_11 {dimension_numbers = #tpu.dot_dimension_numbers<[1], [0], [0], [1], [0, 0, 1, 1], [], []>} : vector<128x8xbf16>, vector<8x16xbf16>, vector<128x16xf32> -> vector<128x16xf32>
    %18 = arith.truncf %17 : vector<128x16xf32> to vector<128x16xbf16>
    %19 = vector.shape_cast %18 : vector<128x16xbf16> to vector<4x32x16xbf16>
    %20 = vector.extract_strided_slice %12 {offsets = [0, 40], sizes = [128, 8], strides = [1, 1]} : vector<128x48xbf16> to vector<128x8xbf16>
    %c1 = arith.constant 1 : index
    %c0_12 = arith.constant 0 : index
    %c0_13 = arith.constant 0 : index
    %21 = vector.load %arg6[%c1, %c0_12, %c0_13] : memref<2x8x16xbf16, #tpu.memory_space<vmem>>, vector<1x8x16xbf16>
    %22 = vector.shape_cast %21 : vector<1x8x16xbf16> to vector<8x16xbf16>
    %cst_14 = arith.constant dense<0.000000e+00> : vector<128x16xf32>
    %23 = tpu.matmul %20, %22, %cst_14 {dimension_numbers = #tpu.dot_dimension_numbers<[1], [0], [0], [1], [0, 0, 1, 1], [], []>} : vector<128x8xbf16>, vector<8x16xbf16>, vector<128x16xf32> -> vector<128x16xf32>
    %24 = arith.truncf %23 : vector<128x16xf32> to vector<128x16xbf16>
    %25 = vector.shape_cast %24 : vector<128x16xbf16> to vector<4x32x16xbf16>
    %26 = vector.extract_strided_slice %19 {offsets = [0, 0, 0], sizes = [4, 16, 16], strides = [1, 1, 1]} : vector<4x32x16xbf16> to vector<4x16x16xbf16>
    %27 = vector.extract_strided_slice %25 {offsets = [0, 0, 0], sizes = [4, 16, 16], strides = [1, 1, 1]} : vector<4x32x16xbf16> to vector<4x16x16xbf16>
    %28 = tpu.concatenate %26, %27 in 1 : vector<4x16x16xbf16>, vector<4x16x16xbf16> -> vector<4x32x16xbf16>
    %29 = vector.extract_strided_slice %19 {offsets = [0, 16, 0], sizes = [4, 16, 16], strides = [1, 1, 1]} : vector<4x32x16xbf16> to vector<4x16x16xbf16>
    %30 = vector.extract_strided_slice %25 {offsets = [0, 16, 0], sizes = [4, 16, 16], strides = [1, 1, 1]} : vector<4x32x16xbf16> to vector<4x16x16xbf16>
    %31 = tpu.concatenate %29, %30 in 1 : vector<4x16x16xbf16>, vector<4x16x16xbf16> -> vector<4x32x16xbf16>
    %32 = vector.extract_strided_slice %13 {offsets = [0, 0, 16], sizes = [4, 16, 8], strides = [1, 1, 1]} : vector<4x32x48xbf16> to vector<4x16x8xbf16>
    %33 = vector.extract_strided_slice %13 {offsets = [0, 0, 24], sizes = [4, 16, 8], strides = [1, 1, 1]} : vector<4x32x48xbf16> to vector<4x16x8xbf16>
    %34 = vector.extract_strided_slice %13 {offsets = [0, 16, 16], sizes = [4, 16, 8], strides = [1, 1, 1]} : vector<4x32x48xbf16> to vector<4x16x8xbf16>
    %35 = vector.extract_strided_slice %13 {offsets = [0, 16, 24], sizes = [4, 16, 8], strides = [1, 1, 1]} : vector<4x32x48xbf16> to vector<4x16x8xbf16>
    %36 = vector.extract_strided_slice %13 {offsets = [0, 0, 0], sizes = [4, 16, 8], strides = [1, 1, 1]} : vector<4x32x48xbf16> to vector<4x16x8xbf16>
    %37 = vector.extract_strided_slice %13 {offsets = [0, 0, 8], sizes = [4, 16, 8], strides = [1, 1, 1]} : vector<4x32x48xbf16> to vector<4x16x8xbf16>
    %c0_15 = arith.constant 0 : index
    %c0_16 = arith.constant 0 : index
    %c0_17 = arith.constant 0 : index
    %c0_18 = arith.constant 0 : index
    %38 = vector.load %arg2[%c0_15, %c0_16, %c0_17, %c0_18] : memref<2x4x16x16xbf16, #tpu.memory_space<vmem>>, vector<1x4x16x16xbf16>
    %39 = vector.shape_cast %38 : vector<1x4x16x16xbf16> to vector<4x16x16xbf16>
    %40 = vector.shape_cast %39 : vector<4x16x16xbf16> to vector<64x16xbf16>
    %c0_19 = arith.constant 0 : index
    %c0_20 = arith.constant 0 : index
    %41 = vector.load %arg7[%c0_19, %c0_20] : memref<16x16xbf16, #tpu.memory_space<vmem>>, vector<16x16xbf16>
    %cst_21 = arith.constant dense<0.000000e+00> : vector<64x16xf32>
    %42 = tpu.matmul %40, %41, %cst_21 {dimension_numbers = #tpu.dot_dimension_numbers<[1], [0], [0], [1], [0, 0, 1, 1], [], []>} : vector<64x16xbf16>, vector<16x16xbf16>, vector<64x16xf32> -> vector<64x16xf32>
    %c0_22 = arith.constant 0 : index
    %c0_23 = arith.constant 0 : index
    %43 = vector.load %arg8[%c0_22, %c0_23] : memref<1x16xf32, #tpu.memory_space<vmem>>, vector<1x16xf32>
    %44 = vector.broadcast %43 : vector<1x16xf32> to vector<64x16xf32>
    %45 = arith.addf %42, %44 : vector<64x16xf32>
    %cst_24 = arith.constant 0.000000e+00 : f32
    %46 = vector.broadcast %cst_24 : f32 to vector<64x16xf32>
    "tpu.trace_start"() <{level = 10 : i32, message = "gqd,gkd->gqk"}> : () -> ()
    %cst_25 = arith.constant dense<0.000000e+00> : vector<4x16x16xf32>
    %47 = tpu.matmul %36, %32, %cst_25 {dimension_numbers = #tpu.dot_dimension_numbers<[2], [2], [1], [1], [0, 0, 0, 1, 1, 1], [0], [0]>} : vector<4x16x8xbf16>, vector<4x16x8xbf16>, vector<4x16x16xf32> -> vector<4x16x16xf32>
    "tpu.trace_stop"() : () -> ()
    %cst_26 = arith.constant dense<0xFF800000> : vector<4x16xf32>
    %48 = vector.multi_reduction <maximumf>, %47, %cst_26 [2] : vector<4x16x16xf32> to vector<4x16xf32>
    %49 = vector.shape_cast %48 : vector<4x16xf32> to vector<4x16x1xf32>
    %50 = vector.broadcast %49 : vector<4x16x1xf32> to vector<4x16x16xf32>
    %51 = arith.subf %47, %50 : vector<4x16x16xf32>
    %52 = math.exp %51 : vector<4x16x16xf32>
    %cst_27 = arith.constant dense<0.000000e+00> : vector<4x16xf32>
    %53 = vector.multi_reduction <add>, %52, %cst_27 [2] : vector<4x16x16xf32> to vector<4x16xf32>
    %54 = vector.shape_cast %53 : vector<4x16xf32> to vector<4x16x1xf32>
    %55 = tpu.reciprocal %54 {approx = true} : vector<4x16x1xf32> -> vector<4x16x1xf32>
    %56 = vector.broadcast %55 : vector<4x16x1xf32> to vector<4x16x16xf32>
    %57 = arith.mulf %52, %56 : vector<4x16x16xf32>
    %58 = arith.truncf %57 : vector<4x16x16xf32> to vector<4x16x16xbf16>
    "tpu.trace_start"() <{level = 10 : i32, message = "gqd,gkd->gqk"}> : () -> ()
    %cst_28 = arith.constant dense<0.000000e+00> : vector<4x16x16xf32>
    %59 = tpu.matmul %37, %33, %cst_28 {dimension_numbers = #tpu.dot_dimension_numbers<[2], [2], [1], [1], [0, 0, 0, 1, 1, 1], [0], [0]>} : vector<4x16x8xbf16>, vector<4x16x8xbf16>, vector<4x16x16xf32> -> vector<4x16x16xf32>
    "tpu.trace_stop"() : () -> ()
    %cst_29 = arith.constant dense<0xFF800000> : vector<4x16xf32>
    %60 = vector.multi_reduction <maximumf>, %59, %cst_29 [2] : vector<4x16x16xf32> to vector<4x16xf32>
    %61 = vector.shape_cast %60 : vector<4x16xf32> to vector<4x16x1xf32>
    %62 = vector.broadcast %61 : vector<4x16x1xf32> to vector<4x16x16xf32>
    %63 = arith.subf %59, %62 : vector<4x16x16xf32>
    %64 = math.exp %63 : vector<4x16x16xf32>
    %cst_30 = arith.constant dense<0.000000e+00> : vector<4x16xf32>
    %65 = vector.multi_reduction <add>, %64, %cst_30 [2] : vector<4x16x16xf32> to vector<4x16xf32>
    %66 = vector.shape_cast %65 : vector<4x16xf32> to vector<4x16x1xf32>
    %67 = tpu.reciprocal %66 {approx = true} : vector<4x16x1xf32> -> vector<4x16x1xf32>
    %68 = vector.broadcast %67 : vector<4x16x1xf32> to vector<4x16x16xf32>
    %69 = arith.mulf %64, %68 : vector<4x16x16xf32>
    %70 = arith.truncf %69 : vector<4x16x16xf32> to vector<4x16x16xbf16>
    %71 = tpu.concatenate %58, %70 in 2 : vector<4x16x16xbf16>, vector<4x16x16xbf16> -> vector<4x16x32xbf16>
    "tpu.trace_start"() <{level = 10 : i32, message = "gqk,gkc->gqc"}> : () -> ()
    %cst_31 = arith.constant dense<0.000000e+00> : vector<4x16x16xf32>
    %72 = tpu.matmul %71, %28, %cst_31 {dimension_numbers = #tpu.dot_dimension_numbers<[2], [1], [1], [2], [0, 0, 0, 1, 1, 2], [0], [0]>} : vector<4x16x32xbf16>, vector<4x32x16xbf16>, vector<4x16x16xf32> -> vector<4x16x16xf32>
    "tpu.trace_stop"() : () -> ()
    %73 = vector.shape_cast %72 : vector<4x16x16xf32> to vector<64x16xf32>
    %74 = arith.addf %45, %73 : vector<64x16xf32>
    %c0_32 = arith.constant 0 : index
    %c0_33 = arith.constant 0 : index
    %75 = vector.load %arg9[%c0_32, %c0_33] : memref<1x16xf32, #tpu.memory_space<vmem>>, vector<1x16xf32>
    %c0_34 = arith.constant 0 : index
    %c0_35 = arith.constant 0 : index
    %76 = vector.load %arg10[%c0_34, %c0_35] : memref<1x16xf32, #tpu.memory_space<vmem>>, vector<1x16xf32>
    %cst_36 = arith.constant dense<0.000000e+00> : vector<64xf32>
    %77 = vector.multi_reduction <add>, %74, %cst_36 [1] : vector<64x16xf32> to vector<64xf32>
    %78 = vector.shape_cast %77 : vector<64xf32> to vector<64x1xf32>
    %cst_37 = arith.constant 1.600000e+01 : f32
    %79 = vector.broadcast %cst_37 : f32 to vector<64x1xf32>
    %80 = arith.divf %78, %79 : vector<64x1xf32>
    %81 = vector.broadcast %80 : vector<64x1xf32> to vector<64x16xf32>
    %82 = arith.subf %74, %81 : vector<64x16xf32>
    %83 = arith.mulf %82, %82 : vector<64x16xf32>
    %cst_38 = arith.constant dense<0.000000e+00> : vector<64xf32>
    %84 = vector.multi_reduction <add>, %83, %cst_38 [1] : vector<64x16xf32> to vector<64xf32>
    %85 = vector.shape_cast %84 : vector<64xf32> to vector<64x1xf32>
    %cst_39 = arith.constant 1.600000e+01 : f32
    %86 = vector.broadcast %cst_39 : f32 to vector<64x1xf32>
    %87 = arith.divf %85, %86 : vector<64x1xf32>
    %88 = vector.broadcast %80 : vector<64x1xf32> to vector<64x16xf32>
    %89 = arith.subf %74, %88 : vector<64x16xf32>
    %cst_40 = arith.constant 9.99999974E-6 : f32
    %90 = vector.broadcast %cst_40 : f32 to vector<64x1xf32>
    %91 = arith.addf %87, %90 : vector<64x1xf32>
    %92 = math.rsqrt %91 : vector<64x1xf32>
    %93 = vector.broadcast %92 : vector<64x1xf32> to vector<64x16xf32>
    %94 = arith.mulf %89, %93 : vector<64x16xf32>
    %95 = vector.broadcast %75 : vector<1x16xf32> to vector<64x16xf32>
    %96 = arith.mulf %94, %95 : vector<64x16xf32>
    %97 = vector.broadcast %76 : vector<1x16xf32> to vector<64x16xf32>
    %98 = arith.addf %96, %97 : vector<64x16xf32>
    %99 = arith.truncf %98 : vector<64x16xf32> to vector<64x16xbf16>
    %c0_41 = arith.constant 0 : index
    %c0_42 = arith.constant 0 : index
    %100 = vector.load %arg11[%c0_41, %c0_42] : memref<16x16xbf16, #tpu.memory_space<vmem>>, vector<16x16xbf16>
    %cst_43 = arith.constant dense<0.000000e+00> : vector<64x16xf32>
    %101 = tpu.matmul %99, %100, %cst_43 {dimension_numbers = #tpu.dot_dimension_numbers<[1], [0], [0], [1], [0, 0, 1, 1], [], []>} : vector<64x16xbf16>, vector<16x16xbf16>, vector<64x16xf32> -> vector<64x16xf32>
    %c0_44 = arith.constant 0 : index
    %c0_45 = arith.constant 0 : index
    %102 = vector.load %arg12[%c0_44, %c0_45] : memref<1x16xf32, #tpu.memory_space<vmem>>, vector<1x16xf32>
    %103 = vector.broadcast %102 : vector<1x16xf32> to vector<64x16xf32>
    %104 = arith.addf %101, %103 : vector<64x16xf32>
    %cst_46 = arith.constant 5.000000e-01 : f32
    %105 = vector.broadcast %cst_46 : f32 to vector<64x16xf32>
    %106 = arith.mulf %105, %104 : vector<64x16xf32>
    %cst_47 = arith.constant 4.471500e-02 : f32
    %107 = vector.broadcast %cst_47 : f32 to vector<64x16xf32>
    %108 = arith.mulf %107, %104 : vector<64x16xf32>
    %109 = arith.mulf %108, %104 : vector<64x16xf32>
    %110 = arith.mulf %109, %104 : vector<64x16xf32>
    %111 = arith.addf %104, %110 : vector<64x16xf32>
    %cst_48 = arith.constant 0.797884583 : f32
    %112 = vector.broadcast %cst_48 : f32 to vector<64x16xf32>
    %113 = arith.mulf %112, %111 : vector<64x16xf32>
    %114 = math.tanh %113 : vector<64x16xf32>
    %cst_49 = arith.constant 1.000000e+00 : f32
    %115 = vector.broadcast %cst_49 : f32 to vector<64x16xf32>
    %116 = arith.addf %115, %114 : vector<64x16xf32>
    %117 = arith.mulf %106, %116 : vector<64x16xf32>
    %118 = arith.truncf %117 : vector<64x16xf32> to vector<64x16xbf16>
    %c0_50 = arith.constant 0 : index
    %c0_51 = arith.constant 0 : index
    %119 = vector.load %arg13[%c0_50, %c0_51] : memref<16x16xbf16, #tpu.memory_space<vmem>>, vector<16x16xbf16>
    %cst_52 = arith.constant dense<0.000000e+00> : vector<64x16xf32>
    %120 = tpu.matmul %118, %119, %cst_52 {dimension_numbers = #tpu.dot_dimension_numbers<[1], [0], [0], [1], [0, 0, 1, 1], [], []>} : vector<64x16xbf16>, vector<16x16xbf16>, vector<64x16xf32> -> vector<64x16xf32>
    %121 = arith.addf %46, %120 : vector<64x16xf32>
    "tpu.trace_start"() <{level = 10 : i32, message = "gqd,gkd->gqk"}> : () -> ()
    %cst_53 = arith.constant dense<0.000000e+00> : vector<4x16x16xf32>
    %122 = tpu.matmul %36, %34, %cst_53 {dimension_numbers = #tpu.dot_dimension_numbers<[2], [2], [1], [1], [0, 0, 0, 1, 1, 1], [0], [0]>} : vector<4x16x8xbf16>, vector<4x16x8xbf16>, vector<4x16x16xf32> -> vector<4x16x16xf32>
    "tpu.trace_stop"() : () -> ()
    %cst_54 = arith.constant dense<0xFF800000> : vector<4x16xf32>
    %123 = vector.multi_reduction <maximumf>, %122, %cst_54 [2] : vector<4x16x16xf32> to vector<4x16xf32>
    %124 = vector.shape_cast %123 : vector<4x16xf32> to vector<4x16x1xf32>
    %125 = vector.broadcast %124 : vector<4x16x1xf32> to vector<4x16x16xf32>
    %126 = arith.subf %122, %125 : vector<4x16x16xf32>
    %127 = math.exp %126 : vector<4x16x16xf32>
    %cst_55 = arith.constant dense<0.000000e+00> : vector<4x16xf32>
    %128 = vector.multi_reduction <add>, %127, %cst_55 [2] : vector<4x16x16xf32> to vector<4x16xf32>
    %129 = vector.shape_cast %128 : vector<4x16xf32> to vector<4x16x1xf32>
    %130 = tpu.reciprocal %129 {approx = true} : vector<4x16x1xf32> -> vector<4x16x1xf32>
    %131 = vector.broadcast %130 : vector<4x16x1xf32> to vector<4x16x16xf32>
    %132 = arith.mulf %127, %131 : vector<4x16x16xf32>
    %133 = arith.truncf %132 : vector<4x16x16xf32> to vector<4x16x16xbf16>
    "tpu.trace_start"() <{level = 10 : i32, message = "gqd,gkd->gqk"}> : () -> ()
    %cst_56 = arith.constant dense<0.000000e+00> : vector<4x16x16xf32>
    %134 = tpu.matmul %37, %35, %cst_56 {dimension_numbers = #tpu.dot_dimension_numbers<[2], [2], [1], [1], [0, 0, 0, 1, 1, 1], [0], [0]>} : vector<4x16x8xbf16>, vector<4x16x8xbf16>, vector<4x16x16xf32> -> vector<4x16x16xf32>
    "tpu.trace_stop"() : () -> ()
    %cst_57 = arith.constant dense<0xFF800000> : vector<4x16xf32>
    %135 = vector.multi_reduction <maximumf>, %134, %cst_57 [2] : vector<4x16x16xf32> to vector<4x16xf32>
    %136 = vector.shape_cast %135 : vector<4x16xf32> to vector<4x16x1xf32>
    %137 = vector.broadcast %136 : vector<4x16x1xf32> to vector<4x16x16xf32>
    %138 = arith.subf %134, %137 : vector<4x16x16xf32>
    %139 = math.exp %138 : vector<4x16x16xf32>
    %cst_58 = arith.constant dense<0.000000e+00> : vector<4x16xf32>
    %140 = vector.multi_reduction <add>, %139, %cst_58 [2] : vector<4x16x16xf32> to vector<4x16xf32>
    %141 = vector.shape_cast %140 : vector<4x16xf32> to vector<4x16x1xf32>
    %142 = tpu.reciprocal %141 {approx = true} : vector<4x16x1xf32> -> vector<4x16x1xf32>
    %143 = vector.broadcast %142 : vector<4x16x1xf32> to vector<4x16x16xf32>
    %144 = arith.mulf %139, %143 : vector<4x16x16xf32>
    %145 = arith.truncf %144 : vector<4x16x16xf32> to vector<4x16x16xbf16>
    %146 = tpu.concatenate %133, %145 in 2 : vector<4x16x16xbf16>, vector<4x16x16xbf16> -> vector<4x16x32xbf16>
    "tpu.trace_start"() <{level = 10 : i32, message = "gqk,gkc->gqc"}> : () -> ()
    %cst_59 = arith.constant dense<0.000000e+00> : vector<4x16x16xf32>
    %147 = tpu.matmul %146, %31, %cst_59 {dimension_numbers = #tpu.dot_dimension_numbers<[2], [1], [1], [2], [0, 0, 0, 1, 1, 2], [0], [0]>} : vector<4x16x32xbf16>, vector<4x32x16xbf16>, vector<4x16x16xf32> -> vector<4x16x16xf32>
    "tpu.trace_stop"() : () -> ()
    %148 = vector.shape_cast %147 : vector<4x16x16xf32> to vector<64x16xf32>
    %149 = arith.addf %45, %148 : vector<64x16xf32>
    %c0_60 = arith.constant 0 : index
    %c0_61 = arith.constant 0 : index
    %150 = vector.load %arg9[%c0_60, %c0_61] : memref<1x16xf32, #tpu.memory_space<vmem>>, vector<1x16xf32>
    %c0_62 = arith.constant 0 : index
    %c0_63 = arith.constant 0 : index
    %151 = vector.load %arg10[%c0_62, %c0_63] : memref<1x16xf32, #tpu.memory_space<vmem>>, vector<1x16xf32>
    %cst_64 = arith.constant dense<0.000000e+00> : vector<64xf32>
    %152 = vector.multi_reduction <add>, %149, %cst_64 [1] : vector<64x16xf32> to vector<64xf32>
    %153 = vector.shape_cast %152 : vector<64xf32> to vector<64x1xf32>
    %cst_65 = arith.constant 1.600000e+01 : f32
    %154 = vector.broadcast %cst_65 : f32 to vector<64x1xf32>
    %155 = arith.divf %153, %154 : vector<64x1xf32>
    %156 = vector.broadcast %155 : vector<64x1xf32> to vector<64x16xf32>
    %157 = arith.subf %149, %156 : vector<64x16xf32>
    %158 = arith.mulf %157, %157 : vector<64x16xf32>
    %cst_66 = arith.constant dense<0.000000e+00> : vector<64xf32>
    %159 = vector.multi_reduction <add>, %158, %cst_66 [1] : vector<64x16xf32> to vector<64xf32>
    %160 = vector.shape_cast %159 : vector<64xf32> to vector<64x1xf32>
    %cst_67 = arith.constant 1.600000e+01 : f32
    %161 = vector.broadcast %cst_67 : f32 to vector<64x1xf32>
    %162 = arith.divf %160, %161 : vector<64x1xf32>
    %163 = vector.broadcast %155 : vector<64x1xf32> to vector<64x16xf32>
    %164 = arith.subf %149, %163 : vector<64x16xf32>
    %cst_68 = arith.constant 9.99999974E-6 : f32
    %165 = vector.broadcast %cst_68 : f32 to vector<64x1xf32>
    %166 = arith.addf %162, %165 : vector<64x1xf32>
    %167 = math.rsqrt %166 : vector<64x1xf32>
    %168 = vector.broadcast %167 : vector<64x1xf32> to vector<64x16xf32>
    %169 = arith.mulf %164, %168 : vector<64x16xf32>
    %170 = vector.broadcast %150 : vector<1x16xf32> to vector<64x16xf32>
    %171 = arith.mulf %169, %170 : vector<64x16xf32>
    %172 = vector.broadcast %151 : vector<1x16xf32> to vector<64x16xf32>
    %173 = arith.addf %171, %172 : vector<64x16xf32>
    %174 = arith.truncf %173 : vector<64x16xf32> to vector<64x16xbf16>
    %c0_69 = arith.constant 0 : index
    %c0_70 = arith.constant 0 : index
    %175 = vector.load %arg11[%c0_69, %c0_70] : memref<16x16xbf16, #tpu.memory_space<vmem>>, vector<16x16xbf16>
    %cst_71 = arith.constant dense<0.000000e+00> : vector<64x16xf32>
    %176 = tpu.matmul %174, %175, %cst_71 {dimension_numbers = #tpu.dot_dimension_numbers<[1], [0], [0], [1], [0, 0, 1, 1], [], []>} : vector<64x16xbf16>, vector<16x16xbf16>, vector<64x16xf32> -> vector<64x16xf32>
    %c0_72 = arith.constant 0 : index
    %c0_73 = arith.constant 0 : index
    %177 = vector.load %arg12[%c0_72, %c0_73] : memref<1x16xf32, #tpu.memory_space<vmem>>, vector<1x16xf32>
    %178 = vector.broadcast %177 : vector<1x16xf32> to vector<64x16xf32>
    %179 = arith.addf %176, %178 : vector<64x16xf32>
    %cst_74 = arith.constant 5.000000e-01 : f32
    %180 = vector.broadcast %cst_74 : f32 to vector<64x16xf32>
    %181 = arith.mulf %180, %179 : vector<64x16xf32>
    %cst_75 = arith.constant 4.471500e-02 : f32
    %182 = vector.broadcast %cst_75 : f32 to vector<64x16xf32>
    %183 = arith.mulf %182, %179 : vector<64x16xf32>
    %184 = arith.mulf %183, %179 : vector<64x16xf32>
    %185 = arith.mulf %184, %179 : vector<64x16xf32>
    %186 = arith.addf %179, %185 : vector<64x16xf32>
    %cst_76 = arith.constant 0.797884583 : f32
    %187 = vector.broadcast %cst_76 : f32 to vector<64x16xf32>
    %188 = arith.mulf %187, %186 : vector<64x16xf32>
    %189 = math.tanh %188 : vector<64x16xf32>
    %cst_77 = arith.constant 1.000000e+00 : f32
    %190 = vector.broadcast %cst_77 : f32 to vector<64x16xf32>
    %191 = arith.addf %190, %189 : vector<64x16xf32>
    %192 = arith.mulf %181, %191 : vector<64x16xf32>
    %193 = arith.truncf %192 : vector<64x16xf32> to vector<64x16xbf16>
    %c0_78 = arith.constant 0 : index
    %c0_79 = arith.constant 0 : index
    %194 = vector.load %arg13[%c0_78, %c0_79] : memref<16x16xbf16, #tpu.memory_space<vmem>>, vector<16x16xbf16>
    %cst_80 = arith.constant dense<0.000000e+00> : vector<64x16xf32>
    %195 = tpu.matmul %193, %194, %cst_80 {dimension_numbers = #tpu.dot_dimension_numbers<[1], [0], [0], [1], [0, 0, 1, 1], [], []>} : vector<64x16xbf16>, vector<16x16xbf16>, vector<64x16xf32> -> vector<64x16xf32>
    %196 = arith.addf %121, %195 : vector<64x16xf32>
    %197 = vector.extract_strided_slice %0 {offsets = [0, 0, 0], sizes = [4, 16, 16], strides = [1, 1, 1]} : vector<4x32x16xf32> to vector<4x16x16xf32>
    %198 = vector.shape_cast %197 : vector<4x16x16xf32> to vector<64x16xf32>
    %cst_81 = arith.constant 5.000000e-01 : f32
    %199 = vector.broadcast %cst_81 : f32 to vector<64x16xf32>
    %200 = arith.mulf %196, %199 : vector<64x16xf32>
    %201 = arith.addf %198, %200 : vector<64x16xf32>
    %c0_82 = arith.constant 0 : index
    %c0_83 = arith.constant 0 : index
    %202 = vector.load %arg14[%c0_82, %c0_83] : memref<1x16xf32, #tpu.memory_space<vmem>>, vector<1x16xf32>
    %203 = vector.broadcast %202 : vector<1x16xf32> to vector<64x16xf32>
    %204 = arith.addf %201, %203 : vector<64x16xf32>
    %cst_84 = arith.constant dense<0.000000e+00> : vector<64xf32>
    %205 = vector.multi_reduction <add>, %198, %cst_84 [1] : vector<64x16xf32> to vector<64xf32>
    %206 = vector.shape_cast %205 : vector<64xf32> to vector<64x1xf32>
    %cst_85 = arith.constant dense<0.000000e+00> : vector<64xf32>
    %207 = vector.multi_reduction <add>, %204, %cst_85 [1] : vector<64x16xf32> to vector<64xf32>
    %208 = vector.shape_cast %207 : vector<64xf32> to vector<64x1xf32>
    %209 = arith.addf %206, %208 : vector<64x1xf32>
    %cst_86 = arith.constant 3.200000e+01 : f32
    %210 = vector.broadcast %cst_86 : f32 to vector<64x1xf32>
    %211 = arith.divf %209, %210 : vector<64x1xf32>
    %212 = vector.broadcast %211 : vector<64x1xf32> to vector<64x16xf32>
    %213 = arith.subf %198, %212 : vector<64x16xf32>
    %214 = arith.mulf %213, %213 : vector<64x16xf32>
    %cst_87 = arith.constant dense<0.000000e+00> : vector<64xf32>
    %215 = vector.multi_reduction <add>, %214, %cst_87 [1] : vector<64x16xf32> to vector<64xf32>
    %216 = vector.shape_cast %215 : vector<64xf32> to vector<64x1xf32>
    %217 = vector.broadcast %211 : vector<64x1xf32> to vector<64x16xf32>
    %218 = arith.subf %204, %217 : vector<64x16xf32>
    %219 = arith.mulf %218, %218 : vector<64x16xf32>
    %cst_88 = arith.constant dense<0.000000e+00> : vector<64xf32>
    %220 = vector.multi_reduction <add>, %219, %cst_88 [1] : vector<64x16xf32> to vector<64xf32>
    %221 = vector.shape_cast %220 : vector<64xf32> to vector<64x1xf32>
    %222 = arith.addf %216, %221 : vector<64x1xf32>
    %cst_89 = arith.constant 3.200000e+01 : f32
    %223 = vector.broadcast %cst_89 : f32 to vector<64x1xf32>
    %224 = arith.divf %222, %223 : vector<64x1xf32>
    %cst_90 = arith.constant 9.99999974E-6 : f32
    %225 = vector.broadcast %cst_90 : f32 to vector<64x1xf32>
    %226 = arith.addf %224, %225 : vector<64x1xf32>
    %227 = math.rsqrt %226 : vector<64x1xf32>
    %228 = vector.broadcast %211 : vector<64x1xf32> to vector<64x16xf32>
    %229 = arith.subf %198, %228 : vector<64x16xf32>
    %230 = vector.broadcast %227 : vector<64x1xf32> to vector<64x16xf32>
    %231 = arith.mulf %229, %230 : vector<64x16xf32>
    %c0_91 = arith.constant 0 : index
    %c0_92 = arith.constant 0 : index
    %232 = vector.load %arg15[%c0_91, %c0_92] : memref<1x16xf32, #tpu.memory_space<vmem>>, vector<1x16xf32>
    %233 = vector.broadcast %232 : vector<1x16xf32> to vector<64x16xf32>
    %234 = arith.mulf %231, %233 : vector<64x16xf32>
    %c0_93 = arith.constant 0 : index
    %c0_94 = arith.constant 0 : index
    %235 = vector.load %arg16[%c0_93, %c0_94] : memref<1x16xf32, #tpu.memory_space<vmem>>, vector<1x16xf32>
    %236 = vector.broadcast %235 : vector<1x16xf32> to vector<64x16xf32>
    %237 = arith.addf %234, %236 : vector<64x16xf32>
    %238 = vector.broadcast %211 : vector<64x1xf32> to vector<64x16xf32>
    %239 = arith.subf %204, %238 : vector<64x16xf32>
    %240 = vector.broadcast %227 : vector<64x1xf32> to vector<64x16xf32>
    %241 = arith.mulf %239, %240 : vector<64x16xf32>
    %c0_95 = arith.constant 0 : index
    %c0_96 = arith.constant 0 : index
    %242 = vector.load %arg17[%c0_95, %c0_96] : memref<1x16xf32, #tpu.memory_space<vmem>>, vector<1x16xf32>
    %243 = vector.broadcast %242 : vector<1x16xf32> to vector<64x16xf32>
    %244 = arith.mulf %241, %243 : vector<64x16xf32>
    %c0_97 = arith.constant 0 : index
    %c0_98 = arith.constant 0 : index
    %245 = vector.load %arg18[%c0_97, %c0_98] : memref<1x16xf32, #tpu.memory_space<vmem>>, vector<1x16xf32>
    %246 = vector.broadcast %245 : vector<1x16xf32> to vector<64x16xf32>
    %247 = arith.addf %244, %246 : vector<64x16xf32>
    %248 = arith.truncf %237 : vector<64x16xf32> to vector<64x16xbf16>
    %c0_99 = arith.constant 0 : index
    %c0_100 = arith.constant 0 : index
    %249 = vector.load %arg19[%c0_99, %c0_100] : memref<16x64xbf16, #tpu.memory_space<vmem>>, vector<16x64xbf16>
    %cst_101 = arith.constant dense<0.000000e+00> : vector<64x64xf32>
    %250 = tpu.matmul %248, %249, %cst_101 {dimension_numbers = #tpu.dot_dimension_numbers<[1], [0], [0], [1], [0, 0, 1, 1], [], []>} : vector<64x16xbf16>, vector<16x64xbf16>, vector<64x64xf32> -> vector<64x64xf32>
    %251 = arith.truncf %247 : vector<64x16xf32> to vector<64x16xbf16>
    %c0_102 = arith.constant 0 : index
    %c0_103 = arith.constant 0 : index
    %252 = vector.load %arg20[%c0_102, %c0_103] : memref<16x64xbf16, #tpu.memory_space<vmem>>, vector<16x64xbf16>
    %cst_104 = arith.constant dense<0.000000e+00> : vector<64x64xf32>
    %253 = tpu.matmul %251, %252, %cst_104 {dimension_numbers = #tpu.dot_dimension_numbers<[1], [0], [0], [1], [0, 0, 1, 1], [], []>} : vector<64x16xbf16>, vector<16x64xbf16>, vector<64x64xf32> -> vector<64x64xf32>
    %254 = arith.addf %250, %253 : vector<64x64xf32>
    %c0_105 = arith.constant 0 : index
    %c0_106 = arith.constant 0 : index
    %255 = vector.load %arg21[%c0_105, %c0_106] : memref<1x64xf32, #tpu.memory_space<vmem>>, vector<1x64xf32>
    %256 = vector.broadcast %255 : vector<1x64xf32> to vector<64x64xf32>
    %257 = arith.addf %254, %256 : vector<64x64xf32>
    %cst_107 = arith.constant 5.000000e-01 : f32
    %258 = vector.broadcast %cst_107 : f32 to vector<64x64xf32>
    %259 = arith.mulf %258, %257 : vector<64x64xf32>
    %cst_108 = arith.constant 4.471500e-02 : f32
    %260 = vector.broadcast %cst_108 : f32 to vector<64x64xf32>
    %261 = arith.mulf %260, %257 : vector<64x64xf32>
    %262 = arith.mulf %261, %257 : vector<64x64xf32>
    %263 = arith.mulf %262, %257 : vector<64x64xf32>
    %264 = arith.addf %257, %263 : vector<64x64xf32>
    %cst_109 = arith.constant 0.797884583 : f32
    %265 = vector.broadcast %cst_109 : f32 to vector<64x64xf32>
    %266 = arith.mulf %265, %264 : vector<64x64xf32>
    %267 = math.tanh %266 : vector<64x64xf32>
    %cst_110 = arith.constant 1.000000e+00 : f32
    %268 = vector.broadcast %cst_110 : f32 to vector<64x64xf32>
    %269 = arith.addf %268, %267 : vector<64x64xf32>
    %270 = arith.mulf %259, %269 : vector<64x64xf32>
    %271 = arith.truncf %270 : vector<64x64xf32> to vector<64x64xbf16>
    %c0_111 = arith.constant 0 : index
    %c0_112 = arith.constant 0 : index
    %272 = vector.load %arg22[%c0_111, %c0_112] : memref<64x16xbf16, #tpu.memory_space<vmem>>, vector<64x16xbf16>
    %cst_113 = arith.constant dense<0.000000e+00> : vector<64x16xf32>
    %273 = tpu.matmul %271, %272, %cst_113 {dimension_numbers = #tpu.dot_dimension_numbers<[1], [0], [0], [1], [0, 0, 1, 1], [], []>} : vector<64x64xbf16>, vector<64x16xbf16>, vector<64x16xf32> -> vector<64x16xf32>
    %c0_114 = arith.constant 0 : index
    %c0_115 = arith.constant 0 : index
    %274 = vector.load %arg23[%c0_114, %c0_115] : memref<1x16xf32, #tpu.memory_space<vmem>>, vector<1x16xf32>
    %275 = vector.broadcast %274 : vector<1x16xf32> to vector<64x16xf32>
    %276 = arith.addf %273, %275 : vector<64x16xf32>
    %277 = vector.shape_cast %276 : vector<64x16xf32> to vector<4x16x16xf32>
    %c0_116 = arith.constant 0 : index
    %c0_117 = arith.constant 0 : index
    %c0_118 = arith.constant 0 : index
    %278 = vector.load %arg24[%c0_116, %c0_117, %c0_118] : memref<4x32x16xf32, #tpu.memory_space<vmem>>, vector<4x16x16xf32>
    tpu.vector_store %arg24[%c0_116, %c0_117, %c0_118], %277 {strides = array<i32>} : memref<4x32x16xf32, #tpu.memory_space<vmem>>, vector<4x16x16xf32>,
    %279 = vector.extract_strided_slice %13 {offsets = [0, 16, 0], sizes = [4, 16, 8], strides = [1, 1, 1]} : vector<4x32x48xbf16> to vector<4x16x8xbf16>
    %280 = vector.extract_strided_slice %13 {offsets = [0, 16, 8], sizes = [4, 16, 8], strides = [1, 1, 1]} : vector<4x32x48xbf16> to vector<4x16x8xbf16>
    %c1_119 = arith.constant 1 : index
    %c0_120 = arith.constant 0 : index
    %c0_121 = arith.constant 0 : index
    %c0_122 = arith.constant 0 : index
    %281 = vector.load %arg2[%c1_119, %c0_120, %c0_121, %c0_122] : memref<2x4x16x16xbf16, #tpu.memory_space<vmem>>, vector<1x4x16x16xbf16>
    %282 = vector.shape_cast %281 : vector<1x4x16x16xbf16> to vector<4x16x16xbf16>
    %283 = vector.shape_cast %282 : vector<4x16x16xbf16> to vector<64x16xbf16>
    %c0_123 = arith.constant 0 : index
    %c0_124 = arith.constant 0 : index
    %284 = vector.load %arg7[%c0_123, %c0_124] : memref<16x16xbf16, #tpu.memory_space<vmem>>, vector<16x16xbf16>
    %cst_125 = arith.constant dense<0.000000e+00> : vector<64x16xf32>
    %285 = tpu.matmul %283, %284, %cst_125 {dimension_numbers = #tpu.dot_dimension_numbers<[1], [0], [0], [1], [0, 0, 1, 1], [], []>} : vector<64x16xbf16>, vector<16x16xbf16>, vector<64x16xf32> -> vector<64x16xf32>
    %c0_126 = arith.constant 0 : index
    %c0_127 = arith.constant 0 : index
    %286 = vector.load %arg8[%c0_126, %c0_127] : memref<1x16xf32, #tpu.memory_space<vmem>>, vector<1x16xf32>
    %287 = vector.broadcast %286 : vector<1x16xf32> to vector<64x16xf32>
    %288 = arith.addf %285, %287 : vector<64x16xf32>
    %cst_128 = arith.constant 0.000000e+00 : f32
    %289 = vector.broadcast %cst_128 : f32 to vector<64x16xf32>
    "tpu.trace_start"() <{level = 10 : i32, message = "gqd,gkd->gqk"}> : () -> ()
    %cst_129 = arith.constant dense<0.000000e+00> : vector<4x16x16xf32>
    %290 = tpu.matmul %279, %32, %cst_129 {dimension_numbers = #tpu.dot_dimension_numbers<[2], [2], [1], [1], [0, 0, 0, 1, 1, 1], [0], [0]>} : vector<4x16x8xbf16>, vector<4x16x8xbf16>, vector<4x16x16xf32> -> vector<4x16x16xf32>
    "tpu.trace_stop"() : () -> ()
    %cst_130 = arith.constant dense<0xFF800000> : vector<4x16xf32>
    %291 = vector.multi_reduction <maximumf>, %290, %cst_130 [2] : vector<4x16x16xf32> to vector<4x16xf32>
    %292 = vector.shape_cast %291 : vector<4x16xf32> to vector<4x16x1xf32>
    %293 = vector.broadcast %292 : vector<4x16x1xf32> to vector<4x16x16xf32>
    %294 = arith.subf %290, %293 : vector<4x16x16xf32>
    %295 = math.exp %294 : vector<4x16x16xf32>
    %cst_131 = arith.constant dense<0.000000e+00> : vector<4x16xf32>
    %296 = vector.multi_reduction <add>, %295, %cst_131 [2] : vector<4x16x16xf32> to vector<4x16xf32>
    %297 = vector.shape_cast %296 : vector<4x16xf32> to vector<4x16x1xf32>
    %298 = tpu.reciprocal %297 {approx = true} : vector<4x16x1xf32> -> vector<4x16x1xf32>
    %299 = vector.broadcast %298 : vector<4x16x1xf32> to vector<4x16x16xf32>
    %300 = arith.mulf %295, %299 : vector<4x16x16xf32>
    %301 = arith.truncf %300 : vector<4x16x16xf32> to vector<4x16x16xbf16>
    "tpu.trace_start"() <{level = 10 : i32, message = "gqd,gkd->gqk"}> : () -> ()
    %cst_132 = arith.constant dense<0.000000e+00> : vector<4x16x16xf32>
    %302 = tpu.matmul %280, %33, %cst_132 {dimension_numbers = #tpu.dot_dimension_numbers<[2], [2], [1], [1], [0, 0, 0, 1, 1, 1], [0], [0]>} : vector<4x16x8xbf16>, vector<4x16x8xbf16>, vector<4x16x16xf32> -> vector<4x16x16xf32>
    "tpu.trace_stop"() : () -> ()
    %cst_133 = arith.constant dense<0xFF800000> : vector<4x16xf32>
    %303 = vector.multi_reduction <maximumf>, %302, %cst_133 [2] : vector<4x16x16xf32> to vector<4x16xf32>
    %304 = vector.shape_cast %303 : vector<4x16xf32> to vector<4x16x1xf32>
    %305 = vector.broadcast %304 : vector<4x16x1xf32> to vector<4x16x16xf32>
    %306 = arith.subf %302, %305 : vector<4x16x16xf32>
    %307 = math.exp %306 : vector<4x16x16xf32>
    %cst_134 = arith.constant dense<0.000000e+00> : vector<4x16xf32>
    %308 = vector.multi_reduction <add>, %307, %cst_134 [2] : vector<4x16x16xf32> to vector<4x16xf32>
    %309 = vector.shape_cast %308 : vector<4x16xf32> to vector<4x16x1xf32>
    %310 = tpu.reciprocal %309 {approx = true} : vector<4x16x1xf32> -> vector<4x16x1xf32>
    %311 = vector.broadcast %310 : vector<4x16x1xf32> to vector<4x16x16xf32>
    %312 = arith.mulf %307, %311 : vector<4x16x16xf32>
    %313 = arith.truncf %312 : vector<4x16x16xf32> to vector<4x16x16xbf16>
    %314 = tpu.concatenate %301, %313 in 2 : vector<4x16x16xbf16>, vector<4x16x16xbf16> -> vector<4x16x32xbf16>
    "tpu.trace_start"() <{level = 10 : i32, message = "gqk,gkc->gqc"}> : () -> ()
    %cst_135 = arith.constant dense<0.000000e+00> : vector<4x16x16xf32>
    %315 = tpu.matmul %314, %28, %cst_135 {dimension_numbers = #tpu.dot_dimension_numbers<[2], [1], [1], [2], [0, 0, 0, 1, 1, 2], [0], [0]>} : vector<4x16x32xbf16>, vector<4x32x16xbf16>, vector<4x16x16xf32> -> vector<4x16x16xf32>
    "tpu.trace_stop"() : () -> ()
    %316 = vector.shape_cast %315 : vector<4x16x16xf32> to vector<64x16xf32>
    %317 = arith.addf %288, %316 : vector<64x16xf32>
    %c0_136 = arith.constant 0 : index
    %c0_137 = arith.constant 0 : index
    %318 = vector.load %arg9[%c0_136, %c0_137] : memref<1x16xf32, #tpu.memory_space<vmem>>, vector<1x16xf32>
    %c0_138 = arith.constant 0 : index
    %c0_139 = arith.constant 0 : index
    %319 = vector.load %arg10[%c0_138, %c0_139] : memref<1x16xf32, #tpu.memory_space<vmem>>, vector<1x16xf32>
    %cst_140 = arith.constant dense<0.000000e+00> : vector<64xf32>
    %320 = vector.multi_reduction <add>, %317, %cst_140 [1] : vector<64x16xf32> to vector<64xf32>
    %321 = vector.shape_cast %320 : vector<64xf32> to vector<64x1xf32>
    %cst_141 = arith.constant 1.600000e+01 : f32
    %322 = vector.broadcast %cst_141 : f32 to vector<64x1xf32>
    %323 = arith.divf %321, %322 : vector<64x1xf32>
    %324 = vector.broadcast %323 : vector<64x1xf32> to vector<64x16xf32>
    %325 = arith.subf %317, %324 : vector<64x16xf32>
    %326 = arith.mulf %325, %325 : vector<64x16xf32>
    %cst_142 = arith.constant dense<0.000000e+00> : vector<64xf32>
    %327 = vector.multi_reduction <add>, %326, %cst_142 [1] : vector<64x16xf32> to vector<64xf32>
    %328 = vector.shape_cast %327 : vector<64xf32> to vector<64x1xf32>
    %cst_143 = arith.constant 1.600000e+01 : f32
    %329 = vector.broadcast %cst_143 : f32 to vector<64x1xf32>
    %330 = arith.divf %328, %329 : vector<64x1xf32>
    %331 = vector.broadcast %323 : vector<64x1xf32> to vector<64x16xf32>
    %332 = arith.subf %317, %331 : vector<64x16xf32>
    %cst_144 = arith.constant 9.99999974E-6 : f32
    %333 = vector.broadcast %cst_144 : f32 to vector<64x1xf32>
    %334 = arith.addf %330, %333 : vector<64x1xf32>
    %335 = math.rsqrt %334 : vector<64x1xf32>
    %336 = vector.broadcast %335 : vector<64x1xf32> to vector<64x16xf32>
    %337 = arith.mulf %332, %336 : vector<64x16xf32>
    %338 = vector.broadcast %318 : vector<1x16xf32> to vector<64x16xf32>
    %339 = arith.mulf %337, %338 : vector<64x16xf32>
    %340 = vector.broadcast %319 : vector<1x16xf32> to vector<64x16xf32>
    %341 = arith.addf %339, %340 : vector<64x16xf32>
    %342 = arith.truncf %341 : vector<64x16xf32> to vector<64x16xbf16>
    %c0_145 = arith.constant 0 : index
    %c0_146 = arith.constant 0 : index
    %343 = vector.load %arg11[%c0_145, %c0_146] : memref<16x16xbf16, #tpu.memory_space<vmem>>, vector<16x16xbf16>
    %cst_147 = arith.constant dense<0.000000e+00> : vector<64x16xf32>
    %344 = tpu.matmul %342, %343, %cst_147 {dimension_numbers = #tpu.dot_dimension_numbers<[1], [0], [0], [1], [0, 0, 1, 1], [], []>} : vector<64x16xbf16>, vector<16x16xbf16>, vector<64x16xf32> -> vector<64x16xf32>
    %c0_148 = arith.constant 0 : index
    %c0_149 = arith.constant 0 : index
    %345 = vector.load %arg12[%c0_148, %c0_149] : memref<1x16xf32, #tpu.memory_space<vmem>>, vector<1x16xf32>
    %346 = vector.broadcast %345 : vector<1x16xf32> to vector<64x16xf32>
    %347 = arith.addf %344, %346 : vector<64x16xf32>
    %cst_150 = arith.constant 5.000000e-01 : f32
    %348 = vector.broadcast %cst_150 : f32 to vector<64x16xf32>
    %349 = arith.mulf %348, %347 : vector<64x16xf32>
    %cst_151 = arith.constant 4.471500e-02 : f32
    %350 = vector.broadcast %cst_151 : f32 to vector<64x16xf32>
    %351 = arith.mulf %350, %347 : vector<64x16xf32>
    %352 = arith.mulf %351, %347 : vector<64x16xf32>
    %353 = arith.mulf %352, %347 : vector<64x16xf32>
    %354 = arith.addf %347, %353 : vector<64x16xf32>
    %cst_152 = arith.constant 0.797884583 : f32
    %355 = vector.broadcast %cst_152 : f32 to vector<64x16xf32>
    %356 = arith.mulf %355, %354 : vector<64x16xf32>
    %357 = math.tanh %356 : vector<64x16xf32>
    %cst_153 = arith.constant 1.000000e+00 : f32
    %358 = vector.broadcast %cst_153 : f32 to vector<64x16xf32>
    %359 = arith.addf %358, %357 : vector<64x16xf32>
    %360 = arith.mulf %349, %359 : vector<64x16xf32>
    %361 = arith.truncf %360 : vector<64x16xf32> to vector<64x16xbf16>
    %c0_154 = arith.constant 0 : index
    %c0_155 = arith.constant 0 : index
    %362 = vector.load %arg13[%c0_154, %c0_155] : memref<16x16xbf16, #tpu.memory_space<vmem>>, vector<16x16xbf16>
    %cst_156 = arith.constant dense<0.000000e+00> : vector<64x16xf32>
    %363 = tpu.matmul %361, %362, %cst_156 {dimension_numbers = #tpu.dot_dimension_numbers<[1], [0], [0], [1], [0, 0, 1, 1], [], []>} : vector<64x16xbf16>, vector<16x16xbf16>, vector<64x16xf32> -> vector<64x16xf32>
    %364 = arith.addf %289, %363 : vector<64x16xf32>
    "tpu.trace_start"() <{level = 10 : i32, message = "gqd,gkd->gqk"}> : () -> ()
    %cst_157 = arith.constant dense<0.000000e+00> : vector<4x16x16xf32>
    %365 = tpu.matmul %279, %34, %cst_157 {dimension_numbers = #tpu.dot_dimension_numbers<[2], [2], [1], [1], [0, 0, 0, 1, 1, 1], [0], [0]>} : vector<4x16x8xbf16>, vector<4x16x8xbf16>, vector<4x16x16xf32> -> vector<4x16x16xf32>
    "tpu.trace_stop"() : () -> ()
    %cst_158 = arith.constant dense<0xFF800000> : vector<4x16xf32>
    %366 = vector.multi_reduction <maximumf>, %365, %cst_158 [2] : vector<4x16x16xf32> to vector<4x16xf32>
    %367 = vector.shape_cast %366 : vector<4x16xf32> to vector<4x16x1xf32>
    %368 = vector.broadcast %367 : vector<4x16x1xf32> to vector<4x16x16xf32>
    %369 = arith.subf %365, %368 : vector<4x16x16xf32>
    %370 = math.exp %369 : vector<4x16x16xf32>
    %cst_159 = arith.constant dense<0.000000e+00> : vector<4x16xf32>
    %371 = vector.multi_reduction <add>, %370, %cst_159 [2] : vector<4x16x16xf32> to vector<4x16xf32>
    %372 = vector.shape_cast %371 : vector<4x16xf32> to vector<4x16x1xf32>
    %373 = tpu.reciprocal %372 {approx = true} : vector<4x16x1xf32> -> vector<4x16x1xf32>
    %374 = vector.broadcast %373 : vector<4x16x1xf32> to vector<4x16x16xf32>
    %375 = arith.mulf %370, %374 : vector<4x16x16xf32>
    %376 = arith.truncf %375 : vector<4x16x16xf32> to vector<4x16x16xbf16>
    "tpu.trace_start"() <{level = 10 : i32, message = "gqd,gkd->gqk"}> : () -> ()
    %cst_160 = arith.constant dense<0.000000e+00> : vector<4x16x16xf32>
    %377 = tpu.matmul %280, %35, %cst_160 {dimension_numbers = #tpu.dot_dimension_numbers<[2], [2], [1], [1], [0, 0, 0, 1, 1, 1], [0], [0]>} : vector<4x16x8xbf16>, vector<4x16x8xbf16>, vector<4x16x16xf32> -> vector<4x16x16xf32>
    "tpu.trace_stop"() : () -> ()
    %cst_161 = arith.constant dense<0xFF800000> : vector<4x16xf32>
    %378 = vector.multi_reduction <maximumf>, %377, %cst_161 [2] : vector<4x16x16xf32> to vector<4x16xf32>
    %379 = vector.shape_cast %378 : vector<4x16xf32> to vector<4x16x1xf32>
    %380 = vector.broadcast %379 : vector<4x16x1xf32> to vector<4x16x16xf32>
    %381 = arith.subf %377, %380 : vector<4x16x16xf32>
    %382 = math.exp %381 : vector<4x16x16xf32>
    %cst_162 = arith.constant dense<0.000000e+00> : vector<4x16xf32>
    %383 = vector.multi_reduction <add>, %382, %cst_162 [2] : vector<4x16x16xf32> to vector<4x16xf32>
    %384 = vector.shape_cast %383 : vector<4x16xf32> to vector<4x16x1xf32>
    %385 = tpu.reciprocal %384 {approx = true} : vector<4x16x1xf32> -> vector<4x16x1xf32>
    %386 = vector.broadcast %385 : vector<4x16x1xf32> to vector<4x16x16xf32>
    %387 = arith.mulf %382, %386 : vector<4x16x16xf32>
    %388 = arith.truncf %387 : vector<4x16x16xf32> to vector<4x16x16xbf16>
    %389 = tpu.concatenate %376, %388 in 2 : vector<4x16x16xbf16>, vector<4x16x16xbf16> -> vector<4x16x32xbf16>
    "tpu.trace_start"() <{level = 10 : i32, message = "gqk,gkc->gqc"}> : () -> ()
    %cst_163 = arith.constant dense<0.000000e+00> : vector<4x16x16xf32>
    %390 = tpu.matmul %389, %31, %cst_163 {dimension_numbers = #tpu.dot_dimension_numbers<[2], [1], [1], [2], [0, 0, 0, 1, 1, 2], [0], [0]>} : vector<4x16x32xbf16>, vector<4x32x16xbf16>, vector<4x16x16xf32> -> vector<4x16x16xf32>
    "tpu.trace_stop"() : () -> ()
    %391 = vector.shape_cast %390 : vector<4x16x16xf32> to vector<64x16xf32>
    %392 = arith.addf %288, %391 : vector<64x16xf32>
    %c0_164 = arith.constant 0 : index
    %c0_165 = arith.constant 0 : index
    %393 = vector.load %arg9[%c0_164, %c0_165] : memref<1x16xf32, #tpu.memory_space<vmem>>, vector<1x16xf32>
    %c0_166 = arith.constant 0 : index
    %c0_167 = arith.constant 0 : index
    %394 = vector.load %arg10[%c0_166, %c0_167] : memref<1x16xf32, #tpu.memory_space<vmem>>, vector<1x16xf32>
    %cst_168 = arith.constant dense<0.000000e+00> : vector<64xf32>
    %395 = vector.multi_reduction <add>, %392, %cst_168 [1] : vector<64x16xf32> to vector<64xf32>
    %396 = vector.shape_cast %395 : vector<64xf32> to vector<64x1xf32>
    %cst_169 = arith.constant 1.600000e+01 : f32
    %397 = vector.broadcast %cst_169 : f32 to vector<64x1xf32>
    %398 = arith.divf %396, %397 : vector<64x1xf32>
    %399 = vector.broadcast %398 : vector<64x1xf32> to vector<64x16xf32>
    %400 = arith.subf %392, %399 : vector<64x16xf32>
    %401 = arith.mulf %400, %400 : vector<64x16xf32>
    %cst_170 = arith.constant dense<0.000000e+00> : vector<64xf32>
    %402 = vector.multi_reduction <add>, %401, %cst_170 [1] : vector<64x16xf32> to vector<64xf32>
    %403 = vector.shape_cast %402 : vector<64xf32> to vector<64x1xf32>
    %cst_171 = arith.constant 1.600000e+01 : f32
    %404 = vector.broadcast %cst_171 : f32 to vector<64x1xf32>
    %405 = arith.divf %403, %404 : vector<64x1xf32>
    %406 = vector.broadcast %398 : vector<64x1xf32> to vector<64x16xf32>
    %407 = arith.subf %392, %406 : vector<64x16xf32>
    %cst_172 = arith.constant 9.99999974E-6 : f32
    %408 = vector.broadcast %cst_172 : f32 to vector<64x1xf32>
    %409 = arith.addf %405, %408 : vector<64x1xf32>
    %410 = math.rsqrt %409 : vector<64x1xf32>
    %411 = vector.broadcast %410 : vector<64x1xf32> to vector<64x16xf32>
    %412 = arith.mulf %407, %411 : vector<64x16xf32>
    %413 = vector.broadcast %393 : vector<1x16xf32> to vector<64x16xf32>
    %414 = arith.mulf %412, %413 : vector<64x16xf32>
    %415 = vector.broadcast %394 : vector<1x16xf32> to vector<64x16xf32>
    %416 = arith.addf %414, %415 : vector<64x16xf32>
    %417 = arith.truncf %416 : vector<64x16xf32> to vector<64x16xbf16>
    %c0_173 = arith.constant 0 : index
    %c0_174 = arith.constant 0 : index
    %418 = vector.load %arg11[%c0_173, %c0_174] : memref<16x16xbf16, #tpu.memory_space<vmem>>, vector<16x16xbf16>
    %cst_175 = arith.constant dense<0.000000e+00> : vector<64x16xf32>
    %419 = tpu.matmul %417, %418, %cst_175 {dimension_numbers = #tpu.dot_dimension_numbers<[1], [0], [0], [1], [0, 0, 1, 1], [], []>} : vector<64x16xbf16>, vector<16x16xbf16>, vector<64x16xf32> -> vector<64x16xf32>
    %c0_176 = arith.constant 0 : index
    %c0_177 = arith.constant 0 : index
    %420 = vector.load %arg12[%c0_176, %c0_177] : memref<1x16xf32, #tpu.memory_space<vmem>>, vector<1x16xf32>
    %421 = vector.broadcast %420 : vector<1x16xf32> to vector<64x16xf32>
    %422 = arith.addf %419, %421 : vector<64x16xf32>
    %cst_178 = arith.constant 5.000000e-01 : f32
    %423 = vector.broadcast %cst_178 : f32 to vector<64x16xf32>
    %424 = arith.mulf %423, %422 : vector<64x16xf32>
    %cst_179 = arith.constant 4.471500e-02 : f32
    %425 = vector.broadcast %cst_179 : f32 to vector<64x16xf32>
    %426 = arith.mulf %425, %422 : vector<64x16xf32>
    %427 = arith.mulf %426, %422 : vector<64x16xf32>
    %428 = arith.mulf %427, %422 : vector<64x16xf32>
    %429 = arith.addf %422, %428 : vector<64x16xf32>
    %cst_180 = arith.constant 0.797884583 : f32
    %430 = vector.broadcast %cst_180 : f32 to vector<64x16xf32>
    %431 = arith.mulf %430, %429 : vector<64x16xf32>
    %432 = math.tanh %431 : vector<64x16xf32>
    %cst_181 = arith.constant 1.000000e+00 : f32
    %433 = vector.broadcast %cst_181 : f32 to vector<64x16xf32>
    %434 = arith.addf %433, %432 : vector<64x16xf32>
    %435 = arith.mulf %424, %434 : vector<64x16xf32>
    %436 = arith.truncf %435 : vector<64x16xf32> to vector<64x16xbf16>
    %c0_182 = arith.constant 0 : index
    %c0_183 = arith.constant 0 : index
    %437 = vector.load %arg13[%c0_182, %c0_183] : memref<16x16xbf16, #tpu.memory_space<vmem>>, vector<16x16xbf16>
    %cst_184 = arith.constant dense<0.000000e+00> : vector<64x16xf32>
    %438 = tpu.matmul %436, %437, %cst_184 {dimension_numbers = #tpu.dot_dimension_numbers<[1], [0], [0], [1], [0, 0, 1, 1], [], []>} : vector<64x16xbf16>, vector<16x16xbf16>, vector<64x16xf32> -> vector<64x16xf32>
    %439 = arith.addf %364, %438 : vector<64x16xf32>
    %440 = vector.extract_strided_slice %0 {offsets = [0, 16, 0], sizes = [4, 16, 16], strides = [1, 1, 1]} : vector<4x32x16xf32> to vector<4x16x16xf32>
    %441 = vector.shape_cast %440 : vector<4x16x16xf32> to vector<64x16xf32>
    %cst_185 = arith.constant 5.000000e-01 : f32
    %442 = vector.broadcast %cst_185 : f32 to vector<64x16xf32>
    %443 = arith.mulf %439, %442 : vector<64x16xf32>
    %444 = arith.addf %441, %443 : vector<64x16xf32>
    %c0_186 = arith.constant 0 : index
    %c0_187 = arith.constant 0 : index
    %445 = vector.load %arg14[%c0_186, %c0_187] : memref<1x16xf32, #tpu.memory_space<vmem>>, vector<1x16xf32>
    %446 = vector.broadcast %445 : vector<1x16xf32> to vector<64x16xf32>
    %447 = arith.addf %444, %446 : vector<64x16xf32>
    %cst_188 = arith.constant dense<0.000000e+00> : vector<64xf32>
    %448 = vector.multi_reduction <add>, %441, %cst_188 [1] : vector<64x16xf32> to vector<64xf32>
    %449 = vector.shape_cast %448 : vector<64xf32> to vector<64x1xf32>
    %cst_189 = arith.constant dense<0.000000e+00> : vector<64xf32>
    %450 = vector.multi_reduction <add>, %447, %cst_189 [1] : vector<64x16xf32> to vector<64xf32>
    %451 = vector.shape_cast %450 : vector<64xf32> to vector<64x1xf32>
    %452 = arith.addf %449, %451 : vector<64x1xf32>
    %cst_190 = arith.constant 3.200000e+01 : f32
    %453 = vector.broadcast %cst_190 : f32 to vector<64x1xf32>
    %454 = arith.divf %452, %453 : vector<64x1xf32>
    %455 = vector.broadcast %454 : vector<64x1xf32> to vector<64x16xf32>
    %456 = arith.subf %441, %455 : vector<64x16xf32>
    %457 = arith.mulf %456, %456 : vector<64x16xf32>
    %cst_191 = arith.constant dense<0.000000e+00> : vector<64xf32>
    %458 = vector.multi_reduction <add>, %457, %cst_191 [1] : vector<64x16xf32> to vector<64xf32>
    %459 = vector.shape_cast %458 : vector<64xf32> to vector<64x1xf32>
    %460 = vector.broadcast %454 : vector<64x1xf32> to vector<64x16xf32>
    %461 = arith.subf %447, %460 : vector<64x16xf32>
    %462 = arith.mulf %461, %461 : vector<64x16xf32>
    %cst_192 = arith.constant dense<0.000000e+00> : vector<64xf32>
    %463 = vector.multi_reduction <add>, %462, %cst_192 [1] : vector<64x16xf32> to vector<64xf32>
    %464 = vector.shape_cast %463 : vector<64xf32> to vector<64x1xf32>
    %465 = arith.addf %459, %464 : vector<64x1xf32>
    %cst_193 = arith.constant 3.200000e+01 : f32
    %466 = vector.broadcast %cst_193 : f32 to vector<64x1xf32>
    %467 = arith.divf %465, %466 : vector<64x1xf32>
    %cst_194 = arith.constant 9.99999974E-6 : f32
    %468 = vector.broadcast %cst_194 : f32 to vector<64x1xf32>
    %469 = arith.addf %467, %468 : vector<64x1xf32>
    %470 = math.rsqrt %469 : vector<64x1xf32>
    %471 = vector.broadcast %454 : vector<64x1xf32> to vector<64x16xf32>
    %472 = arith.subf %441, %471 : vector<64x16xf32>
    %473 = vector.broadcast %470 : vector<64x1xf32> to vector<64x16xf32>
    %474 = arith.mulf %472, %473 : vector<64x16xf32>
    %c0_195 = arith.constant 0 : index
    %c0_196 = arith.constant 0 : index
    %475 = vector.load %arg15[%c0_195, %c0_196] : memref<1x16xf32, #tpu.memory_space<vmem>>, vector<1x16xf32>
    %476 = vector.broadcast %475 : vector<1x16xf32> to vector<64x16xf32>
    %477 = arith.mulf %474, %476 : vector<64x16xf32>
    %c0_197 = arith.constant 0 : index
    %c0_198 = arith.constant 0 : index
    %478 = vector.load %arg16[%c0_197, %c0_198] : memref<1x16xf32, #tpu.memory_space<vmem>>, vector<1x16xf32>
    %479 = vector.broadcast %478 : vector<1x16xf32> to vector<64x16xf32>
    %480 = arith.addf %477, %479 : vector<64x16xf32>
    %481 = vector.broadcast %454 : vector<64x1xf32> to vector<64x16xf32>
    %482 = arith.subf %447, %481 : vector<64x16xf32>
    %483 = vector.broadcast %470 : vector<64x1xf32> to vector<64x16xf32>
    %484 = arith.mulf %482, %483 : vector<64x16xf32>
    %c0_199 = arith.constant 0 : index
    %c0_200 = arith.constant 0 : index
    %485 = vector.load %arg17[%c0_199, %c0_200] : memref<1x16xf32, #tpu.memory_space<vmem>>, vector<1x16xf32>
    %486 = vector.broadcast %485 : vector<1x16xf32> to vector<64x16xf32>
    %487 = arith.mulf %484, %486 : vector<64x16xf32>
    %c0_201 = arith.constant 0 : index
    %c0_202 = arith.constant 0 : index
    %488 = vector.load %arg18[%c0_201, %c0_202] : memref<1x16xf32, #tpu.memory_space<vmem>>, vector<1x16xf32>
    %489 = vector.broadcast %488 : vector<1x16xf32> to vector<64x16xf32>
    %490 = arith.addf %487, %489 : vector<64x16xf32>
    %491 = arith.truncf %480 : vector<64x16xf32> to vector<64x16xbf16>
    %c0_203 = arith.constant 0 : index
    %c0_204 = arith.constant 0 : index
    %492 = vector.load %arg19[%c0_203, %c0_204] : memref<16x64xbf16, #tpu.memory_space<vmem>>, vector<16x64xbf16>
    %cst_205 = arith.constant dense<0.000000e+00> : vector<64x64xf32>
    %493 = tpu.matmul %491, %492, %cst_205 {dimension_numbers = #tpu.dot_dimension_numbers<[1], [0], [0], [1], [0, 0, 1, 1], [], []>} : vector<64x16xbf16>, vector<16x64xbf16>, vector<64x64xf32> -> vector<64x64xf32>
    %494 = arith.truncf %490 : vector<64x16xf32> to vector<64x16xbf16>
    %c0_206 = arith.constant 0 : index
    %c0_207 = arith.constant 0 : index
    %495 = vector.load %arg20[%c0_206, %c0_207] : memref<16x64xbf16, #tpu.memory_space<vmem>>, vector<16x64xbf16>
    %cst_208 = arith.constant dense<0.000000e+00> : vector<64x64xf32>
    %496 = tpu.matmul %494, %495, %cst_208 {dimension_numbers = #tpu.dot_dimension_numbers<[1], [0], [0], [1], [0, 0, 1, 1], [], []>} : vector<64x16xbf16>, vector<16x64xbf16>, vector<64x64xf32> -> vector<64x64xf32>
    %497 = arith.addf %493, %496 : vector<64x64xf32>
    %c0_209 = arith.constant 0 : index
    %c0_210 = arith.constant 0 : index
    %498 = vector.load %arg21[%c0_209, %c0_210] : memref<1x64xf32, #tpu.memory_space<vmem>>, vector<1x64xf32>
    %499 = vector.broadcast %498 : vector<1x64xf32> to vector<64x64xf32>
    %500 = arith.addf %497, %499 : vector<64x64xf32>
    %cst_211 = arith.constant 5.000000e-01 : f32
    %501 = vector.broadcast %cst_211 : f32 to vector<64x64xf32>
    %502 = arith.mulf %501, %500 : vector<64x64xf32>
    %cst_212 = arith.constant 4.471500e-02 : f32
    %503 = vector.broadcast %cst_212 : f32 to vector<64x64xf32>
    %504 = arith.mulf %503, %500 : vector<64x64xf32>
    %505 = arith.mulf %504, %500 : vector<64x64xf32>
    %506 = arith.mulf %505, %500 : vector<64x64xf32>
    %507 = arith.addf %500, %506 : vector<64x64xf32>
    %cst_213 = arith.constant 0.797884583 : f32
    %508 = vector.broadcast %cst_213 : f32 to vector<64x64xf32>
    %509 = arith.mulf %508, %507 : vector<64x64xf32>
    %510 = math.tanh %509 : vector<64x64xf32>
    %cst_214 = arith.constant 1.000000e+00 : f32
    %511 = vector.broadcast %cst_214 : f32 to vector<64x64xf32>
    %512 = arith.addf %511, %510 : vector<64x64xf32>
    %513 = arith.mulf %502, %512 : vector<64x64xf32>
    %514 = arith.truncf %513 : vector<64x64xf32> to vector<64x64xbf16>
    %c0_215 = arith.constant 0 : index
    %c0_216 = arith.constant 0 : index
    %515 = vector.load %arg22[%c0_215, %c0_216] : memref<64x16xbf16, #tpu.memory_space<vmem>>, vector<64x16xbf16>
    %cst_217 = arith.constant dense<0.000000e+00> : vector<64x16xf32>
    %516 = tpu.matmul %514, %515, %cst_217 {dimension_numbers = #tpu.dot_dimension_numbers<[1], [0], [0], [1], [0, 0, 1, 1], [], []>} : vector<64x64xbf16>, vector<64x16xbf16>, vector<64x16xf32> -> vector<64x16xf32>
    %c0_218 = arith.constant 0 : index
    %c0_219 = arith.constant 0 : index
    %517 = vector.load %arg23[%c0_218, %c0_219] : memref<1x16xf32, #tpu.memory_space<vmem>>, vector<1x16xf32>
    %518 = vector.broadcast %517 : vector<1x16xf32> to vector<64x16xf32>
    %519 = arith.addf %516, %518 : vector<64x16xf32>
    %520 = vector.shape_cast %519 : vector<64x16xf32> to vector<4x16x16xf32>
    %c0_220 = arith.constant 0 : index
    %c16 = arith.constant 16 : index
    %c0_221 = arith.constant 0 : index
    %521 = vector.load %arg24[%c0_220, %c16, %c0_221] : memref<4x32x16xf32, #tpu.memory_space<vmem>>, vector<4x16x16xf32>
    tpu.vector_store %arg24[%c0_220, %c16, %c0_221], %520 {strides = array<i32>} : memref<4x32x16xf32, #tpu.memory_space<vmem>>, vector<4x16x16xf32>,
    return
  }
  func.func @transform_0(%arg0: i32) -> (i32, i32, i32) {
    %c0_i32 = arith.constant 0 : i32
    %c0_i32_0 = arith.constant 0 : i32
    %c0_i32_1 = arith.constant 0 : i32
    return %arg0, %c0_i32, %c0_i32_0 : i32, i32, i32
  }
  func.func @transform_1(%arg0: i32) -> (i32, i32, i32, i32) {
    %c0_i32 = arith.constant 0 : i32
    %c0_i32_0 = arith.constant 0 : i32
    %c0_i32_1 = arith.constant 0 : i32
    %c0_i32_2 = arith.constant 0 : i32
    return %c0_i32, %arg0, %c0_i32_0, %c0_i32_1 : i32, i32, i32, i32
  }
  func.func @transform_2(%arg0: i32) -> (i32, i32) {
    %c0_i32 = arith.constant 0 : i32
    %c0_i32_0 = arith.constant 0 : i32
    %c0_i32_1 = arith.constant 0 : i32
    return %c0_i32, %c0_i32_0 : i32, i32
  }
  func.func @transform_3(%arg0: i32) -> (i32, i32) {
    %c0_i32 = arith.constant 0 : i32
    %c0_i32_0 = arith.constant 0 : i32
    %c0_i32_1 = arith.constant 0 : i32
    return %c0_i32, %c0_i32_0 : i32, i32
  }
  func.func @transform_4(%arg0: i32) -> (i32, i32) {
    %c0_i32 = arith.constant 0 : i32
    %c0_i32_0 = arith.constant 0 : i32
    %c0_i32_1 = arith.constant 0 : i32
    return %c0_i32, %c0_i32_0 : i32, i32
  }
  func.func @transform_5(%arg0: i32) -> (i32, i32, i32) {
    %c0_i32 = arith.constant 0 : i32
    %c0_i32_0 = arith.constant 0 : i32
    %c0_i32_1 = arith.constant 0 : i32
    %c0_i32_2 = arith.constant 0 : i32
    return %c0_i32, %c0_i32_0, %c0_i32_1 : i32, i32, i32
  }
  func.func @transform_6(%arg0: i32) -> (i32, i32) {
    %c0_i32 = arith.constant 0 : i32
    %c0_i32_0 = arith.constant 0 : i32
    %c0_i32_1 = arith.constant 0 : i32
    return %c0_i32, %c0_i32_0 : i32, i32
  }
  func.func @transform_7(%arg0: i32) -> (i32, i32) {
    %c0_i32 = arith.constant 0 : i32
    %c0_i32_0 = arith.constant 0 : i32
    %c0_i32_1 = arith.constant 0 : i32
    return %c0_i32, %c0_i32_0 : i32, i32
  }
  func.func @transform_8(%arg0: i32) -> (i32, i32) {
    %c0_i32 = arith.constant 0 : i32
    %c0_i32_0 = arith.constant 0 : i32
    %c0_i32_1 = arith.constant 0 : i32
    return %c0_i32, %c0_i32_0 : i32, i32
  }
  func.func @transform_9(%arg0: i32) -> (i32, i32) {
    %c0_i32 = arith.constant 0 : i32
    %c0_i32_0 = arith.constant 0 : i32
    %c0_i32_1 = arith.constant 0 : i32
    return %c0_i32, %c0_i32_0 : i32, i32
  }
  func.func @transform_10(%arg0: i32) -> (i32, i32) {
    %c0_i32 = arith.constant 0 : i32
    %c0_i32_0 = arith.constant 0 : i32
    %c0_i32_1 = arith.constant 0 : i32
    return %c0_i32, %c0_i32_0 : i32, i32
  }
  func.func @transform_11(%arg0: i32) -> (i32, i32) {
    %c0_i32 = arith.constant 0 : i32
    %c0_i32_0 = arith.constant 0 : i32
    %c0_i32_1 = arith.constant 0 : i32
    return %c0_i32, %c0_i32_0 : i32, i32
  }
  func.func @transform_12(%arg0: i32) -> (i32, i32) {
    %c0_i32 = arith.constant 0 : i32
    %c0_i32_0 = arith.constant 0 : i32
    %c0_i32_1 = arith.constant 0 : i32
    return %c0_i32, %c0_i32_0 : i32, i32
  }
  func.func @transform_13(%arg0: i32) -> (i32, i32) {
    %c0_i32 = arith.constant 0 : i32
    %c0_i32_0 = arith.constant 0 : i32
    %c0_i32_1 = arith.constant 0 : i32
    return %c0_i32, %c0_i32_0 : i32, i32
  }
  func.func @transform_14(%arg0: i32) -> (i32, i32) {
    %c0_i32 = arith.constant 0 : i32
    %c0_i32_0 = arith.constant 0 : i32
    %c0_i32_1 = arith.constant 0 : i32
    return %c0_i32, %c0_i32_0 : i32, i32
  }
  func.func @transform_15(%arg0: i32) -> (i32, i32) {
    %c0_i32 = arith.constant 0 : i32
    %c0_i32_0 = arith.constant 0 : i32
    %c0_i32_1 = arith.constant 0 : i32
    return %c0_i32, %c0_i32_0 : i32, i32
  }
  func.func @transform_16(%arg0: i32) -> (i32, i32) {
    %c0_i32 = arith.constant 0 : i32
    %c0_i32_0 = arith.constant 0 : i32
    %c0_i32_1 = arith.constant 0 : i32
    return %c0_i32, %c0_i32_0 : i32, i32
  }
  func.func @transform_17(%arg0: i32) -> (i32, i32) {
    %c0_i32 = arith.constant 0 : i32
    %c0_i32_0 = arith.constant 0 : i32
    %c0_i32_1 = arith.constant 0 : i32
    return %c0_i32, %c0_i32_0 : i32, i32
  }
  func.func @transform_18(%arg0: i32) -> (i32, i32) {
    %c0_i32 = arith.constant 0 : i32
    %c0_i32_0 = arith.constant 0 : i32
    %c0_i32_1 = arith.constant 0 : i32
    return %c0_i32, %c0_i32_0 : i32, i32
  }
  func.func @transform_19(%arg0: i32) -> (i32, i32) {
    %c0_i32 = arith.constant 0 : i32
    %c0_i32_0 = arith.constant 0 : i32
    %c0_i32_1 = arith.constant 0 : i32
    return %c0_i32, %c0_i32_0 : i32, i32
  }
  func.func @transform_20(%arg0: i32) -> (i32, i32) {
    %c0_i32 = arith.constant 0 : i32
    %c0_i32_0 = arith.constant 0 : i32
    %c0_i32_1 = arith.constant 0 : i32
    return %c0_i32, %c0_i32_0 : i32, i32
  }
  func.func @transform_21(%arg0: i32) -> (i32, i32) {
    %c0_i32 = arith.constant 0 : i32
    %c0_i32_0 = arith.constant 0 : i32
    %c0_i32_1 = arith.constant 0 : i32
    return %c0_i32, %c0_i32_0 : i32, i32
  }
  func.func @transform_22(%arg0: i32) -> (i32, i32) {
    %c0_i32 = arith.constant 0 : i32
    %c0_i32_0 = arith.constant 0 : i32
    %c0_i32_1 = arith.constant 0 : i32
    return %c0_i32, %c0_i32_0 : i32, i32
  }
  func.func @transform_23(%arg0: i32) -> (i32, i32, i32) {
    %c0_i32 = arith.constant 0 : i32
    %c0_i32_0 = arith.constant 0 : i32
    %c0_i32_1 = arith.constant 0 : i32
    return %arg0, %c0_i32, %c0_i32_0 : i32, i32, i32
  }
}

</mosaic_0001>

<llo_original>
// kernel: fwd.1
$region0: #{fwd.1}
  #allocation0 [shape = 'u32[]', space=smem, size = 0x4, offset = 0x4, fixed_abs, tag = 'smem constant byte address 0x4 - core index']
  #allocation1 [shape = 'u32[72,128]{1,0:T(1,128)}', space=vmem, size = 0x9000, scoped, tag = 'internal scratch']
  %s0 = inlined_call_operand.vmem [shape: f32[8,32,16], index: 0, kind: input, shape index: {}]
  %s1 = inlined_call_operand.vmem [shape: bf16[2,8,16,16], index: 1, kind: input, shape index: {}]
  %s2 = inlined_call_operand.vmem [shape: f32[32,16], index: 2, kind: input, shape index: {}]
  %s3 = inlined_call_operand.vmem [shape: bf16[16,48], index: 3, kind: input, shape index: {}]
  %s4 = inlined_call_operand.vmem [shape: f32[1,48], index: 4, kind: input, shape index: {}]
  %s5 = inlined_call_operand.vmem [shape: bf16[2,8,16], index: 5, kind: input, shape index: {}]
  %s6 = inlined_call_operand.vmem [shape: bf16[16,16], index: 6, kind: input, shape index: {}]
  %s7 = inlined_call_operand.vmem [shape: f32[1,16], index: 7, kind: input, shape index: {}]
  %s8 = inlined_call_operand.vmem [shape: f32[1,16], index: 8, kind: input, shape index: {}]
  %s9 = inlined_call_operand.vmem [shape: f32[1,16], index: 9, kind: input, shape index: {}]
  %s10 = inlined_call_operand.vmem [shape: bf16[16,16], index: 10, kind: input, shape index: {}]
  %s11 = inlined_call_operand.vmem [shape: f32[1,16], index: 11, kind: input, shape index: {}]
  %s12 = inlined_call_operand.vmem [shape: bf16[16,16], index: 12, kind: input, shape index: {}]
  %s13 = inlined_call_operand.vmem [shape: f32[1,16], index: 13, kind: input, shape index: {}]
  %s14 = inlined_call_operand.vmem [shape: f32[1,16], index: 14, kind: input, shape index: {}]
  %s15 = inlined_call_operand.vmem [shape: f32[1,16], index: 15, kind: input, shape index: {}]
  %s16 = inlined_call_operand.vmem [shape: f32[1,16], index: 16, kind: input, shape index: {}]
  %s17 = inlined_call_operand.vmem [shape: f32[1,16], index: 17, kind: input, shape index: {}]
  %s18 = inlined_call_operand.vmem [shape: bf16[16,64], index: 18, kind: input, shape index: {}]
  %s19 = inlined_call_operand.vmem [shape: bf16[16,64], index: 19, kind: input, shape index: {}]
  %s20 = inlined_call_operand.vmem [shape: f32[1,64], index: 20, kind: input, shape index: {}]
  %s21 = inlined_call_operand.vmem [shape: bf16[64,16], index: 21, kind: input, shape index: {}]
  %s22 = inlined_call_operand.vmem [shape: f32[1,16], index: 22, kind: input, shape index: {}]
  %s23 = inlined_call_operand.vmem [shape: f32[8,32,16], index: 23, kind: output, shape index: {}]
  %s24 = sld [smem:[#allocation0]]
  $region166: #{fwd.1} parent=0
    _
  %s26 = ssub.s32 1, %s24
  %s27 = scalar_select 0, %s26, %s24
  $region1: #{fwd.1} parent=0
    #allocation2 [shape = 'u8[65536]{0}', space=vmem, size = 0x10000, scoped, tag = 'input window, operand 1']
    loop: start=0, step=1, limit=4
    $region2: #{fwd.1} parent=1 // loop_pre_header
      _
    $region3: #{fwd.1} parent=1 // loop_header
      %s29 = sphi 0, %s33
      %p30 = scmp.ge.s32.totalorder %s29, 4
      %s39 = sphi 0, %s41
      %s42 = sphi 0, %s39
      %s43 = sphi 0, %s42
      %s59 = sphi 0, %s43
      %s65 = sphi 0, %s67
      %s68 = sphi 0, %s65
      %s69 = sphi 0, %s68
      %s85 = sphi 0, %s69
      %s89 = sphi 0, %s89
      %s91 = sphi 0, %s89
      %s92 = sphi 0, %s91
      %s106 = sphi 0, %s92
      %s110 = sphi 0, %s110
      %s112 = sphi 0, %s110
      %s113 = sphi 0, %s112
      %s127 = sphi 0, %s113
      %s131 = sphi 0, %s131
      %s133 = sphi 0, %s131
      %s134 = sphi 0, %s133
      %s148 = sphi 0, %s134
      %s152 = sphi 0, %s152
      %s154 = sphi 0, %s152
      %s155 = sphi 0, %s154
      %s169 = sphi 0, %s155
      %s173 = sphi 0, %s173
      %s175 = sphi 0, %s173
      %s176 = sphi 0, %s175
      %s190 = sphi 0, %s176
      %s194 = sphi 0, %s194
      %s196 = sphi 0, %s194
      %s197 = sphi 0, %s196
      %s211 = sphi 0, %s197
      %s215 = sphi 0, %s215
      %s217 = sphi 0, %s215
      %s218 = sphi 0, %s217
      %s232 = sphi 0, %s218
      %s236 = sphi 0, %s236
      %s238 = sphi 0, %s236
      %s239 = sphi 0, %s238
      %s253 = sphi 0, %s239
      %s257 = sphi 0, %s257
      %s259 = sphi 0, %s257
      %s260 = sphi 0, %s259
      %s274 = sphi 0, %s260
      %s278 = sphi 0, %s278
      %s280 = sphi 0, %s278
      %s281 = sphi 0, %s280
      %s295 = sphi 0, %s281
      %s299 = sphi 0, %s299
      %s301 = sphi 0, %s299
      %s302 = sphi 0, %s301
      %s316 = sphi 0, %s302
      %s320 = sphi 0, %s320
      %s322 = sphi 0, %s320
      %s323 = sphi 0, %s322
      %s337 = sphi 0, %s323
      %s341 = sphi 0, %s341
      %s343 = sphi 0, %s341
      %s344 = sphi 0, %s343
      %s358 = sphi 0, %s344
      %s362 = sphi 0, %s362
      %s364 = sphi 0, %s362
      %s365 = sphi 0, %s364
      %s379 = sphi 0, %s365
      %s383 = sphi 0, %s383
      %s385 = sphi 0, %s383
      %s386 = sphi 0, %s385
      %s400 = sphi 0, %s386
      %s404 = sphi 0, %s404
      %s406 = sphi 0, %s404
      %s407 = sphi 0, %s406
      %s421 = sphi 0, %s407
      %s425 = sphi 0, %s425
      %s427 = sphi 0, %s425
      %s428 = sphi 0, %s427
      %s442 = sphi 0, %s428
      %s446 = sphi 0, %s446
      %s448 = sphi 0, %s446
      %s449 = sphi 0, %s448
      %s463 = sphi 0, %s449
      %s467 = sphi 0, %s467
      %s469 = sphi 0, %s467
      %s470 = sphi 0, %s469
      %s484 = sphi 0, %s470
      %s488 = sphi 0, %s488
      %s490 = sphi 0, %s488
      %s491 = sphi 0, %s490
      %s505 = sphi 0, %s491
      %s509 = sphi 0, %s509
      %s511 = sphi 0, %s509
      %s512 = sphi 0, %s511
      %s526 = sphi 0, %s512
      %s532 = sphi 0, %s534
      %s535 = sphi 0, %s532
      %s536 = sphi 0, %s535
      %s552 = sphi 0, %s536
    $region4: #{fwd.1} parent=1 // loop_header_branch
      %32 = sbr.rel (%p30) target = $region8
    $region5: #{fwd.1} parent=1 // loop_body
      %s34 = ssub.s32 %s29, 1
      %s35 = ssub.s32 %s29, 2
      %s36 = sadd.s32 %s29, 1
      %s37 = ssub.s32 %s29, %s36
      %p38 = scmp.eq.s32.totalorder %s37, 0
      %s40 = sadd.s32 %s39, 1
      %s41 = scalar_select %p38, %s39, %s40
      %p44 = pneg %p38
      %p45 = scmp.eq.s32.totalorder %s29, 1
      %p46 = por %p44, %p45
      %p47 = scmp.ne.s32.totalorder %s39, %s42
      %p48 = scmp.eq.s32.totalorder %s29, 0
      %p49 = por %p47, %p48
      %p50 = scmp.ne.s32.totalorder %s39, %s42
      %p51 = scmp.eq.s32.totalorder %s34, 1
      %p52 = por %p50, %p51
      %p53 = scmp.ne.s32.totalorder %s42, %s43
      %p54 = scmp.eq.s32.totalorder %s34, 0
      %p55 = por %p53, %p54
      %p56 = scmp.ne.s32.totalorder %s42, %s43
      %p57 = scmp.eq.s32.totalorder %s35, 1
      %p58 = por %p56, %p57
      %p60 = scmp.ne.s32.totalorder %s43, %s59
      %p61 = scmp.eq.s32.totalorder %s35, 0
      %p62 = por %p60, %p61
      %s63 = ssub.s32 %s29, %s36
      %p64 = scmp.eq.s32.totalorder %s63, 0
      %s66 = sadd.s32 %s65, 1
      %s67 = scalar_select %p64, %s65, %s66
      %p70 = pneg %p64
      %p71 = scmp.eq.s32.totalorder %s29, 1
      %p72 = por %p70, %p71
      %p73 = scmp.ne.s32.totalorder %s65, %s68
      %p74 = scmp.eq.s32.totalorder %s29, 0
      %p75 = por %p73, %p74
      %p76 = scmp.ne.s32.totalorder %s65, %s68
      %p77 = scmp.eq.s32.totalorder %s34, 1
      %p78 = por %p76, %p77
      %p79 = scmp.ne.s32.totalorder %s68, %s69
      %p80 = scmp.eq.s32.totalorder %s34, 0
      %p81 = por %p79, %p80
      %p82 = scmp.ne.s32.totalorder %s68, %s69
      %p83 = scmp.eq.s32.totalorder %s35, 1
      %p84 = por %p82, %p83
      %p86 = scmp.ne.s32.totalorder %s69, %s85
      %p87 = scmp.eq.s32.totalorder %s35, 0
      %p88 = por %p86, %p87
      %s90 = sadd.s32 %s89, 1
      %p93 = scmp.eq.s32.totalorder %s29, 1
      %p94 = scmp.ne.s32.totalorder %s89, %s91
      %p95 = scmp.eq.s32.totalorder %s29, 0
      %p96 = por %p94, %p95
      %p97 = scmp.ne.s32.totalorder %s89, %s91
      %p98 = scmp.eq.s32.totalorder %s34, 1
      %p99 = por %p97, %p98
      %p100 = scmp.ne.s32.totalorder %s91, %s92
      %p101 = scmp.eq.s32.totalorder %s34, 0
      %p102 = por %p100, %p101
      %p103 = scmp.ne.s32.totalorder %s91, %s92
      %p104 = scmp.eq.s32.totalorder %s35, 1
      %p105 = por %p103, %p104
      %p107 = scmp.ne.s32.totalorder %s92, %s106
      %p108 = scmp.eq.s32.totalorder %s35, 0
      %p109 = por %p107, %p108
      %s111 = sadd.s32 %s110, 1
      %p114 = scmp.eq.s32.totalorder %s29, 1
      %p115 = scmp.ne.s32.totalorder %s110, %s112
      %p116 = scmp.eq.s32.totalorder %s29, 0
      %p117 = por %p115, %p116
      %p118 = scmp.ne.s32.totalorder %s110, %s112
      %p119 = scmp.eq.s32.totalorder %s34, 1
      %p120 = por %p118, %p119
      %p121 = scmp.ne.s32.totalorder %s112, %s113
      %p122 = scmp.eq.s32.totalorder %s34, 0
      %p123 = por %p121, %p122
      %p124 = scmp.ne.s32.totalorder %s112, %s113
      %p125 = scmp.eq.s32.totalorder %s35, 1
      %p126 = por %p124, %p125
      %p128 = scmp.ne.s32.totalorder %s113, %s127
      %p129 = scmp.eq.s32.totalorder %s35, 0
      %p130 = por %p128, %p129
      %s132 = sadd.s32 %s131, 1
      %p135 = scmp.eq.s32.totalorder %s29, 1
      %p136 = scmp.ne.s32.totalorder %s131, %s133
      %p137 = scmp.eq.s32.totalorder %s29, 0
      %p138 = por %p136, %p137
      %p139 = scmp.ne.s32.totalorder %s131, %s133
      %p140 = scmp.eq.s32.totalorder %s34, 1
      %p141 = por %p139, %p140
      %p142 = scmp.ne.s32.totalorder %s133, %s134
      %p143 = scmp.eq.s32.totalorder %s34, 0
      %p144 = por %p142, %p143
      %p145 = scmp.ne.s32.totalorder %s133, %s134
      %p146 = scmp.eq.s32.totalorder %s35, 1
      %p147 = por %p145, %p146
      %p149 = scmp.ne.s32.totalorder %s134, %s148
      %p150 = scmp.eq.s32.totalorder %s35, 0
      %p151 = por %p149, %p150
      %s153 = sadd.s32 %s152, 1
      %p156 = scmp.eq.s32.totalorder %s29, 1
      %p157 = scmp.ne.s32.totalorder %s152, %s154
      %p158 = scmp.eq.s32.totalorder %s29, 0
      %p159 = por %p157, %p158
      %p160 = scmp.ne.s32.totalorder %s152, %s154
      %p161 = scmp.eq.s32.totalorder %s34, 1
      %p162 = por %p160, %p161
      %p163 = scmp.ne.s32.totalorder %s154, %s155
      %p164 = scmp.eq.s32.totalorder %s34, 0
      %p165 = por %p163, %p164
      %p166 = scmp.ne.s32.totalorder %s154, %s155
      %p167 = scmp.eq.s32.totalorder %s35, 1
      %p168 = por %p166, %p167
      %p170 = scmp.ne.s32.totalorder %s155, %s169
      %p171 = scmp.eq.s32.totalorder %s35, 0
      %p172 = por %p170, %p171
      %s174 = sadd.s32 %s173, 1
      %p177 = scmp.eq.s32.totalorder %s29, 1
      %p178 = scmp.ne.s32.totalorder %s173, %s175
      %p179 = scmp.eq.s32.totalorder %s29, 0
      %p180 = por %p178, %p179
      %p181 = scmp.ne.s32.totalorder %s173, %s175
      %p182 = scmp.eq.s32.totalorder %s34, 1
      %p183 = por %p181, %p182
      %p184 = scmp.ne.s32.totalorder %s175, %s176
      %p185 = scmp.eq.s32.totalorder %s34, 0
      %p186 = por %p184, %p185
      %p187 = scmp.ne.s32.totalorder %s175, %s176
      %p188 = scmp.eq.s32.totalorder %s35, 1
      %p189 = por %p187, %p188
      %p191 = scmp.ne.s32.totalorder %s176, %s190
      %p192 = scmp.eq.s32.totalorder %s35, 0
      %p193 = por %p191, %p192
      %s195 = sadd.s32 %s194, 1
      %p198 = scmp.eq.s32.totalorder %s29, 1
      %p199 = scmp.ne.s32.totalorder %s194, %s196
      %p200 = scmp.eq.s32.totalorder %s29, 0
      %p201 = por %p199, %p200
      %p202 = scmp.ne.s32.totalorder %s194, %s196
      %p203 = scmp.eq.s32.totalorder %s34, 1
      %p204 = por %p202, %p203
      %p205 = scmp.ne.s32.totalorder %s196, %s197
      %p206 = scmp.eq.s32.totalorder %s34, 0
      %p207 = por %p205, %p206
      %p208 = scmp.ne.s32.totalorder %s196, %s197
      %p209 = scmp.eq.s32.totalorder %s35, 1
      %p210 = por %p208, %p209
      %p212 = scmp.ne.s32.totalorder %s197, %s211
      %p213 = scmp.eq.s32.totalorder %s35, 0
      %p214 = por %p212, %p213
      %s216 = sadd.s32 %s215, 1
      %p219 = scmp.eq.s32.totalorder %s29, 1
      %p220 = scmp.ne.s32.totalorder %s215, %s217
      %p221 = scmp.eq.s32.totalorder %s29, 0
      %p222 = por %p220, %p221
      %p223 = scmp.ne.s32.totalorder %s215, %s217
      %p224 = scmp.eq.s32.totalorder %s34, 1
      %p225 = por %p223, %p224
      %p226 = scmp.ne.s32.totalorder %s217, %s218
      %p227 = scmp.eq.s32.totalorder %s34, 0
      %p228 = por %p226, %p227
      %p229 = scmp.ne.s32.totalorder %s217, %s218
      %p230 = scmp.eq.s32.totalorder %s35, 1
      %p231 = por %p229, %p230
      %p233 = scmp.ne.s32.totalorder %s218, %s232
      %p234 = scmp.eq.s32.totalorder %s35, 0
      %p235 = por %p233, %p234
      %s237 = sadd.s32 %s236, 1
      %p240 = scmp.eq.s32.totalorder %s29, 1
      %p241 = scmp.ne.s32.totalorder %s236, %s238
      %p242 = scmp.eq.s32.totalorder %s29, 0
      %p243 = por %p241, %p242
      %p244 = scmp.ne.s32.totalorder %s236, %s238
      %p245 = scmp.eq.s32.totalorder %s34, 1
      %p246 = por %p244, %p245
      %p247 = scmp.ne.s32.totalorder %s238, %s239
      %p248 = scmp.eq.s32.totalorder %s34, 0
      %p249 = por %p247, %p248
      %p250 = scmp.ne.s32.totalorder %s238, %s239
      %p251 = scmp.eq.s32.totalorder %s35, 1
      %p252 = por %p250, %p251
      %p254 = scmp.ne.s32.totalorder %s239, %s253
      %p255 = scmp.eq.s32.totalorder %s35, 0
      %p256 = por %p254, %p255
      %s258 = sadd.s32 %s257, 1
      %p261 = scmp.eq.s32.totalorder %s29, 1
      %p262 = scmp.ne.s32.totalorder %s257, %s259
      %p263 = scmp.eq.s32.totalorder %s29, 0
      %p264 = por %p262, %p263
      %p265 = scmp.ne.s32.totalorder %s257, %s259
      %p266 = scmp.eq.s32.totalorder %s34, 1
      %p267 = por %p265, %p266
      %p268 = scmp.ne.s32.totalorder %s259, %s260
      %p269 = scmp.eq.s32.totalorder %s34, 0
      %p270 = por %p268, %p269
      %p271 = scmp.ne.s32.totalorder %s259, %s260
      %p272 = scmp.eq.s32.totalorder %s35, 1
      %p273 = por %p271, %p272
      %p275 = scmp.ne.s32.totalorder %s260, %s274
      %p276 = scmp.eq.s32.totalorder %s35, 0
      %p277 = por %p275, %p276
      %s279 = sadd.s32 %s278, 1
      %p282 = scmp.eq.s32.totalorder %s29, 1
      %p283 = scmp.ne.s32.totalorder %s278, %s280
      %p284 = scmp.eq.s32.totalorder %s29, 0
      %p285 = por %p283, %p284
      %p286 = scmp.ne.s32.totalorder %s278, %s280
      %p287 = scmp.eq.s32.totalorder %s34, 1
      %p288 = por %p286, %p287
      %p289 = scmp.ne.s32.totalorder %s280, %s281
      %p290 = scmp.eq.s32.totalorder %s34, 0
      %p291 = por %p289, %p290
      %p292 = scmp.ne.s32.totalorder %s280, %s281
      %p293 = scmp.eq.s32.totalorder %s35, 1
      %p294 = por %p292, %p293
      %p296 = scmp.ne.s32.totalorder %s281, %s295
      %p297 = scmp.eq.s32.totalorder %s35, 0
      %p298 = por %p296, %p297
      %s300 = sadd.s32 %s299, 1
      %p303 = scmp.eq.s32.totalorder %s29, 1
      %p304 = scmp.ne.s32.totalorder %s299, %s301
      %p305 = scmp.eq.s32.totalorder %s29, 0
      %p306 = por %p304, %p305
      %p307 = scmp.ne.s32.totalorder %s299, %s301
      %p308 = scmp.eq.s32.totalorder %s34, 1
      %p309 = por %p307, %p308
      %p310 = scmp.ne.s32.totalorder %s301, %s302
      %p311 = scmp.eq.s32.totalorder %s34, 0
      %p312 = por %p310, %p311
      %p313 = scmp.ne.s32.totalorder %s301, %s302
      %p314 = scmp.eq.s32.totalorder %s35, 1
      %p315 = por %p313, %p314
      %p317 = scmp.ne.s32.totalorder %s302, %s316
      %p318 = scmp.eq.s32.totalorder %s35, 0
      %p319 = por %p317, %p318
      %s321 = sadd.s32 %s320, 1
      %p324 = scmp.eq.s32.totalorder %s29, 1
      %p325 = scmp.ne.s32.totalorder %s320, %s322
      %p326 = scmp.eq.s32.totalorder %s29, 0
      %p327 = por %p325, %p326
      %p328 = scmp.ne.s32.totalorder %s320, %s322
      %p329 = scmp.eq.s32.totalorder %s34, 1
      %p330 = por %p328, %p329
      %p331 = scmp.ne.s32.totalorder %s322, %s323
      %p332 = scmp.eq.s32.totalorder %s34, 0
      %p333 = por %p331, %p332
      %p334 = scmp.ne.s32.totalorder %s322, %s323
      %p335 = scmp.eq.s32.totalorder %s35, 1
      %p336 = por %p334, %p335
      %p338 = scmp.ne.s32.totalorder %s323, %s337
      %p339 = scmp.eq.s32.totalorder %s35, 0
      %p340 = por %p338, %p339
      %s342 = sadd.s32 %s341, 1
      %p345 = scmp.eq.s32.totalorder %s29, 1
      %p346 = scmp.ne.s32.totalorder %s341, %s343
      %p347 = scmp.eq.s32.totalorder %s29, 0
      %p348 = por %p346, %p347
      %p349 = scmp.ne.s32.totalorder %s341, %s343
      %p350 = scmp.eq.s32.totalorder %s34, 1
      %p351 = por %p349, %p350
      %p352 = scmp.ne.s32.totalorder %s343, %s344
      %p353 = scmp.eq.s32.totalorder %s34, 0
      %p354 = por %p352, %p353
      %p355 = scmp.ne.s32.totalorder %s343, %s344
      %p356 = scmp.eq.s32.totalorder %s35, 1
      %p357 = por %p355, %p356
      %p359 = scmp.ne.s32.totalorder %s344, %s358
      %p360 = scmp.eq.s32.totalorder %s35, 0
      %p361 = por %p359, %p360
      %s363 = sadd.s32 %s362, 1
      %p366 = scmp.eq.s32.totalorder %s29, 1
      %p367 = scmp.ne.s32.totalorder %s362, %s364
      %p368 = scmp.eq.s32.totalorder %s29, 0
      %p369 = por %p367, %p368
      %p370 = scmp.ne.s32.totalorder %s362, %s364
      %p371 = scmp.eq.s32.totalorder %s34, 1
      %p372 = por %p370, %p371
      %p373 = scmp.ne.s32.totalorder %s364, %s365
      %p374 = scmp.eq.s32.totalorder %s34, 0
      %p375 = por %p373, %p374
      %p376 = scmp.ne.s32.totalorder %s364, %s365
      %p377 = scmp.eq.s32.totalorder %s35, 1
      %p378 = por %p376, %p377
      %p380 = scmp.ne.s32.totalorder %s365, %s379
      %p381 = scmp.eq.s32.totalorder %s35, 0
      %p382 = por %p380, %p381
      %s384 = sadd.s32 %s383, 1
      %p387 = scmp.eq.s32.totalorder %s29, 1
      %p388 = scmp.ne.s32.totalorder %s383, %s385
      %p389 = scmp.eq.s32.totalorder %s29, 0
      %p390 = por %p388, %p389
      %p391 = scmp.ne.s32.totalorder %s383, %s385
      %p392 = scmp.eq.s32.totalorder %s34, 1
      %p393 = por %p391, %p392
      %p394 = scmp.ne.s32.totalorder %s385, %s386
      %p395 = scmp.eq.s32.totalorder %s34, 0
      %p396 = por %p394, %p395
      %p397 = scmp.ne.s32.totalorder %s385, %s386
      %p398 = scmp.eq.s32.totalorder %s35, 1
      %p399 = por %p397, %p398
      %p401 = scmp.ne.s32.totalorder %s386, %s400
      %p402 = scmp.eq.s32.totalorder %s35, 0
      %p403 = por %p401, %p402
      %s405 = sadd.s32 %s404, 1
      %p408 = scmp.eq.s32.totalorder %s29, 1
      %p409 = scmp.ne.s32.totalorder %s404, %s406
      %p410 = scmp.eq.s32.totalorder %s29, 0
      %p411 = por %p409, %p410
      %p412 = scmp.ne.s32.totalorder %s404, %s406
      %p413 = scmp.eq.s32.totalorder %s34, 1
      %p414 = por %p412, %p413
      %p415 = scmp.ne.s32.totalorder %s406, %s407
      %p416 = scmp.eq.s32.totalorder %s34, 0
      %p417 = por %p415, %p416
      %p418 = scmp.ne.s32.totalorder %s406, %s407
      %p419 = scmp.eq.s32.totalorder %s35, 1
      %p420 = por %p418, %p419
      %p422 = scmp.ne.s32.totalorder %s407, %s421
      %p423 = scmp.eq.s32.totalorder %s35, 0
      %p424 = por %p422, %p423
      %s426 = sadd.s32 %s425, 1
      %p429 = scmp.eq.s32.totalorder %s29, 1
      %p430 = scmp.ne.s32.totalorder %s425, %s427
      %p431 = scmp.eq.s32.totalorder %s29, 0
      %p432 = por %p430, %p431
      %p433 = scmp.ne.s32.totalorder %s425, %s427
      %p434 = scmp.eq.s32.totalorder %s34, 1
      %p435 = por %p433, %p434
      %p436 = scmp.ne.s32.totalorder %s427, %s428
      %p437 = scmp.eq.s32.totalorder %s34, 0
      %p438 = por %p436, %p437
      %p439 = scmp.ne.s32.totalorder %s427, %s428
      %p440 = scmp.eq.s32.totalorder %s35, 1
      %p441 = por %p439, %p440
      %p443 = scmp.ne.s32.totalorder %s428, %s442
      %p444 = scmp.eq.s32.totalorder %s35, 0
      %p445 = por %p443, %p444
      %s447 = sadd.s32 %s446, 1
      %p450 = scmp.eq.s32.totalorder %s29, 1
      %p451 = scmp.ne.s32.totalorder %s446, %s448
      %p452 = scmp.eq.s32.totalorder %s29, 0
      %p453 = por %p451, %p452
      %p454 = scmp.ne.s32.totalorder %s446, %s448
      %p455 = scmp.eq.s32.totalorder %s34, 1
      %p456 = por %p454, %p455
      %p457 = scmp.ne.s32.totalorder %s448, %s449
      %p458 = scmp.eq.s32.totalorder %s34, 0
      %p459 = por %p457, %p458
      %p460 = scmp.ne.s32.totalorder %s448, %s449
      %p461 = scmp.eq.s32.totalorder %s35, 1
      %p462 = por %p460, %p461
      %p464 = scmp.ne.s32.totalorder %s449, %s463
      %p465 = scmp.eq.s32.totalorder %s35, 0
      %p466 = por %p464, %p465
      %s468 = sadd.s32 %s467, 1
      %p471 = scmp.eq.s32.totalorder %s29, 1
      %p472 = scmp.ne.s32.totalorder %s467, %s469
      %p473 = scmp.eq.s32.totalorder %s29, 0
      %p474 = por %p472, %p473
      %p475 = scmp.ne.s32.totalorder %s467, %s469
      %p476 = scmp.eq.s32.totalorder %s34, 1
      %p477 = por %p475, %p476
      %p478 = scmp.ne.s32.totalorder %s469, %s470
      %p479 = scmp.eq.s32.totalorder %s34, 0
      %p480 = por %p478, %p479
      %p481 = scmp.ne.s32.totalorder %s469, %s470
      %p482 = scmp.eq.s32.totalorder %s35, 1
      %p483 = por %p481, %p482
      %p485 = scmp.ne.s32.totalorder %s470, %s484
      %p486 = scmp.eq.s32.totalorder %s35, 0
      %p487 = por %p485, %p486
      %s489 = sadd.s32 %s488, 1
      %p492 = scmp.eq.s32.totalorder %s29, 1
      %p493 = scmp.ne.s32.totalorder %s488, %s490
      %p494 = scmp.eq.s32.totalorder %s29, 0
      %p495 = por %p493, %p494
      %p496 = scmp.ne.s32.totalorder %s488, %s490
      %p497 = scmp.eq.s32.totalorder %s34, 1
      %p498 = por %p496, %p497
      %p499 = scmp.ne.s32.totalorder %s490, %s491
      %p500 = scmp.eq.s32.totalorder %s34, 0
      %p501 = por %p499, %p500
      %p502 = scmp.ne.s32.totalorder %s490, %s491
      %p503 = scmp.eq.s32.totalorder %s35, 1
      %p504 = por %p502, %p503
      %p506 = scmp.ne.s32.totalorder %s491, %s505
      %p507 = scmp.eq.s32.totalorder %s35, 0
      %p508 = por %p506, %p507
      %s510 = sadd.s32 %s509, 1
      %p513 = scmp.eq.s32.totalorder %s29, 1
      %p514 = scmp.ne.s32.totalorder %s509, %s511
      %p515 = scmp.eq.s32.totalorder %s29, 0
      %p516 = por %p514, %p515
      %p517 = scmp.ne.s32.totalorder %s509, %s511
      %p518 = scmp.eq.s32.totalorder %s34, 1
      %p519 = por %p517, %p518
      %p520 = scmp.ne.s32.totalorder %s511, %s512
      %p521 = scmp.eq.s32.totalorder %s34, 0
      %p522 = por %p520, %p521
      %p523 = scmp.ne.s32.totalorder %s511, %s512
      %p524 = scmp.eq.s32.totalorder %s35, 1
      %p525 = por %p523, %p524
      %p527 = scmp.ne.s32.totalorder %s512, %s526
      %p528 = scmp.eq.s32.totalorder %s35, 0
      %p529 = por %p527, %p528
      %s530 = ssub.s32 %s29, %s36
      %p531 = scmp.eq.s32.totalorder %s530, 0
      %s533 = sadd.s32 %s532, 1
      %s534 = scalar_select %p531, %s532, %s533
      %p537 = pneg %p531
      %p538 = scmp.eq.s32.totalorder %s29, 1
      %p539 = por %p537, %p538
      %p540 = scmp.ne.s32.totalorder %s532, %s535
      %p541 = scmp.eq.s32.totalorder %s29, 0
      %p542 = por %p540, %p541
      %p543 = scmp.ne.s32.totalorder %s532, %s535
      %p544 = scmp.eq.s32.totalorder %s34, 1
      %p545 = por %p543, %p544
      %p546 = scmp.ne.s32.totalorder %s535, %s536
      %p547 = scmp.eq.s32.totalorder %s34, 0
      %p548 = por %p546, %p547
      %p549 = scmp.ne.s32.totalorder %s535, %s536
      %p550 = scmp.eq.s32.totalorder %s35, 1
      %p551 = por %p549, %p550
      %p553 = scmp.ne.s32.totalorder %s536, %s552
      %p554 = scmp.eq.s32.totalorder %s35, 0
      %p555 = por %p553, %p554
      %p556 = scmp.le.s32.totalorder 1, %s29
      %p557 = scmp.lt.s32.totalorder %s29, 3
      %p558 = pnand %p556, %p557
      %p559 = pneg %p558
      // Predicated region
      $region9: #{fwd.1} parent=5 // pred_check
        _
      $region10: #{fwd.1} parent=5 // pred_check_branch
        %561 = sbr.rel (%p558) target = $region12
      $region11: #{fwd.1} parent=5 // pred_region
        %s562 = ssub.s32 %s29, 1
        // Predicated region
        $region13: #{fwd.1} parent=11 // pred_check
          %p563 = pneg %p102
        $region14: #{fwd.1} parent=11 // pred_check_branch
          %565 = sbr.rel (%p563) target = $region16
        $region15: #{fwd.1} parent=11 // pred_region
          _
        $region16: #{fwd.1} parent=11 // pred_fallthru
          _
        // Predicated region
        $region17: #{fwd.1} parent=11 // pred_check
          %p566 = pneg %p123
        $region18: #{fwd.1} parent=11 // pred_check_branch
          %568 = sbr.rel (%p566) target = $region20
        $region19: #{fwd.1} parent=11 // pred_region
          _
        $region20: #{fwd.1} parent=11 // pred_fallthru
          _
        // Predicated region
        $region21: #{fwd.1} parent=11 // pred_check
          %p569 = pneg %p144
        $region22: #{fwd.1} parent=11 // pred_check_branch
          %571 = sbr.rel (%p569) target = $region24
        $region23: #{fwd.1} parent=11 // pred_region
          _
        $region24: #{fwd.1} parent=11 // pred_fallthru
          _
        // Predicated region
        $region25: #{fwd.1} parent=11 // pred_check
          %p572 = pneg %p165
        $region26: #{fwd.1} parent=11 // pred_check_branch
          %574 = sbr.rel (%p572) target = $region28
        $region27: #{fwd.1} parent=11 // pred_region
          _
        $region28: #{fwd.1} parent=11 // pred_fallthru
          _
        // Predicated region
        $region29: #{fwd.1} parent=11 // pred_check
          %p575 = pneg %p186
        $region30: #{fwd.1} parent=11 // pred_check_branch
          %577 = sbr.rel (%p575) target = $region32
        $region31: #{fwd.1} parent=11 // pred_region
          _
        $region32: #{fwd.1} parent=11 // pred_fallthru
          _
        // Predicated region
        $region33: #{fwd.1} parent=11 // pred_check
          %p578 = pneg %p207
        $region34: #{fwd.1} parent=11 // pred_check_branch
          %580 = sbr.rel (%p578) target = $region36
        $region35: #{fwd.1} parent=11 // pred_region
          _
        $region36: #{fwd.1} parent=11 // pred_fallthru
          _
        // Predicated region
        $region37: #{fwd.1} parent=11 // pred_check
          %p581 = pneg %p228
        $region38: #{fwd.1} parent=11 // pred_check_branch
          %583 = sbr.rel (%p581) target = $region40
        $region39: #{fwd.1} parent=11 // pred_region
          _
        $region40: #{fwd.1} parent=11 // pred_fallthru
          _
        // Predicated region
        $region41: #{fwd.1} parent=11 // pred_check
          %p584 = pneg %p249
        $region42: #{fwd.1} parent=11 // pred_check_branch
          %586 = sbr.rel (%p584) target = $region44
        $region43: #{fwd.1} parent=11 // pred_region
          _
        $region44: #{fwd.1} parent=11 // pred_fallthru
          _
        // Predicated region
        $region45: #{fwd.1} parent=11 // pred_check
          %p587 = pneg %p270
        $region46: #{fwd.1} parent=11 // pred_check_branch
          %589 = sbr.rel (%p587) target = $region48
        $region47: #{fwd.1} parent=11 // pred_region
          _
        $region48: #{fwd.1} parent=11 // pred_fallthru
          _
        // Predicated region
        $region49: #{fwd.1} parent=11 // pred_check
          %p590 = pneg %p291
        $region50: #{fwd.1} parent=11 // pred_check_branch
          %592 = sbr.rel (%p590) target = $region52
        $region51: #{fwd.1} parent=11 // pred_region
          _
        $region52: #{fwd.1} parent=11 // pred_fallthru
          _
        // Predicated region
        $region53: #{fwd.1} parent=11 // pred_check
          %p593 = pneg %p312
        $region54: #{fwd.1} parent=11 // pred_check_branch
          %595 = sbr.rel (%p593) target = $region56
        $region55: #{fwd.1} parent=11 // pred_region
          _
        $region56: #{fwd.1} parent=11 // pred_fallthru
          _
        // Predicated region
        $region57: #{fwd.1} parent=11 // pred_check
          %p596 = pneg %p333
        $region58: #{fwd.1} parent=11 // pred_check_branch
          %598 = sbr.rel (%p596) target = $region60
        $region59: #{fwd.1} parent=11 // pred_region
          _
        $region60: #{fwd.1} parent=11 // pred_fallthru
          _
        // Predicated region
        $region61: #{fwd.1} parent=11 // pred_check
          %p599 = pneg %p354
        $region62: #{fwd.1} parent=11 // pred_check_branch
          %601 = sbr.rel (%p599) target = $region64
        $region63: #{fwd.1} parent=11 // pred_region
          _
        $region64: #{fwd.1} parent=11 // pred_fallthru
          _
        // Predicated region
        $region65: #{fwd.1} parent=11 // pred_check
          %p602 = pneg %p375
        $region66: #{fwd.1} parent=11 // pred_check_branch
          %604 = sbr.rel (%p602) target = $region68
        $region67: #{fwd.1} parent=11 // pred_region
          _
        $region68: #{fwd.1} parent=11 // pred_fallthru
          _
        // Predicated region
        $region69: #{fwd.1} parent=11 // pred_check
          %p605 = pneg %p396
        $region70: #{fwd.1} parent=11 // pred_check_branch
          %607 = sbr.rel (%p605) target = $region72
        $region71: #{fwd.1} parent=11 // pred_region
          _
        $region72: #{fwd.1} parent=11 // pred_fallthru
          _
        // Predicated region
        $region73: #{fwd.1} parent=11 // pred_check
          %p608 = pneg %p417
        $region74: #{fwd.1} parent=11 // pred_check_branch
          %610 = sbr.rel (%p608) target = $region76
        $region75: #{fwd.1} parent=11 // pred_region
          _
        $region76: #{fwd.1} parent=11 // pred_fallthru
          _
        // Predicated region
        $region77: #{fwd.1} parent=11 // pred_check
          %p611 = pneg %p438
        $region78: #{fwd.1} parent=11 // pred_check_branch
          %613 = sbr.rel (%p611) target = $region80
        $region79: #{fwd.1} parent=11 // pred_region
          _
        $region80: #{fwd.1} parent=11 // pred_fallthru
          _
        // Predicated region
        $region81: #{fwd.1} parent=11 // pred_check
          %p614 = pneg %p459
        $region82: #{fwd.1} parent=11 // pred_check_branch
          %616 = sbr.rel (%p614) target = $region84
        $region83: #{fwd.1} parent=11 // pred_region
          _
        $region84: #{fwd.1} parent=11 // pred_fallthru
          _
        // Predicated region
        $region85: #{fwd.1} parent=11 // pred_check
          %p617 = pneg %p480
        $region86: #{fwd.1} parent=11 // pred_check_branch
          %619 = sbr.rel (%p617) target = $region88
        $region87: #{fwd.1} parent=11 // pred_region
          _
        $region88: #{fwd.1} parent=11 // pred_fallthru
          _
        // Predicated region
        $region89: #{fwd.1} parent=11 // pred_check
          %p620 = pneg %p501
        $region90: #{fwd.1} parent=11 // pred_check_branch
          %622 = sbr.rel (%p620) target = $region92
        $region91: #{fwd.1} parent=11 // pred_region
          _
        $region92: #{fwd.1} parent=11 // pred_fallthru
          _
        // Predicated region
        $region93: #{fwd.1} parent=11 // pred_check
          %p623 = pneg %p522
        $region94: #{fwd.1} parent=11 // pred_check_branch
          %625 = sbr.rel (%p623) target = $region96
        $region95: #{fwd.1} parent=11 // pred_region
          _
        $region96: #{fwd.1} parent=11 // pred_fallthru
          _
      $region12: #{fwd.1} parent=5 // pred_fallthru
        _
      %p626 = scmp.lt.s32.totalorder %s29, 2
      // Predicated region
      $region97: #{fwd.1} parent=5 // pred_check
        %p627 = pneg %p626
      $region98: #{fwd.1} parent=5 // pred_check_branch
        %629 = sbr.rel (%p627) target = $region100
      $region99: #{fwd.1} parent=5 // pred_region
        // Predicated region
        $region101: #{fwd.1} parent=99 // pred_check
          %p630 = pneg %p49
        $region102: #{fwd.1} parent=99 // pred_check_branch
          %632 = sbr.rel (%p630) target = $region104
        $region103: #{fwd.1} parent=99 // pred_region
          %s633 = smul.u32 4, %s29
          %p634 = scmp.lt.s32.totalorder %s633, 7
          %s635 = scalar_select %p634, %s633, 7
          %s636 = smul.addr %s635, 4
          %s637 = smul.addr %s636, 8
          %s638 = scalar_lea.vmem %s0, %s637
          %s639 = smul.u32 4, %s29
        $region104: #{fwd.1} parent=99 // pred_fallthru
          _
        // Predicated region
        $region105: #{fwd.1} parent=99 // pred_check
          %p640 = pneg %p75
        $region106: #{fwd.1} parent=99 // pred_check_branch
          %642 = sbr.rel (%p640) target = $region108
        $region107: #{fwd.1} parent=99 // pred_region
          %s643 = sand.u32 %s65, 1
          %s644 = sand.u32 %s65, 1
          %s645 = smul.addr %s644, 64
          %s646 = scalar_lea.vmem [#allocation2], %s645
          %s647 = smul.u32 4, %s29
          %s648 = smul.addr %s647, 2
          %s649 = smul.addr %s648, 4
          %s650 = scalar_lea.vmem %s1, %s649
          // Predicated region
          $region109: #{fwd.1} parent=107 // pred_check
            _
          $region110: #{fwd.1} parent=107 // pred_check_branch
            %652 = sbr.rel (0) target = $region112
          $region111: #{fwd.1} parent=107 // pred_region
            // Predicated region
            $region113: #{fwd.1} parent=111 // pred_check
              _
            $region114: #{fwd.1} parent=111 // pred_check_branch
              %654 = sbr.rel target = $region116
            $region115: #{fwd.1} parent=111 // pred_region
              // Predicated region
              $region128: #{fwd.1} parent=115 // pred_check
                _
              $region129: #{fwd.1} parent=115 // pred_check_branch
                %700 = sbr.rel (0) target = $region131
              $region130: #{fwd.1} parent=115 // pred_region
                loop: start=0, step=1, limit=1
                $region132: #{fwd.1} parent=130 // loop_pre_header
                  _
                $region133: #{fwd.1} parent=130 // loop_header
                  %s702 = sphi 0, %s706
                  %p703 = scmp.ge.s32.totalorder %s702, 1
                  %s707 = sphi %s650, %s650
                  %s708 = sphi %s646, %s646
                $region134: #{fwd.1} parent=130 // loop_header_branch
                  %705 = sbr.rel (%p703) target = $region138
                $region135: #{fwd.1} parent=130 // loop_body
                  _
                $region136: #{fwd.1} parent=130 // loop_footer
                  %s706 = sadd.s32 1, %s702
                $region137: #{fwd.1} parent=130 // loop_footer_branch
                  %701 = sbr.rel target = $region133
                $region138: #{fwd.1} parent=130 // loop_exit
                  _
                %s710 = ssub.s32 16, 1
                loop: start=0, step=1, limit=1
                $region139: #{fwd.1} parent=130 // loop_pre_header
                  _
                $region140: #{fwd.1} parent=130 // loop_header
                  %s712 = sphi 0, %s716
                  %p713 = scmp.ge.s32.totalorder %s712, 1
                  %s717 = sphi %s650, %s650
                  %s718 = sphi %s646, %s646
                $region141: #{fwd.1} parent=130 // loop_header_branch
                  %715 = sbr.rel (%p713) target = $region145
                $region142: #{fwd.1} parent=130 // loop_body
                  %v719 = vld [vmem:[%s717] sm:%s710]
                  %720 = vst [vmem:[%s718] sm:%s710] %v719
                  %v721 = vld [vmem:[%s717 + $0x4] sm:%s710]
                  %722 = vst [vmem:[%s718 + $0x4] sm:%s710] %v721
                  %v723 = vld [vmem:[%s717 + $0x8] sm:%s710]
                  %724 = vst [vmem:[%s718 + $0x8] sm:%s710] %v723
                  %v725 = vld [vmem:[%s717 + $0xc] sm:%s710]
                  %726 = vst [vmem:[%s718 + $0xc] sm:%s710] %v725
                  %v727 = vld [vmem:[%s717 + $0x10] sm:%s710]
                  %728 = vst [vmem:[%s718 + $0x10] sm:%s710] %v727
                  %v729 = vld [vmem:[%s717 + $0x14] sm:%s710]
                  %730 = vst [vmem:[%s718 + $0x14] sm:%s710] %v729
                  %v731 = vld [vmem:[%s717 + $0x18] sm:%s710]
                  %732 = vst [vmem:[%s718 + $0x18] sm:%s710] %v731
                  %v733 = vld [vmem:[%s717 + $0x1c] sm:%s710]
                  %734 = vst [vmem:[%s718 + $0x1c] sm:%s710] %v733
                  %v735 = vld [vmem:[%s717 + $0x40] sm:%s710]
                  %736 = vst [vmem:[%s718 + $0x20] sm:%s710] %v735
                  %v737 = vld [vmem:[%s717 + $0x44] sm:%s710]
                  %738 = vst [vmem:[%s718 + $0x24] sm:%s710] %v737
                  %v739 = vld [vmem:[%s717 + $0x48] sm:%s710]
                  %740 = vst [vmem:[%s718 + $0x28] sm:%s710] %v739
                  %v741 = vld [vmem:[%s717 + $0x4c] sm:%s710]
                  %742 = vst [vmem:[%s718 + $0x2c] sm:%s710] %v741
                  %v743 = vld [vmem:[%s717 + $0x50] sm:%s710]
                  %744 = vst [vmem:[%s718 + $0x30] sm:%s710] %v743
                  %v745 = vld [vmem:[%s717 + $0x54] sm:%s710]
                  %746 = vst [vmem:[%s718 + $0x34] sm:%s710] %v745
                  %v747 = vld [vmem:[%s717 + $0x58] sm:%s710]
                  %748 = vst [vmem:[%s718 + $0x38] sm:%s710] %v747
                  %v749 = vld [vmem:[%s717 + $0x5c] sm:%s710]
                  %750 = vst [vmem:[%s718 + $0x3c] sm:%s710] %v749
                $region143: #{fwd.1} parent=130 // loop_footer
                  %s716 = sadd.s32 1, %s712
                $region144: #{fwd.1} parent=130 // loop_footer_branch
                  %711 = sbr.rel target = $region140
                $region145: #{fwd.1} parent=130 // loop_exit
                  _
              $region131: #{fwd.1} parent=115 // pred_fallthru
                _
            $region116: #{fwd.1} parent=111 // pred_fallthru
              _
            // Predicated region
            $region117: #{fwd.1} parent=111 // pred_check
              _
            $region118: #{fwd.1} parent=111 // pred_check_branch
              %656 = sbr.rel (0) target = $region120
            $region119: #{fwd.1} parent=111 // pred_region
              %s658 = ssub.s32 16, 1
              loop: start=0, step=1, limit=1
              $region121: #{fwd.1} parent=119 // loop_pre_header
                _
              $region122: #{fwd.1} parent=119 // loop_header
                %s660 = sphi 0, %s664
                %p661 = scmp.ge.s32.totalorder %s660, 1
                %s665 = sphi %s650, %s650
                %s666 = sphi %s646, %s646
              $region123: #{fwd.1} parent=119 // loop_header_branch
                %663 = sbr.rel (%p661) target = $region127
              $region124: #{fwd.1} parent=119 // loop_body
                %v667 = vld [vmem:[%s665] sm:%s658]
                %668 = vst [vmem:[%s666] sm:%s658] %v667
                %v669 = vld [vmem:[%s665 + $0x4] sm:%s658]
                %670 = vst [vmem:[%s666 + $0x4] sm:%s658] %v669
                %v671 = vld [vmem:[%s665 + $0x8] sm:%s658]
                %672 = vst [vmem:[%s666 + $0x8] sm:%s658] %v671
                %v673 = vld [vmem:[%s665 + $0xc] sm:%s658]
                %674 = vst [vmem:[%s666 + $0xc] sm:%s658] %v673
                %v675 = vld [vmem:[%s665 + $0x10] sm:%s658]
                %676 = vst [vmem:[%s666 + $0x10] sm:%s658] %v675
                %v677 = vld [vmem:[%s665 + $0x14] sm:%s658]
                %678 = vst [vmem:[%s666 + $0x14] sm:%s658] %v677
                %v679 = vld [vmem:[%s665 + $0x18] sm:%s658]
                %680 = vst [vmem:[%s666 + $0x18] sm:%s658] %v679
                %v681 = vld [vmem:[%s665 + $0x1c] sm:%s658]
                %682 = vst [vmem:[%s666 + $0x1c] sm:%s658] %v681
                %v683 = vld [vmem:[%s665 + $0x40] sm:%s658]
                %684 = vst [vmem:[%s666 + $0x20] sm:%s658] %v683
                %v685 = vld [vmem:[%s665 + $0x44] sm:%s658]
                %686 = vst [vmem:[%s666 + $0x24] sm:%s658] %v685
                %v687 = vld [vmem:[%s665 + $0x48] sm:%s658]
                %688 = vst [vmem:[%s666 + $0x28] sm:%s658] %v687
                %v689 = vld [vmem:[%s665 + $0x4c] sm:%s658]
                %690 = vst [vmem:[%s666 + $0x2c] sm:%s658] %v689
                %v691 = vld [vmem:[%s665 + $0x50] sm:%s658]
                %692 = vst [vmem:[%s666 + $0x30] sm:%s658] %v691
                %v693 = vld [vmem:[%s665 + $0x54] sm:%s658]
                %694 = vst [vmem:[%s666 + $0x34] sm:%s658] %v693
                %v695 = vld [vmem:[%s665 + $0x58] sm:%s658]
                %696 = vst [vmem:[%s666 + $0x38] sm:%s658] %v695
                %v697 = vld [vmem:[%s665 + $0x5c] sm:%s658]
                %698 = vst [vmem:[%s666 + $0x3c] sm:%s658] %v697
              $region125: #{fwd.1} parent=119 // loop_footer
                %s664 = sadd.s32 1, %s660
              $region126: #{fwd.1} parent=119 // loop_footer_branch
                %659 = sbr.rel target = $region122
              $region127: #{fwd.1} parent=119 // loop_exit
                _
            $region120: #{fwd.1} parent=111 // pred_fallthru
              _
          $region112: #{fwd.1} parent=107 // pred_fallthru
            _
          %751 = vnop
        $region108: #{fwd.1} parent=99 // pred_fallthru
          _
      $region100: #{fwd.1} parent=5 // pred_fallthru
        _
      %p752 = scmp.le.s32.totalorder 1, %s29
      %p753 = scmp.lt.s32.totalorder %s29, 3
      %p754 = pnand %p752, %p753
      %p755 = pneg %p754
      // Predicated region
      $region146: #{fwd.1} parent=5 // pred_check
        _
      $region147: #{fwd.1} parent=5 // pred_check_branch
        %757 = sbr.rel (%p754) target = $region149
      $region148: #{fwd.1} parent=5 // pred_region
        %s758 = ssub.s32 %s29, 1
        %s759 = sand.u32 %s68, 1
        %s760 = sand.u32 %s68, 1
        %s761 = smul.addr %s760, 64
        %s762 = scalar_lea.vmem [#allocation2], %s761
        // Predicated region
        $region150: #{fwd.1} parent=148 // pred_check
          %p763 = pneg %p81
        $region151: #{fwd.1} parent=148 // pred_check_branch
          %765 = sbr.rel (%p763) target = $region153
        $region152: #{fwd.1} parent=148 // pred_region
          _
        $region153: #{fwd.1} parent=148 // pred_fallthru
          _
        %s766 = smul.u32 4, %s34
        %p767 = scmp.lt.s32.totalorder %s766, 7
        %s768 = scalar_select %p767, %s766, 7
        %s769 = smul.addr %s768, 4
        %s770 = smul.addr %s769, 8
        %s771 = scalar_lea.vmem %s0, %s770
        %p772 = pneg %p55
        %p773 = pneg %p52
        %s774 = sand.u32 %s68, 1
        %s775 = sand.u32 %s68, 1
        %s776 = smul.addr %s775, 64
        %s777 = scalar_lea.vmem [#allocation2], %s776
        %p778 = pneg %p81
        %p779 = pneg %p78
        %p780 = pneg %p102
        %p781 = pneg %p99
        %p782 = pneg %p123
        %p783 = pneg %p120
        %p784 = pneg %p144
        %p785 = pneg %p141
        %p786 = pneg %p165
        %p787 = pneg %p162
        %p788 = pneg %p186
        %p789 = pneg %p183
        %p790 = pneg %p207
        %p791 = pneg %p204
        %p792 = pneg %p228
        %p793 = pneg %p225
        %p794 = pneg %p249
        %p795 = pneg %p246
        %p796 = pneg %p270
        %p797 = pneg %p267
        %p798 = pneg %p291
        %p799 = pneg %p288
        %p800 = pneg %p312
        %p801 = pneg %p309
        %p802 = pneg %p333
        %p803 = pneg %p330
        %p804 = pneg %p354
        %p805 = pneg %p351
        %p806 = pneg %p375
        %p807 = pneg %p372
        %p808 = pneg %p396
        %p809 = pneg %p393
        %p810 = pneg %p417
        %p811 = pneg %p414
        %p812 = pneg %p438
        %p813 = pneg %p435
        %p814 = pneg %p459
        %p815 = pneg %p456
        %p816 = pneg %p480
        %p817 = pneg %p477
        %p818 = pneg %p501
        %p819 = pneg %p498
        %p820 = pneg %p522
        %p821 = pneg %p519
        %p822 = pneg %p548
        %p823 = pneg %p545
        %s824 = smul.u32 4, %s34
        %p825 = scmp.lt.s32.totalorder %s824, 7
        %s826 = scalar_select %p825, %s824, 7
        %s827 = smul.addr %s826, 4
        %s828 = smul.addr %s827, 8
        %s829 = scalar_lea.vmem %s23, %s828
        %s830 = smul.u32 4, %s34
        %p831 = scmp.lt.s32.totalorder %s830, 7
        %s832 = scalar_select %p831, %s830, 7
        %s833 = smul.addr %s832, 4
        %s834 = smul.addr %s833, 8
        %s835 = scalar_lea.vmem %s0, %s834
        %s836 = smul.u32 4, %s34
        %s837 = smul.u32 4, %s34
        %s838 = smul.u32 4, %s34
        %p839 = scmp.lt.s32.totalorder %s838, 7
        %s840 = scalar_select %p839, %s838, 7
        %s841 = smul.addr %s840, 4
        %s842 = smul.addr %s841, 8
        %s843 = scalar_lea.vmem %s23, %s842
        %s844 = smul.u32 4, %s34
        %v846 = vld [vmem:[%s835] sm:$0xff]
        %v847 = vld [vmem:[%s835 + $0x8] sm:$0xff]
        %v848 = vld [vmem:[%s835 + $0x10] sm:$0xff]
        %v849 = vld [vmem:[%s835 + $0x18] sm:$0xff]
        %v850 = vld [vmem:[%s835 + $0x20] sm:$0xff]
        %v851 = vld [vmem:[%s835 + $0x28] sm:$0xff]
        %v852 = vld [vmem:[%s835 + $0x30] sm:$0xff]
        %v853 = vld [vmem:[%s835 + $0x38] sm:$0xff]
        %v854 = vld [vmem:[%s835 + $0x40] sm:$0xff]
        %v855 = vld [vmem:[%s835 + $0x48] sm:$0xff]
        %v856 = vld [vmem:[%s835 + $0x50] sm:$0xff]
        %v857 = vld [vmem:[%s835 + $0x58] sm:$0xff]
        %v858 = vld [vmem:[%s835 + $0x60] sm:$0xff]
        %v859 = vld [vmem:[%s835 + $0x68] sm:$0xff]
        %v860 = vld [vmem:[%s835 + $0x70] sm:$0xff]
        %v861 = vld [vmem:[%s835 + $0x78] sm:$0xff]
        %v862 = vld [vmem:[%s2] sm:$0xff]
        %v863 = vld [vmem:[%s2 + $0x8] sm:$0xff]
        %v864 = vld [vmem:[%s2 + $0x10] sm:$0xff]
        %v865 = vld [vmem:[%s2 + $0x18] sm:$0xff]
        %v866 = vadd.f32 %v846, %v862
        %v867 = vadd.f32 %v847, %v863
        %v868 = vadd.f32 %v848, %v864
        %v869 = vadd.f32 %v849, %v865
        %v870 = vadd.f32 %v850, %v862
        %v871 = vadd.f32 %v851, %v863
        %v872 = vadd.f32 %v852, %v864
        %v873 = vadd.f32 %v853, %v865
        %v874 = vadd.f32 %v854, %v862
        %v875 = vadd.f32 %v855, %v863
        %v876 = vadd.f32 %v856, %v864
        %v877 = vadd.f32 %v857, %v865
        %v878 = vadd.f32 %v858, %v862
        %v879 = vadd.f32 %v859, %v863
        %v880 = vadd.f32 %v860, %v864
        %v881 = vadd.f32 %v861, %v865
        %v882 = vpack.c.bf16 %v867, %v866
        %v883 = vpack.c.bf16 %v869, %v868
        %v884 = vpack.c.bf16 %v871, %v870
        %v885 = vpack.c.bf16 %v873, %v872
        %v886 = vpack.c.bf16 %v875, %v874
        %v887 = vpack.c.bf16 %v877, %v876
        %v888 = vpack.c.bf16 %v879, %v878
        %v889 = vpack.c.bf16 %v881, %v880
        %v890 = vld [vmem:[%s3] sm:$0xf]
        %v891 = vld [vmem:[%s3 + $0x4] sm:$0xf]
        %v892 = vld [vmem:[%s4] sm:$0x1]
        %v894 = vperm.slane %v892, 0
        %v898 = vunpack.c.l.b16 %v890
        %v899 = vunpack.c.l.b16 %v891
        %v900 = vpack.c.b16 %v899, %v898
        %vm902 = vcmask 130048
        %v904 = vsel %vm902, %v882, 0
        %v907 = vsel %vm902, %v883, 0
        %v910 = vsel %vm902, %v884, 0
        %v913 = vsel %vm902, %v885, 0
        %v916 = vsel %vm902, %v886, 0
        %v919 = vsel %vm902, %v887, 0
        %v922 = vsel %vm902, %v888, 0
        %v925 = vsel %vm902, %v889, 0
        %927 = vmatpush.bf16.msra.mxu0 0
        %928 = vmatpush.bf16.msra.mxu0 0
        %929 = vmatpush.bf16.msra.mxu0 0
        %930 = vmatpush.bf16.msra.mxu0 0
        %931 = vmatpush.bf16.msra.mxu0 0
        %932 = vmatpush.bf16.msra.mxu0 0
        %933 = vmatpush.bf16.msra.mxu0 0
        %934 = vmatpush.bf16.msra.mxu0 %v900
        %935 = vmatmul.bf16.gmra.mxu0 %v904
        %v936 = vpop.f32.mrf.mxu0
        %v937 = vadd.f32 %v894, %v936
        %v938 = vpop.f32.mrf.mxu0
        %v939 = vadd.f32 %v894, %v938
        %940 = vmatmul.bf16.gmra.mxu0 %v907
        %v941 = vpop.f32.mrf.mxu0
        %v942 = vadd.f32 %v894, %v941
        %v943 = vpop.f32.mrf.mxu0
        %v944 = vadd.f32 %v894, %v943
        %945 = vmatmul.bf16.gmra.mxu0 %v910
        %v946 = vpop.f32.mrf.mxu0
        %v947 = vadd.f32 %v894, %v946
        %v948 = vpop.f32.mrf.mxu0
        %v949 = vadd.f32 %v894, %v948
        %950 = vmatmul.bf16.gmra.mxu0 %v913
        %v951 = vpop.f32.mrf.mxu0
        %v952 = vadd.f32 %v894, %v951
        %v953 = vpop.f32.mrf.mxu0
        %v954 = vadd.f32 %v894, %v953
        %955 = vmatmul.bf16.gmra.mxu0 %v916
        %v956 = vpop.f32.mrf.mxu0
        %v957 = vadd.f32 %v894, %v956
        %v958 = vpop.f32.mrf.mxu0
        %v959 = vadd.f32 %v894, %v958
        %960 = vmatmul.bf16.gmra.mxu0 %v919
        %v961 = vpop.f32.mrf.mxu0
        %v962 = vadd.f32 %v894, %v961
        %v963 = vpop.f32.mrf.mxu0
        %v964 = vadd.f32 %v894, %v963
        %965 = vmatmul.bf16.gmra.mxu0 %v922
        %v966 = vpop.f32.mrf.mxu0
        %v967 = vadd.f32 %v894, %v966
        %v968 = vpop.f32.mrf.mxu0
        %v969 = vadd.f32 %v894, %v968
        %970 = vmatmul.bf16.gmra.mxu0 %v925
        %v971 = vpop.f32.mrf.mxu0
        %v972 = vadd.f32 %v894, %v971
        %v973 = vpop.f32.mrf.mxu0
        %v974 = vadd.f32 %v894, %v973
        %975 = vdwg.mxu0
        %v976 = vpack.c.bf16 %v937, %v937
        %v977 = vpack.c.bf16 %v939, %v939
        %v978 = vpack.c.bf16 %v942, %v942
        %v979 = vpack.c.bf16 %v944, %v944
        %v980 = vpack.c.bf16 %v947, %v947
        %v981 = vpack.c.bf16 %v949, %v949
        %v982 = vpack.c.bf16 %v952, %v952
        %v983 = vpack.c.bf16 %v954, %v954
        %v984 = vpack.c.bf16 %v957, %v957
        %v985 = vpack.c.bf16 %v959, %v959
        %v986 = vpack.c.bf16 %v962, %v962
        %v987 = vpack.c.bf16 %v964, %v964
        %v988 = vpack.c.bf16 %v967, %v967
        %v989 = vpack.c.bf16 %v969, %v969
        %v990 = vpack.c.bf16 %v972, %v972
        %v991 = vpack.c.bf16 %v974, %v974
        %v992 = vld [vmem:[%s5] sm:$0xf]
        %v1009 = vunpack.c.l.b16 %v976
        %v1010 = vunpack.c.l.b16 %v977
        %v1011 = vunpack.c.l.b16 %v978
        %v1012 = vunpack.c.l.b16 %v979
        %v1013 = vunpack.c.l.b16 %v980
        %v1014 = vunpack.c.l.b16 %v981
        %v1015 = vunpack.c.l.b16 %v982
        %v1016 = vunpack.c.l.b16 %v983
        %v1017 = vunpack.c.l.b16 %v984
        %v1018 = vunpack.c.l.b16 %v985
        %v1019 = vunpack.c.l.b16 %v986
        %v1020 = vunpack.c.l.b16 %v987
        %v1021 = vunpack.c.l.b16 %v988
        %v1022 = vunpack.c.l.b16 %v989
        %v1023 = vunpack.c.l.b16 %v990
        %v1024 = vunpack.c.l.b16 %v991
        %v1025 = vpack.c.b16 %v1010, %v1009
        %v1026 = vpack.c.b16 %v1012, %v1011
        %v1027 = vpack.c.b16 %v1014, %v1013
        %v1028 = vpack.c.b16 %v1016, %v1015
        %v1029 = vpack.c.b16 %v1018, %v1017
        %v1030 = vpack.c.b16 %v1020, %v1019
        %v1031 = vpack.c.b16 %v1022, %v1021
        %v1032 = vpack.c.b16 %v1024, %v1023
        %1033 = vrot.lane.b32.xlu0 %v1025, 96
        %v1034 = vpop.permute.xlu0 %1033
        %1035 = vrot.lane.b32.xlu0 %v1026, 96
        %v1036 = vpop.permute.xlu0 %1035
        %1037 = vrot.lane.b32.xlu0 %v1027, 96
        %v1038 = vpop.permute.xlu0 %1037
        %1039 = vrot.lane.b32.xlu0 %v1028, 96
        %v1040 = vpop.permute.xlu0 %1039
        %1041 = vrot.lane.b32.xlu0 %v1029, 96
        %v1042 = vpop.permute.xlu0 %1041
        %1043 = vrot.lane.b32.xlu0 %v1030, 96
        %v1044 = vpop.permute.xlu0 %1043
        %1045 = vrot.lane.b32.xlu0 %v1031, 96
        %v1046 = vpop.permute.xlu0 %1045
        %1047 = vrot.lane.b32.xlu0 %v1032, 96
        %v1048 = vpop.permute.xlu0 %1047
        %vm1049 = vcmask 64512
        %v1051 = vsel %vm1049, %v1034, 0
        %v1054 = vsel %vm1049, %v1036, 0
        %v1057 = vsel %vm1049, %v1038, 0
        %v1060 = vsel %vm1049, %v1040, 0
        %v1063 = vsel %vm1049, %v1042, 0
        %v1066 = vsel %vm1049, %v1044, 0
        %v1069 = vsel %vm1049, %v1046, 0
        %v1072 = vsel %vm1049, %v1048, 0
        %vm1074 = vcmask 1043456
        %v1076 = vsel %vm1074, %v992, 0
        %1078 = vmatpush.bf16.msra.mxu0 0
        %1079 = vmatpush.bf16.msra.mxu0 0
        %1080 = vmatpush.bf16.msra.mxu0 0
        %1081 = vmatpush.bf16.msra.mxu0 0
        %1082 = vmatpush.bf16.msra.mxu0 0
        %1083 = vmatpush.bf16.msra.mxu0 0
        %1084 = vmatpush.bf16.msra.mxu0 0
        %1085 = vmatpush.bf16.msra.mxu0 %v1076
        %1086 = vmatmul.bf16.gmra.mxu0 %v1051
        %v1087 = vpop.f32.mrf.mxu0
        %v1088 = vadd.f32 0.0, %v1087
        %v1089 = vpop.f32.mrf.mxu0
        %v1090 = vadd.f32 0.0, %v1089
        %1091 = vmatmul.bf16.gmra.mxu0 %v1054
        %v1092 = vpop.f32.mrf.mxu0
        %v1093 = vadd.f32 0.0, %v1092
        %v1094 = vpop.f32.mrf.mxu0
        %v1095 = vadd.f32 0.0, %v1094
        %1096 = vmatmul.bf16.gmra.mxu0 %v1057
        %v1097 = vpop.f32.mrf.mxu0
        %v1098 = vadd.f32 0.0, %v1097
        %v1099 = vpop.f32.mrf.mxu0
        %v1100 = vadd.f32 0.0, %v1099
        %1101 = vmatmul.bf16.gmra.mxu0 %v1060
        %v1102 = vpop.f32.mrf.mxu0
        %v1103 = vadd.f32 0.0, %v1102
        %v1104 = vpop.f32.mrf.mxu0
        %v1105 = vadd.f32 0.0, %v1104
        %1106 = vmatmul.bf16.gmra.mxu0 %v1063
        %v1107 = vpop.f32.mrf.mxu0
        %v1108 = vadd.f32 0.0, %v1107
        %v1109 = vpop.f32.mrf.mxu0
        %v1110 = vadd.f32 0.0, %v1109
        %1111 = vmatmul.bf16.gmra.mxu0 %v1066
        %v1112 = vpop.f32.mrf.mxu0
        %v1113 = vadd.f32 0.0, %v1112
        %v1114 = vpop.f32.mrf.mxu0
        %v1115 = vadd.f32 0.0, %v1114
        %1116 = vmatmul.bf16.gmra.mxu0 %v1069
        %v1117 = vpop.f32.mrf.mxu0
        %v1118 = vadd.f32 0.0, %v1117
        %v1119 = vpop.f32.mrf.mxu0
        %v1120 = vadd.f32 0.0, %v1119
        %1121 = vmatmul.bf16.gmra.mxu0 %v1072
        %v1122 = vpop.f32.mrf.mxu0
        %v1123 = vadd.f32 0.0, %v1122
        %v1124 = vpop.f32.mrf.mxu0
        %v1125 = vadd.f32 0.0, %v1124
        %1126 = vdwg.mxu0
        %v1127 = vpack.c.bf16 %v1088, %v1088
        %v1128 = vpack.c.bf16 %v1090, %v1090
        %v1129 = vpack.c.bf16 %v1093, %v1093
        %v1130 = vpack.c.bf16 %v1095, %v1095
        %v1131 = vpack.c.bf16 %v1098, %v1098
        %v1132 = vpack.c.bf16 %v1100, %v1100
        %v1133 = vpack.c.bf16 %v1103, %v1103
        %v1134 = vpack.c.bf16 %v1105, %v1105
        %v1135 = vpack.c.bf16 %v1108, %v1108
        %v1136 = vpack.c.bf16 %v1110, %v1110
        %v1137 = vpack.c.bf16 %v1113, %v1113
        %v1138 = vpack.c.bf16 %v1115, %v1115
        %v1139 = vpack.c.bf16 %v1118, %v1118
        %v1140 = vpack.c.bf16 %v1120, %v1120
        %v1141 = vpack.c.bf16 %v1123, %v1123
        %v1142 = vpack.c.bf16 %v1125, %v1125
        %s1143 = scalar_lea.vmem %s5, 4
        %v1144 = vld [vmem:[%s1143] sm:$0xf]
        %1145 = vrot.lane.b32.xlu0 %v1025, 88
        %v1146 = vpop.permute.xlu0 %1145
        %1147 = vrot.lane.b32.xlu0 %v1026, 88
        %v1148 = vpop.permute.xlu0 %1147
        %1149 = vrot.lane.b32.xlu0 %v1027, 88
        %v1150 = vpop.permute.xlu0 %1149
        %1151 = vrot.lane.b32.xlu0 %v1028, 88
        %v1152 = vpop.permute.xlu0 %1151
        %1153 = vrot.lane.b32.xlu0 %v1029, 88
        %v1154 = vpop.permute.xlu0 %1153
        %1155 = vrot.lane.b32.xlu0 %v1030, 88
        %v1156 = vpop.permute.xlu0 %1155
        %1157 = vrot.lane.b32.xlu0 %v1031, 88
        %v1158 = vpop.permute.xlu0 %1157
        %1159 = vrot.lane.b32.xlu0 %v1032, 88
        %v1160 = vpop.permute.xlu0 %1159
        %v1162 = vsel %vm1049, %v1146, 0
        %v1165 = vsel %vm1049, %v1148, 0
        %v1168 = vsel %vm1049, %v1150, 0
        %v1171 = vsel %vm1049, %v1152, 0
        %v1174 = vsel %vm1049, %v1154, 0
        %v1177 = vsel %vm1049, %v1156, 0
        %v1180 = vsel %vm1049, %v1158, 0
        %v1183 = vsel %vm1049, %v1160, 0
        %v1186 = vsel %vm1074, %v1144, 0
        %1188 = vmatpush.bf16.msra.mxu0 0
        %1189 = vmatpush.bf16.msra.mxu0 0
        %1190 = vmatpush.bf16.msra.mxu0 0
        %1191 = vmatpush.bf16.msra.mxu0 0
        %1192 = vmatpush.bf16.msra.mxu0 0
        %1193 = vmatpush.bf16.msra.mxu0 0
        %1194 = vmatpush.bf16.msra.mxu0 0
        %1195 = vmatpush.bf16.msra.mxu0 %v1186
        %1196 = vmatmul.bf16.gmra.mxu0 %v1162
        %v1197 = vpop.f32.mrf.mxu0
        %v1198 = vadd.f32 0.0, %v1197
        %v1199 = vpop.f32.mrf.mxu0
        %v1200 = vadd.f32 0.0, %v1199
        %1201 = vmatmul.bf16.gmra.mxu0 %v1165
        %v1202 = vpop.f32.mrf.mxu0
        %v1203 = vadd.f32 0.0, %v1202
        %v1204 = vpop.f32.mrf.mxu0
        %v1205 = vadd.f32 0.0, %v1204
        %1206 = vmatmul.bf16.gmra.mxu0 %v1168
        %v1207 = vpop.f32.mrf.mxu0
        %v1208 = vadd.f32 0.0, %v1207
        %v1209 = vpop.f32.mrf.mxu0
        %v1210 = vadd.f32 0.0, %v1209
        %1211 = vmatmul.bf16.gmra.mxu0 %v1171
        %v1212 = vpop.f32.mrf.mxu0
        %v1213 = vadd.f32 0.0, %v1212
        %v1214 = vpop.f32.mrf.mxu0
        %v1215 = vadd.f32 0.0, %v1214
        %1216 = vmatmul.bf16.gmra.mxu0 %v1174
        %v1217 = vpop.f32.mrf.mxu0
        %v1218 = vadd.f32 0.0, %v1217
        %v1219 = vpop.f32.mrf.mxu0
        %v1220 = vadd.f32 0.0, %v1219
        %1221 = vmatmul.bf16.gmra.mxu0 %v1177
        %v1222 = vpop.f32.mrf.mxu0
        %v1223 = vadd.f32 0.0, %v1222
        %v1224 = vpop.f32.mrf.mxu0
        %v1225 = vadd.f32 0.0, %v1224
        %1226 = vmatmul.bf16.gmra.mxu0 %v1180
        %v1227 = vpop.f32.mrf.mxu0
        %v1228 = vadd.f32 0.0, %v1227
        %v1229 = vpop.f32.mrf.mxu0
        %v1230 = vadd.f32 0.0, %v1229
        %1231 = vmatmul.bf16.gmra.mxu0 %v1183
        %v1232 = vpop.f32.mrf.mxu0
        %v1233 = vadd.f32 0.0, %v1232
        %v1234 = vpop.f32.mrf.mxu0
        %v1235 = vadd.f32 0.0, %v1234
        %1236 = vdwg.mxu0
        %v1237 = vpack.c.bf16 %v1198, %v1198
        %v1238 = vpack.c.bf16 %v1200, %v1200
        %v1239 = vpack.c.bf16 %v1203, %v1203
        %v1240 = vpack.c.bf16 %v1205, %v1205
        %v1241 = vpack.c.bf16 %v1208, %v1208
        %v1242 = vpack.c.bf16 %v1210, %v1210
        %v1243 = vpack.c.bf16 %v1213, %v1213
        %v1244 = vpack.c.bf16 %v1215, %v1215
        %v1245 = vpack.c.bf16 %v1218, %v1218
        %v1246 = vpack.c.bf16 %v1220, %v1220
        %v1247 = vpack.c.bf16 %v1223, %v1223
        %v1248 = vpack.c.bf16 %v1225, %v1225
        %v1249 = vpack.c.bf16 %v1228, %v1228
        %v1250 = vpack.c.bf16 %v1230, %v1230
        %v1251 = vpack.c.bf16 %v1233, %v1233
        %v1252 = vpack.c.bf16 %v1235, %v1235
        %v1261 = vunpack.c.l.b16 %v1127
        %v1262 = vunpack.c.l.b16 %v1128
        %v1263 = vunpack.c.l.b16 %v1131
        %v1264 = vunpack.c.l.b16 %v1132
        %v1265 = vunpack.c.l.b16 %v1135
        %v1266 = vunpack.c.l.b16 %v1136
        %v1267 = vunpack.c.l.b16 %v1139
        %v1268 = vunpack.c.l.b16 %v1140
        %v1269 = vpack.c.b16 %v1262, %v1261
        %v1270 = vpack.c.b16 %v1264, %v1263
        %v1271 = vpack.c.b16 %v1266, %v1265
        %v1272 = vpack.c.b16 %v1268, %v1267
        %v1285 = vunpack.c.l.b16 %v1237
        %v1286 = vunpack.c.l.b16 %v1238
        %v1287 = vunpack.c.l.b16 %v1241
        %v1288 = vunpack.c.l.b16 %v1242
        %v1289 = vunpack.c.l.b16 %v1245
        %v1290 = vunpack.c.l.b16 %v1246
        %v1291 = vunpack.c.l.b16 %v1249
        %v1292 = vunpack.c.l.b16 %v1250
        %v1293 = vpack.c.b16 %v1286, %v1285
        %v1294 = vpack.c.b16 %v1288, %v1287
        %v1295 = vpack.c.b16 %v1290, %v1289
        %v1296 = vpack.c.b16 %v1292, %v1291
        %v1309 = vunpack.c.l.b16 %v1129
        %v1310 = vunpack.c.l.b16 %v1130
        %v1311 = vunpack.c.l.b16 %v1133
        %v1312 = vunpack.c.l.b16 %v1134
        %v1313 = vunpack.c.l.b16 %v1137
        %v1314 = vunpack.c.l.b16 %v1138
        %v1315 = vunpack.c.l.b16 %v1141
        %v1316 = vunpack.c.l.b16 %v1142
        %v1317 = vpack.c.b16 %v1310, %v1309
        %v1318 = vpack.c.b16 %v1312, %v1311
        %v1319 = vpack.c.b16 %v1314, %v1313
        %v1320 = vpack.c.b16 %v1316, %v1315
        %v1333 = vunpack.c.l.b16 %v1239
        %v1334 = vunpack.c.l.b16 %v1240
        %v1335 = vunpack.c.l.b16 %v1243
        %v1336 = vunpack.c.l.b16 %v1244
        %v1337 = vunpack.c.l.b16 %v1247
        %v1338 = vunpack.c.l.b16 %v1248
        %v1339 = vunpack.c.l.b16 %v1251
        %v1340 = vunpack.c.l.b16 %v1252
        %v1341 = vpack.c.b16 %v1334, %v1333
        %v1342 = vpack.c.b16 %v1336, %v1335
        %v1343 = vpack.c.b16 %v1338, %v1337
        %v1344 = vpack.c.b16 %v1340, %v1339
        %v1349 = vld [vmem:[%s762] sm:$0xf]
        %v1350 = vld [vmem:[%s762 + $0x4] sm:$0xf]
        %v1351 = vld [vmem:[%s762 + $0x8] sm:$0xf]
        %v1352 = vld [vmem:[%s762 + $0xc] sm:$0xf]
        %v1353 = vld [vmem:[%s762 + $0x10] sm:$0xf]
        %v1354 = vld [vmem:[%s762 + $0x14] sm:$0xf]
        %v1355 = vld [vmem:[%s762 + $0x18] sm:$0xf]
        %v1356 = vld [vmem:[%s762 + $0x1c] sm:$0xf]
        %v1357 = vld [vmem:[%s6] sm:$0xf]
        %v1358 = vld [vmem:[%s6 + $0x4] sm:$0xf]
        %v1359 = vld [vmem:[%s7] sm:$0x1]
        %v1361 = vperm.slane %v1359, 0
        %v1371 = vunpack.c.l.b16 %v1349
        %v1372 = vunpack.c.l.b16 %v1350
        %v1373 = vunpack.c.l.b16 %v1351
        %v1374 = vunpack.c.l.b16 %v1352
        %v1375 = vunpack.c.l.b16 %v1353
        %v1376 = vunpack.c.l.b16 %v1354
        %v1377 = vunpack.c.l.b16 %v1355
        %v1378 = vunpack.c.l.b16 %v1356
        %v1379 = vpack.c.b16 %v1372, %v1371
        %v1380 = vpack.c.b16 %v1374, %v1373
        %v1381 = vpack.c.b16 %v1376, %v1375
        %v1382 = vpack.c.b16 %v1378, %v1377
        %v1385 = vunpack.c.l.b16 %v1357
        %v1386 = vunpack.c.l.b16 %v1358
        %v1387 = vpack.c.b16 %v1386, %v1385
        %v1390 = vsel %vm902, %v1379, 0
        %v1393 = vsel %vm902, %v1380, 0
        %v1396 = vsel %vm902, %v1381, 0
        %v1399 = vsel %vm902, %v1382, 0
        %1401 = vmatpush.bf16.msra.mxu0 0
        %1402 = vmatpush.bf16.msra.mxu0 0
        %1403 = vmatpush.bf16.msra.mxu0 0
        %1404 = vmatpush.bf16.msra.mxu0 0
        %1405 = vmatpush.bf16.msra.mxu0 0
        %1406 = vmatpush.bf16.msra.mxu0 0
        %1407 = vmatpush.bf16.msra.mxu0 0
        %1408 = vmatpush.bf16.msra.mxu0 %v1387
        %1409 = vmatmul.bf16.gmra.mxu0 %v1390
        %v1410 = vpop.f32.mrf.mxu0
        %v1411 = vadd.f32 %v1361, %v1410
        %v1412 = vpop.f32.mrf.mxu0
        %v1413 = vadd.f32 %v1361, %v1412
        %1414 = vmatmul.bf16.gmra.mxu0 %v1393
        %v1415 = vpop.f32.mrf.mxu0
        %v1416 = vadd.f32 %v1361, %v1415
        %v1417 = vpop.f32.mrf.mxu0
        %v1418 = vadd.f32 %v1361, %v1417
        %1419 = vmatmul.bf16.gmra.mxu0 %v1396
        %v1420 = vpop.f32.mrf.mxu0
        %v1421 = vadd.f32 %v1361, %v1420
        %v1422 = vpop.f32.mrf.mxu0
        %v1423 = vadd.f32 %v1361, %v1422
        %1424 = vmatmul.bf16.gmra.mxu0 %v1399
        %v1425 = vpop.f32.mrf.mxu0
        %v1426 = vadd.f32 %v1361, %v1425
        %v1427 = vpop.f32.mrf.mxu0
        %v1428 = vadd.f32 %v1361, %v1427
        %1429 = vdwg.mxu0
        %1430 = vrot.lane.b32.xlu0 %v1025, 112
        %v1431 = vpop.permute.xlu0 %1430
        %v1433 = vsel %vm1049, %v1025, 0
        %v1436 = vsel %vm1049, %v1431, 0
        %1438 = vmatpush.bf16.xpose.msra.mxu0 0
        %1439 = vmatpush.bf16.xpose.msra.mxu0 0
        %1440 = vmatpush.bf16.xpose.msra.mxu0 0
        %1441 = vmatpush.bf16.xpose.msra.mxu0 0
        %1442 = vmatpush.bf16.xpose.msra.mxu0 0
        %1443 = vmatpush.bf16.xpose.msra.mxu0 0
        %1444 = vmatpush.bf16.xpose.msra.mxu0 0
        %1445 = vmatpush.bf16.xpose.msra.mxu0 %v1436
        %1446 = vmatmul.bf16.gmra.mxu0 %v1433
        %v1447 = vpop.f32.mrf.mxu0
        %v1448 = vadd.f32 0.0, %v1447
        %v1449 = vpop.f32.mrf.mxu0
        %v1450 = vadd.f32 0.0, %v1449
        %1451 = vdwg.mxu0
        %1452 = vrot.lane.b32.xlu0 %v1027, 112
        %v1453 = vpop.permute.xlu0 %1452
        %v1455 = vsel %vm1049, %v1027, 0
        %v1458 = vsel %vm1049, %v1453, 0
        %1460 = vmatpush.bf16.xpose.msra.mxu0 0
        %1461 = vmatpush.bf16.xpose.msra.mxu0 0
        %1462 = vmatpush.bf16.xpose.msra.mxu0 0
        %1463 = vmatpush.bf16.xpose.msra.mxu0 0
        %1464 = vmatpush.bf16.xpose.msra.mxu0 0
        %1465 = vmatpush.bf16.xpose.msra.mxu0 0
        %1466 = vmatpush.bf16.xpose.msra.mxu0 0
        %1467 = vmatpush.bf16.xpose.msra.mxu0 %v1458
        %1468 = vmatmul.bf16.gmra.mxu0 %v1455
        %v1469 = vpop.f32.mrf.mxu0
        %v1470 = vadd.f32 0.0, %v1469
        %v1471 = vpop.f32.mrf.mxu0
        %v1472 = vadd.f32 0.0, %v1471
        %1473 = vdwg.mxu0
        %1474 = vrot.lane.b32.xlu0 %v1029, 112
        %v1475 = vpop.permute.xlu0 %1474
        %v1477 = vsel %vm1049, %v1029, 0
        %v1480 = vsel %vm1049, %v1475, 0
        %1482 = vmatpush.bf16.xpose.msra.mxu0 0
        %1483 = vmatpush.bf16.xpose.msra.mxu0 0
        %1484 = vmatpush.bf16.xpose.msra.mxu0 0
        %1485 = vmatpush.bf16.xpose.msra.mxu0 0
        %1486 = vmatpush.bf16.xpose.msra.mxu0 0
        %1487 = vmatpush.bf16.xpose.msra.mxu0 0
        %1488 = vmatpush.bf16.xpose.msra.mxu0 0
        %1489 = vmatpush.bf16.xpose.msra.mxu0 %v1480
        %1490 = vmatmul.bf16.gmra.mxu0 %v1477
        %v1491 = vpop.f32.mrf.mxu0
        %v1492 = vadd.f32 0.0, %v1491
        %v1493 = vpop.f32.mrf.mxu0
        %v1494 = vadd.f32 0.0, %v1493
        %1495 = vdwg.mxu0
        %1496 = vrot.lane.b32.xlu0 %v1031, 112
        %v1497 = vpop.permute.xlu0 %1496
        %v1499 = vsel %vm1049, %v1031, 0
        %v1502 = vsel %vm1049, %v1497, 0
        %1504 = vmatpush.bf16.xpose.msra.mxu0 0
        %1505 = vmatpush.bf16.xpose.msra.mxu0 0
        %1506 = vmatpush.bf16.xpose.msra.mxu0 0
        %1507 = vmatpush.bf16.xpose.msra.mxu0 0
        %1508 = vmatpush.bf16.xpose.msra.mxu0 0
        %1509 = vmatpush.bf16.xpose.msra.mxu0 0
        %1510 = vmatpush.bf16.xpose.msra.mxu0 0
        %1511 = vmatpush.bf16.xpose.msra.mxu0 %v1502
        %1512 = vmatmul.bf16.gmra.mxu0 %v1499
        %v1513 = vpop.f32.mrf.mxu0
        %v1514 = vadd.f32 0.0, %v1513
        %v1515 = vpop.f32.mrf.mxu0
        %v1516 = vadd.f32 0.0, %v1515
        %1517 = vdwg.mxu0
        %v1518 = vsel %vm902, %v1448, -inf
        %1519 = vmax.xlane.f32.xlu0 %v1518
        %v1520 = vpop.xlane.xlu0 %1519
        %v1521 = vsel %vm902, %v1450, -inf
        %1522 = vmax.xlane.f32.xlu0 %v1521
        %v1523 = vpop.xlane.xlu0 %1522
        %v1524 = vsel %vm902, %v1470, -inf
        %1525 = vmax.xlane.f32.xlu0 %v1524
        %v1526 = vpop.xlane.xlu0 %1525
        %v1527 = vsel %vm902, %v1472, -inf
        %1528 = vmax.xlane.f32.xlu0 %v1527
        %v1529 = vpop.xlane.xlu0 %1528
        %v1530 = vsel %vm902, %v1492, -inf
        %1531 = vmax.xlane.f32.xlu0 %v1530
        %v1532 = vpop.xlane.xlu0 %1531
        %v1533 = vsel %vm902, %v1494, -inf
        %1534 = vmax.xlane.f32.xlu0 %v1533
        %v1535 = vpop.xlane.xlu0 %1534
        %v1536 = vsel %vm902, %v1514, -inf
        %1537 = vmax.xlane.f32.xlu0 %v1536
        %v1538 = vpop.xlane.xlu0 %1537
        %v1539 = vsel %vm902, %v1516, -inf
        %1540 = vmax.xlane.f32.xlu0 %v1539
        %v1541 = vpop.xlane.xlu0 %1540
        %v1542 = vsub.f32 %v1448, %v1520
        %v1543 = vsub.f32 %v1450, %v1523
        %v1544 = vsub.f32 %v1470, %v1526
        %v1545 = vsub.f32 %v1472, %v1529
        %v1546 = vsub.f32 %v1492, %v1532
        %v1547 = vsub.f32 %v1494, %v1535
        %v1548 = vsub.f32 %v1514, %v1538
        %v1549 = vsub.f32 %v1516, %v1541
        %v1550 = vmul.f32 %v1542, 1.442695
        %v1551 = vpow.pop %v1550
        %v1552 = vmul.f32 %v1543, 1.442695
        %v1553 = vpow.pop %v1552
        %v1554 = vmul.f32 %v1544, 1.442695
        %v1555 = vpow.pop %v1554
        %v1556 = vmul.f32 %v1545, 1.442695
        %v1557 = vpow.pop %v1556
        %v1558 = vmul.f32 %v1546, 1.442695
        %v1559 = vpow.pop %v1558
        %v1560 = vmul.f32 %v1547, 1.442695
        %v1561 = vpow.pop %v1560
        %v1562 = vmul.f32 %v1548, 1.442695
        %v1563 = vpow.pop %v1562
        %v1564 = vmul.f32 %v1549, 1.442695
        %v1565 = vpow.pop %v1564
        %v1566 = vsel %vm902, %v1551, 0.0
        %1567 = vadd.xlane.f32.xlu0 %v1566
        %v1568 = vpop.xlane.xlu0 %1567
        %v1569 = vsel %vm902, %v1553, 0.0
        %1570 = vadd.xlane.f32.xlu0 %v1569
        %v1571 = vpop.xlane.xlu0 %1570
        %v1572 = vsel %vm902, %v1555, 0.0
        %1573 = vadd.xlane.f32.xlu0 %v1572
        %v1574 = vpop.xlane.xlu0 %1573
        %v1575 = vsel %vm902, %v1557, 0.0
        %1576 = vadd.xlane.f32.xlu0 %v1575
        %v1577 = vpop.xlane.xlu0 %1576
        %v1578 = vsel %vm902, %v1559, 0.0
        %1579 = vadd.xlane.f32.xlu0 %v1578
        %v1580 = vpop.xlane.xlu0 %1579
        %v1581 = vsel %vm902, %v1561, 0.0
        %1582 = vadd.xlane.f32.xlu0 %v1581
        %v1583 = vpop.xlane.xlu0 %1582
        %v1584 = vsel %vm902, %v1563, 0.0
        %1585 = vadd.xlane.f32.xlu0 %v1584
        %v1586 = vpop.xlane.xlu0 %1585
        %v1587 = vsel %vm902, %v1565, 0.0
        %1588 = vadd.xlane.f32.xlu0 %v1587
        %v1589 = vpop.xlane.xlu0 %1588
        %v1590 = vrcp.pop %v1568
        %v1591 = vrcp.pop %v1571
        %v1592 = vrcp.pop %v1574
        %v1593 = vrcp.pop %v1577
        %v1594 = vrcp.pop %v1580
        %v1595 = vrcp.pop %v1583
        %v1596 = vrcp.pop %v1586
        %v1597 = vrcp.pop %v1589
        %v1598 = vmul.f32 %v1551, %v1590
        %v1599 = vmul.f32 %v1553, %v1591
        %v1600 = vmul.f32 %v1555, %v1592
        %v1601 = vmul.f32 %v1557, %v1593
        %v1602 = vmul.f32 %v1559, %v1594
        %v1603 = vmul.f32 %v1561, %v1595
        %v1604 = vmul.f32 %v1563, %v1596
        %v1605 = vmul.f32 %v1565, %v1597
        %v1606 = vpack.c.bf16 %v1598, %v1598
        %v1607 = vpack.c.bf16 %v1599, %v1599
        %v1608 = vpack.c.bf16 %v1600, %v1600
        %v1609 = vpack.c.bf16 %v1601, %v1601
        %v1610 = vpack.c.bf16 %v1602, %v1602
        %v1611 = vpack.c.bf16 %v1603, %v1603
        %v1612 = vpack.c.bf16 %v1604, %v1604
        %v1613 = vpack.c.bf16 %v1605, %v1605
        %1614 = vrot.lane.b32.xlu0 %v1025, 120
        %v1615 = vpop.permute.xlu0 %1614
        %1616 = vrot.lane.b32.xlu0 %v1025, 104
        %v1617 = vpop.permute.xlu0 %1616
        %v1619 = vsel %vm1049, %v1615, 0
        %v1622 = vsel %vm1049, %v1617, 0
        %1624 = vmatpush.bf16.xpose.msra.mxu0 0
        %1625 = vmatpush.bf16.xpose.msra.mxu0 0
        %1626 = vmatpush.bf16.xpose.msra.mxu0 0
        %1627 = vmatpush.bf16.xpose.msra.mxu0 0
        %1628 = vmatpush.bf16.xpose.msra.mxu0 0
        %1629 = vmatpush.bf16.xpose.msra.mxu0 0
        %1630 = vmatpush.bf16.xpose.msra.mxu0 0
        %1631 = vmatpush.bf16.xpose.msra.mxu0 %v1622
        %1632 = vmatmul.bf16.gmra.mxu0 %v1619
        %v1633 = vpop.f32.mrf.mxu0
        %v1634 = vadd.f32 0.0, %v1633
        %v1635 = vpop.f32.mrf.mxu0
        %v1636 = vadd.f32 0.0, %v1635
        %1637 = vdwg.mxu0
        %1638 = vrot.lane.b32.xlu0 %v1027, 120
        %v1639 = vpop.permute.xlu0 %1638
        %1640 = vrot.lane.b32.xlu0 %v1027, 104
        %v1641 = vpop.permute.xlu0 %1640
        %v1643 = vsel %vm1049, %v1639, 0
        %v1646 = vsel %vm1049, %v1641, 0
        %1648 = vmatpush.bf16.xpose.msra.mxu0 0
        %1649 = vmatpush.bf16.xpose.msra.mxu0 0
        %1650 = vmatpush.bf16.xpose.msra.mxu0 0
        %1651 = vmatpush.bf16.xpose.msra.mxu0 0
        %1652 = vmatpush.bf16.xpose.msra.mxu0 0
        %1653 = vmatpush.bf16.xpose.msra.mxu0 0
        %1654 = vmatpush.bf16.xpose.msra.mxu0 0
        %1655 = vmatpush.bf16.xpose.msra.mxu0 %v1646
        %1656 = vmatmul.bf16.gmra.mxu0 %v1643
        %v1657 = vpop.f32.mrf.mxu0
        %v1658 = vadd.f32 0.0, %v1657
        %v1659 = vpop.f32.mrf.mxu0
        %v1660 = vadd.f32 0.0, %v1659
        %1661 = vdwg.mxu0
        %1662 = vrot.lane.b32.xlu0 %v1029, 120
        %v1663 = vpop.permute.xlu0 %1662
        %1664 = vrot.lane.b32.xlu0 %v1029, 104
        %v1665 = vpop.permute.xlu0 %1664
        %v1667 = vsel %vm1049, %v1663, 0
        %v1670 = vsel %vm1049, %v1665, 0
        %1672 = vmatpush.bf16.xpose.msra.mxu0 0
        %1673 = vmatpush.bf16.xpose.msra.mxu0 0
        %1674 = vmatpush.bf16.xpose.msra.mxu0 0
        %1675 = vmatpush.bf16.xpose.msra.mxu0 0
        %1676 = vmatpush.bf16.xpose.msra.mxu0 0
        %1677 = vmatpush.bf16.xpose.msra.mxu0 0
        %1678 = vmatpush.bf16.xpose.msra.mxu0 0
        %1679 = vmatpush.bf16.xpose.msra.mxu0 %v1670
        %1680 = vmatmul.bf16.gmra.mxu0 %v1667
        %v1681 = vpop.f32.mrf.mxu0
        %v1682 = vadd.f32 0.0, %v1681
        %v1683 = vpop.f32.mrf.mxu0
        %v1684 = vadd.f32 0.0, %v1683
        %1685 = vdwg.mxu0
        %1686 = vrot.lane.b32.xlu0 %v1031, 120
        %v1687 = vpop.permute.xlu0 %1686
        %1688 = vrot.lane.b32.xlu0 %v1031, 104
        %v1689 = vpop.permute.xlu0 %1688
        %v1691 = vsel %vm1049, %v1687, 0
        %v1694 = vsel %vm1049, %v1689, 0
        %1696 = vmatpush.bf16.xpose.msra.mxu0 0
        %1697 = vmatpush.bf16.xpose.msra.mxu0 0
        %1698 = vmatpush.bf16.xpose.msra.mxu0 0
        %1699 = vmatpush.bf16.xpose.msra.mxu0 0
        %1700 = vmatpush.bf16.xpose.msra.mxu0 0
        %1701 = vmatpush.bf16.xpose.msra.mxu0 0
        %1702 = vmatpush.bf16.xpose.msra.mxu0 0
        %1703 = vmatpush.bf16.xpose.msra.mxu0 %v1694
        %1704 = vmatmul.bf16.gmra.mxu0 %v1691
        %v1705 = vpop.f32.mrf.mxu0
        %v1706 = vadd.f32 0.0, %v1705
        %v1707 = vpop.f32.mrf.mxu0
        %v1708 = vadd.f32 0.0, %v1707
        %1709 = vdwg.mxu0
        %v1710 = vsel %vm902, %v1634, -inf
        %1711 = vmax.xlane.f32.xlu0 %v1710
        %v1712 = vpop.xlane.xlu0 %1711
        %v1713 = vsel %vm902, %v1636, -inf
        %1714 = vmax.xlane.f32.xlu0 %v1713
        %v1715 = vpop.xlane.xlu0 %1714
        %v1716 = vsel %vm902, %v1658, -inf
        %1717 = vmax.xlane.f32.xlu0 %v1716
        %v1718 = vpop.xlane.xlu0 %1717
        %v1719 = vsel %vm902, %v1660, -inf
        %1720 = vmax.xlane.f32.xlu0 %v1719
        %v1721 = vpop.xlane.xlu0 %1720
        %v1722 = vsel %vm902, %v1682, -inf
        %1723 = vmax.xlane.f32.xlu0 %v1722
        %v1724 = vpop.xlane.xlu0 %1723
        %v1725 = vsel %vm902, %v1684, -inf
        %1726 = vmax.xlane.f32.xlu0 %v1725
        %v1727 = vpop.xlane.xlu0 %1726
        %v1728 = vsel %vm902, %v1706, -inf
        %1729 = vmax.xlane.f32.xlu0 %v1728
        %v1730 = vpop.xlane.xlu0 %1729
        %v1731 = vsel %vm902, %v1708, -inf
        %1732 = vmax.xlane.f32.xlu0 %v1731
        %v1733 = vpop.xlane.xlu0 %1732
        %v1734 = vsub.f32 %v1634, %v1712
        %v1735 = vsub.f32 %v1636, %v1715
        %v1736 = vsub.f32 %v1658, %v1718
        %v1737 = vsub.f32 %v1660, %v1721
        %v1738 = vsub.f32 %v1682, %v1724
        %v1739 = vsub.f32 %v1684, %v1727
        %v1740 = vsub.f32 %v1706, %v1730
        %v1741 = vsub.f32 %v1708, %v1733
        %v1742 = vmul.f32 %v1734, 1.442695
        %v1743 = vpow.pop %v1742
        %v1744 = vmul.f32 %v1735, 1.442695
        %v1745 = vpow.pop %v1744
        %v1746 = vmul.f32 %v1736, 1.442695
        %v1747 = vpow.pop %v1746
        %v1748 = vmul.f32 %v1737, 1.442695
        %v1749 = vpow.pop %v1748
        %v1750 = vmul.f32 %v1738, 1.442695
        %v1751 = vpow.pop %v1750
        %v1752 = vmul.f32 %v1739, 1.442695
        %v1753 = vpow.pop %v1752
        %v1754 = vmul.f32 %v1740, 1.442695
        %v1755 = vpow.pop %v1754
        %v1756 = vmul.f32 %v1741, 1.442695
        %v1757 = vpow.pop %v1756
        %v1758 = vsel %vm902, %v1743, 0.0
        %1759 = vadd.xlane.f32.xlu0 %v1758
        %v1760 = vpop.xlane.xlu0 %1759
        %v1761 = vsel %vm902, %v1745, 0.0
        %1762 = vadd.xlane.f32.xlu0 %v1761
        %v1763 = vpop.xlane.xlu0 %1762
        %v1764 = vsel %vm902, %v1747, 0.0
        %1765 = vadd.xlane.f32.xlu0 %v1764
        %v1766 = vpop.xlane.xlu0 %1765
        %v1767 = vsel %vm902, %v1749, 0.0
        %1768 = vadd.xlane.f32.xlu0 %v1767
        %v1769 = vpop.xlane.xlu0 %1768
        %v1770 = vsel %vm902, %v1751, 0.0
        %1771 = vadd.xlane.f32.xlu0 %v1770
        %v1772 = vpop.xlane.xlu0 %1771
        %v1773 = vsel %vm902, %v1753, 0.0
        %1774 = vadd.xlane.f32.xlu0 %v1773
        %v1775 = vpop.xlane.xlu0 %1774
        %v1776 = vsel %vm902, %v1755, 0.0
        %1777 = vadd.xlane.f32.xlu0 %v1776
        %v1778 = vpop.xlane.xlu0 %1777
        %v1779 = vsel %vm902, %v1757, 0.0
        %1780 = vadd.xlane.f32.xlu0 %v1779
        %v1781 = vpop.xlane.xlu0 %1780
        %v1782 = vrcp.pop %v1760
        %v1783 = vrcp.pop %v1763
        %v1784 = vrcp.pop %v1766
        %v1785 = vrcp.pop %v1769
        %v1786 = vrcp.pop %v1772
        %v1787 = vrcp.pop %v1775
        %v1788 = vrcp.pop %v1778
        %v1789 = vrcp.pop %v1781
        %v1790 = vmul.f32 %v1743, %v1782
        %v1791 = vmul.f32 %v1745, %v1783
        %v1792 = vmul.f32 %v1747, %v1784
        %v1793 = vmul.f32 %v1749, %v1785
        %v1794 = vmul.f32 %v1751, %v1786
        %v1795 = vmul.f32 %v1753, %v1787
        %v1796 = vmul.f32 %v1755, %v1788
        %v1797 = vmul.f32 %v1757, %v1789
        %v1798 = vpack.c.bf16 %v1790, %v1790
        %v1799 = vpack.c.bf16 %v1791, %v1791
        %v1800 = vpack.c.bf16 %v1792, %v1792
        %v1801 = vpack.c.bf16 %v1793, %v1793
        %v1802 = vpack.c.bf16 %v1794, %v1794
        %v1803 = vpack.c.bf16 %v1795, %v1795
        %v1804 = vpack.c.bf16 %v1796, %v1796
        %v1805 = vpack.c.bf16 %v1797, %v1797
        %v1814 = vunpack.c.l.b16 %v1606
        %v1815 = vunpack.c.l.b16 %v1607
        %v1816 = vunpack.c.l.b16 %v1608
        %v1817 = vunpack.c.l.b16 %v1609
        %v1818 = vunpack.c.l.b16 %v1610
        %v1819 = vunpack.c.l.b16 %v1611
        %v1820 = vunpack.c.l.b16 %v1612
        %v1821 = vunpack.c.l.b16 %v1613
        %v1822 = vpack.c.b16 %v1815, %v1814
        %v1823 = vpack.c.b16 %v1817, %v1816
        %v1824 = vpack.c.b16 %v1819, %v1818
        %v1825 = vpack.c.b16 %v1821, %v1820
        %v1834 = vunpack.c.l.b16 %v1798
        %v1835 = vunpack.c.l.b16 %v1799
        %v1836 = vunpack.c.l.b16 %v1800
        %v1837 = vunpack.c.l.b16 %v1801
        %v1838 = vunpack.c.l.b16 %v1802
        %v1839 = vunpack.c.l.b16 %v1803
        %v1840 = vunpack.c.l.b16 %v1804
        %v1841 = vunpack.c.l.b16 %v1805
        %v1842 = vpack.c.b16 %v1835, %v1834
        %v1843 = vpack.c.b16 %v1837, %v1836
        %v1844 = vpack.c.b16 %v1839, %v1838
        %v1845 = vpack.c.b16 %v1841, %v1840
        %1846 = vrot.lane.b32.xlu0 %v1842, 16
        %v1847 = vpop.permute.xlu0 %1846
        %1848 = vrot.lane.b32.xlu0 %v1843, 16
        %v1849 = vpop.permute.xlu0 %1848
        %1850 = vrot.lane.b32.xlu0 %v1844, 16
        %v1851 = vpop.permute.xlu0 %1850
        %1852 = vrot.lane.b32.xlu0 %v1845, 16
        %v1853 = vpop.permute.xlu0 %1852
        %v1856 = vsel %vm902, %v1822, %v1847
        %v1859 = vsel %vm902, %v1823, %v1849
        %v1862 = vsel %vm902, %v1824, %v1851
        %v1865 = vsel %vm902, %v1825, %v1853
        %vm1866 = vcmask 261120
        %v1867 = vsel %vm1866, %v1856, 0
        %1869 = vmatpush.bf16.msra.mxu0 0
        %1870 = vmatpush.bf16.msra.mxu0 0
        %1871 = vmatpush.bf16.msra.mxu0 0
        %1872 = vmatpush.bf16.msra.mxu0 0
        %1873 = vmatpush.bf16.msra.mxu0 0
        %1874 = vmatpush.bf16.msra.mxu0 0
        %1875 = vmatpush.bf16.msra.mxu0 %v1293
        %1876 = vmatpush.bf16.msra.mxu0 %v1269
        %1877 = vmatmul.bf16.gmra.mxu0 %v1867
        %v1878 = vpop.f32.mrf.mxu0
        %v1879 = vadd.f32 0.0, %v1878
        %v1880 = vpop.f32.mrf.mxu0
        %v1881 = vadd.f32 0.0, %v1880
        %1882 = vdwg.mxu0
        %v1883 = vsel %vm1866, %v1859, 0
        %1885 = vmatpush.bf16.msra.mxu0 0
        %1886 = vmatpush.bf16.msra.mxu0 0
        %1887 = vmatpush.bf16.msra.mxu0 0
        %1888 = vmatpush.bf16.msra.mxu0 0
        %1889 = vmatpush.bf16.msra.mxu0 0
        %1890 = vmatpush.bf16.msra.mxu0 0
        %1891 = vmatpush.bf16.msra.mxu0 %v1294
        %1892 = vmatpush.bf16.msra.mxu0 %v1270
        %1893 = vmatmul.bf16.gmra.mxu0 %v1883
        %v1894 = vpop.f32.mrf.mxu0
        %v1895 = vadd.f32 0.0, %v1894
        %v1896 = vpop.f32.mrf.mxu0
        %v1897 = vadd.f32 0.0, %v1896
        %1898 = vdwg.mxu0
        %v1899 = vsel %vm1866, %v1862, 0
        %1901 = vmatpush.bf16.msra.mxu0 0
        %1902 = vmatpush.bf16.msra.mxu0 0
        %1903 = vmatpush.bf16.msra.mxu0 0
        %1904 = vmatpush.bf16.msra.mxu0 0
        %1905 = vmatpush.bf16.msra.mxu0 0
        %1906 = vmatpush.bf16.msra.mxu0 0
        %1907 = vmatpush.bf16.msra.mxu0 %v1295
        %1908 = vmatpush.bf16.msra.mxu0 %v1271
        %1909 = vmatmul.bf16.gmra.mxu0 %v1899
        %v1910 = vpop.f32.mrf.mxu0
        %v1911 = vadd.f32 0.0, %v1910
        %v1912 = vpop.f32.mrf.mxu0
        %v1913 = vadd.f32 0.0, %v1912
        %1914 = vdwg.mxu0
        %v1915 = vsel %vm1866, %v1865, 0
        %1917 = vmatpush.bf16.msra.mxu0 0
        %1918 = vmatpush.bf16.msra.mxu0 0
        %1919 = vmatpush.bf16.msra.mxu0 0
        %1920 = vmatpush.bf16.msra.mxu0 0
        %1921 = vmatpush.bf16.msra.mxu0 0
        %1922 = vmatpush.bf16.msra.mxu0 0
        %1923 = vmatpush.bf16.msra.mxu0 %v1296
        %1924 = vmatpush.bf16.msra.mxu0 %v1272
        %1925 = vmatmul.bf16.gmra.mxu0 %v1915
        %v1926 = vpop.f32.mrf.mxu0
        %v1927 = vadd.f32 0.0, %v1926
        %v1928 = vpop.f32.mrf.mxu0
        %v1929 = vadd.f32 0.0, %v1928
        %1930 = vdwg.mxu0
        %v1931 = vadd.f32 %v1411, %v1879
        %v1932 = vadd.f32 %v1413, %v1881
        %v1933 = vadd.f32 %v1416, %v1895
        %v1934 = vadd.f32 %v1418, %v1897
        %v1935 = vadd.f32 %v1421, %v1911
        %v1936 = vadd.f32 %v1423, %v1913
        %v1937 = vadd.f32 %v1426, %v1927
        %v1938 = vadd.f32 %v1428, %v1929
        %v1939 = vld [vmem:[%s8] sm:$0x1]
        %v1940 = vld [vmem:[%s9] sm:$0x1]
        %v1941 = vsel %vm902, %v1931, 0.0
        %1942 = vadd.xlane.f32.xlu0 %v1941
        %v1943 = vpop.xlane.xlu0 %1942
        %v1944 = vsel %vm902, %v1932, 0.0
        %1945 = vadd.xlane.f32.xlu0 %v1944
        %v1946 = vpop.xlane.xlu0 %1945
        %v1947 = vsel %vm902, %v1933, 0.0
        %1948 = vadd.xlane.f32.xlu0 %v1947
        %v1949 = vpop.xlane.xlu0 %1948
        %v1950 = vsel %vm902, %v1934, 0.0
        %1951 = vadd.xlane.f32.xlu0 %v1950
        %v1952 = vpop.xlane.xlu0 %1951
        %v1953 = vsel %vm902, %v1935, 0.0
        %1954 = vadd.xlane.f32.xlu0 %v1953
        %v1955 = vpop.xlane.xlu0 %1954
        %v1956 = vsel %vm902, %v1936, 0.0
        %1957 = vadd.xlane.f32.xlu0 %v1956
        %v1958 = vpop.xlane.xlu0 %1957
        %v1959 = vsel %vm902, %v1937, 0.0
        %1960 = vadd.xlane.f32.xlu0 %v1959
        %v1961 = vpop.xlane.xlu0 %1960
        %v1962 = vsel %vm902, %v1938, 0.0
        %1963 = vadd.xlane.f32.xlu0 %v1962
        %v1964 = vpop.xlane.xlu0 %1963
        %v1965 = vrcp.pop 16.0
        %v1966 = vmul.f32 16.0, %v1965
        %v1967 = vsub.f32 1.0, %v1966
        %v1968 = vmul.f32 %v1965, %v1967
        %v1969 = vadd.f32 %v1965, %v1968
        %vm1970 = vweird.f32 %v1965
        %v1971 = vsel %vm1970, %v1965, %v1969
        %v1972 = vmul.f32 %v1943, %v1971
        %v1973 = vmul.f32 %v1946, %v1971
        %v1974 = vmul.f32 %v1949, %v1971
        %v1975 = vmul.f32 %v1952, %v1971
        %v1976 = vmul.f32 %v1955, %v1971
        %v1977 = vmul.f32 %v1958, %v1971
        %v1978 = vmul.f32 %v1961, %v1971
        %v1979 = vmul.f32 %v1964, %v1971
        %v1980 = vsub.f32 %v1931, %v1972
        %v1981 = vsub.f32 %v1932, %v1973
        %v1982 = vsub.f32 %v1933, %v1974
        %v1983 = vsub.f32 %v1934, %v1975
        %v1984 = vsub.f32 %v1935, %v1976
        %v1985 = vsub.f32 %v1936, %v1977
        %v1986 = vsub.f32 %v1937, %v1978
        %v1987 = vsub.f32 %v1938, %v1979
        %v1988 = vmul.f32 %v1980, %v1980
        %v1989 = vmul.f32 %v1981, %v1981
        %v1990 = vmul.f32 %v1982, %v1982
        %v1991 = vmul.f32 %v1983, %v1983
        %v1992 = vmul.f32 %v1984, %v1984
        %v1993 = vmul.f32 %v1985, %v1985
        %v1994 = vmul.f32 %v1986, %v1986
        %v1995 = vmul.f32 %v1987, %v1987
        %v1996 = vsel %vm902, %v1988, 0.0
        %1997 = vadd.xlane.f32.xlu0 %v1996
        %v1998 = vpop.xlane.xlu0 %1997
        %v1999 = vsel %vm902, %v1989, 0.0
        %2000 = vadd.xlane.f32.xlu0 %v1999
        %v2001 = vpop.xlane.xlu0 %2000
        %v2002 = vsel %vm902, %v1990, 0.0
        %2003 = vadd.xlane.f32.xlu0 %v2002
        %v2004 = vpop.xlane.xlu0 %2003
        %v2005 = vsel %vm902, %v1991, 0.0
        %2006 = vadd.xlane.f32.xlu0 %v2005
        %v2007 = vpop.xlane.xlu0 %2006
        %v2008 = vsel %vm902, %v1992, 0.0
        %2009 = vadd.xlane.f32.xlu0 %v2008
        %v2010 = vpop.xlane.xlu0 %2009
        %v2011 = vsel %vm902, %v1993, 0.0
        %2012 = vadd.xlane.f32.xlu0 %v2011
        %v2013 = vpop.xlane.xlu0 %2012
        %v2014 = vsel %vm902, %v1994, 0.0
        %2015 = vadd.xlane.f32.xlu0 %v2014
        %v2016 = vpop.xlane.xlu0 %2015
        %v2017 = vsel %vm902, %v1995, 0.0
        %2018 = vadd.xlane.f32.xlu0 %v2017
        %v2019 = vpop.xlane.xlu0 %2018
        %v2020 = vmul.f32 %v1998, %v1971
        %v2021 = vmul.f32 %v2001, %v1971
        %v2022 = vmul.f32 %v2004, %v1971
        %v2023 = vmul.f32 %v2007, %v1971
        %v2024 = vmul.f32 %v2010, %v1971
        %v2025 = vmul.f32 %v2013, %v1971
        %v2026 = vmul.f32 %v2016, %v1971
        %v2027 = vmul.f32 %v2019, %v1971
        %v2028 = vadd.f32 %v2020, 1e-05
        %v2029 = vadd.f32 %v2021, 1e-05
        %v2030 = vadd.f32 %v2022, 1e-05
        %v2031 = vadd.f32 %v2023, 1e-05
        %v2032 = vadd.f32 %v2024, 1e-05
        %v2033 = vadd.f32 %v2025, 1e-05
        %v2034 = vadd.f32 %v2026, 1e-05
        %v2035 = vadd.f32 %v2027, 1e-05
        %v2036 = vrsqrt.pop %v2028
        %v2037 = vmul.f32 %v2036, %v2028
        %v2038 = vmul.f32 %v2037, %v2036
        %v2039 = vmul.f32 0.5, %v2038
        %v2040 = vsub.f32 1.5, %v2039
        %v2041 = vmul.f32 %v2036, %v2040
        %vm2042 = vweird.f32 %v2028
        %vm2043 = vweird.f32 %v2036
        %vm2044 = vmor %vm2042, %vm2043
        %v2045 = vsel %vm2044, %v2036, %v2041
        %v2046 = vrsqrt.pop %v2029
        %v2047 = vmul.f32 %v2046, %v2029
        %v2048 = vmul.f32 %v2047, %v2046
        %v2049 = vmul.f32 0.5, %v2048
        %v2050 = vsub.f32 1.5, %v2049
        %v2051 = vmul.f32 %v2046, %v2050
        %vm2052 = vweird.f32 %v2029
        %vm2053 = vweird.f32 %v2046
        %vm2054 = vmor %vm2052, %vm2053
        %v2055 = vsel %vm2054, %v2046, %v2051
        %v2056 = vrsqrt.pop %v2030
        %v2057 = vmul.f32 %v2056, %v2030
        %v2058 = vmul.f32 %v2057, %v2056
        %v2059 = vmul.f32 0.5, %v2058
        %v2060 = vsub.f32 1.5, %v2059
        %v2061 = vmul.f32 %v2056, %v2060
        %vm2062 = vweird.f32 %v2030
        %vm2063 = vweird.f32 %v2056
        %vm2064 = vmor %vm2062, %vm2063
        %v2065 = vsel %vm2064, %v2056, %v2061
        %v2066 = vrsqrt.pop %v2031
        %v2067 = vmul.f32 %v2066, %v2031
        %v2068 = vmul.f32 %v2067, %v2066
        %v2069 = vmul.f32 0.5, %v2068
        %v2070 = vsub.f32 1.5, %v2069
        %v2071 = vmul.f32 %v2066, %v2070
        %vm2072 = vweird.f32 %v2031
        %vm2073 = vweird.f32 %v2066
        %vm2074 = vmor %vm2072, %vm2073
        %v2075 = vsel %vm2074, %v2066, %v2071
        %v2076 = vrsqrt.pop %v2032
        %v2077 = vmul.f32 %v2076, %v2032
        %v2078 = vmul.f32 %v2077, %v2076
        %v2079 = vmul.f32 0.5, %v2078
        %v2080 = vsub.f32 1.5, %v2079
        %v2081 = vmul.f32 %v2076, %v2080
        %vm2082 = vweird.f32 %v2032
        %vm2083 = vweird.f32 %v2076
        %vm2084 = vmor %vm2082, %vm2083
        %v2085 = vsel %vm2084, %v2076, %v2081
        %v2086 = vrsqrt.pop %v2033
        %v2087 = vmul.f32 %v2086, %v2033
        %v2088 = vmul.f32 %v2087, %v2086
        %v2089 = vmul.f32 0.5, %v2088
        %v2090 = vsub.f32 1.5, %v2089
        %v2091 = vmul.f32 %v2086, %v2090
        %vm2092 = vweird.f32 %v2033
        %vm2093 = vweird.f32 %v2086
        %vm2094 = vmor %vm2092, %vm2093
        %v2095 = vsel %vm2094, %v2086, %v2091
        %v2096 = vrsqrt.pop %v2034
        %v2097 = vmul.f32 %v2096, %v2034
        %v2098 = vmul.f32 %v2097, %v2096
        %v2099 = vmul.f32 0.5, %v2098
        %v2100 = vsub.f32 1.5, %v2099
        %v2101 = vmul.f32 %v2096, %v2100
        %vm2102 = vweird.f32 %v2034
        %vm2103 = vweird.f32 %v2096
        %vm2104 = vmor %vm2102, %vm2103
        %v2105 = vsel %vm2104, %v2096, %v2101
        %v2106 = vrsqrt.pop %v2035
        %v2107 = vmul.f32 %v2106, %v2035
        %v2108 = vmul.f32 %v2107, %v2106
        %v2109 = vmul.f32 0.5, %v2108
        %v2110 = vsub.f32 1.5, %v2109
        %v2111 = vmul.f32 %v2106, %v2110
        %vm2112 = vweird.f32 %v2035
        %vm2113 = vweird.f32 %v2106
        %vm2114 = vmor %vm2112, %vm2113
        %v2115 = vsel %vm2114, %v2106, %v2111
        %v2116 = vmul.f32 %v1980, %v2045
        %v2117 = vmul.f32 %v1981, %v2055
        %v2118 = vmul.f32 %v1982, %v2065
        %v2119 = vmul.f32 %v1983, %v2075
        %v2120 = vmul.f32 %v1984, %v2085
        %v2121 = vmul.f32 %v1985, %v2095
        %v2122 = vmul.f32 %v1986, %v2105
        %v2123 = vmul.f32 %v1987, %v2115
        %v2125 = vperm.slane %v1939, 0
        %v2127 = vmul.f32 %v2116, %v2125
        %v2128 = vmul.f32 %v2117, %v2125
        %v2129 = vmul.f32 %v2118, %v2125
        %v2130 = vmul.f32 %v2119, %v2125
        %v2131 = vmul.f32 %v2120, %v2125
        %v2132 = vmul.f32 %v2121, %v2125
        %v2133 = vmul.f32 %v2122, %v2125
        %v2134 = vmul.f32 %v2123, %v2125
        %v2136 = vperm.slane %v1940, 0
        %v2138 = vadd.f32 %v2127, %v2136
        %v2139 = vadd.f32 %v2128, %v2136
        %v2140 = vadd.f32 %v2129, %v2136
        %v2141 = vadd.f32 %v2130, %v2136
        %v2142 = vadd.f32 %v2131, %v2136
        %v2143 = vadd.f32 %v2132, %v2136
        %v2144 = vadd.f32 %v2133, %v2136
        %v2145 = vadd.f32 %v2134, %v2136
        %v2146 = vpack.c.bf16 %v2139, %v2138
        %v2147 = vpack.c.bf16 %v2141, %v2140
        %v2148 = vpack.c.bf16 %v2143, %v2142
        %v2149 = vpack.c.bf16 %v2145, %v2144
        %v2150 = vld [vmem:[%s10] sm:$0xf]
        %v2151 = vld [vmem:[%s10 + $0x4] sm:$0xf]
        %v2152 = vld [vmem:[%s11] sm:$0x1]
        %v2154 = vperm.slane %v2152, 0
        %v2158 = vunpack.c.l.b16 %v2150
        %v2159 = vunpack.c.l.b16 %v2151
        %v2160 = vpack.c.b16 %v2159, %v2158
        %v2163 = vsel %vm902, %v2146, 0
        %v2166 = vsel %vm902, %v2147, 0
        %v2169 = vsel %vm902, %v2148, 0
        %v2172 = vsel %vm902, %v2149, 0
        %2174 = vmatpush.bf16.msra.mxu0 0
        %2175 = vmatpush.bf16.msra.mxu0 0
        %2176 = vmatpush.bf16.msra.mxu0 0
        %2177 = vmatpush.bf16.msra.mxu0 0
        %2178 = vmatpush.bf16.msra.mxu0 0
        %2179 = vmatpush.bf16.msra.mxu0 0
        %2180 = vmatpush.bf16.msra.mxu0 0
        %2181 = vmatpush.bf16.msra.mxu0 %v2160
        %2182 = vmatmul.bf16.gmra.mxu0 %v2163
        %v2183 = vpop.f32.mrf.mxu0
        %v2184 = vadd.f32 %v2154, %v2183
        %v2185 = vpop.f32.mrf.mxu0
        %v2186 = vadd.f32 %v2154, %v2185
        %2187 = vmatmul.bf16.gmra.mxu0 %v2166
        %v2188 = vpop.f32.mrf.mxu0
        %v2189 = vadd.f32 %v2154, %v2188
        %v2190 = vpop.f32.mrf.mxu0
        %v2191 = vadd.f32 %v2154, %v2190
        %2192 = vmatmul.bf16.gmra.mxu0 %v2169
        %v2193 = vpop.f32.mrf.mxu0
        %v2194 = vadd.f32 %v2154, %v2193
        %v2195 = vpop.f32.mrf.mxu0
        %v2196 = vadd.f32 %v2154, %v2195
        %2197 = vmatmul.bf16.gmra.mxu0 %v2172
        %v2198 = vpop.f32.mrf.mxu0
        %v2199 = vadd.f32 %v2154, %v2198
        %v2200 = vpop.f32.mrf.mxu0
        %v2201 = vadd.f32 %v2154, %v2200
        %2202 = vdwg.mxu0
        %v2203 = vmul.f32 %v2184, 0.5
        %v2204 = vmul.f32 %v2186, 0.5
        %v2205 = vmul.f32 %v2189, 0.5
        %v2206 = vmul.f32 %v2191, 0.5
        %v2207 = vmul.f32 %v2194, 0.5
        %v2208 = vmul.f32 %v2196, 0.5
        %v2209 = vmul.f32 %v2199, 0.5
        %v2210 = vmul.f32 %v2201, 0.5
        %v2211 = vmul.f32 %v2184, 0.044715
        %v2212 = vmul.f32 %v2186, 0.044715
        %v2213 = vmul.f32 %v2189, 0.044715
        %v2214 = vmul.f32 %v2191, 0.044715
        %v2215 = vmul.f32 %v2194, 0.044715
        %v2216 = vmul.f32 %v2196, 0.044715
        %v2217 = vmul.f32 %v2199, 0.044715
        %v2218 = vmul.f32 %v2201, 0.044715
        %v2219 = vmul.f32 %v2211, %v2184
        %v2220 = vmul.f32 %v2212, %v2186
        %v2221 = vmul.f32 %v2213, %v2189
        %v2222 = vmul.f32 %v2214, %v2191
        %v2223 = vmul.f32 %v2215, %v2194
        %v2224 = vmul.f32 %v2216, %v2196
        %v2225 = vmul.f32 %v2217, %v2199
        %v2226 = vmul.f32 %v2218, %v2201
        %v2227 = vmul.f32 %v2219, %v2184
        %v2228 = vmul.f32 %v2220, %v2186
        %v2229 = vmul.f32 %v2221, %v2189
        %v2230 = vmul.f32 %v2222, %v2191
        %v2231 = vmul.f32 %v2223, %v2194
        %v2232 = vmul.f32 %v2224, %v2196
        %v2233 = vmul.f32 %v2225, %v2199
        %v2234 = vmul.f32 %v2226, %v2201
        %v2235 = vadd.f32 %v2184, %v2227
        %v2236 = vadd.f32 %v2186, %v2228
        %v2237 = vadd.f32 %v2189, %v2229
        %v2238 = vadd.f32 %v2191, %v2230
        %v2239 = vadd.f32 %v2194, %v2231
        %v2240 = vadd.f32 %v2196, %v2232
        %v2241 = vadd.f32 %v2199, %v2233
        %v2242 = vadd.f32 %v2201, %v2234
        %v2243 = vmul.f32 %v2235, 0.7978846
        %v2244 = vmul.f32 %v2236, 0.7978846
        %v2245 = vmul.f32 %v2237, 0.7978846
        %v2246 = vmul.f32 %v2238, 0.7978846
        %v2247 = vmul.f32 %v2239, 0.7978846
        %v2248 = vmul.f32 %v2240, 0.7978846
        %v2249 = vmul.f32 %v2241, 0.7978846
        %v2250 = vmul.f32 %v2242, 0.7978846
        %v2251 = vtanh.pop %v2243
        %v2252 = vtanh.pop %v2244
        %v2253 = vtanh.pop %v2245
        %v2254 = vtanh.pop %v2246
        %v2255 = vtanh.pop %v2247
        %v2256 = vtanh.pop %v2248
        %v2257 = vtanh.pop %v2249
        %v2258 = vtanh.pop %v2250
        %v2259 = vadd.f32 %v2251, 1.0
        %v2260 = vadd.f32 %v2252, 1.0
        %v2261 = vadd.f32 %v2253, 1.0
        %v2262 = vadd.f32 %v2254, 1.0
        %v2263 = vadd.f32 %v2255, 1.0
        %v2264 = vadd.f32 %v2256, 1.0
        %v2265 = vadd.f32 %v2257, 1.0
        %v2266 = vadd.f32 %v2258, 1.0
        %v2267 = vmul.f32 %v2203, %v2259
        %v2268 = vmul.f32 %v2204, %v2260
        %v2269 = vmul.f32 %v2205, %v2261
        %v2270 = vmul.f32 %v2206, %v2262
        %v2271 = vmul.f32 %v2207, %v2263
        %v2272 = vmul.f32 %v2208, %v2264
        %v2273 = vmul.f32 %v2209, %v2265
        %v2274 = vmul.f32 %v2210, %v2266
        %v2275 = vpack.c.bf16 %v2268, %v2267
        %v2276 = vpack.c.bf16 %v2270, %v2269
        %v2277 = vpack.c.bf16 %v2272, %v2271
        %v2278 = vpack.c.bf16 %v2274, %v2273
        %v2279 = vld [vmem:[%s12] sm:$0xf]
        %v2280 = vld [vmem:[%s12 + $0x4] sm:$0xf]
        %2281 = vrot.lane.b32.xlu0 %v1026, 112
        %v2282 = vpop.permute.xlu0 %2281
        %v2284 = vsel %vm1049, %v2282, 0
        %2286 = vmatpush.bf16.xpose.msra.mxu0 0
        %2287 = vmatpush.bf16.xpose.msra.mxu0 0
        %2288 = vmatpush.bf16.xpose.msra.mxu0 0
        %2289 = vmatpush.bf16.xpose.msra.mxu0 0
        %2290 = vmatpush.bf16.xpose.msra.mxu0 0
        %2291 = vmatpush.bf16.xpose.msra.mxu0 0
        %2292 = vmatpush.bf16.xpose.msra.mxu0 0
        %2293 = vmatpush.bf16.xpose.msra.mxu0 %v2284
        %2294 = vmatmul.bf16.gmra.mxu0 %v1433
        %v2295 = vpop.f32.mrf.mxu0
        %v2296 = vadd.f32 0.0, %v2295
        %v2297 = vpop.f32.mrf.mxu0
        %v2298 = vadd.f32 0.0, %v2297
        %2299 = vdwg.mxu0
        %2300 = vrot.lane.b32.xlu0 %v1028, 112
        %v2301 = vpop.permute.xlu0 %2300
        %v2303 = vsel %vm1049, %v2301, 0
        %2305 = vmatpush.bf16.xpose.msra.mxu0 0
        %2306 = vmatpush.bf16.xpose.msra.mxu0 0
        %2307 = vmatpush.bf16.xpose.msra.mxu0 0
        %2308 = vmatpush.bf16.xpose.msra.mxu0 0
        %2309 = vmatpush.bf16.xpose.msra.mxu0 0
        %2310 = vmatpush.bf16.xpose.msra.mxu0 0
        %2311 = vmatpush.bf16.xpose.msra.mxu0 0
        %2312 = vmatpush.bf16.xpose.msra.mxu0 %v2303
        %2313 = vmatmul.bf16.gmra.mxu0 %v1455
        %v2314 = vpop.f32.mrf.mxu0
        %v2315 = vadd.f32 0.0, %v2314
        %v2316 = vpop.f32.mrf.mxu0
        %v2317 = vadd.f32 0.0, %v2316
        %2318 = vdwg.mxu0
        %2319 = vrot.lane.b32.xlu0 %v1030, 112
        %v2320 = vpop.permute.xlu0 %2319
        %v2322 = vsel %vm1049, %v2320, 0
        %2324 = vmatpush.bf16.xpose.msra.mxu0 0
        %2325 = vmatpush.bf16.xpose.msra.mxu0 0
        %2326 = vmatpush.bf16.xpose.msra.mxu0 0
        %2327 = vmatpush.bf16.xpose.msra.mxu0 0
        %2328 = vmatpush.bf16.xpose.msra.mxu0 0
        %2329 = vmatpush.bf16.xpose.msra.mxu0 0
        %2330 = vmatpush.bf16.xpose.msra.mxu0 0
        %2331 = vmatpush.bf16.xpose.msra.mxu0 %v2322
        %2332 = vmatmul.bf16.gmra.mxu0 %v1477
        %v2333 = vpop.f32.mrf.mxu0
        %v2334 = vadd.f32 0.0, %v2333
        %v2335 = vpop.f32.mrf.mxu0
        %v2336 = vadd.f32 0.0, %v2335
        %2337 = vdwg.mxu0
        %2338 = vrot.lane.b32.xlu0 %v1032, 112
        %v2339 = vpop.permute.xlu0 %2338
        %v2341 = vsel %vm1049, %v2339, 0
        %2343 = vmatpush.bf16.xpose.msra.mxu0 0
        %2344 = vmatpush.bf16.xpose.msra.mxu0 0
        %2345 = vmatpush.bf16.xpose.msra.mxu0 0
        %2346 = vmatpush.bf16.xpose.msra.mxu0 0
        %2347 = vmatpush.bf16.xpose.msra.mxu0 0
        %2348 = vmatpush.bf16.xpose.msra.mxu0 0
        %2349 = vmatpush.bf16.xpose.msra.mxu0 0
        %2350 = vmatpush.bf16.xpose.msra.mxu0 %v2341
        %2351 = vmatmul.bf16.gmra.mxu0 %v1499
        %v2352 = vpop.f32.mrf.mxu0
        %v2353 = vadd.f32 0.0, %v2352
        %v2354 = vpop.f32.mrf.mxu0
        %v2355 = vadd.f32 0.0, %v2354
        %2356 = vdwg.mxu0
        %v2357 = vsel %vm902, %v2296, -inf
        %2358 = vmax.xlane.f32.xlu0 %v2357
        %v2359 = vpop.xlane.xlu0 %2358
        %v2360 = vsel %vm902, %v2298, -inf
        %2361 = vmax.xlane.f32.xlu0 %v2360
        %v2362 = vpop.xlane.xlu0 %2361
        %v2363 = vsel %vm902, %v2315, -inf
        %2364 = vmax.xlane.f32.xlu0 %v2363
        %v2365 = vpop.xlane.xlu0 %2364
        %v2366 = vsel %vm902, %v2317, -inf
        %2367 = vmax.xlane.f32.xlu0 %v2366
        %v2368 = vpop.xlane.xlu0 %2367
        %v2369 = vsel %vm902, %v2334, -inf
        %2370 = vmax.xlane.f32.xlu0 %v2369
        %v2371 = vpop.xlane.xlu0 %2370
        %v2372 = vsel %vm902, %v2336, -inf
        %2373 = vmax.xlane.f32.xlu0 %v2372
        %v2374 = vpop.xlane.xlu0 %2373
        %v2375 = vsel %vm902, %v2353, -inf
        %2376 = vmax.xlane.f32.xlu0 %v2375
        %v2377 = vpop.xlane.xlu0 %2376
        %v2378 = vsel %vm902, %v2355, -inf
        %2379 = vmax.xlane.f32.xlu0 %v2378
        %v2380 = vpop.xlane.xlu0 %2379
        %v2381 = vsub.f32 %v2296, %v2359
        %v2382 = vsub.f32 %v2298, %v2362
        %v2383 = vsub.f32 %v2315, %v2365
        %v2384 = vsub.f32 %v2317, %v2368
        %v2385 = vsub.f32 %v2334, %v2371
        %v2386 = vsub.f32 %v2336, %v2374
        %v2387 = vsub.f32 %v2353, %v2377
        %v2388 = vsub.f32 %v2355, %v2380
        %v2389 = vmul.f32 %v2381, 1.442695
        %v2390 = vpow.pop %v2389
        %v2391 = vmul.f32 %v2382, 1.442695
        %v2392 = vpow.pop %v2391
        %v2393 = vmul.f32 %v2383, 1.442695
        %v2394 = vpow.pop %v2393
        %v2395 = vmul.f32 %v2384, 1.442695
        %v2396 = vpow.pop %v2395
        %v2397 = vmul.f32 %v2385, 1.442695
        %v2398 = vpow.pop %v2397
        %v2399 = vmul.f32 %v2386, 1.442695
        %v2400 = vpow.pop %v2399
        %v2401 = vmul.f32 %v2387, 1.442695
        %v2402 = vpow.pop %v2401
        %v2403 = vmul.f32 %v2388, 1.442695
        %v2404 = vpow.pop %v2403
        %v2405 = vsel %vm902, %v2390, 0.0
        %2406 = vadd.xlane.f32.xlu0 %v2405
        %v2407 = vpop.xlane.xlu0 %2406
        %v2408 = vsel %vm902, %v2392, 0.0
        %2409 = vadd.xlane.f32.xlu0 %v2408
        %v2410 = vpop.xlane.xlu0 %2409
        %v2411 = vsel %vm902, %v2394, 0.0
        %2412 = vadd.xlane.f32.xlu0 %v2411
        %v2413 = vpop.xlane.xlu0 %2412
        %v2414 = vsel %vm902, %v2396, 0.0
        %2415 = vadd.xlane.f32.xlu0 %v2414
        %v2416 = vpop.xlane.xlu0 %2415
        %v2417 = vsel %vm902, %v2398, 0.0
        %2418 = vadd.xlane.f32.xlu0 %v2417
        %v2419 = vpop.xlane.xlu0 %2418
        %v2420 = vsel %vm902, %v2400, 0.0
        %2421 = vadd.xlane.f32.xlu0 %v2420
        %v2422 = vpop.xlane.xlu0 %2421
        %v2423 = vsel %vm902, %v2402, 0.0
        %2424 = vadd.xlane.f32.xlu0 %v2423
        %v2425 = vpop.xlane.xlu0 %2424
        %v2426 = vsel %vm902, %v2404, 0.0
        %2427 = vadd.xlane.f32.xlu0 %v2426
        %v2428 = vpop.xlane.xlu0 %2427
        %v2429 = vrcp.pop %v2407
        %v2430 = vrcp.pop %v2410
        %v2431 = vrcp.pop %v2413
        %v2432 = vrcp.pop %v2416
        %v2433 = vrcp.pop %v2419
        %v2434 = vrcp.pop %v2422
        %v2435 = vrcp.pop %v2425
        %v2436 = vrcp.pop %v2428
        %v2437 = vmul.f32 %v2390, %v2429
        %v2438 = vmul.f32 %v2392, %v2430
        %v2439 = vmul.f32 %v2394, %v2431
        %v2440 = vmul.f32 %v2396, %v2432
        %v2441 = vmul.f32 %v2398, %v2433
        %v2442 = vmul.f32 %v2400, %v2434
        %v2443 = vmul.f32 %v2402, %v2435
        %v2444 = vmul.f32 %v2404, %v2436
        %v2445 = vpack.c.bf16 %v2437, %v2437
        %v2446 = vpack.c.bf16 %v2438, %v2438
        %v2447 = vpack.c.bf16 %v2439, %v2439
        %v2448 = vpack.c.bf16 %v2440, %v2440
        %v2449 = vpack.c.bf16 %v2441, %v2441
        %v2450 = vpack.c.bf16 %v2442, %v2442
        %v2451 = vpack.c.bf16 %v2443, %v2443
        %v2452 = vpack.c.bf16 %v2444, %v2444
        %2453 = vrot.lane.b32.xlu0 %v1026, 104
        %v2454 = vpop.permute.xlu0 %2453
        %v2456 = vsel %vm1049, %v2454, 0
        %2458 = vmatpush.bf16.xpose.msra.mxu0 0
        %2459 = vmatpush.bf16.xpose.msra.mxu0 0
        %2460 = vmatpush.bf16.xpose.msra.mxu0 0
        %2461 = vmatpush.bf16.xpose.msra.mxu0 0
        %2462 = vmatpush.bf16.xpose.msra.mxu0 0
        %2463 = vmatpush.bf16.xpose.msra.mxu0 0
        %2464 = vmatpush.bf16.xpose.msra.mxu0 0
        %2465 = vmatpush.bf16.xpose.msra.mxu0 %v2456
        %2466 = vmatmul.bf16.gmra.mxu0 %v1619
        %v2467 = vpop.f32.mrf.mxu0
        %v2468 = vadd.f32 0.0, %v2467
        %v2469 = vpop.f32.mrf.mxu0
        %v2470 = vadd.f32 0.0, %v2469
        %2471 = vdwg.mxu0
        %2472 = vrot.lane.b32.xlu0 %v1028, 104
        %v2473 = vpop.permute.xlu0 %2472
        %v2475 = vsel %vm1049, %v2473, 0
        %2477 = vmatpush.bf16.xpose.msra.mxu0 0
        %2478 = vmatpush.bf16.xpose.msra.mxu0 0
        %2479 = vmatpush.bf16.xpose.msra.mxu0 0
        %2480 = vmatpush.bf16.xpose.msra.mxu0 0
        %2481 = vmatpush.bf16.xpose.msra.mxu0 0
        %2482 = vmatpush.bf16.xpose.msra.mxu0 0
        %2483 = vmatpush.bf16.xpose.msra.mxu0 0
        %2484 = vmatpush.bf16.xpose.msra.mxu0 %v2475
        %2485 = vmatmul.bf16.gmra.mxu0 %v1643
        %v2486 = vpop.f32.mrf.mxu0
        %v2487 = vadd.f32 0.0, %v2486
        %v2488 = vpop.f32.mrf.mxu0
        %v2489 = vadd.f32 0.0, %v2488
        %2490 = vdwg.mxu0
        %2491 = vrot.lane.b32.xlu0 %v1030, 104
        %v2492 = vpop.permute.xlu0 %2491
        %v2494 = vsel %vm1049, %v2492, 0
        %2496 = vmatpush.bf16.xpose.msra.mxu0 0
        %2497 = vmatpush.bf16.xpose.msra.mxu0 0
        %2498 = vmatpush.bf16.xpose.msra.mxu0 0
        %2499 = vmatpush.bf16.xpose.msra.mxu0 0
        %2500 = vmatpush.bf16.xpose.msra.mxu0 0
        %2501 = vmatpush.bf16.xpose.msra.mxu0 0
        %2502 = vmatpush.bf16.xpose.msra.mxu0 0
        %2503 = vmatpush.bf16.xpose.msra.mxu0 %v2494
        %2504 = vmatmul.bf16.gmra.mxu0 %v1667
        %v2505 = vpop.f32.mrf.mxu0
        %v2506 = vadd.f32 0.0, %v2505
        %v2507 = vpop.f32.mrf.mxu0
        %v2508 = vadd.f32 0.0, %v2507
        %2509 = vdwg.mxu0
        %2510 = vrot.lane.b32.xlu0 %v1032, 104
        %v2511 = vpop.permute.xlu0 %2510
        %v2513 = vsel %vm1049, %v2511, 0
        %2515 = vmatpush.bf16.xpose.msra.mxu0 0
        %2516 = vmatpush.bf16.xpose.msra.mxu0 0
        %2517 = vmatpush.bf16.xpose.msra.mxu0 0
        %2518 = vmatpush.bf16.xpose.msra.mxu0 0
        %2519 = vmatpush.bf16.xpose.msra.mxu0 0
        %2520 = vmatpush.bf16.xpose.msra.mxu0 0
        %2521 = vmatpush.bf16.xpose.msra.mxu0 0
        %2522 = vmatpush.bf16.xpose.msra.mxu0 %v2513
        %2523 = vmatmul.bf16.gmra.mxu0 %v1691
        %v2524 = vpop.f32.mrf.mxu0
        %v2525 = vadd.f32 0.0, %v2524
        %v2526 = vpop.f32.mrf.mxu0
        %v2527 = vadd.f32 0.0, %v2526
        %2528 = vdwg.mxu0
        %v2529 = vsel %vm902, %v2468, -inf
        %2530 = vmax.xlane.f32.xlu0 %v2529
        %v2531 = vpop.xlane.xlu0 %2530
        %v2532 = vsel %vm902, %v2470, -inf
        %2533 = vmax.xlane.f32.xlu0 %v2532
        %v2534 = vpop.xlane.xlu0 %2533
        %v2535 = vsel %vm902, %v2487, -inf
        %2536 = vmax.xlane.f32.xlu0 %v2535
        %v2537 = vpop.xlane.xlu0 %2536
        %v2538 = vsel %vm902, %v2489, -inf
        %2539 = vmax.xlane.f32.xlu0 %v2538
        %v2540 = vpop.xlane.xlu0 %2539
        %v2541 = vsel %vm902, %v2506, -inf
        %2542 = vmax.xlane.f32.xlu0 %v2541
        %v2543 = vpop.xlane.xlu0 %2542
        %v2544 = vsel %vm902, %v2508, -inf
        %2545 = vmax.xlane.f32.xlu0 %v2544
        %v2546 = vpop.xlane.xlu0 %2545
        %v2547 = vsel %vm902, %v2525, -inf
        %2548 = vmax.xlane.f32.xlu0 %v2547
        %v2549 = vpop.xlane.xlu0 %2548
        %v2550 = vsel %vm902, %v2527, -inf
        %2551 = vmax.xlane.f32.xlu0 %v2550
        %v2552 = vpop.xlane.xlu0 %2551
        %v2553 = vsub.f32 %v2468, %v2531
        %v2554 = vsub.f32 %v2470, %v2534
        %v2555 = vsub.f32 %v2487, %v2537
        %v2556 = vsub.f32 %v2489, %v2540
        %v2557 = vsub.f32 %v2506, %v2543
        %v2558 = vsub.f32 %v2508, %v2546
        %v2559 = vsub.f32 %v2525, %v2549
        %v2560 = vsub.f32 %v2527, %v2552
        %v2561 = vmul.f32 %v2553, 1.442695
        %v2562 = vpow.pop %v2561
        %v2563 = vmul.f32 %v2554, 1.442695
        %v2564 = vpow.pop %v2563
        %v2565 = vmul.f32 %v2555, 1.442695
        %v2566 = vpow.pop %v2565
        %v2567 = vmul.f32 %v2556, 1.442695
        %v2568 = vpow.pop %v2567
        %v2569 = vmul.f32 %v2557, 1.442695
        %v2570 = vpow.pop %v2569
        %v2571 = vmul.f32 %v2558, 1.442695
        %v2572 = vpow.pop %v2571
        %v2573 = vmul.f32 %v2559, 1.442695
        %v2574 = vpow.pop %v2573
        %v2575 = vmul.f32 %v2560, 1.442695
        %v2576 = vpow.pop %v2575
        %v2577 = vsel %vm902, %v2562, 0.0
        %2578 = vadd.xlane.f32.xlu0 %v2577
        %v2579 = vpop.xlane.xlu0 %2578
        %v2580 = vsel %vm902, %v2564, 0.0
        %2581 = vadd.xlane.f32.xlu0 %v2580
        %v2582 = vpop.xlane.xlu0 %2581
        %v2583 = vsel %vm902, %v2566, 0.0
        %2584 = vadd.xlane.f32.xlu0 %v2583
        %v2585 = vpop.xlane.xlu0 %2584
        %v2586 = vsel %vm902, %v2568, 0.0
        %2587 = vadd.xlane.f32.xlu0 %v2586
        %v2588 = vpop.xlane.xlu0 %2587
        %v2589 = vsel %vm902, %v2570, 0.0
        %2590 = vadd.xlane.f32.xlu0 %v2589
        %v2591 = vpop.xlane.xlu0 %2590
        %v2592 = vsel %vm902, %v2572, 0.0
        %2593 = vadd.xlane.f32.xlu0 %v2592
        %v2594 = vpop.xlane.xlu0 %2593
        %v2595 = vsel %vm902, %v2574, 0.0
        %2596 = vadd.xlane.f32.xlu0 %v2595
        %v2597 = vpop.xlane.xlu0 %2596
        %v2598 = vsel %vm902, %v2576, 0.0
        %2599 = vadd.xlane.f32.xlu0 %v2598
        %v2600 = vpop.xlane.xlu0 %2599
        %v2601 = vrcp.pop %v2579
        %v2602 = vrcp.pop %v2582
        %v2603 = vrcp.pop %v2585
        %v2604 = vrcp.pop %v2588
        %v2605 = vrcp.pop %v2591
        %v2606 = vrcp.pop %v2594
        %v2607 = vrcp.pop %v2597
        %v2608 = vrcp.pop %v2600
        %v2609 = vmul.f32 %v2562, %v2601
        %v2610 = vmul.f32 %v2564, %v2602
        %v2611 = vmul.f32 %v2566, %v2603
        %v2612 = vmul.f32 %v2568, %v2604
        %v2613 = vmul.f32 %v2570, %v2605
        %v2614 = vmul.f32 %v2572, %v2606
        %v2615 = vmul.f32 %v2574, %v2607
        %v2616 = vmul.f32 %v2576, %v2608
        %v2617 = vpack.c.bf16 %v2609, %v2609
        %v2618 = vpack.c.bf16 %v2610, %v2610
        %v2619 = vpack.c.bf16 %v2611, %v2611
        %v2620 = vpack.c.bf16 %v2612, %v2612
        %v2621 = vpack.c.bf16 %v2613, %v2613
        %v2622 = vpack.c.bf16 %v2614, %v2614
        %v2623 = vpack.c.bf16 %v2615, %v2615
        %v2624 = vpack.c.bf16 %v2616, %v2616
        %v2633 = vunpack.c.l.b16 %v2445
        %v2634 = vunpack.c.l.b16 %v2446
        %v2635 = vunpack.c.l.b16 %v2447
        %v2636 = vunpack.c.l.b16 %v2448
        %v2637 = vunpack.c.l.b16 %v2449
        %v2638 = vunpack.c.l.b16 %v2450
        %v2639 = vunpack.c.l.b16 %v2451
        %v2640 = vunpack.c.l.b16 %v2452
        %v2641 = vpack.c.b16 %v2634, %v2633
        %v2642 = vpack.c.b16 %v2636, %v2635
        %v2643 = vpack.c.b16 %v2638, %v2637
        %v2644 = vpack.c.b16 %v2640, %v2639
        %v2653 = vunpack.c.l.b16 %v2617
        %v2654 = vunpack.c.l.b16 %v2618
        %v2655 = vunpack.c.l.b16 %v2619
        %v2656 = vunpack.c.l.b16 %v2620
        %v2657 = vunpack.c.l.b16 %v2621
        %v2658 = vunpack.c.l.b16 %v2622
        %v2659 = vunpack.c.l.b16 %v2623
        %v2660 = vunpack.c.l.b16 %v2624
        %v2661 = vpack.c.b16 %v2654, %v2653
        %v2662 = vpack.c.b16 %v2656, %v2655
        %v2663 = vpack.c.b16 %v2658, %v2657
        %v2664 = vpack.c.b16 %v2660, %v2659
        %2665 = vrot.lane.b32.xlu0 %v2661, 16
        %v2666 = vpop.permute.xlu0 %2665
        %2667 = vrot.lane.b32.xlu0 %v2662, 16
        %v2668 = vpop.permute.xlu0 %2667
        %2669 = vrot.lane.b32.xlu0 %v2663, 16
        %v2670 = vpop.permute.xlu0 %2669
        %2671 = vrot.lane.b32.xlu0 %v2664, 16
        %v2672 = vpop.permute.xlu0 %2671
        %v2675 = vsel %vm902, %v2641, %v2666
        %v2678 = vsel %vm902, %v2642, %v2668
        %v2681 = vsel %vm902, %v2643, %v2670
        %v2684 = vsel %vm902, %v2644, %v2672
        %v2685 = vsel %vm1866, %v2675, 0
        %2687 = vmatpush.bf16.msra.mxu0 0
        %2688 = vmatpush.bf16.msra.mxu0 0
        %2689 = vmatpush.bf16.msra.mxu0 0
        %2690 = vmatpush.bf16.msra.mxu0 0
        %2691 = vmatpush.bf16.msra.mxu0 0
        %2692 = vmatpush.bf16.msra.mxu0 0
        %2693 = vmatpush.bf16.msra.mxu0 %v1341
        %2694 = vmatpush.bf16.msra.mxu0 %v1317
        %2695 = vmatmul.bf16.gmra.mxu0 %v2685
        %v2696 = vpop.f32.mrf.mxu0
        %v2697 = vadd.f32 0.0, %v2696
        %v2698 = vpop.f32.mrf.mxu0
        %v2699 = vadd.f32 0.0, %v2698
        %2700 = vdwg.mxu0
        %v2701 = vsel %vm1866, %v2678, 0
        %2703 = vmatpush.bf16.msra.mxu0 0
        %2704 = vmatpush.bf16.msra.mxu0 0
        %2705 = vmatpush.bf16.msra.mxu0 0
        %2706 = vmatpush.bf16.msra.mxu0 0
        %2707 = vmatpush.bf16.msra.mxu0 0
        %2708 = vmatpush.bf16.msra.mxu0 0
        %2709 = vmatpush.bf16.msra.mxu0 %v1342
        %2710 = vmatpush.bf16.msra.mxu0 %v1318
        %2711 = vmatmul.bf16.gmra.mxu0 %v2701
        %v2712 = vpop.f32.mrf.mxu0
        %v2713 = vadd.f32 0.0, %v2712
        %v2714 = vpop.f32.mrf.mxu0
        %v2715 = vadd.f32 0.0, %v2714
        %2716 = vdwg.mxu0
        %v2717 = vsel %vm1866, %v2681, 0
        %2719 = vmatpush.bf16.msra.mxu0 0
        %2720 = vmatpush.bf16.msra.mxu0 0
        %2721 = vmatpush.bf16.msra.mxu0 0
        %2722 = vmatpush.bf16.msra.mxu0 0
        %2723 = vmatpush.bf16.msra.mxu0 0
        %2724 = vmatpush.bf16.msra.mxu0 0
        %2725 = vmatpush.bf16.msra.mxu0 %v1343
        %2726 = vmatpush.bf16.msra.mxu0 %v1319
        %2727 = vmatmul.bf16.gmra.mxu0 %v2717
        %v2728 = vpop.f32.mrf.mxu0
        %v2729 = vadd.f32 0.0, %v2728
        %v2730 = vpop.f32.mrf.mxu0
        %v2731 = vadd.f32 0.0, %v2730
        %2732 = vdwg.mxu0
        %v2733 = vsel %vm1866, %v2684, 0
        %2735 = vmatpush.bf16.msra.mxu0 0
        %2736 = vmatpush.bf16.msra.mxu0 0
        %2737 = vmatpush.bf16.msra.mxu0 0
        %2738 = vmatpush.bf16.msra.mxu0 0
        %2739 = vmatpush.bf16.msra.mxu0 0
        %2740 = vmatpush.bf16.msra.mxu0 0
        %2741 = vmatpush.bf16.msra.mxu0 %v1344
        %2742 = vmatpush.bf16.msra.mxu0 %v1320
        %2743 = vmatmul.bf16.gmra.mxu0 %v2733
        %v2744 = vpop.f32.mrf.mxu0
        %v2745 = vadd.f32 0.0, %v2744
        %v2746 = vpop.f32.mrf.mxu0
        %v2747 = vadd.f32 0.0, %v2746
        %2748 = vdwg.mxu0
        %v2749 = vadd.f32 %v1411, %v2697
        %v2750 = vadd.f32 %v1413, %v2699
        %v2751 = vadd.f32 %v1416, %v2713
        %v2752 = vadd.f32 %v1418, %v2715
        %v2753 = vadd.f32 %v1421, %v2729
        %v2754 = vadd.f32 %v1423, %v2731
        %v2755 = vadd.f32 %v1426, %v2745
        %v2756 = vadd.f32 %v1428, %v2747
        %v2757 = vld [vmem:[%s8] sm:$0x1]
        %v2758 = vld [vmem:[%s9] sm:$0x1]
        %v2759 = vsel %vm902, %v2749, 0.0
        %2760 = vadd.xlane.f32.xlu0 %v2759
        %v2761 = vpop.xlane.xlu0 %2760
        %v2762 = vsel %vm902, %v2750, 0.0
        %2763 = vadd.xlane.f32.xlu0 %v2762
        %v2764 = vpop.xlane.xlu0 %2763
        %v2765 = vsel %vm902, %v2751, 0.0
        %2766 = vadd.xlane.f32.xlu0 %v2765
        %v2767 = vpop.xlane.xlu0 %2766
        %v2768 = vsel %vm902, %v2752, 0.0
        %2769 = vadd.xlane.f32.xlu0 %v2768
        %v2770 = vpop.xlane.xlu0 %2769
        %v2771 = vsel %vm902, %v2753, 0.0
        %2772 = vadd.xlane.f32.xlu0 %v2771
        %v2773 = vpop.xlane.xlu0 %2772
        %v2774 = vsel %vm902, %v2754, 0.0
        %2775 = vadd.xlane.f32.xlu0 %v2774
        %v2776 = vpop.xlane.xlu0 %2775
        %v2777 = vsel %vm902, %v2755, 0.0
        %2778 = vadd.xlane.f32.xlu0 %v2777
        %v2779 = vpop.xlane.xlu0 %2778
        %v2780 = vsel %vm902, %v2756, 0.0
        %2781 = vadd.xlane.f32.xlu0 %v2780
        %v2782 = vpop.xlane.xlu0 %2781
        %v2783 = vmul.f32 %v2761, %v1971
        %v2784 = vmul.f32 %v2764, %v1971
        %v2785 = vmul.f32 %v2767, %v1971
        %v2786 = vmul.f32 %v2770, %v1971
        %v2787 = vmul.f32 %v2773, %v1971
        %v2788 = vmul.f32 %v2776, %v1971
        %v2789 = vmul.f32 %v2779, %v1971
        %v2790 = vmul.f32 %v2782, %v1971
        %v2791 = vsub.f32 %v2749, %v2783
        %v2792 = vsub.f32 %v2750, %v2784
        %v2793 = vsub.f32 %v2751, %v2785
        %v2794 = vsub.f32 %v2752, %v2786
        %v2795 = vsub.f32 %v2753, %v2787
        %v2796 = vsub.f32 %v2754, %v2788
        %v2797 = vsub.f32 %v2755, %v2789
        %v2798 = vsub.f32 %v2756, %v2790
        %v2799 = vmul.f32 %v2791, %v2791
        %v2800 = vmul.f32 %v2792, %v2792
        %v2801 = vmul.f32 %v2793, %v2793
        %v2802 = vmul.f32 %v2794, %v2794
        %v2803 = vmul.f32 %v2795, %v2795
        %v2804 = vmul.f32 %v2796, %v2796
        %v2805 = vmul.f32 %v2797, %v2797
        %v2806 = vmul.f32 %v2798, %v2798
        %v2807 = vsel %vm902, %v2799, 0.0
        %2808 = vadd.xlane.f32.xlu0 %v2807
        %v2809 = vpop.xlane.xlu0 %2808
        %v2810 = vsel %vm902, %v2800, 0.0
        %2811 = vadd.xlane.f32.xlu0 %v2810
        %v2812 = vpop.xlane.xlu0 %2811
        %v2813 = vsel %vm902, %v2801, 0.0
        %2814 = vadd.xlane.f32.xlu0 %v2813
        %v2815 = vpop.xlane.xlu0 %2814
        %v2816 = vsel %vm902, %v2802, 0.0
        %2817 = vadd.xlane.f32.xlu0 %v2816
        %v2818 = vpop.xlane.xlu0 %2817
        %v2819 = vsel %vm902, %v2803, 0.0
        %2820 = vadd.xlane.f32.xlu0 %v2819
        %v2821 = vpop.xlane.xlu0 %2820
        %v2822 = vsel %vm902, %v2804, 0.0
        %2823 = vadd.xlane.f32.xlu0 %v2822
        %v2824 = vpop.xlane.xlu0 %2823
        %v2825 = vsel %vm902, %v2805, 0.0
        %2826 = vadd.xlane.f32.xlu0 %v2825
        %v2827 = vpop.xlane.xlu0 %2826
        %v2828 = vsel %vm902, %v2806, 0.0
        %2829 = vadd.xlane.f32.xlu0 %v2828
        %v2830 = vpop.xlane.xlu0 %2829
        %v2831 = vmul.f32 %v2809, %v1971
        %v2832 = vmul.f32 %v2812, %v1971
        %v2833 = vmul.f32 %v2815, %v1971
        %v2834 = vmul.f32 %v2818, %v1971
        %v2835 = vmul.f32 %v2821, %v1971
        %v2836 = vmul.f32 %v2824, %v1971
        %v2837 = vmul.f32 %v2827, %v1971
        %v2838 = vmul.f32 %v2830, %v1971
        %v2839 = vadd.f32 %v2831, 1e-05
        %v2840 = vadd.f32 %v2832, 1e-05
        %v2841 = vadd.f32 %v2833, 1e-05
        %v2842 = vadd.f32 %v2834, 1e-05
        %v2843 = vadd.f32 %v2835, 1e-05
        %v2844 = vadd.f32 %v2836, 1e-05
        %v2845 = vadd.f32 %v2837, 1e-05
        %v2846 = vadd.f32 %v2838, 1e-05
        %v2847 = vrsqrt.pop %v2839
        %v2848 = vmul.f32 %v2847, %v2839
        %v2849 = vmul.f32 %v2848, %v2847
        %v2850 = vmul.f32 0.5, %v2849
        %v2851 = vsub.f32 1.5, %v2850
        %v2852 = vmul.f32 %v2847, %v2851
        %vm2853 = vweird.f32 %v2839
        %vm2854 = vweird.f32 %v2847
        %vm2855 = vmor %vm2853, %vm2854
        %v2856 = vsel %vm2855, %v2847, %v2852
        %v2857 = vrsqrt.pop %v2840
        %v2858 = vmul.f32 %v2857, %v2840
        %v2859 = vmul.f32 %v2858, %v2857
        %v2860 = vmul.f32 0.5, %v2859
        %v2861 = vsub.f32 1.5, %v2860
        %v2862 = vmul.f32 %v2857, %v2861
        %vm2863 = vweird.f32 %v2840
        %vm2864 = vweird.f32 %v2857
        %vm2865 = vmor %vm2863, %vm2864
        %v2866 = vsel %vm2865, %v2857, %v2862
        %v2867 = vrsqrt.pop %v2841
        %v2868 = vmul.f32 %v2867, %v2841
        %v2869 = vmul.f32 %v2868, %v2867
        %v2870 = vmul.f32 0.5, %v2869
        %v2871 = vsub.f32 1.5, %v2870
        %v2872 = vmul.f32 %v2867, %v2871
        %vm2873 = vweird.f32 %v2841
        %vm2874 = vweird.f32 %v2867
        %vm2875 = vmor %vm2873, %vm2874
        %v2876 = vsel %vm2875, %v2867, %v2872
        %v2877 = vrsqrt.pop %v2842
        %v2878 = vmul.f32 %v2877, %v2842
        %v2879 = vmul.f32 %v2878, %v2877
        %v2880 = vmul.f32 0.5, %v2879
        %v2881 = vsub.f32 1.5, %v2880
        %v2882 = vmul.f32 %v2877, %v2881
        %vm2883 = vweird.f32 %v2842
        %vm2884 = vweird.f32 %v2877
        %vm2885 = vmor %vm2883, %vm2884
        %v2886 = vsel %vm2885, %v2877, %v2882
        %v2887 = vrsqrt.pop %v2843
        %v2888 = vmul.f32 %v2887, %v2843
        %v2889 = vmul.f32 %v2888, %v2887
        %v2890 = vmul.f32 0.5, %v2889
        %v2891 = vsub.f32 1.5, %v2890
        %v2892 = vmul.f32 %v2887, %v2891
        %vm2893 = vweird.f32 %v2843
        %vm2894 = vweird.f32 %v2887
        %vm2895 = vmor %vm2893, %vm2894
        %v2896 = vsel %vm2895, %v2887, %v2892
        %v2897 = vrsqrt.pop %v2844
        %v2898 = vmul.f32 %v2897, %v2844
        %v2899 = vmul.f32 %v2898, %v2897
        %v2900 = vmul.f32 0.5, %v2899
        %v2901 = vsub.f32 1.5, %v2900
        %v2902 = vmul.f32 %v2897, %v2901
        %vm2903 = vweird.f32 %v2844
        %vm2904 = vweird.f32 %v2897
        %vm2905 = vmor %vm2903, %vm2904
        %v2906 = vsel %vm2905, %v2897, %v2902
        %v2907 = vrsqrt.pop %v2845
        %v2908 = vmul.f32 %v2907, %v2845
        %v2909 = vmul.f32 %v2908, %v2907
        %v2910 = vmul.f32 0.5, %v2909
        %v2911 = vsub.f32 1.5, %v2910
        %v2912 = vmul.f32 %v2907, %v2911
        %vm2913 = vweird.f32 %v2845
        %vm2914 = vweird.f32 %v2907
        %vm2915 = vmor %vm2913, %vm2914
        %v2916 = vsel %vm2915, %v2907, %v2912
        %v2917 = vrsqrt.pop %v2846
        %v2918 = vmul.f32 %v2917, %v2846
        %v2919 = vmul.f32 %v2918, %v2917
        %v2920 = vmul.f32 0.5, %v2919
        %v2921 = vsub.f32 1.5, %v2920
        %v2922 = vmul.f32 %v2917, %v2921
        %vm2923 = vweird.f32 %v2846
        %vm2924 = vweird.f32 %v2917
        %vm2925 = vmor %vm2923, %vm2924
        %v2926 = vsel %vm2925, %v2917, %v2922
        %v2927 = vmul.f32 %v2791, %v2856
        %v2928 = vmul.f32 %v2792, %v2866
        %v2929 = vmul.f32 %v2793, %v2876
        %v2930 = vmul.f32 %v2794, %v2886
        %v2931 = vmul.f32 %v2795, %v2896
        %v2932 = vmul.f32 %v2796, %v2906
        %v2933 = vmul.f32 %v2797, %v2916
        %v2934 = vmul.f32 %v2798, %v2926
        %v2936 = vperm.slane %v2757, 0
        %v2938 = vmul.f32 %v2927, %v2936
        %v2939 = vmul.f32 %v2928, %v2936
        %v2940 = vmul.f32 %v2929, %v2936
        %v2941 = vmul.f32 %v2930, %v2936
        %v2942 = vmul.f32 %v2931, %v2936
        %v2943 = vmul.f32 %v2932, %v2936
        %v2944 = vmul.f32 %v2933, %v2936
        %v2945 = vmul.f32 %v2934, %v2936
        %v2947 = vperm.slane %v2758, 0
        %v2949 = vadd.f32 %v2938, %v2947
        %v2950 = vadd.f32 %v2939, %v2947
        %v2951 = vadd.f32 %v2940, %v2947
        %v2952 = vadd.f32 %v2941, %v2947
        %v2953 = vadd.f32 %v2942, %v2947
        %v2954 = vadd.f32 %v2943, %v2947
        %v2955 = vadd.f32 %v2944, %v2947
        %v2956 = vadd.f32 %v2945, %v2947
        %v2957 = vpack.c.bf16 %v2950, %v2949
        %v2958 = vpack.c.bf16 %v2952, %v2951
        %v2959 = vpack.c.bf16 %v2954, %v2953
        %v2960 = vpack.c.bf16 %v2956, %v2955
        %v2961 = vld [vmem:[%s10] sm:$0xf]
        %v2962 = vld [vmem:[%s10 + $0x4] sm:$0xf]
        %v2963 = vld [vmem:[%s11] sm:$0x1]
        %v2965 = vperm.slane %v2963, 0
        %v2969 = vunpack.c.l.b16 %v2961
        %v2970 = vunpack.c.l.b16 %v2962
        %v2971 = vpack.c.b16 %v2970, %v2969
        %v2974 = vsel %vm902, %v2957, 0
        %v2977 = vsel %vm902, %v2958, 0
        %v2980 = vsel %vm902, %v2959, 0
        %v2983 = vsel %vm902, %v2960, 0
        %2985 = vmatpush.bf16.msra.mxu0 0
        %2986 = vmatpush.bf16.msra.mxu0 0
        %2987 = vmatpush.bf16.msra.mxu0 0
        %2988 = vmatpush.bf16.msra.mxu0 0
        %2989 = vmatpush.bf16.msra.mxu0 0
        %2990 = vmatpush.bf16.msra.mxu0 0
        %2991 = vmatpush.bf16.msra.mxu0 0
        %2992 = vmatpush.bf16.msra.mxu0 %v2971
        %2993 = vmatmul.bf16.gmra.mxu0 %v2974
        %v2994 = vpop.f32.mrf.mxu0
        %v2995 = vadd.f32 %v2965, %v2994
        %v2996 = vpop.f32.mrf.mxu0
        %v2997 = vadd.f32 %v2965, %v2996
        %2998 = vmatmul.bf16.gmra.mxu0 %v2977
        %v2999 = vpop.f32.mrf.mxu0
        %v3000 = vadd.f32 %v2965, %v2999
        %v3001 = vpop.f32.mrf.mxu0
        %v3002 = vadd.f32 %v2965, %v3001
        %3003 = vmatmul.bf16.gmra.mxu0 %v2980
        %v3004 = vpop.f32.mrf.mxu0
        %v3005 = vadd.f32 %v2965, %v3004
        %v3006 = vpop.f32.mrf.mxu0
        %v3007 = vadd.f32 %v2965, %v3006
        %3008 = vmatmul.bf16.gmra.mxu0 %v2983
        %v3009 = vpop.f32.mrf.mxu0
        %v3010 = vadd.f32 %v2965, %v3009
        %v3011 = vpop.f32.mrf.mxu0
        %v3012 = vadd.f32 %v2965, %v3011
        %3013 = vdwg.mxu0
        %v3014 = vmul.f32 %v2995, 0.5
        %v3015 = vmul.f32 %v2997, 0.5
        %v3016 = vmul.f32 %v3000, 0.5
        %v3017 = vmul.f32 %v3002, 0.5
        %v3018 = vmul.f32 %v3005, 0.5
        %v3019 = vmul.f32 %v3007, 0.5
        %v3020 = vmul.f32 %v3010, 0.5
        %v3021 = vmul.f32 %v3012, 0.5
        %v3022 = vmul.f32 %v2995, 0.044715
        %v3023 = vmul.f32 %v2997, 0.044715
        %v3024 = vmul.f32 %v3000, 0.044715
        %v3025 = vmul.f32 %v3002, 0.044715
        %v3026 = vmul.f32 %v3005, 0.044715
        %v3027 = vmul.f32 %v3007, 0.044715
        %v3028 = vmul.f32 %v3010, 0.044715
        %v3029 = vmul.f32 %v3012, 0.044715
        %v3030 = vmul.f32 %v3022, %v2995
        %v3031 = vmul.f32 %v3023, %v2997
        %v3032 = vmul.f32 %v3024, %v3000
        %v3033 = vmul.f32 %v3025, %v3002
        %v3034 = vmul.f32 %v3026, %v3005
        %v3035 = vmul.f32 %v3027, %v3007
        %v3036 = vmul.f32 %v3028, %v3010
        %v3037 = vmul.f32 %v3029, %v3012
        %v3038 = vmul.f32 %v3030, %v2995
        %v3039 = vmul.f32 %v3031, %v2997
        %v3040 = vmul.f32 %v3032, %v3000
        %v3041 = vmul.f32 %v3033, %v3002
        %v3042 = vmul.f32 %v3034, %v3005
        %v3043 = vmul.f32 %v3035, %v3007
        %v3044 = vmul.f32 %v3036, %v3010
        %v3045 = vmul.f32 %v3037, %v3012
        %v3046 = vadd.f32 %v2995, %v3038
        %v3047 = vadd.f32 %v2997, %v3039
        %v3048 = vadd.f32 %v3000, %v3040
        %v3049 = vadd.f32 %v3002, %v3041
        %v3050 = vadd.f32 %v3005, %v3042
        %v3051 = vadd.f32 %v3007, %v3043
        %v3052 = vadd.f32 %v3010, %v3044
        %v3053 = vadd.f32 %v3012, %v3045
        %v3054 = vmul.f32 %v3046, 0.7978846
        %v3055 = vmul.f32 %v3047, 0.7978846
        %v3056 = vmul.f32 %v3048, 0.7978846
        %v3057 = vmul.f32 %v3049, 0.7978846
        %v3058 = vmul.f32 %v3050, 0.7978846
        %v3059 = vmul.f32 %v3051, 0.7978846
        %v3060 = vmul.f32 %v3052, 0.7978846
        %v3061 = vmul.f32 %v3053, 0.7978846
        %v3062 = vtanh.pop %v3054
        %v3063 = vtanh.pop %v3055
        %v3064 = vtanh.pop %v3056
        %v3065 = vtanh.pop %v3057
        %v3066 = vtanh.pop %v3058
        %v3067 = vtanh.pop %v3059
        %v3068 = vtanh.pop %v3060
        %v3069 = vtanh.pop %v3061
        %v3070 = vadd.f32 %v3062, 1.0
        %v3071 = vadd.f32 %v3063, 1.0
        %v3072 = vadd.f32 %v3064, 1.0
        %v3073 = vadd.f32 %v3065, 1.0
        %v3074 = vadd.f32 %v3066, 1.0
        %v3075 = vadd.f32 %v3067, 1.0
        %v3076 = vadd.f32 %v3068, 1.0
        %v3077 = vadd.f32 %v3069, 1.0
        %v3078 = vmul.f32 %v3014, %v3070
        %v3079 = vmul.f32 %v3015, %v3071
        %v3080 = vmul.f32 %v3016, %v3072
        %v3081 = vmul.f32 %v3017, %v3073
        %v3082 = vmul.f32 %v3018, %v3074
        %v3083 = vmul.f32 %v3019, %v3075
        %v3084 = vmul.f32 %v3020, %v3076
        %v3085 = vmul.f32 %v3021, %v3077
        %v3086 = vpack.c.bf16 %v3079, %v3078
        %v3087 = vpack.c.bf16 %v3081, %v3080
        %v3088 = vpack.c.bf16 %v3083, %v3082
        %v3089 = vpack.c.bf16 %v3085, %v3084
        %v3090 = vld [vmem:[%s12] sm:$0xf]
        %v3091 = vld [vmem:[%s12 + $0x4] sm:$0xf]
        %v3094 = vunpack.c.l.b16 %v3090
        %v3095 = vunpack.c.l.b16 %v3091
        %v3096 = vpack.c.b16 %v3095, %v3094
        %v3099 = vsel %vm902, %v3086, 0
        %v3102 = vsel %vm902, %v3087, 0
        %v3105 = vsel %vm902, %v3088, 0
        %v3108 = vsel %vm902, %v3089, 0
        %3110 = vmatpush.bf16.msra.mxu0 0
        %3111 = vmatpush.bf16.msra.mxu0 0
        %3112 = vmatpush.bf16.msra.mxu0 0
        %3113 = vmatpush.bf16.msra.mxu0 0
        %3114 = vmatpush.bf16.msra.mxu0 0
        %3115 = vmatpush.bf16.msra.mxu0 0
        %3116 = vmatpush.bf16.msra.mxu0 0
        %3117 = vmatpush.bf16.msra.mxu0 %v3096
        %3118 = vmatmul.bf16.gmra.mxu0 %v3099
        %v3119 = vpop.f32.mrf.mxu0
        %v3120 = vadd.f32 0.0, %v3119
        %v3121 = vpop.f32.mrf.mxu0
        %v3122 = vadd.f32 0.0, %v3121
        %3123 = vmatmul.bf16.gmra.mxu0 %v3102
        %v3124 = vpop.f32.mrf.mxu0
        %v3125 = vadd.f32 0.0, %v3124
        %v3126 = vpop.f32.mrf.mxu0
        %v3127 = vadd.f32 0.0, %v3126
        %3128 = vmatmul.bf16.gmra.mxu0 %v3105
        %v3129 = vpop.f32.mrf.mxu0
        %v3130 = vadd.f32 0.0, %v3129
        %v3131 = vpop.f32.mrf.mxu0
        %v3132 = vadd.f32 0.0, %v3131
        %3133 = vmatmul.bf16.gmra.mxu0 %v3108
        %v3134 = vpop.f32.mrf.mxu0
        %v3135 = vadd.f32 0.0, %v3134
        %v3136 = vpop.f32.mrf.mxu0
        %v3137 = vadd.f32 0.0, %v3136
        %3138 = vdwg.mxu0
        %v3141 = vunpack.c.l.b16 %v2279
        %v3142 = vunpack.c.l.b16 %v2280
        %v3143 = vpack.c.b16 %v3142, %v3141
        %v3146 = vsel %vm902, %v2275, 0
        %v3149 = vsel %vm902, %v2276, 0
        %v3152 = vsel %vm902, %v2277, 0
        %v3155 = vsel %vm902, %v2278, 0
        %3157 = vmatpush.bf16.msra.mxu0 0
        %3158 = vmatpush.bf16.msra.mxu0 0
        %3159 = vmatpush.bf16.msra.mxu0 0
        %3160 = vmatpush.bf16.msra.mxu0 0
        %3161 = vmatpush.bf16.msra.mxu0 0
        %3162 = vmatpush.bf16.msra.mxu0 0
        %3163 = vmatpush.bf16.msra.mxu0 0
        %3164 = vmatpush.bf16.msra.mxu0 %v3143
        %3165 = vmatmul.bf16.gmra.mxu0 %v3146
        %v3166 = vpop.f32.mrf.mxu0
        %v3167 = vadd.f32 %v3120, %v3166
        %v3168 = vpop.f32.mrf.mxu0
        %v3169 = vadd.f32 %v3122, %v3168
        %3170 = vmatmul.bf16.gmra.mxu0 %v3149
        %v3171 = vpop.f32.mrf.mxu0
        %v3172 = vadd.f32 %v3125, %v3171
        %v3173 = vpop.f32.mrf.mxu0
        %v3174 = vadd.f32 %v3127, %v3173
        %3175 = vmatmul.bf16.gmra.mxu0 %v3152
        %v3176 = vpop.f32.mrf.mxu0
        %v3177 = vadd.f32 %v3130, %v3176
        %v3178 = vpop.f32.mrf.mxu0
        %v3179 = vadd.f32 %v3132, %v3178
        %3180 = vmatmul.bf16.gmra.mxu0 %v3155
        %v3181 = vpop.f32.mrf.mxu0
        %v3182 = vadd.f32 %v3135, %v3181
        %v3183 = vpop.f32.mrf.mxu0
        %v3184 = vadd.f32 %v3137, %v3183
        %3185 = vdwg.mxu0
        %v3186 = vmul.f32 %v3167, 0.5
        %v3187 = vmul.f32 %v3169, 0.5
        %v3188 = vmul.f32 %v3172, 0.5
        %v3189 = vmul.f32 %v3174, 0.5
        %v3190 = vmul.f32 %v3177, 0.5
        %v3191 = vmul.f32 %v3179, 0.5
        %v3192 = vmul.f32 %v3182, 0.5
        %v3193 = vmul.f32 %v3184, 0.5
        %v3194 = vadd.f32 %v846, %v3186
        %v3195 = vadd.f32 %v847, %v3187
        %v3196 = vadd.f32 %v850, %v3188
        %v3197 = vadd.f32 %v851, %v3189
        %v3198 = vadd.f32 %v854, %v3190
        %v3199 = vadd.f32 %v855, %v3191
        %v3200 = vadd.f32 %v858, %v3192
        %v3201 = vadd.f32 %v859, %v3193
        %v3202 = vld [vmem:[%s13] sm:$0x1]
        %v3204 = vperm.slane %v3202, 0
        %v3206 = vadd.f32 %v3194, %v3204
        %v3207 = vadd.f32 %v3195, %v3204
        %v3208 = vadd.f32 %v3196, %v3204
        %v3209 = vadd.f32 %v3197, %v3204
        %v3210 = vadd.f32 %v3198, %v3204
        %v3211 = vadd.f32 %v3199, %v3204
        %v3212 = vadd.f32 %v3200, %v3204
        %v3213 = vadd.f32 %v3201, %v3204
        %v3214 = vsel %vm902, %v846, 0.0
        %3215 = vadd.xlane.f32.xlu0 %v3214
        %v3216 = vpop.xlane.xlu0 %3215
        %v3217 = vsel %vm902, %v847, 0.0
        %3218 = vadd.xlane.f32.xlu0 %v3217
        %v3219 = vpop.xlane.xlu0 %3218
        %v3220 = vsel %vm902, %v850, 0.0
        %3221 = vadd.xlane.f32.xlu0 %v3220
        %v3222 = vpop.xlane.xlu0 %3221
        %v3223 = vsel %vm902, %v851, 0.0
        %3224 = vadd.xlane.f32.xlu0 %v3223
        %v3225 = vpop.xlane.xlu0 %3224
        %v3226 = vsel %vm902, %v854, 0.0
        %3227 = vadd.xlane.f32.xlu0 %v3226
        %v3228 = vpop.xlane.xlu0 %3227
        %v3229 = vsel %vm902, %v855, 0.0
        %3230 = vadd.xlane.f32.xlu0 %v3229
        %v3231 = vpop.xlane.xlu0 %3230
        %v3232 = vsel %vm902, %v858, 0.0
        %3233 = vadd.xlane.f32.xlu0 %v3232
        %v3234 = vpop.xlane.xlu0 %3233
        %v3235 = vsel %vm902, %v859, 0.0
        %3236 = vadd.xlane.f32.xlu0 %v3235
        %v3237 = vpop.xlane.xlu0 %3236
        %v3238 = vsel %vm902, %v3206, 0.0
        %3239 = vadd.xlane.f32.xlu0 %v3238
        %v3240 = vpop.xlane.xlu0 %3239
        %v3241 = vsel %vm902, %v3207, 0.0
        %3242 = vadd.xlane.f32.xlu0 %v3241
        %v3243 = vpop.xlane.xlu0 %3242
        %v3244 = vsel %vm902, %v3208, 0.0
        %3245 = vadd.xlane.f32.xlu0 %v3244
        %v3246 = vpop.xlane.xlu0 %3245
        %v3247 = vsel %vm902, %v3209, 0.0
        %3248 = vadd.xlane.f32.xlu0 %v3247
        %v3249 = vpop.xlane.xlu0 %3248
        %v3250 = vsel %vm902, %v3210, 0.0
        %3251 = vadd.xlane.f32.xlu0 %v3250
        %v3252 = vpop.xlane.xlu0 %3251
        %v3253 = vsel %vm902, %v3211, 0.0
        %3254 = vadd.xlane.f32.xlu0 %v3253
        %v3255 = vpop.xlane.xlu0 %3254
        %v3256 = vsel %vm902, %v3212, 0.0
        %3257 = vadd.xlane.f32.xlu0 %v3256
        %v3258 = vpop.xlane.xlu0 %3257
        %v3259 = vsel %vm902, %v3213, 0.0
        %3260 = vadd.xlane.f32.xlu0 %v3259
        %v3261 = vpop.xlane.xlu0 %3260
        %v3262 = vadd.f32 %v3216, %v3240
        %v3263 = vadd.f32 %v3219, %v3243
        %v3264 = vadd.f32 %v3222, %v3246
        %v3265 = vadd.f32 %v3225, %v3249
        %v3266 = vadd.f32 %v3228, %v3252
        %v3267 = vadd.f32 %v3231, %v3255
        %v3268 = vadd.f32 %v3234, %v3258
        %v3269 = vadd.f32 %v3237, %v3261
        %v3270 = vrcp.pop 32.0
        %v3271 = vmul.f32 32.0, %v3270
        %v3272 = vsub.f32 1.0, %v3271
        %v3273 = vmul.f32 %v3270, %v3272
        %v3274 = vadd.f32 %v3270, %v3273
        %vm3275 = vweird.f32 %v3270
        %v3276 = vsel %vm3275, %v3270, %v3274
        %v3277 = vmul.f32 %v3262, %v3276
        %v3278 = vmul.f32 %v3263, %v3276
        %v3279 = vmul.f32 %v3264, %v3276
        %v3280 = vmul.f32 %v3265, %v3276
        %v3281 = vmul.f32 %v3266, %v3276
        %v3282 = vmul.f32 %v3267, %v3276
        %v3283 = vmul.f32 %v3268, %v3276
        %v3284 = vmul.f32 %v3269, %v3276
        %v3285 = vsub.f32 %v846, %v3277
        %v3286 = vsub.f32 %v847, %v3278
        %v3287 = vsub.f32 %v850, %v3279
        %v3288 = vsub.f32 %v851, %v3280
        %v3289 = vsub.f32 %v854, %v3281
        %v3290 = vsub.f32 %v855, %v3282
        %v3291 = vsub.f32 %v858, %v3283
        %v3292 = vsub.f32 %v859, %v3284
        %v3293 = vmul.f32 %v3285, %v3285
        %v3294 = vmul.f32 %v3286, %v3286
        %v3295 = vmul.f32 %v3287, %v3287
        %v3296 = vmul.f32 %v3288, %v3288
        %v3297 = vmul.f32 %v3289, %v3289
        %v3298 = vmul.f32 %v3290, %v3290
        %v3299 = vmul.f32 %v3291, %v3291
        %v3300 = vmul.f32 %v3292, %v3292
        %v3301 = vsel %vm902, %v3293, 0.0
        %3302 = vadd.xlane.f32.xlu0 %v3301
        %v3303 = vpop.xlane.xlu0 %3302
        %v3304 = vsel %vm902, %v3294, 0.0
        %3305 = vadd.xlane.f32.xlu0 %v3304
        %v3306 = vpop.xlane.xlu0 %3305
        %v3307 = vsel %vm902, %v3295, 0.0
        %3308 = vadd.xlane.f32.xlu0 %v3307
        %v3309 = vpop.xlane.xlu0 %3308
        %v3310 = vsel %vm902, %v3296, 0.0
        %3311 = vadd.xlane.f32.xlu0 %v3310
        %v3312 = vpop.xlane.xlu0 %3311
        %v3313 = vsel %vm902, %v3297, 0.0
        %3314 = vadd.xlane.f32.xlu0 %v3313
        %v3315 = vpop.xlane.xlu0 %3314
        %v3316 = vsel %vm902, %v3298, 0.0
        %3317 = vadd.xlane.f32.xlu0 %v3316
        %v3318 = vpop.xlane.xlu0 %3317
        %v3319 = vsel %vm902, %v3299, 0.0
        %3320 = vadd.xlane.f32.xlu0 %v3319
        %v3321 = vpop.xlane.xlu0 %3320
        %v3322 = vsel %vm902, %v3300, 0.0
        %3323 = vadd.xlane.f32.xlu0 %v3322
        %v3324 = vpop.xlane.xlu0 %3323
        %v3325 = vsub.f32 %v3206, %v3277
        %v3326 = vsub.f32 %v3207, %v3278
        %v3327 = vsub.f32 %v3208, %v3279
        %v3328 = vsub.f32 %v3209, %v3280
        %v3329 = vsub.f32 %v3210, %v3281
        %v3330 = vsub.f32 %v3211, %v3282
        %v3331 = vsub.f32 %v3212, %v3283
        %v3332 = vsub.f32 %v3213, %v3284
        %v3333 = vmul.f32 %v3325, %v3325
        %v3334 = vmul.f32 %v3326, %v3326
        %v3335 = vmul.f32 %v3327, %v3327
        %v3336 = vmul.f32 %v3328, %v3328
        %v3337 = vmul.f32 %v3329, %v3329
        %v3338 = vmul.f32 %v3330, %v3330
        %v3339 = vmul.f32 %v3331, %v3331
        %v3340 = vmul.f32 %v3332, %v3332
        %v3341 = vsel %vm902, %v3333, 0.0
        %3342 = vadd.xlane.f32.xlu0 %v3341
        %v3343 = vpop.xlane.xlu0 %3342
        %v3344 = vsel %vm902, %v3334, 0.0
        %3345 = vadd.xlane.f32.xlu0 %v3344
        %v3346 = vpop.xlane.xlu0 %3345
        %v3347 = vsel %vm902, %v3335, 0.0
        %3348 = vadd.xlane.f32.xlu0 %v3347
        %v3349 = vpop.xlane.xlu0 %3348
        %v3350 = vsel %vm902, %v3336, 0.0
        %3351 = vadd.xlane.f32.xlu0 %v3350
        %v3352 = vpop.xlane.xlu0 %3351
        %v3353 = vsel %vm902, %v3337, 0.0
        %3354 = vadd.xlane.f32.xlu0 %v3353
        %v3355 = vpop.xlane.xlu0 %3354
        %v3356 = vsel %vm902, %v3338, 0.0
        %3357 = vadd.xlane.f32.xlu0 %v3356
        %v3358 = vpop.xlane.xlu0 %3357
        %v3359 = vsel %vm902, %v3339, 0.0
        %3360 = vadd.xlane.f32.xlu0 %v3359
        %v3361 = vpop.xlane.xlu0 %3360
        %v3362 = vsel %vm902, %v3340, 0.0
        %3363 = vadd.xlane.f32.xlu0 %v3362
        %v3364 = vpop.xlane.xlu0 %3363
        %v3365 = vadd.f32 %v3303, %v3343
        %v3366 = vadd.f32 %v3306, %v3346
        %v3367 = vadd.f32 %v3309, %v3349
        %v3368 = vadd.f32 %v3312, %v3352
        %v3369 = vadd.f32 %v3315, %v3355
        %v3370 = vadd.f32 %v3318, %v3358
        %v3371 = vadd.f32 %v3321, %v3361
        %v3372 = vadd.f32 %v3324, %v3364
        %v3373 = vmul.f32 %v3365, %v3276
        %v3374 = vmul.f32 %v3366, %v3276
        %v3375 = vmul.f32 %v3367, %v3276
        %v3376 = vmul.f32 %v3368, %v3276
        %v3377 = vmul.f32 %v3369, %v3276
        %v3378 = vmul.f32 %v3370, %v3276
        %v3379 = vmul.f32 %v3371, %v3276
        %v3380 = vmul.f32 %v3372, %v3276
        %v3381 = vadd.f32 %v3373, 1e-05
        %v3382 = vadd.f32 %v3374, 1e-05
        %v3383 = vadd.f32 %v3375, 1e-05
        %v3384 = vadd.f32 %v3376, 1e-05
        %v3385 = vadd.f32 %v3377, 1e-05
        %v3386 = vadd.f32 %v3378, 1e-05
        %v3387 = vadd.f32 %v3379, 1e-05
        %v3388 = vadd.f32 %v3380, 1e-05
        %v3389 = vrsqrt.pop %v3381
        %v3390 = vmul.f32 %v3389, %v3381
        %v3391 = vmul.f32 %v3390, %v3389
        %v3392 = vmul.f32 0.5, %v3391
        %v3393 = vsub.f32 1.5, %v3392
        %v3394 = vmul.f32 %v3389, %v3393
        %vm3395 = vweird.f32 %v3381
        %vm3396 = vweird.f32 %v3389
        %vm3397 = vmor %vm3395, %vm3396
        %v3398 = vsel %vm3397, %v3389, %v3394
        %v3399 = vrsqrt.pop %v3382
        %v3400 = vmul.f32 %v3399, %v3382
        %v3401 = vmul.f32 %v3400, %v3399
        %v3402 = vmul.f32 0.5, %v3401
        %v3403 = vsub.f32 1.5, %v3402
        %v3404 = vmul.f32 %v3399, %v3403
        %vm3405 = vweird.f32 %v3382
        %vm3406 = vweird.f32 %v3399
        %vm3407 = vmor %vm3405, %vm3406
        %v3408 = vsel %vm3407, %v3399, %v3404
        %v3409 = vrsqrt.pop %v3383
        %v3410 = vmul.f32 %v3409, %v3383
        %v3411 = vmul.f32 %v3410, %v3409
        %v3412 = vmul.f32 0.5, %v3411
        %v3413 = vsub.f32 1.5, %v3412
        %v3414 = vmul.f32 %v3409, %v3413
        %vm3415 = vweird.f32 %v3383
        %vm3416 = vweird.f32 %v3409
        %vm3417 = vmor %vm3415, %vm3416
        %v3418 = vsel %vm3417, %v3409, %v3414
        %v3419 = vrsqrt.pop %v3384
        %v3420 = vmul.f32 %v3419, %v3384
        %v3421 = vmul.f32 %v3420, %v3419
        %v3422 = vmul.f32 0.5, %v3421
        %v3423 = vsub.f32 1.5, %v3422
        %v3424 = vmul.f32 %v3419, %v3423
        %vm3425 = vweird.f32 %v3384
        %vm3426 = vweird.f32 %v3419
        %vm3427 = vmor %vm3425, %vm3426
        %v3428 = vsel %vm3427, %v3419, %v3424
        %v3429 = vrsqrt.pop %v3385
        %v3430 = vmul.f32 %v3429, %v3385
        %v3431 = vmul.f32 %v3430, %v3429
        %v3432 = vmul.f32 0.5, %v3431
        %v3433 = vsub.f32 1.5, %v3432
        %v3434 = vmul.f32 %v3429, %v3433
        %vm3435 = vweird.f32 %v3385
        %vm3436 = vweird.f32 %v3429
        %vm3437 = vmor %vm3435, %vm3436
        %v3438 = vsel %vm3437, %v3429, %v3434
        %v3439 = vrsqrt.pop %v3386
        %v3440 = vmul.f32 %v3439, %v3386
        %v3441 = vmul.f32 %v3440, %v3439
        %v3442 = vmul.f32 0.5, %v3441
        %v3443 = vsub.f32 1.5, %v3442
        %v3444 = vmul.f32 %v3439, %v3443
        %vm3445 = vweird.f32 %v3386
        %vm3446 = vweird.f32 %v3439
        %vm3447 = vmor %vm3445, %vm3446
        %v3448 = vsel %vm3447, %v3439, %v3444
        %v3449 = vrsqrt.pop %v3387
        %v3450 = vmul.f32 %v3449, %v3387
        %v3451 = vmul.f32 %v3450, %v3449
        %v3452 = vmul.f32 0.5, %v3451
        %v3453 = vsub.f32 1.5, %v3452
        %v3454 = vmul.f32 %v3449, %v3453
        %vm3455 = vweird.f32 %v3387
        %vm3456 = vweird.f32 %v3449
        %vm3457 = vmor %vm3455, %vm3456
        %v3458 = vsel %vm3457, %v3449, %v3454
        %v3459 = vrsqrt.pop %v3388
        %v3460 = vmul.f32 %v3459, %v3388
        %v3461 = vmul.f32 %v3460, %v3459
        %v3462 = vmul.f32 0.5, %v3461
        %v3463 = vsub.f32 1.5, %v3462
        %v3464 = vmul.f32 %v3459, %v3463
        %vm3465 = vweird.f32 %v3388
        %vm3466 = vweird.f32 %v3459
        %vm3467 = vmor %vm3465, %vm3466
        %v3468 = vsel %vm3467, %v3459, %v3464
        %v3469 = vmul.f32 %v3285, %v3398
        %v3470 = vmul.f32 %v3286, %v3408
        %v3471 = vmul.f32 %v3287, %v3418
        %v3472 = vmul.f32 %v3288, %v3428
        %v3473 = vmul.f32 %v3289, %v3438
        %v3474 = vmul.f32 %v3290, %v3448
        %v3475 = vmul.f32 %v3291, %v3458
        %v3476 = vmul.f32 %v3292, %v3468
        %v3477 = vld [vmem:[%s14] sm:$0x1]
        %v3479 = vperm.slane %v3477, 0
        %v3481 = vmul.f32 %v3469, %v3479
        %v3482 = vmul.f32 %v3470, %v3479
        %v3483 = vmul.f32 %v3471, %v3479
        %v3484 = vmul.f32 %v3472, %v3479
        %v3485 = vmul.f32 %v3473, %v3479
        %v3486 = vmul.f32 %v3474, %v3479
        %v3487 = vmul.f32 %v3475, %v3479
        %v3488 = vmul.f32 %v3476, %v3479
        %v3489 = vld [vmem:[%s15] sm:$0x1]
        %v3491 = vperm.slane %v3489, 0
        %v3493 = vadd.f32 %v3481, %v3491
        %v3494 = vadd.f32 %v3482, %v3491
        %v3495 = vadd.f32 %v3483, %v3491
        %v3496 = vadd.f32 %v3484, %v3491
        %v3497 = vadd.f32 %v3485, %v3491
        %v3498 = vadd.f32 %v3486, %v3491
        %v3499 = vadd.f32 %v3487, %v3491
        %v3500 = vadd.f32 %v3488, %v3491
        %v3501 = vmul.f32 %v3325, %v3398
        %v3502 = vmul.f32 %v3326, %v3408
        %v3503 = vmul.f32 %v3327, %v3418
        %v3504 = vmul.f32 %v3328, %v3428
        %v3505 = vmul.f32 %v3329, %v3438
        %v3506 = vmul.f32 %v3330, %v3448
        %v3507 = vmul.f32 %v3331, %v3458
        %v3508 = vmul.f32 %v3332, %v3468
        %v3509 = vld [vmem:[%s16] sm:$0x1]
        %v3511 = vperm.slane %v3509, 0
        %v3513 = vmul.f32 %v3501, %v3511
        %v3514 = vmul.f32 %v3502, %v3511
        %v3515 = vmul.f32 %v3503, %v3511
        %v3516 = vmul.f32 %v3504, %v3511
        %v3517 = vmul.f32 %v3505, %v3511
        %v3518 = vmul.f32 %v3506, %v3511
        %v3519 = vmul.f32 %v3507, %v3511
        %v3520 = vmul.f32 %v3508, %v3511
        %v3521 = vld [vmem:[%s17] sm:$0x1]
        %v3523 = vperm.slane %v3521, 0
        %v3525 = vadd.f32 %v3513, %v3523
        %v3526 = vadd.f32 %v3514, %v3523
        %v3527 = vadd.f32 %v3515, %v3523
        %v3528 = vadd.f32 %v3516, %v3523
        %v3529 = vadd.f32 %v3517, %v3523
        %v3530 = vadd.f32 %v3518, %v3523
        %v3531 = vadd.f32 %v3519, %v3523
        %v3532 = vadd.f32 %v3520, %v3523
        %v3533 = vpack.c.bf16 %v3494, %v3493
        %v3534 = vpack.c.bf16 %v3496, %v3495
        %v3535 = vpack.c.bf16 %v3498, %v3497
        %v3536 = vpack.c.bf16 %v3500, %v3499
        %v3537 = vld [vmem:[%s18] sm:$0xf]
        %v3538 = vld [vmem:[%s18 + $0x4] sm:$0xf]
        %v3539 = vpack.c.bf16 %v3526, %v3525
        %v3540 = vpack.c.bf16 %v3528, %v3527
        %v3541 = vpack.c.bf16 %v3530, %v3529
        %v3542 = vpack.c.bf16 %v3532, %v3531
        %v3543 = vld [vmem:[%s19] sm:$0xf]
        %v3544 = vld [vmem:[%s19 + $0x4] sm:$0xf]
        %v3547 = vunpack.c.l.b16 %v3543
        %v3548 = vunpack.c.l.b16 %v3544
        %v3549 = vpack.c.b16 %v3548, %v3547
        %v3552 = vsel %vm902, %v3539, 0
        %v3555 = vsel %vm902, %v3540, 0
        %v3558 = vsel %vm902, %v3541, 0
        %v3561 = vsel %vm902, %v3542, 0
        %3563 = vmatpush.bf16.msra.mxu0 0
        %3564 = vmatpush.bf16.msra.mxu0 0
        %3565 = vmatpush.bf16.msra.mxu0 0
        %3566 = vmatpush.bf16.msra.mxu0 0
        %3567 = vmatpush.bf16.msra.mxu0 0
        %3568 = vmatpush.bf16.msra.mxu0 0
        %3569 = vmatpush.bf16.msra.mxu0 0
        %3570 = vmatpush.bf16.msra.mxu0 %v3549
        %3571 = vmatmul.bf16.gmra.mxu0 %v3552
        %v3572 = vpop.f32.mrf.mxu0
        %v3573 = vadd.f32 0.0, %v3572
        %v3574 = vpop.f32.mrf.mxu0
        %v3575 = vadd.f32 0.0, %v3574
        %3576 = vmatmul.bf16.gmra.mxu0 %v3555
        %v3577 = vpop.f32.mrf.mxu0
        %v3578 = vadd.f32 0.0, %v3577
        %v3579 = vpop.f32.mrf.mxu0
        %v3580 = vadd.f32 0.0, %v3579
        %3581 = vmatmul.bf16.gmra.mxu0 %v3558
        %v3582 = vpop.f32.mrf.mxu0
        %v3583 = vadd.f32 0.0, %v3582
        %v3584 = vpop.f32.mrf.mxu0
        %v3585 = vadd.f32 0.0, %v3584
        %3586 = vmatmul.bf16.gmra.mxu0 %v3561
        %v3587 = vpop.f32.mrf.mxu0
        %v3588 = vadd.f32 0.0, %v3587
        %v3589 = vpop.f32.mrf.mxu0
        %v3590 = vadd.f32 0.0, %v3589
        %3591 = vdwg.mxu0
        %v3594 = vunpack.c.l.b16 %v3537
        %v3595 = vunpack.c.l.b16 %v3538
        %v3596 = vpack.c.b16 %v3595, %v3594
        %v3599 = vsel %vm902, %v3533, 0
        %v3602 = vsel %vm902, %v3534, 0
        %v3605 = vsel %vm902, %v3535, 0
        %v3608 = vsel %vm902, %v3536, 0
        %3610 = vmatpush.bf16.msra.mxu0 0
        %3611 = vmatpush.bf16.msra.mxu0 0
        %3612 = vmatpush.bf16.msra.mxu0 0
        %3613 = vmatpush.bf16.msra.mxu0 0
        %3614 = vmatpush.bf16.msra.mxu0 0
        %3615 = vmatpush.bf16.msra.mxu0 0
        %3616 = vmatpush.bf16.msra.mxu0 0
        %3617 = vmatpush.bf16.msra.mxu0 %v3596
        %3618 = vmatmul.bf16.gmra.mxu0 %v3599
        %v3619 = vpop.f32.mrf.mxu0
        %v3620 = vadd.f32 %v3573, %v3619
        %v3621 = vpop.f32.mrf.mxu0
        %v3622 = vadd.f32 %v3575, %v3621
        %3623 = vmatmul.bf16.gmra.mxu0 %v3602
        %v3624 = vpop.f32.mrf.mxu0
        %v3625 = vadd.f32 %v3578, %v3624
        %v3626 = vpop.f32.mrf.mxu0
        %v3627 = vadd.f32 %v3580, %v3626
        %3628 = vmatmul.bf16.gmra.mxu0 %v3605
        %v3629 = vpop.f32.mrf.mxu0
        %v3630 = vadd.f32 %v3583, %v3629
        %v3631 = vpop.f32.mrf.mxu0
        %v3632 = vadd.f32 %v3585, %v3631
        %3633 = vmatmul.bf16.gmra.mxu0 %v3608
        %v3634 = vpop.f32.mrf.mxu0
        %v3635 = vadd.f32 %v3588, %v3634
        %v3636 = vpop.f32.mrf.mxu0
        %v3637 = vadd.f32 %v3590, %v3636
        %3638 = vdwg.mxu0
        %v3639 = vld [vmem:[%s20] sm:$0x1]
        %v3641 = vperm.slane %v3639, 0
        %v3643 = vadd.f32 %v3620, %v3641
        %v3644 = vadd.f32 %v3622, %v3641
        %v3645 = vadd.f32 %v3625, %v3641
        %v3646 = vadd.f32 %v3627, %v3641
        %v3647 = vadd.f32 %v3630, %v3641
        %v3648 = vadd.f32 %v3632, %v3641
        %v3649 = vadd.f32 %v3635, %v3641
        %v3650 = vadd.f32 %v3637, %v3641
        %v3651 = vmul.f32 %v3643, 0.5
        %v3652 = vmul.f32 %v3644, 0.5
        %v3653 = vmul.f32 %v3645, 0.5
        %v3654 = vmul.f32 %v3646, 0.5
        %v3655 = vmul.f32 %v3647, 0.5
        %v3656 = vmul.f32 %v3648, 0.5
        %v3657 = vmul.f32 %v3649, 0.5
        %v3658 = vmul.f32 %v3650, 0.5
        %v3659 = vmul.f32 %v3643, 0.044715
        %v3660 = vmul.f32 %v3644, 0.044715
        %v3661 = vmul.f32 %v3645, 0.044715
        %v3662 = vmul.f32 %v3646, 0.044715
        %v3663 = vmul.f32 %v3647, 0.044715
        %v3664 = vmul.f32 %v3648, 0.044715
        %v3665 = vmul.f32 %v3649, 0.044715
        %v3666 = vmul.f32 %v3650, 0.044715
        %v3667 = vmul.f32 %v3659, %v3643
        %v3668 = vmul.f32 %v3660, %v3644
        %v3669 = vmul.f32 %v3661, %v3645
        %v3670 = vmul.f32 %v3662, %v3646
        %v3671 = vmul.f32 %v3663, %v3647
        %v3672 = vmul.f32 %v3664, %v3648
        %v3673 = vmul.f32 %v3665, %v3649
        %v3674 = vmul.f32 %v3666, %v3650
        %v3675 = vmul.f32 %v3667, %v3643
        %v3676 = vmul.f32 %v3668, %v3644
        %v3677 = vmul.f32 %v3669, %v3645
        %v3678 = vmul.f32 %v3670, %v3646
        %v3679 = vmul.f32 %v3671, %v3647
        %v3680 = vmul.f32 %v3672, %v3648
        %v3681 = vmul.f32 %v3673, %v3649
        %v3682 = vmul.f32 %v3674, %v3650
        %v3683 = vadd.f32 %v3643, %v3675
        %v3684 = vadd.f32 %v3644, %v3676
        %v3685 = vadd.f32 %v3645, %v3677
        %v3686 = vadd.f32 %v3646, %v3678
        %v3687 = vadd.f32 %v3647, %v3679
        %v3688 = vadd.f32 %v3648, %v3680
        %v3689 = vadd.f32 %v3649, %v3681
        %v3690 = vadd.f32 %v3650, %v3682
        %v3691 = vmul.f32 %v3683, 0.7978846
        %v3692 = vmul.f32 %v3684, 0.7978846
        %v3693 = vmul.f32 %v3685, 0.7978846
        %v3694 = vmul.f32 %v3686, 0.7978846
        %v3695 = vmul.f32 %v3687, 0.7978846
        %v3696 = vmul.f32 %v3688, 0.7978846
        %v3697 = vmul.f32 %v3689, 0.7978846
        %v3698 = vmul.f32 %v3690, 0.7978846
        %v3699 = vtanh.pop %v3691
        %v3700 = vtanh.pop %v3692
        %v3701 = vtanh.pop %v3693
        %v3702 = vtanh.pop %v3694
        %v3703 = vtanh.pop %v3695
        %v3704 = vtanh.pop %v3696
        %v3705 = vtanh.pop %v3697
        %v3706 = vtanh.pop %v3698
        %v3707 = vadd.f32 %v3699, 1.0
        %v3708 = vadd.f32 %v3700, 1.0
        %v3709 = vadd.f32 %v3701, 1.0
        %v3710 = vadd.f32 %v3702, 1.0
        %v3711 = vadd.f32 %v3703, 1.0
        %v3712 = vadd.f32 %v3704, 1.0
        %v3713 = vadd.f32 %v3705, 1.0
        %v3714 = vadd.f32 %v3706, 1.0
        %v3715 = vmul.f32 %v3651, %v3707
        %v3716 = vmul.f32 %v3652, %v3708
        %v3717 = vmul.f32 %v3653, %v3709
        %v3718 = vmul.f32 %v3654, %v3710
        %v3719 = vmul.f32 %v3655, %v3711
        %v3720 = vmul.f32 %v3656, %v3712
        %v3721 = vmul.f32 %v3657, %v3713
        %v3722 = vmul.f32 %v3658, %v3714
        %v3723 = vpack.c.bf16 %v3716, %v3715
        %v3724 = vpack.c.bf16 %v3718, %v3717
        %v3725 = vpack.c.bf16 %v3720, %v3719
        %v3726 = vpack.c.bf16 %v3722, %v3721
        %v3727 = vld [vmem:[%s21] sm:$0xf]
        %v3728 = vld [vmem:[%s21 + $0x4] sm:$0xf]
        %v3729 = vld [vmem:[%s21 + $0x8] sm:$0xf]
        %v3730 = vld [vmem:[%s21 + $0xc] sm:$0xf]
        %v3731 = vld [vmem:[%s21 + $0x10] sm:$0xf]
        %v3732 = vld [vmem:[%s21 + $0x14] sm:$0xf]
        %v3733 = vld [vmem:[%s21 + $0x18] sm:$0xf]
        %v3734 = vld [vmem:[%s21 + $0x1c] sm:$0xf]
        %v3735 = vld [vmem:[%s22] sm:$0x1]
        %v3737 = vperm.slane %v3735, 0
        %v3747 = vunpack.c.l.b16 %v3727
        %v3748 = vunpack.c.l.b16 %v3728
        %v3749 = vunpack.c.l.b16 %v3729
        %v3750 = vunpack.c.l.b16 %v3730
        %v3751 = vunpack.c.l.b16 %v3731
        %v3752 = vunpack.c.l.b16 %v3732
        %v3753 = vunpack.c.l.b16 %v3733
        %v3754 = vunpack.c.l.b16 %v3734
        %v3755 = vpack.c.b16 %v3748, %v3747
        %v3756 = vpack.c.b16 %v3750, %v3749
        %v3757 = vpack.c.b16 %v3752, %v3751
        %v3758 = vpack.c.b16 %v3754, %v3753
        %vm3763 = vcmask 523264
        %v3765 = vsel %vm3763, %v3723, 0
        %v3768 = vsel %vm3763, %v3724, 0
        %v3771 = vsel %vm3763, %v3725, 0
        %v3774 = vsel %vm3763, %v3726, 0
        %3776 = vmatpush.bf16.msra.mxu0 0
        %3777 = vmatpush.bf16.msra.mxu0 0
        %3778 = vmatpush.bf16.msra.mxu0 0
        %3779 = vmatpush.bf16.msra.mxu0 0
        %3780 = vmatpush.bf16.msra.mxu0 %v3758
        %3781 = vmatpush.bf16.msra.mxu0 %v3757
        %3782 = vmatpush.bf16.msra.mxu0 %v3756
        %3783 = vmatpush.bf16.msra.mxu0 %v3755
        %3784 = vmatmul.bf16.gmra.mxu0 %v3765
        %v3785 = vpop.f32.mrf.mxu0
        %v3786 = vadd.f32 %v3737, %v3785
        %v3787 = vpop.f32.mrf.mxu0
        %v3788 = vadd.f32 %v3737, %v3787
        %3789 = vmatmul.bf16.gmra.mxu0 %v3768
        %v3790 = vpop.f32.mrf.mxu0
        %v3791 = vadd.f32 %v3737, %v3790
        %v3792 = vpop.f32.mrf.mxu0
        %v3793 = vadd.f32 %v3737, %v3792
        %3794 = vmatmul.bf16.gmra.mxu0 %v3771
        %v3795 = vpop.f32.mrf.mxu0
        %v3796 = vadd.f32 %v3737, %v3795
        %v3797 = vpop.f32.mrf.mxu0
        %v3798 = vadd.f32 %v3737, %v3797
        %3799 = vmatmul.bf16.gmra.mxu0 %v3774
        %v3800 = vpop.f32.mrf.mxu0
        %v3801 = vadd.f32 %v3737, %v3800
        %v3802 = vpop.f32.mrf.mxu0
        %v3803 = vadd.f32 %v3737, %v3802
        %3804 = vdwg.mxu0
        %3805 = vst.msk [vmem:[%s843] sm:$0xff] %vm902, %v3786
        %3806 = vst.msk [vmem:[%s843 + $0x8] sm:$0xff] %vm902, %v3788
        %3807 = vst.msk [vmem:[%s843 + $0x20] sm:$0xff] %vm902, %v3791
        %3808 = vst.msk [vmem:[%s843 + $0x28] sm:$0xff] %vm902, %v3793
        %3809 = vst.msk [vmem:[%s843 + $0x40] sm:$0xff] %vm902, %v3796
        %3810 = vst.msk [vmem:[%s843 + $0x48] sm:$0xff] %vm902, %v3798
        %3811 = vst.msk [vmem:[%s843 + $0x60] sm:$0xff] %vm902, %v3801
        %3812 = vst.msk [vmem:[%s843 + $0x68] sm:$0xff] %vm902, %v3803
        %s3813 = scalar_lea.vmem %s762, 32 [#allocation2]
        %v3814 = vld [vmem:[%s3813] sm:$0xf]
        %v3815 = vld [vmem:[%s3813 + $0x4] sm:$0xf]
        %v3816 = vld [vmem:[%s3813 + $0x8] sm:$0xf]
        %v3817 = vld [vmem:[%s3813 + $0xc] sm:$0xf]
        %v3818 = vld [vmem:[%s3813 + $0x10] sm:$0xf]
        %v3819 = vld [vmem:[%s3813 + $0x14] sm:$0xf]
        %v3820 = vld [vmem:[%s3813 + $0x18] sm:$0xf]
        %v3821 = vld [vmem:[%s3813 + $0x1c] sm:$0xf]
        %v3822 = vld [vmem:[%s6] sm:$0xf]
        %v3823 = vld [vmem:[%s6 + $0x4] sm:$0xf]
        %v3824 = vld [vmem:[%s7] sm:$0x1]
        %v3826 = vperm.slane %v3824, 0
        %v3836 = vunpack.c.l.b16 %v3814
        %v3837 = vunpack.c.l.b16 %v3815
        %v3838 = vunpack.c.l.b16 %v3816
        %v3839 = vunpack.c.l.b16 %v3817
        %v3840 = vunpack.c.l.b16 %v3818
        %v3841 = vunpack.c.l.b16 %v3819
        %v3842 = vunpack.c.l.b16 %v3820
        %v3843 = vunpack.c.l.b16 %v3821
        %v3844 = vpack.c.b16 %v3837, %v3836
        %v3845 = vpack.c.b16 %v3839, %v3838
        %v3846 = vpack.c.b16 %v3841, %v3840
        %v3847 = vpack.c.b16 %v3843, %v3842
        %v3850 = vunpack.c.l.b16 %v3822
        %v3851 = vunpack.c.l.b16 %v3823
        %v3852 = vpack.c.b16 %v3851, %v3850
        %v3855 = vsel %vm902, %v3844, 0
        %v3858 = vsel %vm902, %v3845, 0
        %v3861 = vsel %vm902, %v3846, 0
        %v3864 = vsel %vm902, %v3847, 0
        %3866 = vmatpush.bf16.msra.mxu0 0
        %3867 = vmatpush.bf16.msra.mxu0 0
        %3868 = vmatpush.bf16.msra.mxu0 0
        %3869 = vmatpush.bf16.msra.mxu0 0
        %3870 = vmatpush.bf16.msra.mxu0 0
        %3871 = vmatpush.bf16.msra.mxu0 0
        %3872 = vmatpush.bf16.msra.mxu0 0
        %3873 = vmatpush.bf16.msra.mxu0 %v3852
        %3874 = vmatmul.bf16.gmra.mxu0 %v3855
        %v3875 = vpop.f32.mrf.mxu0
        %v3876 = vadd.f32 %v3826, %v3875
        %v3877 = vpop.f32.mrf.mxu0
        %v3878 = vadd.f32 %v3826, %v3877
        %3879 = vmatmul.bf16.gmra.mxu0 %v3858
        %v3880 = vpop.f32.mrf.mxu0
        %v3881 = vadd.f32 %v3826, %v3880
        %v3882 = vpop.f32.mrf.mxu0
        %v3883 = vadd.f32 %v3826, %v3882
        %3884 = vmatmul.bf16.gmra.mxu0 %v3861
        %v3885 = vpop.f32.mrf.mxu0
        %v3886 = vadd.f32 %v3826, %v3885
        %v3887 = vpop.f32.mrf.mxu0
        %v3888 = vadd.f32 %v3826, %v3887
        %3889 = vmatmul.bf16.gmra.mxu0 %v3864
        %v3890 = vpop.f32.mrf.mxu0
        %v3891 = vadd.f32 %v3826, %v3890
        %v3892 = vpop.f32.mrf.mxu0
        %v3893 = vadd.f32 %v3826, %v3892
        %3894 = vdwg.mxu0
        %v3896 = vsel %vm1049, %v1026, 0
        %3898 = vmatpush.bf16.xpose.msra.mxu0 0
        %3899 = vmatpush.bf16.xpose.msra.mxu0 0
        %3900 = vmatpush.bf16.xpose.msra.mxu0 0
        %3901 = vmatpush.bf16.xpose.msra.mxu0 0
        %3902 = vmatpush.bf16.xpose.msra.mxu0 0
        %3903 = vmatpush.bf16.xpose.msra.mxu0 0
        %3904 = vmatpush.bf16.xpose.msra.mxu0 0
        %3905 = vmatpush.bf16.xpose.msra.mxu0 %v1436
        %3906 = vmatmul.bf16.gmra.mxu0 %v3896
        %v3907 = vpop.f32.mrf.mxu0
        %v3908 = vadd.f32 0.0, %v3907
        %v3909 = vpop.f32.mrf.mxu0
        %v3910 = vadd.f32 0.0, %v3909
        %3911 = vdwg.mxu0
        %v3913 = vsel %vm1049, %v1028, 0
        %3915 = vmatpush.bf16.xpose.msra.mxu0 0
        %3916 = vmatpush.bf16.xpose.msra.mxu0 0
        %3917 = vmatpush.bf16.xpose.msra.mxu0 0
        %3918 = vmatpush.bf16.xpose.msra.mxu0 0
        %3919 = vmatpush.bf16.xpose.msra.mxu0 0
        %3920 = vmatpush.bf16.xpose.msra.mxu0 0
        %3921 = vmatpush.bf16.xpose.msra.mxu0 0
        %3922 = vmatpush.bf16.xpose.msra.mxu0 %v1458
        %3923 = vmatmul.bf16.gmra.mxu0 %v3913
        %v3924 = vpop.f32.mrf.mxu0
        %v3925 = vadd.f32 0.0, %v3924
        %v3926 = vpop.f32.mrf.mxu0
        %v3927 = vadd.f32 0.0, %v3926
        %3928 = vdwg.mxu0
        %v3930 = vsel %vm1049, %v1030, 0
        %3932 = vmatpush.bf16.xpose.msra.mxu0 0
        %3933 = vmatpush.bf16.xpose.msra.mxu0 0
        %3934 = vmatpush.bf16.xpose.msra.mxu0 0
        %3935 = vmatpush.bf16.xpose.msra.mxu0 0
        %3936 = vmatpush.bf16.xpose.msra.mxu0 0
        %3937 = vmatpush.bf16.xpose.msra.mxu0 0
        %3938 = vmatpush.bf16.xpose.msra.mxu0 0
        %3939 = vmatpush.bf16.xpose.msra.mxu0 %v1480
        %3940 = vmatmul.bf16.gmra.mxu0 %v3930
        %v3941 = vpop.f32.mrf.mxu0
        %v3942 = vadd.f32 0.0, %v3941
        %v3943 = vpop.f32.mrf.mxu0
        %v3944 = vadd.f32 0.0, %v3943
        %3945 = vdwg.mxu0
        %v3947 = vsel %vm1049, %v1032, 0
        %3949 = vmatpush.bf16.xpose.msra.mxu0 0
        %3950 = vmatpush.bf16.xpose.msra.mxu0 0
        %3951 = vmatpush.bf16.xpose.msra.mxu0 0
        %3952 = vmatpush.bf16.xpose.msra.mxu0 0
        %3953 = vmatpush.bf16.xpose.msra.mxu0 0
        %3954 = vmatpush.bf16.xpose.msra.mxu0 0
        %3955 = vmatpush.bf16.xpose.msra.mxu0 0
        %3956 = vmatpush.bf16.xpose.msra.mxu0 %v1502
        %3957 = vmatmul.bf16.gmra.mxu0 %v3947
        %v3958 = vpop.f32.mrf.mxu0
        %v3959 = vadd.f32 0.0, %v3958
        %v3960 = vpop.f32.mrf.mxu0
        %v3961 = vadd.f32 0.0, %v3960
        %3962 = vdwg.mxu0
        %v3963 = vsel %vm902, %v3908, -inf
        %3964 = vmax.xlane.f32.xlu0 %v3963
        %v3965 = vpop.xlane.xlu0 %3964
        %v3966 = vsel %vm902, %v3910, -inf
        %3967 = vmax.xlane.f32.xlu0 %v3966
        %v3968 = vpop.xlane.xlu0 %3967
        %v3969 = vsel %vm902, %v3925, -inf
        %3970 = vmax.xlane.f32.xlu0 %v3969
        %v3971 = vpop.xlane.xlu0 %3970
        %v3972 = vsel %vm902, %v3927, -inf
        %3973 = vmax.xlane.f32.xlu0 %v3972
        %v3974 = vpop.xlane.xlu0 %3973
        %v3975 = vsel %vm902, %v3942, -inf
        %3976 = vmax.xlane.f32.xlu0 %v3975
        %v3977 = vpop.xlane.xlu0 %3976
        %v3978 = vsel %vm902, %v3944, -inf
        %3979 = vmax.xlane.f32.xlu0 %v3978
        %v3980 = vpop.xlane.xlu0 %3979
        %v3981 = vsel %vm902, %v3959, -inf
        %3982 = vmax.xlane.f32.xlu0 %v3981
        %v3983 = vpop.xlane.xlu0 %3982
        %v3984 = vsel %vm902, %v3961, -inf
        %3985 = vmax.xlane.f32.xlu0 %v3984
        %v3986 = vpop.xlane.xlu0 %3985
        %v3987 = vsub.f32 %v3908, %v3965
        %v3988 = vsub.f32 %v3910, %v3968
        %v3989 = vsub.f32 %v3925, %v3971
        %v3990 = vsub.f32 %v3927, %v3974
        %v3991 = vsub.f32 %v3942, %v3977
        %v3992 = vsub.f32 %v3944, %v3980
        %v3993 = vsub.f32 %v3959, %v3983
        %v3994 = vsub.f32 %v3961, %v3986
        %v3995 = vmul.f32 %v3987, 1.442695
        %v3996 = vpow.pop %v3995
        %v3997 = vmul.f32 %v3988, 1.442695
        %v3998 = vpow.pop %v3997
        %v3999 = vmul.f32 %v3989, 1.442695
        %v4000 = vpow.pop %v3999
        %v4001 = vmul.f32 %v3990, 1.442695
        %v4002 = vpow.pop %v4001
        %v4003 = vmul.f32 %v3991, 1.442695
        %v4004 = vpow.pop %v4003
        %v4005 = vmul.f32 %v3992, 1.442695
        %v4006 = vpow.pop %v4005
        %v4007 = vmul.f32 %v3993, 1.442695
        %v4008 = vpow.pop %v4007
        %v4009 = vmul.f32 %v3994, 1.442695
        %v4010 = vpow.pop %v4009
        %v4011 = vsel %vm902, %v3996, 0.0
        %4012 = vadd.xlane.f32.xlu0 %v4011
        %v4013 = vpop.xlane.xlu0 %4012
        %v4014 = vsel %vm902, %v3998, 0.0
        %4015 = vadd.xlane.f32.xlu0 %v4014
        %v4016 = vpop.xlane.xlu0 %4015
        %v4017 = vsel %vm902, %v4000, 0.0
        %4018 = vadd.xlane.f32.xlu0 %v4017
        %v4019 = vpop.xlane.xlu0 %4018
        %v4020 = vsel %vm902, %v4002, 0.0
        %4021 = vadd.xlane.f32.xlu0 %v4020
        %v4022 = vpop.xlane.xlu0 %4021
        %v4023 = vsel %vm902, %v4004, 0.0
        %4024 = vadd.xlane.f32.xlu0 %v4023
        %v4025 = vpop.xlane.xlu0 %4024
        %v4026 = vsel %vm902, %v4006, 0.0
        %4027 = vadd.xlane.f32.xlu0 %v4026
        %v4028 = vpop.xlane.xlu0 %4027
        %v4029 = vsel %vm902, %v4008, 0.0
        %4030 = vadd.xlane.f32.xlu0 %v4029
        %v4031 = vpop.xlane.xlu0 %4030
        %v4032 = vsel %vm902, %v4010, 0.0
        %4033 = vadd.xlane.f32.xlu0 %v4032
        %v4034 = vpop.xlane.xlu0 %4033
        %v4035 = vrcp.pop %v4013
        %v4036 = vrcp.pop %v4016
        %v4037 = vrcp.pop %v4019
        %v4038 = vrcp.pop %v4022
        %v4039 = vrcp.pop %v4025
        %v4040 = vrcp.pop %v4028
        %v4041 = vrcp.pop %v4031
        %v4042 = vrcp.pop %v4034
        %v4043 = vmul.f32 %v3996, %v4035
        %v4044 = vmul.f32 %v3998, %v4036
        %v4045 = vmul.f32 %v4000, %v4037
        %v4046 = vmul.f32 %v4002, %v4038
        %v4047 = vmul.f32 %v4004, %v4039
        %v4048 = vmul.f32 %v4006, %v4040
        %v4049 = vmul.f32 %v4008, %v4041
        %v4050 = vmul.f32 %v4010, %v4042
        %v4051 = vpack.c.bf16 %v4043, %v4043
        %v4052 = vpack.c.bf16 %v4044, %v4044
        %v4053 = vpack.c.bf16 %v4045, %v4045
        %v4054 = vpack.c.bf16 %v4046, %v4046
        %v4055 = vpack.c.bf16 %v4047, %v4047
        %v4056 = vpack.c.bf16 %v4048, %v4048
        %v4057 = vpack.c.bf16 %v4049, %v4049
        %v4058 = vpack.c.bf16 %v4050, %v4050
        %4059 = vrot.lane.b32.xlu0 %v1026, 120
        %v4060 = vpop.permute.xlu0 %4059
        %v4062 = vsel %vm1049, %v4060, 0
        %4064 = vmatpush.bf16.xpose.msra.mxu0 0
        %4065 = vmatpush.bf16.xpose.msra.mxu0 0
        %4066 = vmatpush.bf16.xpose.msra.mxu0 0
        %4067 = vmatpush.bf16.xpose.msra.mxu0 0
        %4068 = vmatpush.bf16.xpose.msra.mxu0 0
        %4069 = vmatpush.bf16.xpose.msra.mxu0 0
        %4070 = vmatpush.bf16.xpose.msra.mxu0 0
        %4071 = vmatpush.bf16.xpose.msra.mxu0 %v1622
        %4072 = vmatmul.bf16.gmra.mxu0 %v4062
        %v4073 = vpop.f32.mrf.mxu0
        %v4074 = vadd.f32 0.0, %v4073
        %v4075 = vpop.f32.mrf.mxu0
        %v4076 = vadd.f32 0.0, %v4075
        %4077 = vdwg.mxu0
        %4078 = vrot.lane.b32.xlu0 %v1028, 120
        %v4079 = vpop.permute.xlu0 %4078
        %v4081 = vsel %vm1049, %v4079, 0
        %4083 = vmatpush.bf16.xpose.msra.mxu0 0
        %4084 = vmatpush.bf16.xpose.msra.mxu0 0
        %4085 = vmatpush.bf16.xpose.msra.mxu0 0
        %4086 = vmatpush.bf16.xpose.msra.mxu0 0
        %4087 = vmatpush.bf16.xpose.msra.mxu0 0
        %4088 = vmatpush.bf16.xpose.msra.mxu0 0
        %4089 = vmatpush.bf16.xpose.msra.mxu0 0
        %4090 = vmatpush.bf16.xpose.msra.mxu0 %v1646
        %4091 = vmatmul.bf16.gmra.mxu0 %v4081
        %v4092 = vpop.f32.mrf.mxu0
        %v4093 = vadd.f32 0.0, %v4092
        %v4094 = vpop.f32.mrf.mxu0
        %v4095 = vadd.f32 0.0, %v4094
        %4096 = vdwg.mxu0
        %4097 = vrot.lane.b32.xlu0 %v1030, 120
        %v4098 = vpop.permute.xlu0 %4097
        %v4100 = vsel %vm1049, %v4098, 0
        %4102 = vmatpush.bf16.xpose.msra.mxu0 0
        %4103 = vmatpush.bf16.xpose.msra.mxu0 0
        %4104 = vmatpush.bf16.xpose.msra.mxu0 0
        %4105 = vmatpush.bf16.xpose.msra.mxu0 0
        %4106 = vmatpush.bf16.xpose.msra.mxu0 0
        %4107 = vmatpush.bf16.xpose.msra.mxu0 0
        %4108 = vmatpush.bf16.xpose.msra.mxu0 0
        %4109 = vmatpush.bf16.xpose.msra.mxu0 %v1670
        %4110 = vmatmul.bf16.gmra.mxu0 %v4100
        %v4111 = vpop.f32.mrf.mxu0
        %v4112 = vadd.f32 0.0, %v4111
        %v4113 = vpop.f32.mrf.mxu0
        %v4114 = vadd.f32 0.0, %v4113
        %4115 = vdwg.mxu0
        %4116 = vrot.lane.b32.xlu0 %v1032, 120
        %v4117 = vpop.permute.xlu0 %4116
        %v4119 = vsel %vm1049, %v4117, 0
        %4121 = vmatpush.bf16.xpose.msra.mxu0 0
        %4122 = vmatpush.bf16.xpose.msra.mxu0 0
        %4123 = vmatpush.bf16.xpose.msra.mxu0 0
        %4124 = vmatpush.bf16.xpose.msra.mxu0 0
        %4125 = vmatpush.bf16.xpose.msra.mxu0 0
        %4126 = vmatpush.bf16.xpose.msra.mxu0 0
        %4127 = vmatpush.bf16.xpose.msra.mxu0 0
        %4128 = vmatpush.bf16.xpose.msra.mxu0 %v1694
        %4129 = vmatmul.bf16.gmra.mxu0 %v4119
        %v4130 = vpop.f32.mrf.mxu0
        %v4131 = vadd.f32 0.0, %v4130
        %v4132 = vpop.f32.mrf.mxu0
        %v4133 = vadd.f32 0.0, %v4132
        %4134 = vdwg.mxu0
        %v4135 = vsel %vm902, %v4074, -inf
        %4136 = vmax.xlane.f32.xlu0 %v4135
        %v4137 = vpop.xlane.xlu0 %4136
        %v4138 = vsel %vm902, %v4076, -inf
        %4139 = vmax.xlane.f32.xlu0 %v4138
        %v4140 = vpop.xlane.xlu0 %4139
        %v4141 = vsel %vm902, %v4093, -inf
        %4142 = vmax.xlane.f32.xlu0 %v4141
        %v4143 = vpop.xlane.xlu0 %4142
        %v4144 = vsel %vm902, %v4095, -inf
        %4145 = vmax.xlane.f32.xlu0 %v4144
        %v4146 = vpop.xlane.xlu0 %4145
        %v4147 = vsel %vm902, %v4112, -inf
        %4148 = vmax.xlane.f32.xlu0 %v4147
        %v4149 = vpop.xlane.xlu0 %4148
        %v4150 = vsel %vm902, %v4114, -inf
        %4151 = vmax.xlane.f32.xlu0 %v4150
        %v4152 = vpop.xlane.xlu0 %4151
        %v4153 = vsel %vm902, %v4131, -inf
        %4154 = vmax.xlane.f32.xlu0 %v4153
        %v4155 = vpop.xlane.xlu0 %4154
        %v4156 = vsel %vm902, %v4133, -inf
        %4157 = vmax.xlane.f32.xlu0 %v4156
        %v4158 = vpop.xlane.xlu0 %4157
        %v4159 = vsub.f32 %v4074, %v4137
        %v4160 = vsub.f32 %v4076, %v4140
        %v4161 = vsub.f32 %v4093, %v4143
        %v4162 = vsub.f32 %v4095, %v4146
        %v4163 = vsub.f32 %v4112, %v4149
        %v4164 = vsub.f32 %v4114, %v4152
        %v4165 = vsub.f32 %v4131, %v4155
        %v4166 = vsub.f32 %v4133, %v4158
        %v4167 = vmul.f32 %v4159, 1.442695
        %v4168 = vpow.pop %v4167
        %v4169 = vmul.f32 %v4160, 1.442695
        %v4170 = vpow.pop %v4169
        %v4171 = vmul.f32 %v4161, 1.442695
        %v4172 = vpow.pop %v4171
        %v4173 = vmul.f32 %v4162, 1.442695
        %v4174 = vpow.pop %v4173
        %v4175 = vmul.f32 %v4163, 1.442695
        %v4176 = vpow.pop %v4175
        %v4177 = vmul.f32 %v4164, 1.442695
        %v4178 = vpow.pop %v4177
        %v4179 = vmul.f32 %v4165, 1.442695
        %v4180 = vpow.pop %v4179
        %v4181 = vmul.f32 %v4166, 1.442695
        %v4182 = vpow.pop %v4181
        %v4183 = vsel %vm902, %v4168, 0.0
        %4184 = vadd.xlane.f32.xlu0 %v4183
        %v4185 = vpop.xlane.xlu0 %4184
        %v4186 = vsel %vm902, %v4170, 0.0
        %4187 = vadd.xlane.f32.xlu0 %v4186
        %v4188 = vpop.xlane.xlu0 %4187
        %v4189 = vsel %vm902, %v4172, 0.0
        %4190 = vadd.xlane.f32.xlu0 %v4189
        %v4191 = vpop.xlane.xlu0 %4190
        %v4192 = vsel %vm902, %v4174, 0.0
        %4193 = vadd.xlane.f32.xlu0 %v4192
        %v4194 = vpop.xlane.xlu0 %4193
        %v4195 = vsel %vm902, %v4176, 0.0
        %4196 = vadd.xlane.f32.xlu0 %v4195
        %v4197 = vpop.xlane.xlu0 %4196
        %v4198 = vsel %vm902, %v4178, 0.0
        %4199 = vadd.xlane.f32.xlu0 %v4198
        %v4200 = vpop.xlane.xlu0 %4199
        %v4201 = vsel %vm902, %v4180, 0.0
        %4202 = vadd.xlane.f32.xlu0 %v4201
        %v4203 = vpop.xlane.xlu0 %4202
        %v4204 = vsel %vm902, %v4182, 0.0
        %4205 = vadd.xlane.f32.xlu0 %v4204
        %v4206 = vpop.xlane.xlu0 %4205
        %v4207 = vrcp.pop %v4185
        %v4208 = vrcp.pop %v4188
        %v4209 = vrcp.pop %v4191
        %v4210 = vrcp.pop %v4194
        %v4211 = vrcp.pop %v4197
        %v4212 = vrcp.pop %v4200
        %v4213 = vrcp.pop %v4203
        %v4214 = vrcp.pop %v4206
        %v4215 = vmul.f32 %v4168, %v4207
        %v4216 = vmul.f32 %v4170, %v4208
        %v4217 = vmul.f32 %v4172, %v4209
        %v4218 = vmul.f32 %v4174, %v4210
        %v4219 = vmul.f32 %v4176, %v4211
        %v4220 = vmul.f32 %v4178, %v4212
        %v4221 = vmul.f32 %v4180, %v4213
        %v4222 = vmul.f32 %v4182, %v4214
        %v4223 = vpack.c.bf16 %v4215, %v4215
        %v4224 = vpack.c.bf16 %v4216, %v4216
        %v4225 = vpack.c.bf16 %v4217, %v4217
        %v4226 = vpack.c.bf16 %v4218, %v4218
        %v4227 = vpack.c.bf16 %v4219, %v4219
        %v4228 = vpack.c.bf16 %v4220, %v4220
        %v4229 = vpack.c.bf16 %v4221, %v4221
        %v4230 = vpack.c.bf16 %v4222, %v4222
        %v4239 = vunpack.c.l.b16 %v4051
        %v4240 = vunpack.c.l.b16 %v4052
        %v4241 = vunpack.c.l.b16 %v4053
        %v4242 = vunpack.c.l.b16 %v4054
        %v4243 = vunpack.c.l.b16 %v4055
        %v4244 = vunpack.c.l.b16 %v4056
        %v4245 = vunpack.c.l.b16 %v4057
        %v4246 = vunpack.c.l.b16 %v4058
        %v4247 = vpack.c.b16 %v4240, %v4239
        %v4248 = vpack.c.b16 %v4242, %v4241
        %v4249 = vpack.c.b16 %v4244, %v4243
        %v4250 = vpack.c.b16 %v4246, %v4245
        %v4259 = vunpack.c.l.b16 %v4223
        %v4260 = vunpack.c.l.b16 %v4224
        %v4261 = vunpack.c.l.b16 %v4225
        %v4262 = vunpack.c.l.b16 %v4226
        %v4263 = vunpack.c.l.b16 %v4227
        %v4264 = vunpack.c.l.b16 %v4228
        %v4265 = vunpack.c.l.b16 %v4229
        %v4266 = vunpack.c.l.b16 %v4230
        %v4267 = vpack.c.b16 %v4260, %v4259
        %v4268 = vpack.c.b16 %v4262, %v4261
        %v4269 = vpack.c.b16 %v4264, %v4263
        %v4270 = vpack.c.b16 %v4266, %v4265
        %4271 = vrot.lane.b32.xlu0 %v4267, 16
        %v4272 = vpop.permute.xlu0 %4271
        %4273 = vrot.lane.b32.xlu0 %v4268, 16
        %v4274 = vpop.permute.xlu0 %4273
        %4275 = vrot.lane.b32.xlu0 %v4269, 16
        %v4276 = vpop.permute.xlu0 %4275
        %4277 = vrot.lane.b32.xlu0 %v4270, 16
        %v4278 = vpop.permute.xlu0 %4277
        %v4281 = vsel %vm902, %v4247, %v4272
        %v4284 = vsel %vm902, %v4248, %v4274
        %v4287 = vsel %vm902, %v4249, %v4276
        %v4290 = vsel %vm902, %v4250, %v4278
        %v4291 = vsel %vm1866, %v4281, 0
        %4293 = vmatpush.bf16.msra.mxu0 0
        %4294 = vmatpush.bf16.msra.mxu0 0
        %4295 = vmatpush.bf16.msra.mxu0 0
        %4296 = vmatpush.bf16.msra.mxu0 0
        %4297 = vmatpush.bf16.msra.mxu0 0
        %4298 = vmatpush.bf16.msra.mxu0 0
        %4299 = vmatpush.bf16.msra.mxu0 %v1293
        %4300 = vmatpush.bf16.msra.mxu0 %v1269
        %4301 = vmatmul.bf16.gmra.mxu0 %v4291
        %v4302 = vpop.f32.mrf.mxu0
        %v4303 = vadd.f32 0.0, %v4302
        %v4304 = vpop.f32.mrf.mxu0
        %v4305 = vadd.f32 0.0, %v4304
        %4306 = vdwg.mxu0
        %v4307 = vsel %vm1866, %v4284, 0
        %4309 = vmatpush.bf16.msra.mxu0 0
        %4310 = vmatpush.bf16.msra.mxu0 0
        %4311 = vmatpush.bf16.msra.mxu0 0
        %4312 = vmatpush.bf16.msra.mxu0 0
        %4313 = vmatpush.bf16.msra.mxu0 0
        %4314 = vmatpush.bf16.msra.mxu0 0
        %4315 = vmatpush.bf16.msra.mxu0 %v1294
        %4316 = vmatpush.bf16.msra.mxu0 %v1270
        %4317 = vmatmul.bf16.gmra.mxu0 %v4307
        %v4318 = vpop.f32.mrf.mxu0
        %v4319 = vadd.f32 0.0, %v4318
        %v4320 = vpop.f32.mrf.mxu0
        %v4321 = vadd.f32 0.0, %v4320
        %4322 = vdwg.mxu0
        %v4323 = vsel %vm1866, %v4287, 0
        %4325 = vmatpush.bf16.msra.mxu0 0
        %4326 = vmatpush.bf16.msra.mxu0 0
        %4327 = vmatpush.bf16.msra.mxu0 0
        %4328 = vmatpush.bf16.msra.mxu0 0
        %4329 = vmatpush.bf16.msra.mxu0 0
        %4330 = vmatpush.bf16.msra.mxu0 0
        %4331 = vmatpush.bf16.msra.mxu0 %v1295
        %4332 = vmatpush.bf16.msra.mxu0 %v1271
        %4333 = vmatmul.bf16.gmra.mxu0 %v4323
        %v4334 = vpop.f32.mrf.mxu0
        %v4335 = vadd.f32 0.0, %v4334
        %v4336 = vpop.f32.mrf.mxu0
        %v4337 = vadd.f32 0.0, %v4336
        %4338 = vdwg.mxu0
        %v4339 = vsel %vm1866, %v4290, 0
        %4341 = vmatpush.bf16.msra.mxu0 0
        %4342 = vmatpush.bf16.msra.mxu0 0
        %4343 = vmatpush.bf16.msra.mxu0 0
        %4344 = vmatpush.bf16.msra.mxu0 0
        %4345 = vmatpush.bf16.msra.mxu0 0
        %4346 = vmatpush.bf16.msra.mxu0 0
        %4347 = vmatpush.bf16.msra.mxu0 %v1296
        %4348 = vmatpush.bf16.msra.mxu0 %v1272
        %4349 = vmatmul.bf16.gmra.mxu0 %v4339
        %v4350 = vpop.f32.mrf.mxu0
        %v4351 = vadd.f32 0.0, %v4350
        %v4352 = vpop.f32.mrf.mxu0
        %v4353 = vadd.f32 0.0, %v4352
        %4354 = vdwg.mxu0
        %v4355 = vadd.f32 %v3876, %v4303
        %v4356 = vadd.f32 %v3878, %v4305
        %v4357 = vadd.f32 %v3881, %v4319
        %v4358 = vadd.f32 %v3883, %v4321
        %v4359 = vadd.f32 %v3886, %v4335
        %v4360 = vadd.f32 %v3888, %v4337
        %v4361 = vadd.f32 %v3891, %v4351
        %v4362 = vadd.f32 %v3893, %v4353
        %v4363 = vld [vmem:[%s8] sm:$0x1]
        %v4364 = vld [vmem:[%s9] sm:$0x1]
        %v4365 = vsel %vm902, %v4355, 0.0
        %4366 = vadd.xlane.f32.xlu0 %v4365
        %v4367 = vpop.xlane.xlu0 %4366
        %v4368 = vsel %vm902, %v4356, 0.0
        %4369 = vadd.xlane.f32.xlu0 %v4368
        %v4370 = vpop.xlane.xlu0 %4369
        %v4371 = vsel %vm902, %v4357, 0.0
        %4372 = vadd.xlane.f32.xlu0 %v4371
        %v4373 = vpop.xlane.xlu0 %4372
        %v4374 = vsel %vm902, %v4358, 0.0
        %4375 = vadd.xlane.f32.xlu0 %v4374
        %v4376 = vpop.xlane.xlu0 %4375
        %v4377 = vsel %vm902, %v4359, 0.0
        %4378 = vadd.xlane.f32.xlu0 %v4377
        %v4379 = vpop.xlane.xlu0 %4378
        %v4380 = vsel %vm902, %v4360, 0.0
        %4381 = vadd.xlane.f32.xlu0 %v4380
        %v4382 = vpop.xlane.xlu0 %4381
        %v4383 = vsel %vm902, %v4361, 0.0
        %4384 = vadd.xlane.f32.xlu0 %v4383
        %v4385 = vpop.xlane.xlu0 %4384
        %v4386 = vsel %vm902, %v4362, 0.0
        %4387 = vadd.xlane.f32.xlu0 %v4386
        %v4388 = vpop.xlane.xlu0 %4387
        %v4389 = vmul.f32 %v4367, %v1971
        %v4390 = vmul.f32 %v4370, %v1971
        %v4391 = vmul.f32 %v4373, %v1971
        %v4392 = vmul.f32 %v4376, %v1971
        %v4393 = vmul.f32 %v4379, %v1971
        %v4394 = vmul.f32 %v4382, %v1971
        %v4395 = vmul.f32 %v4385, %v1971
        %v4396 = vmul.f32 %v4388, %v1971
        %v4397 = vsub.f32 %v4355, %v4389
        %v4398 = vsub.f32 %v4356, %v4390
        %v4399 = vsub.f32 %v4357, %v4391
        %v4400 = vsub.f32 %v4358, %v4392
        %v4401 = vsub.f32 %v4359, %v4393
        %v4402 = vsub.f32 %v4360, %v4394
        %v4403 = vsub.f32 %v4361, %v4395
        %v4404 = vsub.f32 %v4362, %v4396
        %v4405 = vmul.f32 %v4397, %v4397
        %v4406 = vmul.f32 %v4398, %v4398
        %v4407 = vmul.f32 %v4399, %v4399
        %v4408 = vmul.f32 %v4400, %v4400
        %v4409 = vmul.f32 %v4401, %v4401
        %v4410 = vmul.f32 %v4402, %v4402
        %v4411 = vmul.f32 %v4403, %v4403
        %v4412 = vmul.f32 %v4404, %v4404
        %v4413 = vsel %vm902, %v4405, 0.0
        %4414 = vadd.xlane.f32.xlu0 %v4413
        %v4415 = vpop.xlane.xlu0 %4414
        %v4416 = vsel %vm902, %v4406, 0.0
        %4417 = vadd.xlane.f32.xlu0 %v4416
        %v4418 = vpop.xlane.xlu0 %4417
        %v4419 = vsel %vm902, %v4407, 0.0
        %4420 = vadd.xlane.f32.xlu0 %v4419
        %v4421 = vpop.xlane.xlu0 %4420
        %v4422 = vsel %vm902, %v4408, 0.0
        %4423 = vadd.xlane.f32.xlu0 %v4422
        %v4424 = vpop.xlane.xlu0 %4423
        %v4425 = vsel %vm902, %v4409, 0.0
        %4426 = vadd.xlane.f32.xlu0 %v4425
        %v4427 = vpop.xlane.xlu0 %4426
        %v4428 = vsel %vm902, %v4410, 0.0
        %4429 = vadd.xlane.f32.xlu0 %v4428
        %v4430 = vpop.xlane.xlu0 %4429
        %v4431 = vsel %vm902, %v4411, 0.0
        %4432 = vadd.xlane.f32.xlu0 %v4431
        %v4433 = vpop.xlane.xlu0 %4432
        %v4434 = vsel %vm902, %v4412, 0.0
        %4435 = vadd.xlane.f32.xlu0 %v4434
        %v4436 = vpop.xlane.xlu0 %4435
        %v4437 = vmul.f32 %v4415, %v1971
        %v4438 = vmul.f32 %v4418, %v1971
        %v4439 = vmul.f32 %v4421, %v1971
        %v4440 = vmul.f32 %v4424, %v1971
        %v4441 = vmul.f32 %v4427, %v1971
        %v4442 = vmul.f32 %v4430, %v1971
        %v4443 = vmul.f32 %v4433, %v1971
        %v4444 = vmul.f32 %v4436, %v1971
        %v4445 = vadd.f32 %v4437, 1e-05
        %v4446 = vadd.f32 %v4438, 1e-05
        %v4447 = vadd.f32 %v4439, 1e-05
        %v4448 = vadd.f32 %v4440, 1e-05
        %v4449 = vadd.f32 %v4441, 1e-05
        %v4450 = vadd.f32 %v4442, 1e-05
        %v4451 = vadd.f32 %v4443, 1e-05
        %v4452 = vadd.f32 %v4444, 1e-05
        %v4453 = vrsqrt.pop %v4445
        %v4454 = vmul.f32 %v4453, %v4445
        %v4455 = vmul.f32 %v4454, %v4453
        %v4456 = vmul.f32 0.5, %v4455
        %v4457 = vsub.f32 1.5, %v4456
        %v4458 = vmul.f32 %v4453, %v4457
        %vm4459 = vweird.f32 %v4445
        %vm4460 = vweird.f32 %v4453
        %vm4461 = vmor %vm4459, %vm4460
        %v4462 = vsel %vm4461, %v4453, %v4458
        %v4463 = vrsqrt.pop %v4446
        %v4464 = vmul.f32 %v4463, %v4446
        %v4465 = vmul.f32 %v4464, %v4463
        %v4466 = vmul.f32 0.5, %v4465
        %v4467 = vsub.f32 1.5, %v4466
        %v4468 = vmul.f32 %v4463, %v4467
        %vm4469 = vweird.f32 %v4446
        %vm4470 = vweird.f32 %v4463
        %vm4471 = vmor %vm4469, %vm4470
        %v4472 = vsel %vm4471, %v4463, %v4468
        %v4473 = vrsqrt.pop %v4447
        %v4474 = vmul.f32 %v4473, %v4447
        %v4475 = vmul.f32 %v4474, %v4473
        %v4476 = vmul.f32 0.5, %v4475
        %v4477 = vsub.f32 1.5, %v4476
        %v4478 = vmul.f32 %v4473, %v4477
        %vm4479 = vweird.f32 %v4447
        %vm4480 = vweird.f32 %v4473
        %vm4481 = vmor %vm4479, %vm4480
        %v4482 = vsel %vm4481, %v4473, %v4478
        %v4483 = vrsqrt.pop %v4448
        %v4484 = vmul.f32 %v4483, %v4448
        %v4485 = vmul.f32 %v4484, %v4483
        %v4486 = vmul.f32 0.5, %v4485
        %v4487 = vsub.f32 1.5, %v4486
        %v4488 = vmul.f32 %v4483, %v4487
        %vm4489 = vweird.f32 %v4448
        %vm4490 = vweird.f32 %v4483
        %vm4491 = vmor %vm4489, %vm4490
        %v4492 = vsel %vm4491, %v4483, %v4488
        %v4493 = vrsqrt.pop %v4449
        %v4494 = vmul.f32 %v4493, %v4449
        %v4495 = vmul.f32 %v4494, %v4493
        %v4496 = vmul.f32 0.5, %v4495
        %v4497 = vsub.f32 1.5, %v4496
        %v4498 = vmul.f32 %v4493, %v4497
        %vm4499 = vweird.f32 %v4449
        %vm4500 = vweird.f32 %v4493
        %vm4501 = vmor %vm4499, %vm4500
        %v4502 = vsel %vm4501, %v4493, %v4498
        %v4503 = vrsqrt.pop %v4450
        %v4504 = vmul.f32 %v4503, %v4450
        %v4505 = vmul.f32 %v4504, %v4503
        %v4506 = vmul.f32 0.5, %v4505
        %v4507 = vsub.f32 1.5, %v4506
        %v4508 = vmul.f32 %v4503, %v4507
        %vm4509 = vweird.f32 %v4450
        %vm4510 = vweird.f32 %v4503
        %vm4511 = vmor %vm4509, %vm4510
        %v4512 = vsel %vm4511, %v4503, %v4508
        %v4513 = vrsqrt.pop %v4451
        %v4514 = vmul.f32 %v4513, %v4451
        %v4515 = vmul.f32 %v4514, %v4513
        %v4516 = vmul.f32 0.5, %v4515
        %v4517 = vsub.f32 1.5, %v4516
        %v4518 = vmul.f32 %v4513, %v4517
        %vm4519 = vweird.f32 %v4451
        %vm4520 = vweird.f32 %v4513
        %vm4521 = vmor %vm4519, %vm4520
        %v4522 = vsel %vm4521, %v4513, %v4518
        %v4523 = vrsqrt.pop %v4452
        %v4524 = vmul.f32 %v4523, %v4452
        %v4525 = vmul.f32 %v4524, %v4523
        %v4526 = vmul.f32 0.5, %v4525
        %v4527 = vsub.f32 1.5, %v4526
        %v4528 = vmul.f32 %v4523, %v4527
        %vm4529 = vweird.f32 %v4452
        %vm4530 = vweird.f32 %v4523
        %vm4531 = vmor %vm4529, %vm4530
        %v4532 = vsel %vm4531, %v4523, %v4528
        %v4533 = vmul.f32 %v4397, %v4462
        %v4534 = vmul.f32 %v4398, %v4472
        %v4535 = vmul.f32 %v4399, %v4482
        %v4536 = vmul.f32 %v4400, %v4492
        %v4537 = vmul.f32 %v4401, %v4502
        %v4538 = vmul.f32 %v4402, %v4512
        %v4539 = vmul.f32 %v4403, %v4522
        %v4540 = vmul.f32 %v4404, %v4532
        %v4542 = vperm.slane %v4363, 0
        %v4544 = vmul.f32 %v4533, %v4542
        %v4545 = vmul.f32 %v4534, %v4542
        %v4546 = vmul.f32 %v4535, %v4542
        %v4547 = vmul.f32 %v4536, %v4542
        %v4548 = vmul.f32 %v4537, %v4542
        %v4549 = vmul.f32 %v4538, %v4542
        %v4550 = vmul.f32 %v4539, %v4542
        %v4551 = vmul.f32 %v4540, %v4542
        %v4553 = vperm.slane %v4364, 0
        %v4555 = vadd.f32 %v4544, %v4553
        %v4556 = vadd.f32 %v4545, %v4553
        %v4557 = vadd.f32 %v4546, %v4553
        %v4558 = vadd.f32 %v4547, %v4553
        %v4559 = vadd.f32 %v4548, %v4553
        %v4560 = vadd.f32 %v4549, %v4553
        %v4561 = vadd.f32 %v4550, %v4553
        %v4562 = vadd.f32 %v4551, %v4553
        %v4563 = vpack.c.bf16 %v4556, %v4555
        %v4564 = vpack.c.bf16 %v4558, %v4557
        %v4565 = vpack.c.bf16 %v4560, %v4559
        %v4566 = vpack.c.bf16 %v4562, %v4561
        %v4567 = vld [vmem:[%s10] sm:$0xf]
        %v4568 = vld [vmem:[%s10 + $0x4] sm:$0xf]
        %v4569 = vld [vmem:[%s11] sm:$0x1]
        %v4571 = vperm.slane %v4569, 0
        %v4575 = vunpack.c.l.b16 %v4567
        %v4576 = vunpack.c.l.b16 %v4568
        %v4577 = vpack.c.b16 %v4576, %v4575
        %v4580 = vsel %vm902, %v4563, 0
        %v4583 = vsel %vm902, %v4564, 0
        %v4586 = vsel %vm902, %v4565, 0
        %v4589 = vsel %vm902, %v4566, 0
        %4591 = vmatpush.bf16.msra.mxu0 0
        %4592 = vmatpush.bf16.msra.mxu0 0
        %4593 = vmatpush.bf16.msra.mxu0 0
        %4594 = vmatpush.bf16.msra.mxu0 0
        %4595 = vmatpush.bf16.msra.mxu0 0
        %4596 = vmatpush.bf16.msra.mxu0 0
        %4597 = vmatpush.bf16.msra.mxu0 0
        %4598 = vmatpush.bf16.msra.mxu0 %v4577
        %4599 = vmatmul.bf16.gmra.mxu0 %v4580
        %v4600 = vpop.f32.mrf.mxu0
        %v4601 = vadd.f32 %v4571, %v4600
        %v4602 = vpop.f32.mrf.mxu0
        %v4603 = vadd.f32 %v4571, %v4602
        %4604 = vmatmul.bf16.gmra.mxu0 %v4583
        %v4605 = vpop.f32.mrf.mxu0
        %v4606 = vadd.f32 %v4571, %v4605
        %v4607 = vpop.f32.mrf.mxu0
        %v4608 = vadd.f32 %v4571, %v4607
        %4609 = vmatmul.bf16.gmra.mxu0 %v4586
        %v4610 = vpop.f32.mrf.mxu0
        %v4611 = vadd.f32 %v4571, %v4610
        %v4612 = vpop.f32.mrf.mxu0
        %v4613 = vadd.f32 %v4571, %v4612
        %4614 = vmatmul.bf16.gmra.mxu0 %v4589
        %v4615 = vpop.f32.mrf.mxu0
        %v4616 = vadd.f32 %v4571, %v4615
        %v4617 = vpop.f32.mrf.mxu0
        %v4618 = vadd.f32 %v4571, %v4617
        %4619 = vdwg.mxu0
        %v4620 = vmul.f32 %v4601, 0.5
        %v4621 = vmul.f32 %v4603, 0.5
        %v4622 = vmul.f32 %v4606, 0.5
        %v4623 = vmul.f32 %v4608, 0.5
        %v4624 = vmul.f32 %v4611, 0.5
        %v4625 = vmul.f32 %v4613, 0.5
        %v4626 = vmul.f32 %v4616, 0.5
        %v4627 = vmul.f32 %v4618, 0.5
        %v4628 = vmul.f32 %v4601, 0.044715
        %v4629 = vmul.f32 %v4603, 0.044715
        %v4630 = vmul.f32 %v4606, 0.044715
        %v4631 = vmul.f32 %v4608, 0.044715
        %v4632 = vmul.f32 %v4611, 0.044715
        %v4633 = vmul.f32 %v4613, 0.044715
        %v4634 = vmul.f32 %v4616, 0.044715
        %v4635 = vmul.f32 %v4618, 0.044715
        %v4636 = vmul.f32 %v4628, %v4601
        %v4637 = vmul.f32 %v4629, %v4603
        %v4638 = vmul.f32 %v4630, %v4606
        %v4639 = vmul.f32 %v4631, %v4608
        %v4640 = vmul.f32 %v4632, %v4611
        %v4641 = vmul.f32 %v4633, %v4613
        %v4642 = vmul.f32 %v4634, %v4616
        %v4643 = vmul.f32 %v4635, %v4618
        %v4644 = vmul.f32 %v4636, %v4601
        %v4645 = vmul.f32 %v4637, %v4603
        %v4646 = vmul.f32 %v4638, %v4606
        %v4647 = vmul.f32 %v4639, %v4608
        %v4648 = vmul.f32 %v4640, %v4611
        %v4649 = vmul.f32 %v4641, %v4613
        %v4650 = vmul.f32 %v4642, %v4616
        %v4651 = vmul.f32 %v4643, %v4618
        %v4652 = vadd.f32 %v4601, %v4644
        %v4653 = vadd.f32 %v4603, %v4645
        %v4654 = vadd.f32 %v4606, %v4646
        %v4655 = vadd.f32 %v4608, %v4647
        %v4656 = vadd.f32 %v4611, %v4648
        %v4657 = vadd.f32 %v4613, %v4649
        %v4658 = vadd.f32 %v4616, %v4650
        %v4659 = vadd.f32 %v4618, %v4651
        %v4660 = vmul.f32 %v4652, 0.7978846
        %v4661 = vmul.f32 %v4653, 0.7978846
        %v4662 = vmul.f32 %v4654, 0.7978846
        %v4663 = vmul.f32 %v4655, 0.7978846
        %v4664 = vmul.f32 %v4656, 0.7978846
        %v4665 = vmul.f32 %v4657, 0.7978846
        %v4666 = vmul.f32 %v4658, 0.7978846
        %v4667 = vmul.f32 %v4659, 0.7978846
        %v4668 = vtanh.pop %v4660
        %v4669 = vtanh.pop %v4661
        %v4670 = vtanh.pop %v4662
        %v4671 = vtanh.pop %v4663
        %v4672 = vtanh.pop %v4664
        %v4673 = vtanh.pop %v4665
        %v4674 = vtanh.pop %v4666
        %v4675 = vtanh.pop %v4667
        %v4676 = vadd.f32 %v4668, 1.0
        %v4677 = vadd.f32 %v4669, 1.0
        %v4678 = vadd.f32 %v4670, 1.0
        %v4679 = vadd.f32 %v4671, 1.0
        %v4680 = vadd.f32 %v4672, 1.0
        %v4681 = vadd.f32 %v4673, 1.0
        %v4682 = vadd.f32 %v4674, 1.0
        %v4683 = vadd.f32 %v4675, 1.0
        %v4684 = vmul.f32 %v4620, %v4676
        %v4685 = vmul.f32 %v4621, %v4677
        %v4686 = vmul.f32 %v4622, %v4678
        %v4687 = vmul.f32 %v4623, %v4679
        %v4688 = vmul.f32 %v4624, %v4680
        %v4689 = vmul.f32 %v4625, %v4681
        %v4690 = vmul.f32 %v4626, %v4682
        %v4691 = vmul.f32 %v4627, %v4683
        %v4692 = vpack.c.bf16 %v4685, %v4684
        %v4693 = vpack.c.bf16 %v4687, %v4686
        %v4694 = vpack.c.bf16 %v4689, %v4688
        %v4695 = vpack.c.bf16 %v4691, %v4690
        %v4696 = vld [vmem:[%s12] sm:$0xf]
        %v4697 = vld [vmem:[%s12 + $0x4] sm:$0xf]
        %4698 = vmatpush.bf16.xpose.msra.mxu0 0
        %4699 = vmatpush.bf16.xpose.msra.mxu0 0
        %4700 = vmatpush.bf16.xpose.msra.mxu0 0
        %4701 = vmatpush.bf16.xpose.msra.mxu0 0
        %4702 = vmatpush.bf16.xpose.msra.mxu0 0
        %4703 = vmatpush.bf16.xpose.msra.mxu0 0
        %4704 = vmatpush.bf16.xpose.msra.mxu0 0
        %4705 = vmatpush.bf16.xpose.msra.mxu0 %v2284
        %4706 = vmatmul.bf16.gmra.mxu0 %v3896
        %v4707 = vpop.f32.mrf.mxu0
        %v4708 = vadd.f32 0.0, %v4707
        %v4709 = vpop.f32.mrf.mxu0
        %v4710 = vadd.f32 0.0, %v4709
        %4711 = vdwg.mxu0
        %4712 = vmatpush.bf16.xpose.msra.mxu0 0
        %4713 = vmatpush.bf16.xpose.msra.mxu0 0
        %4714 = vmatpush.bf16.xpose.msra.mxu0 0
        %4715 = vmatpush.bf16.xpose.msra.mxu0 0
        %4716 = vmatpush.bf16.xpose.msra.mxu0 0
        %4717 = vmatpush.bf16.xpose.msra.mxu0 0
        %4718 = vmatpush.bf16.xpose.msra.mxu0 0
        %4719 = vmatpush.bf16.xpose.msra.mxu0 %v2303
        %4720 = vmatmul.bf16.gmra.mxu0 %v3913
        %v4721 = vpop.f32.mrf.mxu0
        %v4722 = vadd.f32 0.0, %v4721
        %v4723 = vpop.f32.mrf.mxu0
        %v4724 = vadd.f32 0.0, %v4723
        %4725 = vdwg.mxu0
        %4726 = vmatpush.bf16.xpose.msra.mxu0 0
        %4727 = vmatpush.bf16.xpose.msra.mxu0 0
        %4728 = vmatpush.bf16.xpose.msra.mxu0 0
        %4729 = vmatpush.bf16.xpose.msra.mxu0 0
        %4730 = vmatpush.bf16.xpose.msra.mxu0 0
        %4731 = vmatpush.bf16.xpose.msra.mxu0 0
        %4732 = vmatpush.bf16.xpose.msra.mxu0 0
        %4733 = vmatpush.bf16.xpose.msra.mxu0 %v2322
        %4734 = vmatmul.bf16.gmra.mxu0 %v3930
        %v4735 = vpop.f32.mrf.mxu0
        %v4736 = vadd.f32 0.0, %v4735
        %v4737 = vpop.f32.mrf.mxu0
        %v4738 = vadd.f32 0.0, %v4737
        %4739 = vdwg.mxu0
        %4740 = vmatpush.bf16.xpose.msra.mxu0 0
        %4741 = vmatpush.bf16.xpose.msra.mxu0 0
        %4742 = vmatpush.bf16.xpose.msra.mxu0 0
        %4743 = vmatpush.bf16.xpose.msra.mxu0 0
        %4744 = vmatpush.bf16.xpose.msra.mxu0 0
        %4745 = vmatpush.bf16.xpose.msra.mxu0 0
        %4746 = vmatpush.bf16.xpose.msra.mxu0 0
        %4747 = vmatpush.bf16.xpose.msra.mxu0 %v2341
        %4748 = vmatmul.bf16.gmra.mxu0 %v3947
        %v4749 = vpop.f32.mrf.mxu0
        %v4750 = vadd.f32 0.0, %v4749
        %v4751 = vpop.f32.mrf.mxu0
        %v4752 = vadd.f32 0.0, %v4751
        %4753 = vdwg.mxu0
        %v4754 = vsel %vm902, %v4708, -inf
        %4755 = vmax.xlane.f32.xlu0 %v4754
        %v4756 = vpop.xlane.xlu0 %4755
        %v4757 = vsel %vm902, %v4710, -inf
        %4758 = vmax.xlane.f32.xlu0 %v4757
        %v4759 = vpop.xlane.xlu0 %4758
        %v4760 = vsel %vm902, %v4722, -inf
        %4761 = vmax.xlane.f32.xlu0 %v4760
        %v4762 = vpop.xlane.xlu0 %4761
        %v4763 = vsel %vm902, %v4724, -inf
        %4764 = vmax.xlane.f32.xlu0 %v4763
        %v4765 = vpop.xlane.xlu0 %4764
        %v4766 = vsel %vm902, %v4736, -inf
        %4767 = vmax.xlane.f32.xlu0 %v4766
        %v4768 = vpop.xlane.xlu0 %4767
        %v4769 = vsel %vm902, %v4738, -inf
        %4770 = vmax.xlane.f32.xlu0 %v4769
        %v4771 = vpop.xlane.xlu0 %4770
        %v4772 = vsel %vm902, %v4750, -inf
        %4773 = vmax.xlane.f32.xlu0 %v4772
        %v4774 = vpop.xlane.xlu0 %4773
        %v4775 = vsel %vm902, %v4752, -inf
        %4776 = vmax.xlane.f32.xlu0 %v4775
        %v4777 = vpop.xlane.xlu0 %4776
        %v4778 = vsub.f32 %v4708, %v4756
        %v4779 = vsub.f32 %v4710, %v4759
        %v4780 = vsub.f32 %v4722, %v4762
        %v4781 = vsub.f32 %v4724, %v4765
        %v4782 = vsub.f32 %v4736, %v4768
        %v4783 = vsub.f32 %v4738, %v4771
        %v4784 = vsub.f32 %v4750, %v4774
        %v4785 = vsub.f32 %v4752, %v4777
        %v4786 = vmul.f32 %v4778, 1.442695
        %v4787 = vpow.pop %v4786
        %v4788 = vmul.f32 %v4779, 1.442695
        %v4789 = vpow.pop %v4788
        %v4790 = vmul.f32 %v4780, 1.442695
        %v4791 = vpow.pop %v4790
        %v4792 = vmul.f32 %v4781, 1.442695
        %v4793 = vpow.pop %v4792
        %v4794 = vmul.f32 %v4782, 1.442695
        %v4795 = vpow.pop %v4794
        %v4796 = vmul.f32 %v4783, 1.442695
        %v4797 = vpow.pop %v4796
        %v4798 = vmul.f32 %v4784, 1.442695
        %v4799 = vpow.pop %v4798
        %v4800 = vmul.f32 %v4785, 1.442695
        %v4801 = vpow.pop %v4800
        %v4802 = vsel %vm902, %v4787, 0.0
        %4803 = vadd.xlane.f32.xlu0 %v4802
        %v4804 = vpop.xlane.xlu0 %4803
        %v4805 = vsel %vm902, %v4789, 0.0
        %4806 = vadd.xlane.f32.xlu0 %v4805
        %v4807 = vpop.xlane.xlu0 %4806
        %v4808 = vsel %vm902, %v4791, 0.0
        %4809 = vadd.xlane.f32.xlu0 %v4808
        %v4810 = vpop.xlane.xlu0 %4809
        %v4811 = vsel %vm902, %v4793, 0.0
        %4812 = vadd.xlane.f32.xlu0 %v4811
        %v4813 = vpop.xlane.xlu0 %4812
        %v4814 = vsel %vm902, %v4795, 0.0
        %4815 = vadd.xlane.f32.xlu0 %v4814
        %v4816 = vpop.xlane.xlu0 %4815
        %v4817 = vsel %vm902, %v4797, 0.0
        %4818 = vadd.xlane.f32.xlu0 %v4817
        %v4819 = vpop.xlane.xlu0 %4818
        %v4820 = vsel %vm902, %v4799, 0.0
        %4821 = vadd.xlane.f32.xlu0 %v4820
        %v4822 = vpop.xlane.xlu0 %4821
        %v4823 = vsel %vm902, %v4801, 0.0
        %4824 = vadd.xlane.f32.xlu0 %v4823
        %v4825 = vpop.xlane.xlu0 %4824
        %v4826 = vrcp.pop %v4804
        %v4827 = vrcp.pop %v4807
        %v4828 = vrcp.pop %v4810
        %v4829 = vrcp.pop %v4813
        %v4830 = vrcp.pop %v4816
        %v4831 = vrcp.pop %v4819
        %v4832 = vrcp.pop %v4822
        %v4833 = vrcp.pop %v4825
        %v4834 = vmul.f32 %v4787, %v4826
        %v4835 = vmul.f32 %v4789, %v4827
        %v4836 = vmul.f32 %v4791, %v4828
        %v4837 = vmul.f32 %v4793, %v4829
        %v4838 = vmul.f32 %v4795, %v4830
        %v4839 = vmul.f32 %v4797, %v4831
        %v4840 = vmul.f32 %v4799, %v4832
        %v4841 = vmul.f32 %v4801, %v4833
        %v4842 = vpack.c.bf16 %v4834, %v4834
        %v4843 = vpack.c.bf16 %v4835, %v4835
        %v4844 = vpack.c.bf16 %v4836, %v4836
        %v4845 = vpack.c.bf16 %v4837, %v4837
        %v4846 = vpack.c.bf16 %v4838, %v4838
        %v4847 = vpack.c.bf16 %v4839, %v4839
        %v4848 = vpack.c.bf16 %v4840, %v4840
        %v4849 = vpack.c.bf16 %v4841, %v4841
        %4850 = vmatpush.bf16.xpose.msra.mxu0 0
        %4851 = vmatpush.bf16.xpose.msra.mxu0 0
        %4852 = vmatpush.bf16.xpose.msra.mxu0 0
        %4853 = vmatpush.bf16.xpose.msra.mxu0 0
        %4854 = vmatpush.bf16.xpose.msra.mxu0 0
        %4855 = vmatpush.bf16.xpose.msra.mxu0 0
        %4856 = vmatpush.bf16.xpose.msra.mxu0 0
        %4857 = vmatpush.bf16.xpose.msra.mxu0 %v2456
        %4858 = vmatmul.bf16.gmra.mxu0 %v4062
        %v4859 = vpop.f32.mrf.mxu0
        %v4860 = vadd.f32 0.0, %v4859
        %v4861 = vpop.f32.mrf.mxu0
        %v4862 = vadd.f32 0.0, %v4861
        %4863 = vdwg.mxu0
        %4864 = vmatpush.bf16.xpose.msra.mxu0 0
        %4865 = vmatpush.bf16.xpose.msra.mxu0 0
        %4866 = vmatpush.bf16.xpose.msra.mxu0 0
        %4867 = vmatpush.bf16.xpose.msra.mxu0 0
        %4868 = vmatpush.bf16.xpose.msra.mxu0 0
        %4869 = vmatpush.bf16.xpose.msra.mxu0 0
        %4870 = vmatpush.bf16.xpose.msra.mxu0 0
        %4871 = vmatpush.bf16.xpose.msra.mxu0 %v2475
        %4872 = vmatmul.bf16.gmra.mxu0 %v4081
        %v4873 = vpop.f32.mrf.mxu0
        %v4874 = vadd.f32 0.0, %v4873
        %v4875 = vpop.f32.mrf.mxu0
        %v4876 = vadd.f32 0.0, %v4875
        %4877 = vdwg.mxu0
        %4878 = vmatpush.bf16.xpose.msra.mxu0 0
        %4879 = vmatpush.bf16.xpose.msra.mxu0 0
        %4880 = vmatpush.bf16.xpose.msra.mxu0 0
        %4881 = vmatpush.bf16.xpose.msra.mxu0 0
        %4882 = vmatpush.bf16.xpose.msra.mxu0 0
        %4883 = vmatpush.bf16.xpose.msra.mxu0 0
        %4884 = vmatpush.bf16.xpose.msra.mxu0 0
        %4885 = vmatpush.bf16.xpose.msra.mxu0 %v2494
        %4886 = vmatmul.bf16.gmra.mxu0 %v4100
        %v4887 = vpop.f32.mrf.mxu0
        %v4888 = vadd.f32 0.0, %v4887
        %v4889 = vpop.f32.mrf.mxu0
        %v4890 = vadd.f32 0.0, %v4889
        %4891 = vdwg.mxu0
        %4892 = vmatpush.bf16.xpose.msra.mxu0 0
        %4893 = vmatpush.bf16.xpose.msra.mxu0 0
        %4894 = vmatpush.bf16.xpose.msra.mxu0 0
        %4895 = vmatpush.bf16.xpose.msra.mxu0 0
        %4896 = vmatpush.bf16.xpose.msra.mxu0 0
        %4897 = vmatpush.bf16.xpose.msra.mxu0 0
        %4898 = vmatpush.bf16.xpose.msra.mxu0 0
        %4899 = vmatpush.bf16.xpose.msra.mxu0 %v2513
        %4900 = vmatmul.bf16.gmra.mxu0 %v4119
        %v4901 = vpop.f32.mrf.mxu0
        %v4902 = vadd.f32 0.0, %v4901
        %v4903 = vpop.f32.mrf.mxu0
        %v4904 = vadd.f32 0.0, %v4903
        %4905 = vdwg.mxu0
        %v4906 = vsel %vm902, %v4860, -inf
        %4907 = vmax.xlane.f32.xlu0 %v4906
        %v4908 = vpop.xlane.xlu0 %4907
        %v4909 = vsel %vm902, %v4862, -inf
        %4910 = vmax.xlane.f32.xlu0 %v4909
        %v4911 = vpop.xlane.xlu0 %4910
        %v4912 = vsel %vm902, %v4874, -inf
        %4913 = vmax.xlane.f32.xlu0 %v4912
        %v4914 = vpop.xlane.xlu0 %4913
        %v4915 = vsel %vm902, %v4876, -inf
        %4916 = vmax.xlane.f32.xlu0 %v4915
        %v4917 = vpop.xlane.xlu0 %4916
        %v4918 = vsel %vm902, %v4888, -inf
        %4919 = vmax.xlane.f32.xlu0 %v4918
        %v4920 = vpop.xlane.xlu0 %4919
        %v4921 = vsel %vm902, %v4890, -inf
        %4922 = vmax.xlane.f32.xlu0 %v4921
        %v4923 = vpop.xlane.xlu0 %4922
        %v4924 = vsel %vm902, %v4902, -inf
        %4925 = vmax.xlane.f32.xlu0 %v4924
        %v4926 = vpop.xlane.xlu0 %4925
        %v4927 = vsel %vm902, %v4904, -inf
        %4928 = vmax.xlane.f32.xlu0 %v4927
        %v4929 = vpop.xlane.xlu0 %4928
        %v4930 = vsub.f32 %v4860, %v4908
        %v4931 = vsub.f32 %v4862, %v4911
        %v4932 = vsub.f32 %v4874, %v4914
        %v4933 = vsub.f32 %v4876, %v4917
        %v4934 = vsub.f32 %v4888, %v4920
        %v4935 = vsub.f32 %v4890, %v4923
        %v4936 = vsub.f32 %v4902, %v4926
        %v4937 = vsub.f32 %v4904, %v4929
        %v4938 = vmul.f32 %v4930, 1.442695
        %v4939 = vpow.pop %v4938
        %v4940 = vmul.f32 %v4931, 1.442695
        %v4941 = vpow.pop %v4940
        %v4942 = vmul.f32 %v4932, 1.442695
        %v4943 = vpow.pop %v4942
        %v4944 = vmul.f32 %v4933, 1.442695
        %v4945 = vpow.pop %v4944
        %v4946 = vmul.f32 %v4934, 1.442695
        %v4947 = vpow.pop %v4946
        %v4948 = vmul.f32 %v4935, 1.442695
        %v4949 = vpow.pop %v4948
        %v4950 = vmul.f32 %v4936, 1.442695
        %v4951 = vpow.pop %v4950
        %v4952 = vmul.f32 %v4937, 1.442695
        %v4953 = vpow.pop %v4952
        %v4954 = vsel %vm902, %v4939, 0.0
        %4955 = vadd.xlane.f32.xlu0 %v4954
        %v4956 = vpop.xlane.xlu0 %4955
        %v4957 = vsel %vm902, %v4941, 0.0
        %4958 = vadd.xlane.f32.xlu0 %v4957
        %v4959 = vpop.xlane.xlu0 %4958
        %v4960 = vsel %vm902, %v4943, 0.0
        %4961 = vadd.xlane.f32.xlu0 %v4960
        %v4962 = vpop.xlane.xlu0 %4961
        %v4963 = vsel %vm902, %v4945, 0.0
        %4964 = vadd.xlane.f32.xlu0 %v4963
        %v4965 = vpop.xlane.xlu0 %4964
        %v4966 = vsel %vm902, %v4947, 0.0
        %4967 = vadd.xlane.f32.xlu0 %v4966
        %v4968 = vpop.xlane.xlu0 %4967
        %v4969 = vsel %vm902, %v4949, 0.0
        %4970 = vadd.xlane.f32.xlu0 %v4969
        %v4971 = vpop.xlane.xlu0 %4970
        %v4972 = vsel %vm902, %v4951, 0.0
        %4973 = vadd.xlane.f32.xlu0 %v4972
        %v4974 = vpop.xlane.xlu0 %4973
        %v4975 = vsel %vm902, %v4953, 0.0
        %4976 = vadd.xlane.f32.xlu0 %v4975
        %v4977 = vpop.xlane.xlu0 %4976
        %v4978 = vrcp.pop %v4956
        %v4979 = vrcp.pop %v4959
        %v4980 = vrcp.pop %v4962
        %v4981 = vrcp.pop %v4965
        %v4982 = vrcp.pop %v4968
        %v4983 = vrcp.pop %v4971
        %v4984 = vrcp.pop %v4974
        %v4985 = vrcp.pop %v4977
        %v4986 = vmul.f32 %v4939, %v4978
        %v4987 = vmul.f32 %v4941, %v4979
        %v4988 = vmul.f32 %v4943, %v4980
        %v4989 = vmul.f32 %v4945, %v4981
        %v4990 = vmul.f32 %v4947, %v4982
        %v4991 = vmul.f32 %v4949, %v4983
        %v4992 = vmul.f32 %v4951, %v4984
        %v4993 = vmul.f32 %v4953, %v4985
        %v4994 = vpack.c.bf16 %v4986, %v4986
        %v4995 = vpack.c.bf16 %v4987, %v4987
        %v4996 = vpack.c.bf16 %v4988, %v4988
        %v4997 = vpack.c.bf16 %v4989, %v4989
        %v4998 = vpack.c.bf16 %v4990, %v4990
        %v4999 = vpack.c.bf16 %v4991, %v4991
        %v5000 = vpack.c.bf16 %v4992, %v4992
        %v5001 = vpack.c.bf16 %v4993, %v4993
        %v5010 = vunpack.c.l.b16 %v4842
        %v5011 = vunpack.c.l.b16 %v4843
        %v5012 = vunpack.c.l.b16 %v4844
        %v5013 = vunpack.c.l.b16 %v4845
        %v5014 = vunpack.c.l.b16 %v4846
        %v5015 = vunpack.c.l.b16 %v4847
        %v5016 = vunpack.c.l.b16 %v4848
        %v5017 = vunpack.c.l.b16 %v4849
        %v5018 = vpack.c.b16 %v5011, %v5010
        %v5019 = vpack.c.b16 %v5013, %v5012
        %v5020 = vpack.c.b16 %v5015, %v5014
        %v5021 = vpack.c.b16 %v5017, %v5016
        %v5030 = vunpack.c.l.b16 %v4994
        %v5031 = vunpack.c.l.b16 %v4995
        %v5032 = vunpack.c.l.b16 %v4996
        %v5033 = vunpack.c.l.b16 %v4997
        %v5034 = vunpack.c.l.b16 %v4998
        %v5035 = vunpack.c.l.b16 %v4999
        %v5036 = vunpack.c.l.b16 %v5000
        %v5037 = vunpack.c.l.b16 %v5001
        %v5038 = vpack.c.b16 %v5031, %v5030
        %v5039 = vpack.c.b16 %v5033, %v5032
        %v5040 = vpack.c.b16 %v5035, %v5034
        %v5041 = vpack.c.b16 %v5037, %v5036
        %5042 = vrot.lane.b32.xlu0 %v5038, 16
        %v5043 = vpop.permute.xlu0 %5042
        %5044 = vrot.lane.b32.xlu0 %v5039, 16
        %v5045 = vpop.permute.xlu0 %5044
        %5046 = vrot.lane.b32.xlu0 %v5040, 16
        %v5047 = vpop.permute.xlu0 %5046
        %5048 = vrot.lane.b32.xlu0 %v5041, 16
        %v5049 = vpop.permute.xlu0 %5048
        %v5052 = vsel %vm902, %v5018, %v5043
        %v5055 = vsel %vm902, %v5019, %v5045
        %v5058 = vsel %vm902, %v5020, %v5047
        %v5061 = vsel %vm902, %v5021, %v5049
        %v5062 = vsel %vm1866, %v5052, 0
        %5064 = vmatpush.bf16.msra.mxu0 0
        %5065 = vmatpush.bf16.msra.mxu0 0
        %5066 = vmatpush.bf16.msra.mxu0 0
        %5067 = vmatpush.bf16.msra.mxu0 0
        %5068 = vmatpush.bf16.msra.mxu0 0
        %5069 = vmatpush.bf16.msra.mxu0 0
        %5070 = vmatpush.bf16.msra.mxu0 %v1341
        %5071 = vmatpush.bf16.msra.mxu0 %v1317
        %5072 = vmatmul.bf16.gmra.mxu0 %v5062
        %v5073 = vpop.f32.mrf.mxu0
        %v5074 = vadd.f32 0.0, %v5073
        %v5075 = vpop.f32.mrf.mxu0
        %v5076 = vadd.f32 0.0, %v5075
        %5077 = vdwg.mxu0
        %v5078 = vsel %vm1866, %v5055, 0
        %5080 = vmatpush.bf16.msra.mxu0 0
        %5081 = vmatpush.bf16.msra.mxu0 0
        %5082 = vmatpush.bf16.msra.mxu0 0
        %5083 = vmatpush.bf16.msra.mxu0 0
        %5084 = vmatpush.bf16.msra.mxu0 0
        %5085 = vmatpush.bf16.msra.mxu0 0
        %5086 = vmatpush.bf16.msra.mxu0 %v1342
        %5087 = vmatpush.bf16.msra.mxu0 %v1318
        %5088 = vmatmul.bf16.gmra.mxu0 %v5078
        %v5089 = vpop.f32.mrf.mxu0
        %v5090 = vadd.f32 0.0, %v5089
        %v5091 = vpop.f32.mrf.mxu0
        %v5092 = vadd.f32 0.0, %v5091
        %5093 = vdwg.mxu0
        %v5094 = vsel %vm1866, %v5058, 0
        %5096 = vmatpush.bf16.msra.mxu0 0
        %5097 = vmatpush.bf16.msra.mxu0 0
        %5098 = vmatpush.bf16.msra.mxu0 0
        %5099 = vmatpush.bf16.msra.mxu0 0
        %5100 = vmatpush.bf16.msra.mxu0 0
        %5101 = vmatpush.bf16.msra.mxu0 0
        %5102 = vmatpush.bf16.msra.mxu0 %v1343
        %5103 = vmatpush.bf16.msra.mxu0 %v1319
        %5104 = vmatmul.bf16.gmra.mxu0 %v5094
        %v5105 = vpop.f32.mrf.mxu0
        %v5106 = vadd.f32 0.0, %v5105
        %v5107 = vpop.f32.mrf.mxu0
        %v5108 = vadd.f32 0.0, %v5107
        %5109 = vdwg.mxu0
        %v5110 = vsel %vm1866, %v5061, 0
        %5112 = vmatpush.bf16.msra.mxu0 0
        %5113 = vmatpush.bf16.msra.mxu0 0
        %5114 = vmatpush.bf16.msra.mxu0 0
        %5115 = vmatpush.bf16.msra.mxu0 0
        %5116 = vmatpush.bf16.msra.mxu0 0
        %5117 = vmatpush.bf16.msra.mxu0 0
        %5118 = vmatpush.bf16.msra.mxu0 %v1344
        %5119 = vmatpush.bf16.msra.mxu0 %v1320
        %5120 = vmatmul.bf16.gmra.mxu0 %v5110
        %v5121 = vpop.f32.mrf.mxu0
        %v5122 = vadd.f32 0.0, %v5121
        %v5123 = vpop.f32.mrf.mxu0
        %v5124 = vadd.f32 0.0, %v5123
        %5125 = vdwg.mxu0
        %v5126 = vadd.f32 %v3876, %v5074
        %v5127 = vadd.f32 %v3878, %v5076
        %v5128 = vadd.f32 %v3881, %v5090
        %v5129 = vadd.f32 %v3883, %v5092
        %v5130 = vadd.f32 %v3886, %v5106
        %v5131 = vadd.f32 %v3888, %v5108
        %v5132 = vadd.f32 %v3891, %v5122
        %v5133 = vadd.f32 %v3893, %v5124
        %v5134 = vld [vmem:[%s8] sm:$0x1]
        %v5135 = vld [vmem:[%s9] sm:$0x1]
        %v5136 = vsel %vm902, %v5126, 0.0
        %5137 = vadd.xlane.f32.xlu0 %v5136
        %v5138 = vpop.xlane.xlu0 %5137
        %v5139 = vsel %vm902, %v5127, 0.0
        %5140 = vadd.xlane.f32.xlu0 %v5139
        %v5141 = vpop.xlane.xlu0 %5140
        %v5142 = vsel %vm902, %v5128, 0.0
        %5143 = vadd.xlane.f32.xlu0 %v5142
        %v5144 = vpop.xlane.xlu0 %5143
        %v5145 = vsel %vm902, %v5129, 0.0
        %5146 = vadd.xlane.f32.xlu0 %v5145
        %v5147 = vpop.xlane.xlu0 %5146
        %v5148 = vsel %vm902, %v5130, 0.0
        %5149 = vadd.xlane.f32.xlu0 %v5148
        %v5150 = vpop.xlane.xlu0 %5149
        %v5151 = vsel %vm902, %v5131, 0.0
        %5152 = vadd.xlane.f32.xlu0 %v5151
        %v5153 = vpop.xlane.xlu0 %5152
        %v5154 = vsel %vm902, %v5132, 0.0
        %5155 = vadd.xlane.f32.xlu0 %v5154
        %v5156 = vpop.xlane.xlu0 %5155
        %v5157 = vsel %vm902, %v5133, 0.0
        %5158 = vadd.xlane.f32.xlu0 %v5157
        %v5159 = vpop.xlane.xlu0 %5158
        %v5160 = vmul.f32 %v5138, %v1971
        %v5161 = vmul.f32 %v5141, %v1971
        %v5162 = vmul.f32 %v5144, %v1971
        %v5163 = vmul.f32 %v5147, %v1971
        %v5164 = vmul.f32 %v5150, %v1971
        %v5165 = vmul.f32 %v5153, %v1971
        %v5166 = vmul.f32 %v5156, %v1971
        %v5167 = vmul.f32 %v5159, %v1971
        %v5168 = vsub.f32 %v5126, %v5160
        %v5169 = vsub.f32 %v5127, %v5161
        %v5170 = vsub.f32 %v5128, %v5162
        %v5171 = vsub.f32 %v5129, %v5163
        %v5172 = vsub.f32 %v5130, %v5164
        %v5173 = vsub.f32 %v5131, %v5165
        %v5174 = vsub.f32 %v5132, %v5166
        %v5175 = vsub.f32 %v5133, %v5167
        %v5176 = vmul.f32 %v5168, %v5168
        %v5177 = vmul.f32 %v5169, %v5169
        %v5178 = vmul.f32 %v5170, %v5170
        %v5179 = vmul.f32 %v5171, %v5171
        %v5180 = vmul.f32 %v5172, %v5172
        %v5181 = vmul.f32 %v5173, %v5173
        %v5182 = vmul.f32 %v5174, %v5174
        %v5183 = vmul.f32 %v5175, %v5175
        %v5184 = vsel %vm902, %v5176, 0.0
        %5185 = vadd.xlane.f32.xlu0 %v5184
        %v5186 = vpop.xlane.xlu0 %5185
        %v5187 = vsel %vm902, %v5177, 0.0
        %5188 = vadd.xlane.f32.xlu0 %v5187
        %v5189 = vpop.xlane.xlu0 %5188
        %v5190 = vsel %vm902, %v5178, 0.0
        %5191 = vadd.xlane.f32.xlu0 %v5190
        %v5192 = vpop.xlane.xlu0 %5191
        %v5193 = vsel %vm902, %v5179, 0.0
        %5194 = vadd.xlane.f32.xlu0 %v5193
        %v5195 = vpop.xlane.xlu0 %5194
        %v5196 = vsel %vm902, %v5180, 0.0
        %5197 = vadd.xlane.f32.xlu0 %v5196
        %v5198 = vpop.xlane.xlu0 %5197
        %v5199 = vsel %vm902, %v5181, 0.0
        %5200 = vadd.xlane.f32.xlu0 %v5199
        %v5201 = vpop.xlane.xlu0 %5200
        %v5202 = vsel %vm902, %v5182, 0.0
        %5203 = vadd.xlane.f32.xlu0 %v5202
        %v5204 = vpop.xlane.xlu0 %5203
        %v5205 = vsel %vm902, %v5183, 0.0
        %5206 = vadd.xlane.f32.xlu0 %v5205
        %v5207 = vpop.xlane.xlu0 %5206
        %v5208 = vmul.f32 %v5186, %v1971
        %v5209 = vmul.f32 %v5189, %v1971
        %v5210 = vmul.f32 %v5192, %v1971
        %v5211 = vmul.f32 %v5195, %v1971
        %v5212 = vmul.f32 %v5198, %v1971
        %v5213 = vmul.f32 %v5201, %v1971
        %v5214 = vmul.f32 %v5204, %v1971
        %v5215 = vmul.f32 %v5207, %v1971
        %v5216 = vadd.f32 %v5208, 1e-05
        %v5217 = vadd.f32 %v5209, 1e-05
        %v5218 = vadd.f32 %v5210, 1e-05
        %v5219 = vadd.f32 %v5211, 1e-05
        %v5220 = vadd.f32 %v5212, 1e-05
        %v5221 = vadd.f32 %v5213, 1e-05
        %v5222 = vadd.f32 %v5214, 1e-05
        %v5223 = vadd.f32 %v5215, 1e-05
        %v5224 = vrsqrt.pop %v5216
        %v5225 = vmul.f32 %v5224, %v5216
        %v5226 = vmul.f32 %v5225, %v5224
        %v5227 = vmul.f32 0.5, %v5226
        %v5228 = vsub.f32 1.5, %v5227
        %v5229 = vmul.f32 %v5224, %v5228
        %vm5230 = vweird.f32 %v5216
        %vm5231 = vweird.f32 %v5224
        %vm5232 = vmor %vm5230, %vm5231
        %v5233 = vsel %vm5232, %v5224, %v5229
        %v5234 = vrsqrt.pop %v5217
        %v5235 = vmul.f32 %v5234, %v5217
        %v5236 = vmul.f32 %v5235, %v5234
        %v5237 = vmul.f32 0.5, %v5236
        %v5238 = vsub.f32 1.5, %v5237
        %v5239 = vmul.f32 %v5234, %v5238
        %vm5240 = vweird.f32 %v5217
        %vm5241 = vweird.f32 %v5234
        %vm5242 = vmor %vm5240, %vm5241
        %v5243 = vsel %vm5242, %v5234, %v5239
        %v5244 = vrsqrt.pop %v5218
        %v5245 = vmul.f32 %v5244, %v5218
        %v5246 = vmul.f32 %v5245, %v5244
        %v5247 = vmul.f32 0.5, %v5246
        %v5248 = vsub.f32 1.5, %v5247
        %v5249 = vmul.f32 %v5244, %v5248
        %vm5250 = vweird.f32 %v5218
        %vm5251 = vweird.f32 %v5244
        %vm5252 = vmor %vm5250, %vm5251
        %v5253 = vsel %vm5252, %v5244, %v5249
        %v5254 = vrsqrt.pop %v5219
        %v5255 = vmul.f32 %v5254, %v5219
        %v5256 = vmul.f32 %v5255, %v5254
        %v5257 = vmul.f32 0.5, %v5256
        %v5258 = vsub.f32 1.5, %v5257
        %v5259 = vmul.f32 %v5254, %v5258
        %vm5260 = vweird.f32 %v5219
        %vm5261 = vweird.f32 %v5254
        %vm5262 = vmor %vm5260, %vm5261
        %v5263 = vsel %vm5262, %v5254, %v5259
        %v5264 = vrsqrt.pop %v5220
        %v5265 = vmul.f32 %v5264, %v5220
        %v5266 = vmul.f32 %v5265, %v5264
        %v5267 = vmul.f32 0.5, %v5266
        %v5268 = vsub.f32 1.5, %v5267
        %v5269 = vmul.f32 %v5264, %v5268
        %vm5270 = vweird.f32 %v5220
        %vm5271 = vweird.f32 %v5264
        %vm5272 = vmor %vm5270, %vm5271
        %v5273 = vsel %vm5272, %v5264, %v5269
        %v5274 = vrsqrt.pop %v5221
        %v5275 = vmul.f32 %v5274, %v5221
        %v5276 = vmul.f32 %v5275, %v5274
        %v5277 = vmul.f32 0.5, %v5276
        %v5278 = vsub.f32 1.5, %v5277
        %v5279 = vmul.f32 %v5274, %v5278
        %vm5280 = vweird.f32 %v5221
        %vm5281 = vweird.f32 %v5274
        %vm5282 = vmor %vm5280, %vm5281
        %v5283 = vsel %vm5282, %v5274, %v5279
        %v5284 = vrsqrt.pop %v5222
        %v5285 = vmul.f32 %v5284, %v5222
        %v5286 = vmul.f32 %v5285, %v5284
        %v5287 = vmul.f32 0.5, %v5286
        %v5288 = vsub.f32 1.5, %v5287
        %v5289 = vmul.f32 %v5284, %v5288
        %vm5290 = vweird.f32 %v5222
        %vm5291 = vweird.f32 %v5284
        %vm5292 = vmor %vm5290, %vm5291
        %v5293 = vsel %vm5292, %v5284, %v5289
        %v5294 = vrsqrt.pop %v5223
        %v5295 = vmul.f32 %v5294, %v5223
        %v5296 = vmul.f32 %v5295, %v5294
        %v5297 = vmul.f32 0.5, %v5296
        %v5298 = vsub.f32 1.5, %v5297
        %v5299 = vmul.f32 %v5294, %v5298
        %vm5300 = vweird.f32 %v5223
        %vm5301 = vweird.f32 %v5294
        %vm5302 = vmor %vm5300, %vm5301
        %v5303 = vsel %vm5302, %v5294, %v5299
        %v5304 = vmul.f32 %v5168, %v5233
        %v5305 = vmul.f32 %v5169, %v5243
        %v5306 = vmul.f32 %v5170, %v5253
        %v5307 = vmul.f32 %v5171, %v5263
        %v5308 = vmul.f32 %v5172, %v5273
        %v5309 = vmul.f32 %v5173, %v5283
        %v5310 = vmul.f32 %v5174, %v5293
        %v5311 = vmul.f32 %v5175, %v5303
        %v5313 = vperm.slane %v5134, 0
        %v5315 = vmul.f32 %v5304, %v5313
        %v5316 = vmul.f32 %v5305, %v5313
        %v5317 = vmul.f32 %v5306, %v5313
        %v5318 = vmul.f32 %v5307, %v5313
        %v5319 = vmul.f32 %v5308, %v5313
        %v5320 = vmul.f32 %v5309, %v5313
        %v5321 = vmul.f32 %v5310, %v5313
        %v5322 = vmul.f32 %v5311, %v5313
        %v5324 = vperm.slane %v5135, 0
        %v5326 = vadd.f32 %v5315, %v5324
        %v5327 = vadd.f32 %v5316, %v5324
        %v5328 = vadd.f32 %v5317, %v5324
        %v5329 = vadd.f32 %v5318, %v5324
        %v5330 = vadd.f32 %v5319, %v5324
        %v5331 = vadd.f32 %v5320, %v5324
        %v5332 = vadd.f32 %v5321, %v5324
        %v5333 = vadd.f32 %v5322, %v5324
        %v5334 = vpack.c.bf16 %v5327, %v5326
        %v5335 = vpack.c.bf16 %v5329, %v5328
        %v5336 = vpack.c.bf16 %v5331, %v5330
        %v5337 = vpack.c.bf16 %v5333, %v5332
        %v5338 = vld [vmem:[%s10] sm:$0xf]
        %v5339 = vld [vmem:[%s10 + $0x4] sm:$0xf]
        %v5340 = vld [vmem:[%s11] sm:$0x1]
        %v5342 = vperm.slane %v5340, 0
        %v5346 = vunpack.c.l.b16 %v5338
        %v5347 = vunpack.c.l.b16 %v5339
        %v5348 = vpack.c.b16 %v5347, %v5346
        %v5351 = vsel %vm902, %v5334, 0
        %v5354 = vsel %vm902, %v5335, 0
        %v5357 = vsel %vm902, %v5336, 0
        %v5360 = vsel %vm902, %v5337, 0
        %5362 = vmatpush.bf16.msra.mxu0 0
        %5363 = vmatpush.bf16.msra.mxu0 0
        %5364 = vmatpush.bf16.msra.mxu0 0
        %5365 = vmatpush.bf16.msra.mxu0 0
        %5366 = vmatpush.bf16.msra.mxu0 0
        %5367 = vmatpush.bf16.msra.mxu0 0
        %5368 = vmatpush.bf16.msra.mxu0 0
        %5369 = vmatpush.bf16.msra.mxu0 %v5348
        %5370 = vmatmul.bf16.gmra.mxu0 %v5351
        %v5371 = vpop.f32.mrf.mxu0
        %v5372 = vadd.f32 %v5342, %v5371
        %v5373 = vpop.f32.mrf.mxu0
        %v5374 = vadd.f32 %v5342, %v5373
        %5375 = vmatmul.bf16.gmra.mxu0 %v5354
        %v5376 = vpop.f32.mrf.mxu0
        %v5377 = vadd.f32 %v5342, %v5376
        %v5378 = vpop.f32.mrf.mxu0
        %v5379 = vadd.f32 %v5342, %v5378
        %5380 = vmatmul.bf16.gmra.mxu0 %v5357
        %v5381 = vpop.f32.mrf.mxu0
        %v5382 = vadd.f32 %v5342, %v5381
        %v5383 = vpop.f32.mrf.mxu0
        %v5384 = vadd.f32 %v5342, %v5383
        %5385 = vmatmul.bf16.gmra.mxu0 %v5360
        %v5386 = vpop.f32.mrf.mxu0
        %v5387 = vadd.f32 %v5342, %v5386
        %v5388 = vpop.f32.mrf.mxu0
        %v5389 = vadd.f32 %v5342, %v5388
        %5390 = vdwg.mxu0
        %v5391 = vmul.f32 %v5372, 0.5
        %v5392 = vmul.f32 %v5374, 0.5
        %v5393 = vmul.f32 %v5377, 0.5
        %v5394 = vmul.f32 %v5379, 0.5
        %v5395 = vmul.f32 %v5382, 0.5
        %v5396 = vmul.f32 %v5384, 0.5
        %v5397 = vmul.f32 %v5387, 0.5
        %v5398 = vmul.f32 %v5389, 0.5
        %v5399 = vmul.f32 %v5372, 0.044715
        %v5400 = vmul.f32 %v5374, 0.044715
        %v5401 = vmul.f32 %v5377, 0.044715
        %v5402 = vmul.f32 %v5379, 0.044715
        %v5403 = vmul.f32 %v5382, 0.044715
        %v5404 = vmul.f32 %v5384, 0.044715
        %v5405 = vmul.f32 %v5387, 0.044715
        %v5406 = vmul.f32 %v5389, 0.044715
        %v5407 = vmul.f32 %v5399, %v5372
        %v5408 = vmul.f32 %v5400, %v5374
        %v5409 = vmul.f32 %v5401, %v5377
        %v5410 = vmul.f32 %v5402, %v5379
        %v5411 = vmul.f32 %v5403, %v5382
        %v5412 = vmul.f32 %v5404, %v5384
        %v5413 = vmul.f32 %v5405, %v5387
        %v5414 = vmul.f32 %v5406, %v5389
        %v5415 = vmul.f32 %v5407, %v5372
        %v5416 = vmul.f32 %v5408, %v5374
        %v5417 = vmul.f32 %v5409, %v5377
        %v5418 = vmul.f32 %v5410, %v5379
        %v5419 = vmul.f32 %v5411, %v5382
        %v5420 = vmul.f32 %v5412, %v5384
        %v5421 = vmul.f32 %v5413, %v5387
        %v5422 = vmul.f32 %v5414, %v5389
        %v5423 = vadd.f32 %v5372, %v5415
        %v5424 = vadd.f32 %v5374, %v5416
        %v5425 = vadd.f32 %v5377, %v5417
        %v5426 = vadd.f32 %v5379, %v5418
        %v5427 = vadd.f32 %v5382, %v5419
        %v5428 = vadd.f32 %v5384, %v5420
        %v5429 = vadd.f32 %v5387, %v5421
        %v5430 = vadd.f32 %v5389, %v5422
        %v5431 = vmul.f32 %v5423, 0.7978846
        %v5432 = vmul.f32 %v5424, 0.7978846
        %v5433 = vmul.f32 %v5425, 0.7978846
        %v5434 = vmul.f32 %v5426, 0.7978846
        %v5435 = vmul.f32 %v5427, 0.7978846
        %v5436 = vmul.f32 %v5428, 0.7978846
        %v5437 = vmul.f32 %v5429, 0.7978846
        %v5438 = vmul.f32 %v5430, 0.7978846
        %v5439 = vtanh.pop %v5431
        %v5440 = vtanh.pop %v5432
        %v5441 = vtanh.pop %v5433
        %v5442 = vtanh.pop %v5434
        %v5443 = vtanh.pop %v5435
        %v5444 = vtanh.pop %v5436
        %v5445 = vtanh.pop %v5437
        %v5446 = vtanh.pop %v5438
        %v5447 = vadd.f32 %v5439, 1.0
        %v5448 = vadd.f32 %v5440, 1.0
        %v5449 = vadd.f32 %v5441, 1.0
        %v5450 = vadd.f32 %v5442, 1.0
        %v5451 = vadd.f32 %v5443, 1.0
        %v5452 = vadd.f32 %v5444, 1.0
        %v5453 = vadd.f32 %v5445, 1.0
        %v5454 = vadd.f32 %v5446, 1.0
        %v5455 = vmul.f32 %v5391, %v5447
        %v5456 = vmul.f32 %v5392, %v5448
        %v5457 = vmul.f32 %v5393, %v5449
        %v5458 = vmul.f32 %v5394, %v5450
        %v5459 = vmul.f32 %v5395, %v5451
        %v5460 = vmul.f32 %v5396, %v5452
        %v5461 = vmul.f32 %v5397, %v5453
        %v5462 = vmul.f32 %v5398, %v5454
        %v5463 = vpack.c.bf16 %v5456, %v5455
        %v5464 = vpack.c.bf16 %v5458, %v5457
        %v5465 = vpack.c.bf16 %v5460, %v5459
        %v5466 = vpack.c.bf16 %v5462, %v5461
        %v5467 = vld [vmem:[%s12] sm:$0xf]
        %v5468 = vld [vmem:[%s12 + $0x4] sm:$0xf]
        %v5471 = vunpack.c.l.b16 %v5467
        %v5472 = vunpack.c.l.b16 %v5468
        %v5473 = vpack.c.b16 %v5472, %v5471
        %v5476 = vsel %vm902, %v5463, 0
        %v5479 = vsel %vm902, %v5464, 0
        %v5482 = vsel %vm902, %v5465, 0
        %v5485 = vsel %vm902, %v5466, 0
        %5487 = vmatpush.bf16.msra.mxu0 0
        %5488 = vmatpush.bf16.msra.mxu0 0
        %5489 = vmatpush.bf16.msra.mxu0 0
        %5490 = vmatpush.bf16.msra.mxu0 0
        %5491 = vmatpush.bf16.msra.mxu0 0
        %5492 = vmatpush.bf16.msra.mxu0 0
        %5493 = vmatpush.bf16.msra.mxu0 0
        %5494 = vmatpush.bf16.msra.mxu0 %v5473
        %5495 = vmatmul.bf16.gmra.mxu0 %v5476
        %v5496 = vpop.f32.mrf.mxu0
        %v5497 = vadd.f32 0.0, %v5496
        %v5498 = vpop.f32.mrf.mxu0
        %v5499 = vadd.f32 0.0, %v5498
        %5500 = vmatmul.bf16.gmra.mxu0 %v5479
        %v5501 = vpop.f32.mrf.mxu0
        %v5502 = vadd.f32 0.0, %v5501
        %v5503 = vpop.f32.mrf.mxu0
        %v5504 = vadd.f32 0.0, %v5503
        %5505 = vmatmul.bf16.gmra.mxu0 %v5482
        %v5506 = vpop.f32.mrf.mxu0
        %v5507 = vadd.f32 0.0, %v5506
        %v5508 = vpop.f32.mrf.mxu0
        %v5509 = vadd.f32 0.0, %v5508
        %5510 = vmatmul.bf16.gmra.mxu0 %v5485
        %v5511 = vpop.f32.mrf.mxu0
        %v5512 = vadd.f32 0.0, %v5511
        %v5513 = vpop.f32.mrf.mxu0
        %v5514 = vadd.f32 0.0, %v5513
        %5515 = vdwg.mxu0
        %v5518 = vunpack.c.l.b16 %v4696
        %v5519 = vunpack.c.l.b16 %v4697
        %v5520 = vpack.c.b16 %v5519, %v5518
        %v5523 = vsel %vm902, %v4692, 0
        %v5526 = vsel %vm902, %v4693, 0
        %v5529 = vsel %vm902, %v4694, 0
        %v5532 = vsel %vm902, %v4695, 0
        %5534 = vmatpush.bf16.msra.mxu0 0
        %5535 = vmatpush.bf16.msra.mxu0 0
        %5536 = vmatpush.bf16.msra.mxu0 0
        %5537 = vmatpush.bf16.msra.mxu0 0
        %5538 = vmatpush.bf16.msra.mxu0 0
        %5539 = vmatpush.bf16.msra.mxu0 0
        %5540 = vmatpush.bf16.msra.mxu0 0
        %5541 = vmatpush.bf16.msra.mxu0 %v5520
        %5542 = vmatmul.bf16.gmra.mxu0 %v5523
        %v5543 = vpop.f32.mrf.mxu0
        %v5544 = vadd.f32 %v5497, %v5543
        %v5545 = vpop.f32.mrf.mxu0
        %v5546 = vadd.f32 %v5499, %v5545
        %5547 = vmatmul.bf16.gmra.mxu0 %v5526
        %v5548 = vpop.f32.mrf.mxu0
        %v5549 = vadd.f32 %v5502, %v5548
        %v5550 = vpop.f32.mrf.mxu0
        %v5551 = vadd.f32 %v5504, %v5550
        %5552 = vmatmul.bf16.gmra.mxu0 %v5529
        %v5553 = vpop.f32.mrf.mxu0
        %v5554 = vadd.f32 %v5507, %v5553
        %v5555 = vpop.f32.mrf.mxu0
        %v5556 = vadd.f32 %v5509, %v5555
        %5557 = vmatmul.bf16.gmra.mxu0 %v5532
        %v5558 = vpop.f32.mrf.mxu0
        %v5559 = vadd.f32 %v5512, %v5558
        %v5560 = vpop.f32.mrf.mxu0
        %v5561 = vadd.f32 %v5514, %v5560
        %5562 = vdwg.mxu0
        %v5563 = vmul.f32 %v5544, 0.5
        %v5564 = vmul.f32 %v5546, 0.5
        %v5565 = vmul.f32 %v5549, 0.5
        %v5566 = vmul.f32 %v5551, 0.5
        %v5567 = vmul.f32 %v5554, 0.5
        %v5568 = vmul.f32 %v5556, 0.5
        %v5569 = vmul.f32 %v5559, 0.5
        %v5570 = vmul.f32 %v5561, 0.5
        %v5571 = vadd.f32 %v848, %v5563
        %v5572 = vadd.f32 %v849, %v5564
        %v5573 = vadd.f32 %v852, %v5565
        %v5574 = vadd.f32 %v853, %v5566
        %v5575 = vadd.f32 %v856, %v5567
        %v5576 = vadd.f32 %v857, %v5568
        %v5577 = vadd.f32 %v860, %v5569
        %v5578 = vadd.f32 %v861, %v5570
        %v5579 = vld [vmem:[%s13] sm:$0x1]
        %v5581 = vperm.slane %v5579, 0
        %v5583 = vadd.f32 %v5571, %v5581
        %v5584 = vadd.f32 %v5572, %v5581
        %v5585 = vadd.f32 %v5573, %v5581
        %v5586 = vadd.f32 %v5574, %v5581
        %v5587 = vadd.f32 %v5575, %v5581
        %v5588 = vadd.f32 %v5576, %v5581
        %v5589 = vadd.f32 %v5577, %v5581
        %v5590 = vadd.f32 %v5578, %v5581
        %v5591 = vsel %vm902, %v848, 0.0
        %5592 = vadd.xlane.f32.xlu0 %v5591
        %v5593 = vpop.xlane.xlu0 %5592
        %v5594 = vsel %vm902, %v849, 0.0
        %5595 = vadd.xlane.f32.xlu0 %v5594
        %v5596 = vpop.xlane.xlu0 %5595
        %v5597 = vsel %vm902, %v852, 0.0
        %5598 = vadd.xlane.f32.xlu0 %v5597
        %v5599 = vpop.xlane.xlu0 %5598
        %v5600 = vsel %vm902, %v853, 0.0
        %5601 = vadd.xlane.f32.xlu0 %v5600
        %v5602 = vpop.xlane.xlu0 %5601
        %v5603 = vsel %vm902, %v856, 0.0
        %5604 = vadd.xlane.f32.xlu0 %v5603
        %v5605 = vpop.xlane.xlu0 %5604
        %v5606 = vsel %vm902, %v857, 0.0
        %5607 = vadd.xlane.f32.xlu0 %v5606
        %v5608 = vpop.xlane.xlu0 %5607
        %v5609 = vsel %vm902, %v860, 0.0
        %5610 = vadd.xlane.f32.xlu0 %v5609
        %v5611 = vpop.xlane.xlu0 %5610
        %v5612 = vsel %vm902, %v861, 0.0
        %5613 = vadd.xlane.f32.xlu0 %v5612
        %v5614 = vpop.xlane.xlu0 %5613
        %v5615 = vsel %vm902, %v5583, 0.0
        %5616 = vadd.xlane.f32.xlu0 %v5615
        %v5617 = vpop.xlane.xlu0 %5616
        %v5618 = vsel %vm902, %v5584, 0.0
        %5619 = vadd.xlane.f32.xlu0 %v5618
        %v5620 = vpop.xlane.xlu0 %5619
        %v5621 = vsel %vm902, %v5585, 0.0
        %5622 = vadd.xlane.f32.xlu0 %v5621
        %v5623 = vpop.xlane.xlu0 %5622
        %v5624 = vsel %vm902, %v5586, 0.0
        %5625 = vadd.xlane.f32.xlu0 %v5624
        %v5626 = vpop.xlane.xlu0 %5625
        %v5627 = vsel %vm902, %v5587, 0.0
        %5628 = vadd.xlane.f32.xlu0 %v5627
        %v5629 = vpop.xlane.xlu0 %5628
        %v5630 = vsel %vm902, %v5588, 0.0
        %5631 = vadd.xlane.f32.xlu0 %v5630
        %v5632 = vpop.xlane.xlu0 %5631
        %v5633 = vsel %vm902, %v5589, 0.0
        %5634 = vadd.xlane.f32.xlu0 %v5633
        %v5635 = vpop.xlane.xlu0 %5634
        %v5636 = vsel %vm902, %v5590, 0.0
        %5637 = vadd.xlane.f32.xlu0 %v5636
        %v5638 = vpop.xlane.xlu0 %5637
        %v5639 = vadd.f32 %v5593, %v5617
        %v5640 = vadd.f32 %v5596, %v5620
        %v5641 = vadd.f32 %v5599, %v5623
        %v5642 = vadd.f32 %v5602, %v5626
        %v5643 = vadd.f32 %v5605, %v5629
        %v5644 = vadd.f32 %v5608, %v5632
        %v5645 = vadd.f32 %v5611, %v5635
        %v5646 = vadd.f32 %v5614, %v5638
        %v5647 = vmul.f32 %v5639, %v3276
        %v5648 = vmul.f32 %v5640, %v3276
        %v5649 = vmul.f32 %v5641, %v3276
        %v5650 = vmul.f32 %v5642, %v3276
        %v5651 = vmul.f32 %v5643, %v3276
        %v5652 = vmul.f32 %v5644, %v3276
        %v5653 = vmul.f32 %v5645, %v3276
        %v5654 = vmul.f32 %v5646, %v3276
        %v5655 = vsub.f32 %v848, %v5647
        %v5656 = vsub.f32 %v849, %v5648
        %v5657 = vsub.f32 %v852, %v5649
        %v5658 = vsub.f32 %v853, %v5650
        %v5659 = vsub.f32 %v856, %v5651
        %v5660 = vsub.f32 %v857, %v5652
        %v5661 = vsub.f32 %v860, %v5653
        %v5662 = vsub.f32 %v861, %v5654
        %v5663 = vmul.f32 %v5655, %v5655
        %v5664 = vmul.f32 %v5656, %v5656
        %v5665 = vmul.f32 %v5657, %v5657
        %v5666 = vmul.f32 %v5658, %v5658
        %v5667 = vmul.f32 %v5659, %v5659
        %v5668 = vmul.f32 %v5660, %v5660
        %v5669 = vmul.f32 %v5661, %v5661
        %v5670 = vmul.f32 %v5662, %v5662
        %v5671 = vsel %vm902, %v5663, 0.0
        %5672 = vadd.xlane.f32.xlu0 %v5671
        %v5673 = vpop.xlane.xlu0 %5672
        %v5674 = vsel %vm902, %v5664, 0.0
        %5675 = vadd.xlane.f32.xlu0 %v5674
        %v5676 = vpop.xlane.xlu0 %5675
        %v5677 = vsel %vm902, %v5665, 0.0
        %5678 = vadd.xlane.f32.xlu0 %v5677
        %v5679 = vpop.xlane.xlu0 %5678
        %v5680 = vsel %vm902, %v5666, 0.0
        %5681 = vadd.xlane.f32.xlu0 %v5680
        %v5682 = vpop.xlane.xlu0 %5681
        %v5683 = vsel %vm902, %v5667, 0.0
        %5684 = vadd.xlane.f32.xlu0 %v5683
        %v5685 = vpop.xlane.xlu0 %5684
        %v5686 = vsel %vm902, %v5668, 0.0
        %5687 = vadd.xlane.f32.xlu0 %v5686
        %v5688 = vpop.xlane.xlu0 %5687
        %v5689 = vsel %vm902, %v5669, 0.0
        %5690 = vadd.xlane.f32.xlu0 %v5689
        %v5691 = vpop.xlane.xlu0 %5690
        %v5692 = vsel %vm902, %v5670, 0.0
        %5693 = vadd.xlane.f32.xlu0 %v5692
        %v5694 = vpop.xlane.xlu0 %5693
        %v5695 = vsub.f32 %v5583, %v5647
        %v5696 = vsub.f32 %v5584, %v5648
        %v5697 = vsub.f32 %v5585, %v5649
        %v5698 = vsub.f32 %v5586, %v5650
        %v5699 = vsub.f32 %v5587, %v5651
        %v5700 = vsub.f32 %v5588, %v5652
        %v5701 = vsub.f32 %v5589, %v5653
        %v5702 = vsub.f32 %v5590, %v5654
        %v5703 = vmul.f32 %v5695, %v5695
        %v5704 = vmul.f32 %v5696, %v5696
        %v5705 = vmul.f32 %v5697, %v5697
        %v5706 = vmul.f32 %v5698, %v5698
        %v5707 = vmul.f32 %v5699, %v5699
        %v5708 = vmul.f32 %v5700, %v5700
        %v5709 = vmul.f32 %v5701, %v5701
        %v5710 = vmul.f32 %v5702, %v5702
        %v5711 = vsel %vm902, %v5703, 0.0
        %5712 = vadd.xlane.f32.xlu0 %v5711
        %v5713 = vpop.xlane.xlu0 %5712
        %v5714 = vsel %vm902, %v5704, 0.0
        %5715 = vadd.xlane.f32.xlu0 %v5714
        %v5716 = vpop.xlane.xlu0 %5715
        %v5717 = vsel %vm902, %v5705, 0.0
        %5718 = vadd.xlane.f32.xlu0 %v5717
        %v5719 = vpop.xlane.xlu0 %5718
        %v5720 = vsel %vm902, %v5706, 0.0
        %5721 = vadd.xlane.f32.xlu0 %v5720
        %v5722 = vpop.xlane.xlu0 %5721
        %v5723 = vsel %vm902, %v5707, 0.0
        %5724 = vadd.xlane.f32.xlu0 %v5723
        %v5725 = vpop.xlane.xlu0 %5724
        %v5726 = vsel %vm902, %v5708, 0.0
        %5727 = vadd.xlane.f32.xlu0 %v5726
        %v5728 = vpop.xlane.xlu0 %5727
        %v5729 = vsel %vm902, %v5709, 0.0
        %5730 = vadd.xlane.f32.xlu0 %v5729
        %v5731 = vpop.xlane.xlu0 %5730
        %v5732 = vsel %vm902, %v5710, 0.0
        %5733 = vadd.xlane.f32.xlu0 %v5732
        %v5734 = vpop.xlane.xlu0 %5733
        %v5735 = vadd.f32 %v5673, %v5713
        %v5736 = vadd.f32 %v5676, %v5716
        %v5737 = vadd.f32 %v5679, %v5719
        %v5738 = vadd.f32 %v5682, %v5722
        %v5739 = vadd.f32 %v5685, %v5725
        %v5740 = vadd.f32 %v5688, %v5728
        %v5741 = vadd.f32 %v5691, %v5731
        %v5742 = vadd.f32 %v5694, %v5734
        %v5743 = vmul.f32 %v5735, %v3276
        %v5744 = vmul.f32 %v5736, %v3276
        %v5745 = vmul.f32 %v5737, %v3276
        %v5746 = vmul.f32 %v5738, %v3276
        %v5747 = vmul.f32 %v5739, %v3276
        %v5748 = vmul.f32 %v5740, %v3276
        %v5749 = vmul.f32 %v5741, %v3276
        %v5750 = vmul.f32 %v5742, %v3276
        %v5751 = vadd.f32 %v5743, 1e-05
        %v5752 = vadd.f32 %v5744, 1e-05
        %v5753 = vadd.f32 %v5745, 1e-05
        %v5754 = vadd.f32 %v5746, 1e-05
        %v5755 = vadd.f32 %v5747, 1e-05
        %v5756 = vadd.f32 %v5748, 1e-05
        %v5757 = vadd.f32 %v5749, 1e-05
        %v5758 = vadd.f32 %v5750, 1e-05
        %v5759 = vrsqrt.pop %v5751
        %v5760 = vmul.f32 %v5759, %v5751
        %v5761 = vmul.f32 %v5760, %v5759
        %v5762 = vmul.f32 0.5, %v5761
        %v5763 = vsub.f32 1.5, %v5762
        %v5764 = vmul.f32 %v5759, %v5763
        %vm5765 = vweird.f32 %v5751
        %vm5766 = vweird.f32 %v5759
        %vm5767 = vmor %vm5765, %vm5766
        %v5768 = vsel %vm5767, %v5759, %v5764
        %v5769 = vrsqrt.pop %v5752
        %v5770 = vmul.f32 %v5769, %v5752
        %v5771 = vmul.f32 %v5770, %v5769
        %v5772 = vmul.f32 0.5, %v5771
        %v5773 = vsub.f32 1.5, %v5772
        %v5774 = vmul.f32 %v5769, %v5773
        %vm5775 = vweird.f32 %v5752
        %vm5776 = vweird.f32 %v5769
        %vm5777 = vmor %vm5775, %vm5776
        %v5778 = vsel %vm5777, %v5769, %v5774
        %v5779 = vrsqrt.pop %v5753
        %v5780 = vmul.f32 %v5779, %v5753
        %v5781 = vmul.f32 %v5780, %v5779
        %v5782 = vmul.f32 0.5, %v5781
        %v5783 = vsub.f32 1.5, %v5782
        %v5784 = vmul.f32 %v5779, %v5783
        %vm5785 = vweird.f32 %v5753
        %vm5786 = vweird.f32 %v5779
        %vm5787 = vmor %vm5785, %vm5786
        %v5788 = vsel %vm5787, %v5779, %v5784
        %v5789 = vrsqrt.pop %v5754
        %v5790 = vmul.f32 %v5789, %v5754
        %v5791 = vmul.f32 %v5790, %v5789
        %v5792 = vmul.f32 0.5, %v5791
        %v5793 = vsub.f32 1.5, %v5792
        %v5794 = vmul.f32 %v5789, %v5793
        %vm5795 = vweird.f32 %v5754
        %vm5796 = vweird.f32 %v5789
        %vm5797 = vmor %vm5795, %vm5796
        %v5798 = vsel %vm5797, %v5789, %v5794
        %v5799 = vrsqrt.pop %v5755
        %v5800 = vmul.f32 %v5799, %v5755
        %v5801 = vmul.f32 %v5800, %v5799
        %v5802 = vmul.f32 0.5, %v5801
        %v5803 = vsub.f32 1.5, %v5802
        %v5804 = vmul.f32 %v5799, %v5803
        %vm5805 = vweird.f32 %v5755
        %vm5806 = vweird.f32 %v5799
        %vm5807 = vmor %vm5805, %vm5806
        %v5808 = vsel %vm5807, %v5799, %v5804
        %v5809 = vrsqrt.pop %v5756
        %v5810 = vmul.f32 %v5809, %v5756
        %v5811 = vmul.f32 %v5810, %v5809
        %v5812 = vmul.f32 0.5, %v5811
        %v5813 = vsub.f32 1.5, %v5812
        %v5814 = vmul.f32 %v5809, %v5813
        %vm5815 = vweird.f32 %v5756
        %vm5816 = vweird.f32 %v5809
        %vm5817 = vmor %vm5815, %vm5816
        %v5818 = vsel %vm5817, %v5809, %v5814
        %v5819 = vrsqrt.pop %v5757
        %v5820 = vmul.f32 %v5819, %v5757
        %v5821 = vmul.f32 %v5820, %v5819
        %v5822 = vmul.f32 0.5, %v5821
        %v5823 = vsub.f32 1.5, %v5822
        %v5824 = vmul.f32 %v5819, %v5823
        %vm5825 = vweird.f32 %v5757
        %vm5826 = vweird.f32 %v5819
        %vm5827 = vmor %vm5825, %vm5826
        %v5828 = vsel %vm5827, %v5819, %v5824
        %v5829 = vrsqrt.pop %v5758
        %v5830 = vmul.f32 %v5829, %v5758
        %v5831 = vmul.f32 %v5830, %v5829
        %v5832 = vmul.f32 0.5, %v5831
        %v5833 = vsub.f32 1.5, %v5832
        %v5834 = vmul.f32 %v5829, %v5833
        %vm5835 = vweird.f32 %v5758
        %vm5836 = vweird.f32 %v5829
        %vm5837 = vmor %vm5835, %vm5836
        %v5838 = vsel %vm5837, %v5829, %v5834
        %v5839 = vmul.f32 %v5655, %v5768
        %v5840 = vmul.f32 %v5656, %v5778
        %v5841 = vmul.f32 %v5657, %v5788
        %v5842 = vmul.f32 %v5658, %v5798
        %v5843 = vmul.f32 %v5659, %v5808
        %v5844 = vmul.f32 %v5660, %v5818
        %v5845 = vmul.f32 %v5661, %v5828
        %v5846 = vmul.f32 %v5662, %v5838
        %v5847 = vld [vmem:[%s14] sm:$0x1]
        %v5849 = vperm.slane %v5847, 0
        %v5851 = vmul.f32 %v5839, %v5849
        %v5852 = vmul.f32 %v5840, %v5849
        %v5853 = vmul.f32 %v5841, %v5849
        %v5854 = vmul.f32 %v5842, %v5849
        %v5855 = vmul.f32 %v5843, %v5849
        %v5856 = vmul.f32 %v5844, %v5849
        %v5857 = vmul.f32 %v5845, %v5849
        %v5858 = vmul.f32 %v5846, %v5849
        %v5859 = vld [vmem:[%s15] sm:$0x1]
        %v5861 = vperm.slane %v5859, 0
        %v5863 = vadd.f32 %v5851, %v5861
        %v5864 = vadd.f32 %v5852, %v5861
        %v5865 = vadd.f32 %v5853, %v5861
        %v5866 = vadd.f32 %v5854, %v5861
        %v5867 = vadd.f32 %v5855, %v5861
        %v5868 = vadd.f32 %v5856, %v5861
        %v5869 = vadd.f32 %v5857, %v5861
        %v5870 = vadd.f32 %v5858, %v5861
        %v5871 = vmul.f32 %v5695, %v5768
        %v5872 = vmul.f32 %v5696, %v5778
        %v5873 = vmul.f32 %v5697, %v5788
        %v5874 = vmul.f32 %v5698, %v5798
        %v5875 = vmul.f32 %v5699, %v5808
        %v5876 = vmul.f32 %v5700, %v5818
        %v5877 = vmul.f32 %v5701, %v5828
        %v5878 = vmul.f32 %v5702, %v5838
        %v5879 = vld [vmem:[%s16] sm:$0x1]
        %v5881 = vperm.slane %v5879, 0
        %v5883 = vmul.f32 %v5871, %v5881
        %v5884 = vmul.f32 %v5872, %v5881
        %v5885 = vmul.f32 %v5873, %v5881
        %v5886 = vmul.f32 %v5874, %v5881
        %v5887 = vmul.f32 %v5875, %v5881
        %v5888 = vmul.f32 %v5876, %v5881
        %v5889 = vmul.f32 %v5877, %v5881
        %v5890 = vmul.f32 %v5878, %v5881
        %v5891 = vld [vmem:[%s17] sm:$0x1]
        %v5893 = vperm.slane %v5891, 0
        %v5895 = vadd.f32 %v5883, %v5893
        %v5896 = vadd.f32 %v5884, %v5893
        %v5897 = vadd.f32 %v5885, %v5893
        %v5898 = vadd.f32 %v5886, %v5893
        %v5899 = vadd.f32 %v5887, %v5893
        %v5900 = vadd.f32 %v5888, %v5893
        %v5901 = vadd.f32 %v5889, %v5893
        %v5902 = vadd.f32 %v5890, %v5893
        %v5903 = vpack.c.bf16 %v5864, %v5863
        %v5904 = vpack.c.bf16 %v5866, %v5865
        %v5905 = vpack.c.bf16 %v5868, %v5867
        %v5906 = vpack.c.bf16 %v5870, %v5869
        %v5907 = vld [vmem:[%s18] sm:$0xf]
        %v5908 = vld [vmem:[%s18 + $0x4] sm:$0xf]
        %v5909 = vpack.c.bf16 %v5896, %v5895
        %v5910 = vpack.c.bf16 %v5898, %v5897
        %v5911 = vpack.c.bf16 %v5900, %v5899
        %v5912 = vpack.c.bf16 %v5902, %v5901
        %v5913 = vld [vmem:[%s19] sm:$0xf]
        %v5914 = vld [vmem:[%s19 + $0x4] sm:$0xf]
        %v5917 = vunpack.c.l.b16 %v5913
        %v5918 = vunpack.c.l.b16 %v5914
        %v5919 = vpack.c.b16 %v5918, %v5917
        %v5922 = vsel %vm902, %v5909, 0
        %v5925 = vsel %vm902, %v5910, 0
        %v5928 = vsel %vm902, %v5911, 0
        %v5931 = vsel %vm902, %v5912, 0
        %5933 = vmatpush.bf16.msra.mxu0 0
        %5934 = vmatpush.bf16.msra.mxu0 0
        %5935 = vmatpush.bf16.msra.mxu0 0
        %5936 = vmatpush.bf16.msra.mxu0 0
        %5937 = vmatpush.bf16.msra.mxu0 0
        %5938 = vmatpush.bf16.msra.mxu0 0
        %5939 = vmatpush.bf16.msra.mxu0 0
        %5940 = vmatpush.bf16.msra.mxu0 %v5919
        %5941 = vmatmul.bf16.gmra.mxu0 %v5922
        %v5942 = vpop.f32.mrf.mxu0
        %v5943 = vadd.f32 0.0, %v5942
        %v5944 = vpop.f32.mrf.mxu0
        %v5945 = vadd.f32 0.0, %v5944
        %5946 = vmatmul.bf16.gmra.mxu0 %v5925
        %v5947 = vpop.f32.mrf.mxu0
        %v5948 = vadd.f32 0.0, %v5947
        %v5949 = vpop.f32.mrf.mxu0
        %v5950 = vadd.f32 0.0, %v5949
        %5951 = vmatmul.bf16.gmra.mxu0 %v5928
        %v5952 = vpop.f32.mrf.mxu0
        %v5953 = vadd.f32 0.0, %v5952
        %v5954 = vpop.f32.mrf.mxu0
        %v5955 = vadd.f32 0.0, %v5954
        %5956 = vmatmul.bf16.gmra.mxu0 %v5931
        %v5957 = vpop.f32.mrf.mxu0
        %v5958 = vadd.f32 0.0, %v5957
        %v5959 = vpop.f32.mrf.mxu0
        %v5960 = vadd.f32 0.0, %v5959
        %5961 = vdwg.mxu0
        %v5964 = vunpack.c.l.b16 %v5907
        %v5965 = vunpack.c.l.b16 %v5908
        %v5966 = vpack.c.b16 %v5965, %v5964
        %v5969 = vsel %vm902, %v5903, 0
        %v5972 = vsel %vm902, %v5904, 0
        %v5975 = vsel %vm902, %v5905, 0
        %v5978 = vsel %vm902, %v5906, 0
        %5980 = vmatpush.bf16.msra.mxu0 0
        %5981 = vmatpush.bf16.msra.mxu0 0
        %5982 = vmatpush.bf16.msra.mxu0 0
        %5983 = vmatpush.bf16.msra.mxu0 0
        %5984 = vmatpush.bf16.msra.mxu0 0
        %5985 = vmatpush.bf16.msra.mxu0 0
        %5986 = vmatpush.bf16.msra.mxu0 0
        %5987 = vmatpush.bf16.msra.mxu0 %v5966
        %5988 = vmatmul.bf16.gmra.mxu0 %v5969
        %v5989 = vpop.f32.mrf.mxu0
        %v5990 = vadd.f32 %v5943, %v5989
        %v5991 = vpop.f32.mrf.mxu0
        %v5992 = vadd.f32 %v5945, %v5991
        %5993 = vmatmul.bf16.gmra.mxu0 %v5972
        %v5994 = vpop.f32.mrf.mxu0
        %v5995 = vadd.f32 %v5948, %v5994
        %v5996 = vpop.f32.mrf.mxu0
        %v5997 = vadd.f32 %v5950, %v5996
        %5998 = vmatmul.bf16.gmra.mxu0 %v5975
        %v5999 = vpop.f32.mrf.mxu0
        %v6000 = vadd.f32 %v5953, %v5999
        %v6001 = vpop.f32.mrf.mxu0
        %v6002 = vadd.f32 %v5955, %v6001
        %6003 = vmatmul.bf16.gmra.mxu0 %v5978
        %v6004 = vpop.f32.mrf.mxu0
        %v6005 = vadd.f32 %v5958, %v6004
        %v6006 = vpop.f32.mrf.mxu0
        %v6007 = vadd.f32 %v5960, %v6006
        %6008 = vdwg.mxu0
        %v6009 = vld [vmem:[%s20] sm:$0x1]
        %v6011 = vperm.slane %v6009, 0
        %v6013 = vadd.f32 %v5990, %v6011
        %v6014 = vadd.f32 %v5992, %v6011
        %v6015 = vadd.f32 %v5995, %v6011
        %v6016 = vadd.f32 %v5997, %v6011
        %v6017 = vadd.f32 %v6000, %v6011
        %v6018 = vadd.f32 %v6002, %v6011
        %v6019 = vadd.f32 %v6005, %v6011
        %v6020 = vadd.f32 %v6007, %v6011
        %v6021 = vmul.f32 %v6013, 0.5
        %v6022 = vmul.f32 %v6014, 0.5
        %v6023 = vmul.f32 %v6015, 0.5
        %v6024 = vmul.f32 %v6016, 0.5
        %v6025 = vmul.f32 %v6017, 0.5
        %v6026 = vmul.f32 %v6018, 0.5
        %v6027 = vmul.f32 %v6019, 0.5
        %v6028 = vmul.f32 %v6020, 0.5
        %v6029 = vmul.f32 %v6013, 0.044715
        %v6030 = vmul.f32 %v6014, 0.044715
        %v6031 = vmul.f32 %v6015, 0.044715
        %v6032 = vmul.f32 %v6016, 0.044715
        %v6033 = vmul.f32 %v6017, 0.044715
        %v6034 = vmul.f32 %v6018, 0.044715
        %v6035 = vmul.f32 %v6019, 0.044715
        %v6036 = vmul.f32 %v6020, 0.044715
        %v6037 = vmul.f32 %v6029, %v6013
        %v6038 = vmul.f32 %v6030, %v6014
        %v6039 = vmul.f32 %v6031, %v6015
        %v6040 = vmul.f32 %v6032, %v6016
        %v6041 = vmul.f32 %v6033, %v6017
        %v6042 = vmul.f32 %v6034, %v6018
        %v6043 = vmul.f32 %v6035, %v6019
        %v6044 = vmul.f32 %v6036, %v6020
        %v6045 = vmul.f32 %v6037, %v6013
        %v6046 = vmul.f32 %v6038, %v6014
        %v6047 = vmul.f32 %v6039, %v6015
        %v6048 = vmul.f32 %v6040, %v6016
        %v6049 = vmul.f32 %v6041, %v6017
        %v6050 = vmul.f32 %v6042, %v6018
        %v6051 = vmul.f32 %v6043, %v6019
        %v6052 = vmul.f32 %v6044, %v6020
        %v6053 = vadd.f32 %v6013, %v6045
        %v6054 = vadd.f32 %v6014, %v6046
        %v6055 = vadd.f32 %v6015, %v6047
        %v6056 = vadd.f32 %v6016, %v6048
        %v6057 = vadd.f32 %v6017, %v6049
        %v6058 = vadd.f32 %v6018, %v6050
        %v6059 = vadd.f32 %v6019, %v6051
        %v6060 = vadd.f32 %v6020, %v6052
        %v6061 = vmul.f32 %v6053, 0.7978846
        %v6062 = vmul.f32 %v6054, 0.7978846
        %v6063 = vmul.f32 %v6055, 0.7978846
        %v6064 = vmul.f32 %v6056, 0.7978846
        %v6065 = vmul.f32 %v6057, 0.7978846
        %v6066 = vmul.f32 %v6058, 0.7978846
        %v6067 = vmul.f32 %v6059, 0.7978846
        %v6068 = vmul.f32 %v6060, 0.7978846
        %v6069 = vtanh.pop %v6061
        %v6070 = vtanh.pop %v6062
        %v6071 = vtanh.pop %v6063
        %v6072 = vtanh.pop %v6064
        %v6073 = vtanh.pop %v6065
        %v6074 = vtanh.pop %v6066
        %v6075 = vtanh.pop %v6067
        %v6076 = vtanh.pop %v6068
        %v6077 = vadd.f32 %v6069, 1.0
        %v6078 = vadd.f32 %v6070, 1.0
        %v6079 = vadd.f32 %v6071, 1.0
        %v6080 = vadd.f32 %v6072, 1.0
        %v6081 = vadd.f32 %v6073, 1.0
        %v6082 = vadd.f32 %v6074, 1.0
        %v6083 = vadd.f32 %v6075, 1.0
        %v6084 = vadd.f32 %v6076, 1.0
        %v6085 = vmul.f32 %v6021, %v6077
        %v6086 = vmul.f32 %v6022, %v6078
        %v6087 = vmul.f32 %v6023, %v6079
        %v6088 = vmul.f32 %v6024, %v6080
        %v6089 = vmul.f32 %v6025, %v6081
        %v6090 = vmul.f32 %v6026, %v6082
        %v6091 = vmul.f32 %v6027, %v6083
        %v6092 = vmul.f32 %v6028, %v6084
        %v6093 = vpack.c.bf16 %v6086, %v6085
        %v6094 = vpack.c.bf16 %v6088, %v6087
        %v6095 = vpack.c.bf16 %v6090, %v6089
        %v6096 = vpack.c.bf16 %v6092, %v6091
        %v6097 = vld [vmem:[%s21] sm:$0xf]
        %v6098 = vld [vmem:[%s21 + $0x4] sm:$0xf]
        %v6099 = vld [vmem:[%s21 + $0x8] sm:$0xf]
        %v6100 = vld [vmem:[%s21 + $0xc] sm:$0xf]
        %v6101 = vld [vmem:[%s21 + $0x10] sm:$0xf]
        %v6102 = vld [vmem:[%s21 + $0x14] sm:$0xf]
        %v6103 = vld [vmem:[%s21 + $0x18] sm:$0xf]
        %v6104 = vld [vmem:[%s21 + $0x1c] sm:$0xf]
        %v6105 = vld [vmem:[%s22] sm:$0x1]
        %v6107 = vperm.slane %v6105, 0
        %v6117 = vunpack.c.l.b16 %v6097
        %v6118 = vunpack.c.l.b16 %v6098
        %v6119 = vunpack.c.l.b16 %v6099
        %v6120 = vunpack.c.l.b16 %v6100
        %v6121 = vunpack.c.l.b16 %v6101
        %v6122 = vunpack.c.l.b16 %v6102
        %v6123 = vunpack.c.l.b16 %v6103
        %v6124 = vunpack.c.l.b16 %v6104
        %v6125 = vpack.c.b16 %v6118, %v6117
        %v6126 = vpack.c.b16 %v6120, %v6119
        %v6127 = vpack.c.b16 %v6122, %v6121
        %v6128 = vpack.c.b16 %v6124, %v6123
        %v6134 = vsel %vm3763, %v6093, 0
        %v6137 = vsel %vm3763, %v6094, 0
        %v6140 = vsel %vm3763, %v6095, 0
        %v6143 = vsel %vm3763, %v6096, 0
        %6145 = vmatpush.bf16.msra.mxu0 0
        %6146 = vmatpush.bf16.msra.mxu0 0
        %6147 = vmatpush.bf16.msra.mxu0 0
        %6148 = vmatpush.bf16.msra.mxu0 0
        %6149 = vmatpush.bf16.msra.mxu0 %v6128
        %6150 = vmatpush.bf16.msra.mxu0 %v6127
        %6151 = vmatpush.bf16.msra.mxu0 %v6126
        %6152 = vmatpush.bf16.msra.mxu0 %v6125
        %6153 = vmatmul.bf16.gmra.mxu0 %v6134
        %v6154 = vpop.f32.mrf.mxu0
        %v6155 = vadd.f32 %v6107, %v6154
        %v6156 = vpop.f32.mrf.mxu0
        %v6157 = vadd.f32 %v6107, %v6156
        %6158 = vmatmul.bf16.gmra.mxu0 %v6137
        %v6159 = vpop.f32.mrf.mxu0
        %v6160 = vadd.f32 %v6107, %v6159
        %v6161 = vpop.f32.mrf.mxu0
        %v6162 = vadd.f32 %v6107, %v6161
        %6163 = vmatmul.bf16.gmra.mxu0 %v6140
        %v6164 = vpop.f32.mrf.mxu0
        %v6165 = vadd.f32 %v6107, %v6164
        %v6166 = vpop.f32.mrf.mxu0
        %v6167 = vadd.f32 %v6107, %v6166
        %6168 = vmatmul.bf16.gmra.mxu0 %v6143
        %v6169 = vpop.f32.mrf.mxu0
        %v6170 = vadd.f32 %v6107, %v6169
        %v6171 = vpop.f32.mrf.mxu0
        %v6172 = vadd.f32 %v6107, %v6171
        %6173 = vdwg.mxu0
        %6174 = vst.msk [vmem:[%s843 + $0x10] sm:$0xff] %vm902, %v6155
        %6175 = vst.msk [vmem:[%s843 + $0x18] sm:$0xff] %vm902, %v6157
        %6176 = vst.msk [vmem:[%s843 + $0x30] sm:$0xff] %vm902, %v6160
        %6177 = vst.msk [vmem:[%s843 + $0x38] sm:$0xff] %vm902, %v6162
        %6178 = vst.msk [vmem:[%s843 + $0x50] sm:$0xff] %vm902, %v6165
        %6179 = vst.msk [vmem:[%s843 + $0x58] sm:$0xff] %vm902, %v6167
        %6180 = vst.msk [vmem:[%s843 + $0x70] sm:$0xff] %vm902, %v6170
        %6181 = vst.msk [vmem:[%s843 + $0x78] sm:$0xff] %vm902, %v6172
        %s6182 = smul.u32 4, %s34
        %p6183 = scmp.lt.s32.totalorder %s6182, 7
        %s6184 = scalar_select %p6183, %s6182, 7
        %s6185 = smul.addr %s6184, 4
        %s6186 = smul.addr %s6185, 8
        %s6187 = scalar_lea.vmem %s23, %s6186
        // Predicated region
        $region154: #{fwd.1} parent=148 // pred_check
          %p6188 = pneg %p545
        $region155: #{fwd.1} parent=148 // pred_check_branch
          %6190 = sbr.rel (%p6188) target = $region157
        $region156: #{fwd.1} parent=148 // pred_region
          %s6191 = smul.u32 4, %s34
        $region157: #{fwd.1} parent=148 // pred_fallthru
          _
      $region149: #{fwd.1} parent=5 // pred_fallthru
        _
      %p6192 = scmp.le.s32.totalorder 2, %s29
      // Predicated region
      $region158: #{fwd.1} parent=5 // pred_check
        %p6193 = pneg %p6192
      $region159: #{fwd.1} parent=5 // pred_check_branch
        %6195 = sbr.rel (%p6193) target = $region161
      $region160: #{fwd.1} parent=5 // pred_region
        %s6196 = ssub.s32 %s29, 2
        // Predicated region
        $region162: #{fwd.1} parent=160 // pred_check
          %p6197 = pneg %p551
        $region163: #{fwd.1} parent=160 // pred_check_branch
          %6199 = sbr.rel (%p6197) target = $region165
        $region164: #{fwd.1} parent=160 // pred_region
          %s6200 = smul.u32 4, %s35
          %p6201 = scmp.lt.s32.totalorder %s6200, 7
          %s6202 = scalar_select %p6201, %s6200, 7
          %s6203 = smul.addr %s6202, 4
          %s6204 = smul.addr %s6203, 8
          %s6205 = scalar_lea.vmem %s23, %s6204
        $region165: #{fwd.1} parent=160 // pred_fallthru
          _
      $region161: #{fwd.1} parent=5 // pred_fallthru
        _
    $region6: #{fwd.1} parent=1 // loop_footer
      %s33 = sadd.s32 1, %s29
    $region7: #{fwd.1} parent=1 // loop_footer_branch
      %28 = sbr.rel target = $region3
    $region8: #{fwd.1} parent=1 // loop_exit
      _

</llo_original>
